<compile_context>
chip_gen: v7x
topology: tpu7x:2x2x1
jax: 0.10.0
libtpu: 0.0.40
codegen_flags: <defaults>
</compile_context>

<pallas_src>
import functools

import jax
import jax.numpy as jnp
from jax import lax
from jax.experimental import pallas as pl
from jax.experimental.pallas import tpu as pltpu


def _elu_plus_one(z):
    # ELU(z) + 1 written as exp(min(z,0)) + max(z,0): same EUP exp count as the
    # where-form, no VPU select, no spurious exp(+large) on the positive branch.
    return jnp.exp(jnp.minimum(z, 0.0)) + jnp.maximum(z, 0.0)


# ---------------------------------------------------------------------------
# Kernel 1: K/V phase (reduction over S tiles).
# ---------------------------------------------------------------------------
def _kv_phase_kernel(x_ref, wkv_ref, kv_ref, ksum_ref, *,
                     num_heads, head_dim, seq_len, tile_s, batch_block,
                     compute_dtype, padded):
    s_idx = pl.program_id(1)

    @pl.when(s_idx == 0)
    def _init():
        kv_ref[...] = jnp.zeros_like(kv_ref)
        ksum_ref[...] = jnp.zeros_like(ksum_ref)

    C = x_ref.shape[1]
    if padded:
        tok = s_idx * tile_s + lax.broadcasted_iota(jnp.int32, (1, tile_s), 1)
        valid = tok < seq_len                                      # (1, TS)

    for bb in range(batch_block):
        xt = x_ref[bb].astype(compute_dtype)                       # (C, TS)
        # Fused K/V projection: one (2C, C) @ (C, TS) MXU pass.
        kvp = jnp.dot(wkv_ref[...], xt,
                      preferred_element_type=jnp.float32)          # (2C, TS) f32
        kt = kvp[:C, :]
        vt = kvp[C:, :]
        phi_kt = _elu_plus_one(kt)                                 # (C, TS) f32
        if padded:
            # Padded tokens would contribute phi(0) = 1 to ksum -- mask them.
            phi_kt = jnp.where(valid, phi_kt, 0.0)

        # Token-sum of phi(K): one lane reduction for all heads at once.
        ksum_ref[bb, :, :] += jnp.sum(phi_kt, axis=1, keepdims=True)

        vt_c = vt.astype(compute_dtype)
        phik_c = phi_kt.astype(compute_dtype)
        for h in range(num_heads):
            lo = h * head_dim
            hi = lo + head_dim
            # kv^T contribution: contract both operands over the token (lane)
            # axis -- no transposes materialized.
            kv_ref[bb, lo:hi, :] += lax.dot_general(
                vt_c[lo:hi, :], phik_c[lo:hi, :],
                (((1,), (1,)), ((), ())),
                preferred_element_type=jnp.float32)                # (D, D) f32


# ---------------------------------------------------------------------------
# Kernel 2: Q phase (independent per S tile; kv/ksum are read-only).
# ---------------------------------------------------------------------------
def _q_phase_kernel(x_ref, kv_ref, ksum_ref, wq_ref, wo_t_ref, bo_ref,
                    o_ref, att_ref, *,
                    num_heads, head_dim, batch_block, compute_dtype):
    for bb in range(batch_block):
        xt = x_ref[bb].astype(compute_dtype)                       # (C, TS)
        qt = jnp.dot(wq_ref[...], xt,
                     preferred_element_type=jnp.float32)           # (C, TS) f32
        phi_qt = _elu_plus_one(qt)                                 # (C, TS) f32

        # Denominator stays off the MXU: one VPU multiply for all heads, then a
        # per-head sublane (XLU) reduction inside the loop.
        kp = ksum_ref[bb] * phi_qt                                 # (C, TS) f32

        phiq_c = phi_qt.astype(compute_dtype)
        kv_c = kv_ref[bb].astype(compute_dtype)                    # (C, D)
        for h in range(num_heads):
            lo = h * head_dim
            hi = lo + head_dim
            # numerator^T = kv^T @ phi_Q^T for this head (MXU).
            num_t = jnp.dot(kv_c[lo:hi, :], phiq_c[lo:hi, :],
                            preferred_element_type=jnp.float32)    # (D, TS)
            den_t = jnp.sum(kp[lo:hi, :], axis=0, keepdims=True)   # (1, TS)
            att = num_t * pl.reciprocal(den_t + 1e-6, approx=True)
            # Stage this head's slab; the out-projection below contracts over
            # the full C axis in a single MXU pass (no per-head accumulation).
            att_ref[lo:hi, :] = att.astype(att_ref.dtype)

        # out^T = Wo @ att^T via the (in, out)-layout weight (no transposes).
        out_t = lax.dot_general(
            wo_t_ref[...], att_ref[...],
            (((0,), (0,)), ((), ())),
            preferred_element_type=jnp.float32)                    # (C, TS) f32
        o_ref[bb, :, :] = (out_t + bo_ref[...]).astype(o_ref.dtype)


# ---------------------------------------------------------------------------
# Wrapper
# ---------------------------------------------------------------------------
def _pick_s_tile(s_padded, ts_max):
    ts = max(128, min(ts_max, s_padded))
    ts -= ts % 128
    while s_padded % ts != 0:
        ts -= 128
    return ts


def _const_spec(block_shape, single_buffer):
    ndim = len(block_shape)
    index_map = lambda b, s: (0,) * ndim
    if single_buffer:
        try:
            # Constant across the whole grid -> double-buffering is pure VMEM
            # waste; request a single resident copy.
            return pl.BlockSpec(block_shape, index_map,
                                pipeline_mode=pl.Buffered(1))
        except TypeError:
            pass
    return pl.BlockSpec(block_shape, index_map)


def _linear_attention_impl(x_nchw, wq, wk, wv, wo, bo, *, num_heads,
                           compute_dtype, ts_max, batch_block,
                           single_buffer_weights):
    B, C, Hh, Ww = x_nchw.shape
    S = Hh * Ww
    assert C % num_heads == 0, "embed_dim must be divisible by num_heads"
    D = C // num_heads

    s_pad = ((S + 127) // 128) * 128          # lane-dense (unmasked) stores
    ts = _pick_s_tile(s_pad, ts_max)
    ns = s_pad // ts

    tb = max(1, min(batch_block, B))
    while B % tb:
        tb -= 1
    nb = B // tb

    x_bcs = x_nchw.reshape(B, C, S)           # native NCHW flatten, no transpose
    if s_pad != S:
        x_bcs = jnp.pad(x_bcs, ((0, 0), (0, 0), (0, s_pad - S)))

    f32 = jnp.float32
    wkv = jnp.concatenate([wk, wv], axis=0).astype(compute_dtype)   # (2C, C)
    wq_c = wq.astype(compute_dtype)                                  # (C, C)
    wo_t = wo.T.astype(compute_dtype)                                # (C, C) (in, out)
    bo2 = bo.reshape(C, 1).astype(f32)

    kv_kernel = functools.partial(
        _kv_phase_kernel, num_heads=num_heads, head_dim=D, seq_len=S,
        tile_s=ts, batch_block=tb, compute_dtype=compute_dtype,
        padded=(s_pad != S))

    kv, ksum = pl.pallas_call(
        kv_kernel,
        out_shape=(jax.ShapeDtypeStruct((B, C, D), f32),
                   jax.ShapeDtypeStruct((B, C, 1), f32)),
        grid_spec=pltpu.PrefetchScalarGridSpec(
            num_scalar_prefetch=0,
            grid=(nb, ns),
            in_specs=[
                pl.BlockSpec((tb, C, ts), lambda b, s: (b, 0, s)),   # x tile
                _const_spec((2 * C, C), single_buffer_weights),      # [Wk;Wv]
            ],
            out_specs=[
                pl.BlockSpec((tb, C, D), lambda b, s: (b, 0, 0)),    # kv^T
                pl.BlockSpec((tb, C, 1), lambda b, s: (b, 0, 0)),    # ksum
            ]),
        compiler_params=pltpu.CompilerParams(
            dimension_semantics=("parallel", "arbitrary")),
    )(x_bcs, wkv)

    q_kernel = functools.partial(
        _q_phase_kernel, num_heads=num_heads, head_dim=D, batch_block=tb,
        compute_dtype=compute_dtype)

    out_bcs = pl.pallas_call(
        q_kernel,
        out_shape=jax.ShapeDtypeStruct((B, C, s_pad), x_nchw.dtype),
        grid_spec=pltpu.PrefetchScalarGridSpec(
            num_scalar_prefetch=0,
            grid=(nb, ns),
            in_specs=[
                pl.BlockSpec((tb, C, ts), lambda b, s: (b, 0, s)),   # x tile
                pl.BlockSpec((tb, C, D), lambda b, s: (b, 0, 0)),    # kv^T
                pl.BlockSpec((tb, C, 1), lambda b, s: (b, 0, 0)),    # ksum
                _const_spec((C, C), single_buffer_weights),          # Wq
                _const_spec((C, C), single_buffer_weights),          # Wo^T
                _const_spec((C, 1), single_buffer_weights),          # bias
            ],
            out_specs=pl.BlockSpec((tb, C, ts), lambda b, s: (b, 0, s)),
            scratch_shapes=[pltpu.VMEM((C, ts), compute_dtype)]),    # att slab
        compiler_params=pltpu.CompilerParams(
            # Both axes independent -> both v7x TensorCores get work even when
            # the batch-block axis has extent 1.
            dimension_semantics=("parallel", "parallel")),
    )(x_bcs, kv, ksum, wq_c, wo_t, bo2)

    if s_pad != S:
        out_bcs = out_bcs[:, :, :S]
    return out_bcs.reshape(B, C, Hh, Ww)


def linear_attention(x_nchw, wq, wk, wv, wo, bo, *, num_heads,
                     compute_dtype=jnp.bfloat16, ts_max=512, batch_block=1):
    """x_nchw: (B, C, H, W); wq/wk/wv/wo: (C, C) PyTorch (out, in); bo: (C,).

    Returns (B, C, H, W).  `ts_max` is the token-tile upper bound (multiple of
    128; ~512 also fits v7x's 64 MiB VMEM); `batch_block` packs several batch
    elements per grid step when per-batch work is tiny.
    """
    kwargs = dict(num_heads=num_heads, compute_dtype=compute_dtype,
                  ts_max=ts_max, batch_block=batch_block)
    try:
        return _linear_attention_impl(x_nchw, wq, wk, wv, wo, bo,
                                      single_buffer_weights=True, **kwargs)
    except Exception:
        # Fallback if this jax build rejects pipeline_mode=pl.Buffered(1);
        # identical kernel, default double-buffered constant operands.
        return _linear_attention_impl(x_nchw, wq, wk, wv, wo, bo,
                                      single_buffer_weights=False, **kwargs)


# ---------------------------------------------------------------------------
# Pure-JAX reference (mirrors the PyTorch forward exactly).
# ---------------------------------------------------------------------------
def linear_attention_reference(x_nchw, wq, wk, wv, wo, bo, *, num_heads):
    B, C, Hh, Ww = x_nchw.shape
    S = Hh * Ww
    D = C // num_heads
    x = jnp.transpose(x_nchw.reshape(B, C, S), (0, 2, 1))               # (B, S, C)
    q = x @ wq.T
    k = x @ wk.T
    v = x @ wv.T

    def heads(t):
        return jnp.transpose(t.reshape(B, S, num_heads, D), (0, 2, 1, 3))

    q, k, v = heads(q), heads(k), heads(v)                              # (B, Hh, S, D)
    phi_q = jnp.where(q > 0, q + 1.0, jnp.exp(q))
    phi_k = jnp.where(k > 0, k + 1.0, jnp.exp(k))
    num = phi_q @ (jnp.swapaxes(phi_k, 2, 3) @ v)
    ones = jnp.ones((B, num_heads, S, 1), x.dtype)
    den = phi_q @ (jnp.swapaxes(phi_k, 2, 3) @ ones)
    out = num / (den + 1e-6)
    out = jnp.transpose(out, (0, 2, 1, 3)).reshape(B, S, C)
    out = out @ wo.T + bo
    return jnp.transpose(out, (0, 2, 1)).reshape(B, C, Hh, Ww)


if __name__ == "__main__":
    # Full-precision matmuls in the pure-JAX reference.
    jax.config.update("jax_default_matmul_precision", "highest")

    def make_inputs(key, B, C, Hh, Ww):
        k_x, k_q, k_k, k_v, k_o, k_b = jax.random.split(key, 6)
        scale = 1.0 / jnp.sqrt(jnp.float32(C))
        x = jax.random.normal(k_x, (B, C, Hh, Ww), jnp.float32)
        wq = jax.random.normal(k_q, (C, C), jnp.float32) * scale
        wk = jax.random.normal(k_k, (C, C), jnp.float32) * scale
        wv = jax.random.normal(k_v, (C, C), jnp.float32) * scale
        wo = jax.random.normal(k_o, (C, C), jnp.float32) * scale
        bo = jax.random.normal(k_b, (C,), jnp.float32) * scale
        return x, wq, wk, wv, wo, bo

    key = jax.random.PRNGKey(0)
    cases = [
        # f32-compute path, multiple S tiles (ts_max=128 forces 2 tiles at S=256)
        dict(shape=(2, 32, 16, 16), heads=4, tol=1e-2,
             kw=dict(compute_dtype=jnp.float32, ts_max=128, batch_block=1)),
        # bf16 MXU path, same tiling (looser tolerance for bf16 matmul inputs)
        dict(shape=(2, 32, 16, 16), heads=4, tol=2.5e-2,
             kw=dict(compute_dtype=jnp.bfloat16, ts_max=128, batch_block=1)),
        # tiny S (64 -> padded to 128, masked) + batch blocking of 2
        dict(shape=(2, 16, 8, 8), heads=2, tol=2.5e-2,
             kw=dict(compute_dtype=jnp.bfloat16, batch_block=2)),
    ]

    for i, case in enumerate(cases):
        key, sub = jax.random.split(key)
        B, C, Hh, Ww = case["shape"]
        x, wq, wk, wv, wo, bo = make_inputs(sub, B, C, Hh, Ww)
        out = linear_attention(x, wq, wk, wv, wo, bo,
                               num_heads=case["heads"], **case["kw"])
        out = jax.block_until_ready(out)
        ref = linear_attention_reference(x, wq, wk, wv, wo, bo,
                                         num_heads=case["heads"])
        assert out.shape == ref.shape
        max_err = float(jnp.max(jnp.abs(out - ref)))
        assert jnp.allclose(out, ref, rtol=case["tol"], atol=case["tol"]), (
            f"case {i}: mismatch vs reference (max abs err {max_err})")

    print("KERNEL_OK")
</pallas_src>

<mosaic_0001>
module attributes {stable_mosaic.version = 11 : i64} {
  func.func @_kv_phase_kernel(%arg0: i32, %arg1: i32, %arg2: memref<1x32x128xf32, #tpu.memory_space<vmem>>, %arg3: memref<64x32xf32, #tpu.memory_space<vmem>>, %arg4: memref<1x32x8xf32, #tpu.memory_space<vmem>>, %arg5: memref<1x32x1xf32, #tpu.memory_space<vmem>>) attributes {dimension_semantics = [#tpu.dimension_semantics<parallel>, #tpu.dimension_semantics<arbitrary>], iteration_bounds = array<i64: 2, 2>, scalar_prefetch = 0 : i64, scratch_operands = 0 : i64, tpu.core_type = #tpu.core_type<tc>, window_params = [{transform_indices = @transform_0, window_bounds = array<i64: 1, 32, 128>}, {pipeline_mode = #tpu.pipeline_mode<synchronous>, transform_indices = @transform_1, window_bounds = array<i64: 64, 32>}, {transform_indices = @transform_2, window_bounds = array<i64: 1, 32, 8>}, {transform_indices = @transform_3, window_bounds = array<i64: 1, 32, 1>}]} {
    %c0_i32 = arith.constant 0 : i32
    %0 = arith.cmpi eq, %arg1, %c0_i32 : i32
    %1 = arith.extui %0 : i1 to i32
    %c0_i32_0 = arith.constant 0 : i32
    %2 = arith.cmpi ne, %1, %c0_i32_0 : i32
    scf.if %2 {
      %cst_39 = arith.constant 0.000000e+00 : f32
      %59 = vector.broadcast %cst_39 : f32 to vector<1x32x8xf32>
      %c0_40 = arith.constant 0 : index
      %c0_41 = arith.constant 0 : index
      %c0_42 = arith.constant 0 : index
      %60 = vector.load %arg4[%c0_40, %c0_41, %c0_42] : memref<1x32x8xf32, #tpu.memory_space<vmem>>, vector<1x32x8xf32>
      tpu.vector_store %arg4[%c0_40, %c0_41, %c0_42], %59 {strides = array<i32>} : memref<1x32x8xf32, #tpu.memory_space<vmem>>, vector<1x32x8xf32>,
      %cst_43 = arith.constant 0.000000e+00 : f32
      %61 = vector.broadcast %cst_43 : f32 to vector<1x32x1xf32>
      %c0_44 = arith.constant 0 : index
      %c0_45 = arith.constant 0 : index
      %c0_46 = arith.constant 0 : index
      %62 = vector.load %arg5[%c0_44, %c0_45, %c0_46] : memref<1x32x1xf32, #tpu.memory_space<vmem>>, vector<1x32x1xf32>
      tpu.vector_store %arg5[%c0_44, %c0_45, %c0_46], %61 {strides = array<i32>} : memref<1x32x1xf32, #tpu.memory_space<vmem>>, vector<1x32x1xf32>,
    } else {
    }
    %c0 = arith.constant 0 : index
    %c0_1 = arith.constant 0 : index
    %c0_2 = arith.constant 0 : index
    %3 = vector.load %arg2[%c0, %c0_1, %c0_2] : memref<1x32x128xf32, #tpu.memory_space<vmem>>, vector<1x32x128xf32>
    %4 = vector.shape_cast %3 : vector<1x32x128xf32> to vector<32x128xf32>
    %c0_3 = arith.constant 0 : index
    %c0_4 = arith.constant 0 : index
    %5 = vector.load %arg3[%c0_3, %c0_4] : memref<64x32xf32, #tpu.memory_space<vmem>>, vector<64x32xf32>
    %cst = arith.constant dense<0.000000e+00> : vector<64x128xf32>
    %6 = tpu.matmul %5, %4, %cst {dimension_numbers = #tpu.dot_dimension_numbers<[1], [0], [0], [1], [0, 0, 1, 1], [], []>, precision = #tpu.contract_precision<fp32>} : vector<64x32xf32>, vector<32x128xf32>, vector<64x128xf32> -> vector<64x128xf32>
    %7 = vector.extract_strided_slice %6 {offsets = [0, 0], sizes = [32, 128], strides = [1, 1]} : vector<64x128xf32> to vector<32x128xf32>
    %8 = vector.extract_strided_slice %6 {offsets = [32, 0], sizes = [32, 128], strides = [1, 1]} : vector<64x128xf32> to vector<32x128xf32>
    %cst_5 = arith.constant 0.000000e+00 : f32
    %9 = vector.broadcast %cst_5 : f32 to vector<32x128xf32>
    %10 = arith.minimumf %7, %9 : vector<32x128xf32>
    %11 = math.exp %10 : vector<32x128xf32>
    %cst_6 = arith.constant 0.000000e+00 : f32
    %12 = vector.broadcast %cst_6 : f32 to vector<32x128xf32>
    %13 = arith.maximumf %7, %12 : vector<32x128xf32>
    %14 = arith.addf %11, %13 : vector<32x128xf32>
    %c0_7 = arith.constant 0 : index
    %c0_8 = arith.constant 0 : index
    %c0_9 = arith.constant 0 : index
    %15 = vector.load %arg5[%c0_7, %c0_8, %c0_9] : memref<1x32x1xf32, #tpu.memory_space<vmem>>, vector<1x32x1xf32>
    %16 = vector.shape_cast %15 : vector<1x32x1xf32> to vector<32x1xf32>
    %cst_10 = arith.constant dense<0.000000e+00> : vector<32xf32>
    %17 = vector.multi_reduction <add>, %14, %cst_10 [1] : vector<32x128xf32> to vector<32xf32>
    %18 = vector.shape_cast %17 : vector<32xf32> to vector<32x1xf32>
    %19 = arith.addf %16, %18 : vector<32x1xf32>
    %c0_11 = arith.constant 0 : index
    %c0_12 = arith.constant 0 : index
    %c0_13 = arith.constant 0 : index
    %20 = vector.load %arg5[%c0_11, %c0_12, %c0_13] : memref<1x32x1xf32, #tpu.memory_space<vmem>>, vector<1x32x1xf32>
    %21 = vector.shape_cast %20 : vector<1x32x1xf32> to vector<32x1xf32>
    %22 = vector.shape_cast %19 : vector<32x1xf32> to vector<1x32x1xf32>
    tpu.vector_store %arg5[%c0_11, %c0_12, %c0_13], %22 {strides = array<i32>} : memref<1x32x1xf32, #tpu.memory_space<vmem>>, vector<1x32x1xf32>,
    %c0_14 = arith.constant 0 : index
    %c0_15 = arith.constant 0 : index
    %c0_16 = arith.constant 0 : index
    %23 = vector.load %arg4[%c0_14, %c0_15, %c0_16] : memref<1x32x8xf32, #tpu.memory_space<vmem>>, vector<1x8x8xf32>
    %24 = vector.shape_cast %23 : vector<1x8x8xf32> to vector<8x8xf32>
    %25 = vector.extract_strided_slice %8 {offsets = [0, 0], sizes = [8, 128], strides = [1, 1]} : vector<32x128xf32> to vector<8x128xf32>
    %26 = vector.extract_strided_slice %14 {offsets = [0, 0], sizes = [8, 128], strides = [1, 1]} : vector<32x128xf32> to vector<8x128xf32>
    %cst_17 = arith.constant dense<0.000000e+00> : vector<8x8xf32>
    %27 = tpu.matmul %25, %26, %cst_17 {dimension_numbers = #tpu.dot_dimension_numbers<[1], [1], [0], [0], [0, 0, 1, 0], [], []>, precision = #tpu.contract_precision<fp32>} : vector<8x128xf32>, vector<8x128xf32>, vector<8x8xf32> -> vector<8x8xf32>
    %28 = arith.addf %24, %27 : vector<8x8xf32>
    %c0_18 = arith.constant 0 : index
    %c0_19 = arith.constant 0 : index
    %c0_20 = arith.constant 0 : index
    %29 = vector.load %arg4[%c0_18, %c0_19, %c0_20] : memref<1x32x8xf32, #tpu.memory_space<vmem>>, vector<1x8x8xf32>
    %30 = vector.shape_cast %29 : vector<1x8x8xf32> to vector<8x8xf32>
    %31 = vector.shape_cast %28 : vector<8x8xf32> to vector<1x8x8xf32>
    tpu.vector_store %arg4[%c0_18, %c0_19, %c0_20], %31 {strides = array<i32>} : memref<1x32x8xf32, #tpu.memory_space<vmem>>, vector<1x8x8xf32>,
    %c0_21 = arith.constant 0 : index
    %c8 = arith.constant 8 : index
    %c0_22 = arith.constant 0 : index
    %32 = vector.load %arg4[%c0_21, %c8, %c0_22] : memref<1x32x8xf32, #tpu.memory_space<vmem>>, vector<1x8x8xf32>
    %33 = vector.shape_cast %32 : vector<1x8x8xf32> to vector<8x8xf32>
    %34 = vector.extract_strided_slice %8 {offsets = [8, 0], sizes = [8, 128], strides = [1, 1]} : vector<32x128xf32> to vector<8x128xf32>
    %35 = vector.extract_strided_slice %14 {offsets = [8, 0], sizes = [8, 128], strides = [1, 1]} : vector<32x128xf32> to vector<8x128xf32>
    %cst_23 = arith.constant dense<0.000000e+00> : vector<8x8xf32>
    %36 = tpu.matmul %34, %35, %cst_23 {dimension_numbers = #tpu.dot_dimension_numbers<[1], [1], [0], [0], [0, 0, 1, 0], [], []>, precision = #tpu.contract_precision<fp32>} : vector<8x128xf32>, vector<8x128xf32>, vector<8x8xf32> -> vector<8x8xf32>
    %37 = arith.addf %33, %36 : vector<8x8xf32>
    %c0_24 = arith.constant 0 : index
    %c8_25 = arith.constant 8 : index
    %c0_26 = arith.constant 0 : index
    %38 = vector.load %arg4[%c0_24, %c8_25, %c0_26] : memref<1x32x8xf32, #tpu.memory_space<vmem>>, vector<1x8x8xf32>
    %39 = vector.shape_cast %38 : vector<1x8x8xf32> to vector<8x8xf32>
    %40 = vector.shape_cast %37 : vector<8x8xf32> to vector<1x8x8xf32>
    tpu.vector_store %arg4[%c0_24, %c8_25, %c0_26], %40 {strides = array<i32>} : memref<1x32x8xf32, #tpu.memory_space<vmem>>, vector<1x8x8xf32>,
    %c0_27 = arith.constant 0 : index
    %c16 = arith.constant 16 : index
    %c0_28 = arith.constant 0 : index
    %41 = vector.load %arg4[%c0_27, %c16, %c0_28] : memref<1x32x8xf32, #tpu.memory_space<vmem>>, vector<1x8x8xf32>
    %42 = vector.shape_cast %41 : vector<1x8x8xf32> to vector<8x8xf32>
    %43 = vector.extract_strided_slice %8 {offsets = [16, 0], sizes = [8, 128], strides = [1, 1]} : vector<32x128xf32> to vector<8x128xf32>
    %44 = vector.extract_strided_slice %14 {offsets = [16, 0], sizes = [8, 128], strides = [1, 1]} : vector<32x128xf32> to vector<8x128xf32>
    %cst_29 = arith.constant dense<0.000000e+00> : vector<8x8xf32>
    %45 = tpu.matmul %43, %44, %cst_29 {dimension_numbers = #tpu.dot_dimension_numbers<[1], [1], [0], [0], [0, 0, 1, 0], [], []>, precision = #tpu.contract_precision<fp32>} : vector<8x128xf32>, vector<8x128xf32>, vector<8x8xf32> -> vector<8x8xf32>
    %46 = arith.addf %42, %45 : vector<8x8xf32>
    %c0_30 = arith.constant 0 : index
    %c16_31 = arith.constant 16 : index
    %c0_32 = arith.constant 0 : index
    %47 = vector.load %arg4[%c0_30, %c16_31, %c0_32] : memref<1x32x8xf32, #tpu.memory_space<vmem>>, vector<1x8x8xf32>
    %48 = vector.shape_cast %47 : vector<1x8x8xf32> to vector<8x8xf32>
    %49 = vector.shape_cast %46 : vector<8x8xf32> to vector<1x8x8xf32>
    tpu.vector_store %arg4[%c0_30, %c16_31, %c0_32], %49 {strides = array<i32>} : memref<1x32x8xf32, #tpu.memory_space<vmem>>, vector<1x8x8xf32>,
    %c0_33 = arith.constant 0 : index
    %c24 = arith.constant 24 : index
    %c0_34 = arith.constant 0 : index
    %50 = vector.load %arg4[%c0_33, %c24, %c0_34] : memref<1x32x8xf32, #tpu.memory_space<vmem>>, vector<1x8x8xf32>
    %51 = vector.shape_cast %50 : vector<1x8x8xf32> to vector<8x8xf32>
    %52 = vector.extract_strided_slice %8 {offsets = [24, 0], sizes = [8, 128], strides = [1, 1]} : vector<32x128xf32> to vector<8x128xf32>
    %53 = vector.extract_strided_slice %14 {offsets = [24, 0], sizes = [8, 128], strides = [1, 1]} : vector<32x128xf32> to vector<8x128xf32>
    %cst_35 = arith.constant dense<0.000000e+00> : vector<8x8xf32>
    %54 = tpu.matmul %52, %53, %cst_35 {dimension_numbers = #tpu.dot_dimension_numbers<[1], [1], [0], [0], [0, 0, 1, 0], [], []>, precision = #tpu.contract_precision<fp32>} : vector<8x128xf32>, vector<8x128xf32>, vector<8x8xf32> -> vector<8x8xf32>
    %55 = arith.addf %51, %54 : vector<8x8xf32>
    %c0_36 = arith.constant 0 : index
    %c24_37 = arith.constant 24 : index
    %c0_38 = arith.constant 0 : index
    %56 = vector.load %arg4[%c0_36, %c24_37, %c0_38] : memref<1x32x8xf32, #tpu.memory_space<vmem>>, vector<1x8x8xf32>
    %57 = vector.shape_cast %56 : vector<1x8x8xf32> to vector<8x8xf32>
    %58 = vector.shape_cast %55 : vector<8x8xf32> to vector<1x8x8xf32>
    tpu.vector_store %arg4[%c0_36, %c24_37, %c0_38], %58 {strides = array<i32>} : memref<1x32x8xf32, #tpu.memory_space<vmem>>, vector<1x8x8xf32>,
    return
  }
  func.func @transform_0(%arg0: i32, %arg1: i32) -> (i32, i32, i32) {
    %c0_i32 = arith.constant 0 : i32
    %c0_i32_0 = arith.constant 0 : i32
    return %arg0, %c0_i32, %arg1 : i32, i32, i32
  }
  func.func @transform_1(%arg0: i32, %arg1: i32) -> (i32, i32) {
    %c0_i32 = arith.constant 0 : i32
    %c0_i32_0 = arith.constant 0 : i32
    %c0_i32_1 = arith.constant 0 : i32
    return %c0_i32, %c0_i32_0 : i32, i32
  }
  func.func @transform_2(%arg0: i32, %arg1: i32) -> (i32, i32, i32) {
    %c0_i32 = arith.constant 0 : i32
    %c0_i32_0 = arith.constant 0 : i32
    %c0_i32_1 = arith.constant 0 : i32
    return %arg0, %c0_i32, %c0_i32_0 : i32, i32, i32
  }
  func.func @transform_3(%arg0: i32, %arg1: i32) -> (i32, i32, i32) {
    %c0_i32 = arith.constant 0 : i32
    %c0_i32_0 = arith.constant 0 : i32
    %c0_i32_1 = arith.constant 0 : i32
    return %arg0, %c0_i32, %c0_i32_0 : i32, i32, i32
  }
}

module attributes {stable_mosaic.version = 11 : i64} {
  func.func @_kv_phase_kernel(%arg0: i32, %arg1: i32, %arg2: memref<1x32x128xf32, #tpu.memory_space<vmem>>, %arg3: memref<64x32xf32, #tpu.memory_space<vmem>>, %arg4: memref<1x32x8xf32, #tpu.memory_space<vmem>>, %arg5: memref<1x32x1xf32, #tpu.memory_space<vmem>>) attributes {dimension_semantics = [#tpu.dimension_semantics<parallel>, #tpu.dimension_semantics<arbitrary>], iteration_bounds = array<i64: 2, 2>, scalar_prefetch = 0 : i64, scratch_operands = 0 : i64, tpu.core_type = #tpu.core_type<tc>, window_params = [{transform_indices = @transform_0, window_bounds = array<i64: 1, 32, 128>}, {pipeline_mode = #tpu.pipeline_mode<synchronous>, transform_indices = @transform_1, window_bounds = array<i64: 64, 32>}, {transform_indices = @transform_2, window_bounds = array<i64: 1, 32, 8>}, {transform_indices = @transform_3, window_bounds = array<i64: 1, 32, 1>}]} {
    %c0_i32 = arith.constant 0 : i32
    %0 = arith.cmpi eq, %arg1, %c0_i32 : i32
    %1 = arith.extui %0 : i1 to i32
    %c0_i32_0 = arith.constant 0 : i32
    %2 = arith.cmpi ne, %1, %c0_i32_0 : i32
    scf.if %2 {
      %cst_39 = arith.constant 0.000000e+00 : f32
      %59 = vector.broadcast %cst_39 : f32 to vector<1x32x8xf32>
      %c0_40 = arith.constant 0 : index
      %c0_41 = arith.constant 0 : index
      %c0_42 = arith.constant 0 : index
      %60 = vector.load %arg4[%c0_40, %c0_41, %c0_42] : memref<1x32x8xf32, #tpu.memory_space<vmem>>, vector<1x32x8xf32>
      tpu.vector_store %arg4[%c0_40, %c0_41, %c0_42], %59 {strides = array<i32>} : memref<1x32x8xf32, #tpu.memory_space<vmem>>, vector<1x32x8xf32>,
      %cst_43 = arith.constant 0.000000e+00 : f32
      %61 = vector.broadcast %cst_43 : f32 to vector<1x32x1xf32>
      %c0_44 = arith.constant 0 : index
      %c0_45 = arith.constant 0 : index
      %c0_46 = arith.constant 0 : index
      %62 = vector.load %arg5[%c0_44, %c0_45, %c0_46] : memref<1x32x1xf32, #tpu.memory_space<vmem>>, vector<1x32x1xf32>
      tpu.vector_store %arg5[%c0_44, %c0_45, %c0_46], %61 {strides = array<i32>} : memref<1x32x1xf32, #tpu.memory_space<vmem>>, vector<1x32x1xf32>,
    } else {
    }
    %c0 = arith.constant 0 : index
    %c0_1 = arith.constant 0 : index
    %c0_2 = arith.constant 0 : index
    %3 = vector.load %arg2[%c0, %c0_1, %c0_2] : memref<1x32x128xf32, #tpu.memory_space<vmem>>, vector<1x32x128xf32>
    %4 = vector.shape_cast %3 : vector<1x32x128xf32> to vector<32x128xf32>
    %c0_3 = arith.constant 0 : index
    %c0_4 = arith.constant 0 : index
    %5 = vector.load %arg3[%c0_3, %c0_4] : memref<64x32xf32, #tpu.memory_space<vmem>>, vector<64x32xf32>
    %cst = arith.constant dense<0.000000e+00> : vector<64x128xf32>
    %6 = tpu.matmul %5, %4, %cst {dimension_numbers = #tpu.dot_dimension_numbers<[1], [0], [0], [1], [0, 0, 1, 1], [], []>, precision = #tpu.contract_precision<fp32>} : vector<64x32xf32>, vector<32x128xf32>, vector<64x128xf32> -> vector<64x128xf32>
    %7 = vector.extract_strided_slice %6 {offsets = [0, 0], sizes = [32, 128], strides = [1, 1]} : vector<64x128xf32> to vector<32x128xf32>
    %8 = vector.extract_strided_slice %6 {offsets = [32, 0], sizes = [32, 128], strides = [1, 1]} : vector<64x128xf32> to vector<32x128xf32>
    %cst_5 = arith.constant 0.000000e+00 : f32
    %9 = vector.broadcast %cst_5 : f32 to vector<32x128xf32>
    %10 = arith.minimumf %7, %9 : vector<32x128xf32>
    %11 = math.exp %10 : vector<32x128xf32>
    %cst_6 = arith.constant 0.000000e+00 : f32
    %12 = vector.broadcast %cst_6 : f32 to vector<32x128xf32>
    %13 = arith.maximumf %7, %12 : vector<32x128xf32>
    %14 = arith.addf %11, %13 : vector<32x128xf32>
    %c0_7 = arith.constant 0 : index
    %c0_8 = arith.constant 0 : index
    %c0_9 = arith.constant 0 : index
    %15 = vector.load %arg5[%c0_7, %c0_8, %c0_9] : memref<1x32x1xf32, #tpu.memory_space<vmem>>, vector<1x32x1xf32>
    %16 = vector.shape_cast %15 : vector<1x32x1xf32> to vector<32x1xf32>
    %cst_10 = arith.constant dense<0.000000e+00> : vector<32xf32>
    %17 = vector.multi_reduction <add>, %14, %cst_10 [1] : vector<32x128xf32> to vector<32xf32>
    %18 = vector.shape_cast %17 : vector<32xf32> to vector<32x1xf32>
    %19 = arith.addf %16, %18 : vector<32x1xf32>
    %c0_11 = arith.constant 0 : index
    %c0_12 = arith.constant 0 : index
    %c0_13 = arith.constant 0 : index
    %20 = vector.load %arg5[%c0_11, %c0_12, %c0_13] : memref<1x32x1xf32, #tpu.memory_space<vmem>>, vector<1x32x1xf32>
    %21 = vector.shape_cast %20 : vector<1x32x1xf32> to vector<32x1xf32>
    %22 = vector.shape_cast %19 : vector<32x1xf32> to vector<1x32x1xf32>
    tpu.vector_store %arg5[%c0_11, %c0_12, %c0_13], %22 {strides = array<i32>} : memref<1x32x1xf32, #tpu.memory_space<vmem>>, vector<1x32x1xf32>,
    %c0_14 = arith.constant 0 : index
    %c0_15 = arith.constant 0 : index
    %c0_16 = arith.constant 0 : index
    %23 = vector.load %arg4[%c0_14, %c0_15, %c0_16] : memref<1x32x8xf32, #tpu.memory_space<vmem>>, vector<1x8x8xf32>
    %24 = vector.shape_cast %23 : vector<1x8x8xf32> to vector<8x8xf32>
    %25 = vector.extract_strided_slice %8 {offsets = [0, 0], sizes = [8, 128], strides = [1, 1]} : vector<32x128xf32> to vector<8x128xf32>
    %26 = vector.extract_strided_slice %14 {offsets = [0, 0], sizes = [8, 128], strides = [1, 1]} : vector<32x128xf32> to vector<8x128xf32>
    %cst_17 = arith.constant dense<0.000000e+00> : vector<8x8xf32>
    %27 = tpu.matmul %25, %26, %cst_17 {dimension_numbers = #tpu.dot_dimension_numbers<[1], [1], [0], [0], [0, 0, 1, 0], [], []>, precision = #tpu.contract_precision<fp32>} : vector<8x128xf32>, vector<8x128xf32>, vector<8x8xf32> -> vector<8x8xf32>
    %28 = arith.addf %24, %27 : vector<8x8xf32>
    %c0_18 = arith.constant 0 : index
    %c0_19 = arith.constant 0 : index
    %c0_20 = arith.constant 0 : index
    %29 = vector.load %arg4[%c0_18, %c0_19, %c0_20] : memref<1x32x8xf32, #tpu.memory_space<vmem>>, vector<1x8x8xf32>
    %30 = vector.shape_cast %29 : vector<1x8x8xf32> to vector<8x8xf32>
    %31 = vector.shape_cast %28 : vector<8x8xf32> to vector<1x8x8xf32>
    tpu.vector_store %arg4[%c0_18, %c0_19, %c0_20], %31 {strides = array<i32>} : memref<1x32x8xf32, #tpu.memory_space<vmem>>, vector<1x8x8xf32>,
    %c0_21 = arith.constant 0 : index
    %c8 = arith.constant 8 : index
    %c0_22 = arith.constant 0 : index
    %32 = vector.load %arg4[%c0_21, %c8, %c0_22] : memref<1x32x8xf32, #tpu.memory_space<vmem>>, vector<1x8x8xf32>
    %33 = vector.shape_cast %32 : vector<1x8x8xf32> to vector<8x8xf32>
    %34 = vector.extract_strided_slice %8 {offsets = [8, 0], sizes = [8, 128], strides = [1, 1]} : vector<32x128xf32> to vector<8x128xf32>
    %35 = vector.extract_strided_slice %14 {offsets = [8, 0], sizes = [8, 128], strides = [1, 1]} : vector<32x128xf32> to vector<8x128xf32>
    %cst_23 = arith.constant dense<0.000000e+00> : vector<8x8xf32>
    %36 = tpu.matmul %34, %35, %cst_23 {dimension_numbers = #tpu.dot_dimension_numbers<[1], [1], [0], [0], [0, 0, 1, 0], [], []>, precision = #tpu.contract_precision<fp32>} : vector<8x128xf32>, vector<8x128xf32>, vector<8x8xf32> -> vector<8x8xf32>
    %37 = arith.addf %33, %36 : vector<8x8xf32>
    %c0_24 = arith.constant 0 : index
    %c8_25 = arith.constant 8 : index
    %c0_26 = arith.constant 0 : index
    %38 = vector.load %arg4[%c0_24, %c8_25, %c0_26] : memref<1x32x8xf32, #tpu.memory_space<vmem>>, vector<1x8x8xf32>
    %39 = vector.shape_cast %38 : vector<1x8x8xf32> to vector<8x8xf32>
    %40 = vector.shape_cast %37 : vector<8x8xf32> to vector<1x8x8xf32>
    tpu.vector_store %arg4[%c0_24, %c8_25, %c0_26], %40 {strides = array<i32>} : memref<1x32x8xf32, #tpu.memory_space<vmem>>, vector<1x8x8xf32>,
    %c0_27 = arith.constant 0 : index
    %c16 = arith.constant 16 : index
    %c0_28 = arith.constant 0 : index
    %41 = vector.load %arg4[%c0_27, %c16, %c0_28] : memref<1x32x8xf32, #tpu.memory_space<vmem>>, vector<1x8x8xf32>
    %42 = vector.shape_cast %41 : vector<1x8x8xf32> to vector<8x8xf32>
    %43 = vector.extract_strided_slice %8 {offsets = [16, 0], sizes = [8, 128], strides = [1, 1]} : vector<32x128xf32> to vector<8x128xf32>
    %44 = vector.extract_strided_slice %14 {offsets = [16, 0], sizes = [8, 128], strides = [1, 1]} : vector<32x128xf32> to vector<8x128xf32>
    %cst_29 = arith.constant dense<0.000000e+00> : vector<8x8xf32>
    %45 = tpu.matmul %43, %44, %cst_29 {dimension_numbers = #tpu.dot_dimension_numbers<[1], [1], [0], [0], [0, 0, 1, 0], [], []>, precision = #tpu.contract_precision<fp32>} : vector<8x128xf32>, vector<8x128xf32>, vector<8x8xf32> -> vector<8x8xf32>
    %46 = arith.addf %42, %45 : vector<8x8xf32>
    %c0_30 = arith.constant 0 : index
    %c16_31 = arith.constant 16 : index
    %c0_32 = arith.constant 0 : index
    %47 = vector.load %arg4[%c0_30, %c16_31, %c0_32] : memref<1x32x8xf32, #tpu.memory_space<vmem>>, vector<1x8x8xf32>
    %48 = vector.shape_cast %47 : vector<1x8x8xf32> to vector<8x8xf32>
    %49 = vector.shape_cast %46 : vector<8x8xf32> to vector<1x8x8xf32>
    tpu.vector_store %arg4[%c0_30, %c16_31, %c0_32], %49 {strides = array<i32>} : memref<1x32x8xf32, #tpu.memory_space<vmem>>, vector<1x8x8xf32>,
    %c0_33 = arith.constant 0 : index
    %c24 = arith.constant 24 : index
    %c0_34 = arith.constant 0 : index
    %50 = vector.load %arg4[%c0_33, %c24, %c0_34] : memref<1x32x8xf32, #tpu.memory_space<vmem>>, vector<1x8x8xf32>
    %51 = vector.shape_cast %50 : vector<1x8x8xf32> to vector<8x8xf32>
    %52 = vector.extract_strided_slice %8 {offsets = [24, 0], sizes = [8, 128], strides = [1, 1]} : vector<32x128xf32> to vector<8x128xf32>
    %53 = vector.extract_strided_slice %14 {offsets = [24, 0], sizes = [8, 128], strides = [1, 1]} : vector<32x128xf32> to vector<8x128xf32>
    %cst_35 = arith.constant dense<0.000000e+00> : vector<8x8xf32>
    %54 = tpu.matmul %52, %53, %cst_35 {dimension_numbers = #tpu.dot_dimension_numbers<[1], [1], [0], [0], [0, 0, 1, 0], [], []>, precision = #tpu.contract_precision<fp32>} : vector<8x128xf32>, vector<8x128xf32>, vector<8x8xf32> -> vector<8x8xf32>
    %55 = arith.addf %51, %54 : vector<8x8xf32>
    %c0_36 = arith.constant 0 : index
    %c24_37 = arith.constant 24 : index
    %c0_38 = arith.constant 0 : index
    %56 = vector.load %arg4[%c0_36, %c24_37, %c0_38] : memref<1x32x8xf32, #tpu.memory_space<vmem>>, vector<1x8x8xf32>
    %57 = vector.shape_cast %56 : vector<1x8x8xf32> to vector<8x8xf32>
    %58 = vector.shape_cast %55 : vector<8x8xf32> to vector<1x8x8xf32>
    tpu.vector_store %arg4[%c0_36, %c24_37, %c0_38], %58 {strides = array<i32>} : memref<1x32x8xf32, #tpu.memory_space<vmem>>, vector<1x8x8xf32>,
    return
  }
  func.func @transform_0(%arg0: i32, %arg1: i32) -> (i32, i32, i32) {
    %c0_i32 = arith.constant 0 : i32
    %c0_i32_0 = arith.constant 0 : i32
    return %arg0, %c0_i32, %arg1 : i32, i32, i32
  }
  func.func @transform_1(%arg0: i32, %arg1: i32) -> (i32, i32) {
    %c0_i32 = arith.constant 0 : i32
    %c0_i32_0 = arith.constant 0 : i32
    %c0_i32_1 = arith.constant 0 : i32
    return %c0_i32, %c0_i32_0 : i32, i32
  }
  func.func @transform_2(%arg0: i32, %arg1: i32) -> (i32, i32, i32) {
    %c0_i32 = arith.constant 0 : i32
    %c0_i32_0 = arith.constant 0 : i32
    %c0_i32_1 = arith.constant 0 : i32
    return %arg0, %c0_i32, %c0_i32_0 : i32, i32, i32
  }
  func.func @transform_3(%arg0: i32, %arg1: i32) -> (i32, i32, i32) {
    %c0_i32 = arith.constant 0 : i32
    %c0_i32_0 = arith.constant 0 : i32
    %c0_i32_1 = arith.constant 0 : i32
    return %arg0, %c0_i32, %c0_i32_0 : i32, i32, i32
  }
}

</mosaic_0001>

<llo_original>
// kernel: tpu_custom_call.1
$region0: #{tpu_custom_call.1}
  #allocation0 [shape = 'u32[]', space=smem, size = 0x4, offset = 0x4, fixed_abs, tag = 'smem constant byte address 0x4 - core index']
  #allocation1 [shape = 'u32[144,128]{1,0:T(1,128)}', space=vmem, size = 0x12000, scoped, tag = 'internal scratch']
  %s0 = inlined_call_operand.hbm [shape: f32[2,32,256], index: 0, kind: input, shape index: {}]
  %s1 = inlined_call_operand.vmem [shape: f32[64,32], index: 1, kind: input, shape index: {}]
  %s2 = inlined_call_operand.vmem [shape: f32[2,32,8], index: 2, kind: output, shape index: {0}]
  %s3 = inlined_call_operand.vmem [shape: f32[2,32,1], index: 3, kind: output, shape index: {1}]
  %4 = xla_tuple %s2, %s3
  %s5 = sld [smem:[#allocation0]]
  $region57: #{tpu_custom_call.1} parent=0
    _
  %s7 = ssub.s32 1, %s5
  %s8 = scalar_select 0, %s7, %s5
  $region1: #{tpu_custom_call.1} parent=0
    #allocation2 [shape = 'u8[32768]{0}', space=vmem, size = 0x8000, scoped, tag = 'input window, operand 0']
    #allocation3 [shape = 's32[2]{0}', space=sflag, size = 0x8, scoped, tag = 'scoped memory for tpu_custom_call.1']
    %9 = vsyncpa [#allocation3], 0
    %s10 = scalar_lea.sflag [#allocation3], 1
    %11 = vsyncpa %s10, 0
    loop: start=0, step=1, limit=6
    $region2: #{tpu_custom_call.1} parent=1 // loop_pre_header
      _
    $region3: #{tpu_custom_call.1} parent=1 // loop_header
      %s13 = sphi 0, %s17
      %p14 = scmp.ge.s32.totalorder %s13, 6
      %s20 = sphi 0, %s32
      %s21 = sphi 0, %s28
      %s22 = sphi 0, %s20
      %s23 = sphi 0, %s21
      %s24 = sphi 0, %s22
      %s25 = sphi 0, %s23
      %s37 = sphi 0, %s39
      %s40 = sphi 0, %s37
      %s41 = sphi 0, %s40
      %s57 = sphi 0, %s41
      %s61 = sphi 0, %s61
      %s63 = sphi 0, %s61
      %s64 = sphi 0, %s63
      %s78 = sphi 0, %s64
      %s84 = sphi 0, %s86
      %s87 = sphi 0, %s84
      %s88 = sphi 0, %s87
      %s104 = sphi 0, %s88
      %s110 = sphi 0, %s112
      %s113 = sphi 0, %s110
      %s114 = sphi 0, %s113
      %s130 = sphi 0, %s114
    $region4: #{tpu_custom_call.1} parent=1 // loop_header_branch
      %16 = sbr.rel (%p14) target = $region8
    $region5: #{tpu_custom_call.1} parent=1 // loop_body
      %s18 = ssub.s32 %s13, 1
      %s19 = ssub.s32 %s13, 2
      %s26 = sadd.s32 1, %s21
      %p27 = scmp.ge.s32.totalorder %s26, 2
      %s28 = scalar_select %p27, 0, %s26
      %s29 = sadd.s32 1, %s20
      %s30 = scalar_select %p27, %s29, %s20
      %p31 = scmp.ge.s32.totalorder %s30, 2
      %s32 = scalar_select %p31, 0, %s30
      %s33 = ssub.s32 %s20, %s32
      %s34 = ssub.s32 %s21, %s28
      %s35 = sor.u32 %s33, %s34
      %p36 = scmp.eq.s32.totalorder %s35, 0
      %s38 = sadd.s32 %s37, 1
      %s39 = scalar_select %p36, %s37, %s38
      %p42 = pneg %p36
      %p43 = scmp.eq.s32.totalorder %s13, 3
      %p44 = por %p42, %p43
      %p45 = scmp.ne.s32.totalorder %s37, %s40
      %p46 = scmp.eq.s32.totalorder %s13, 0
      %p47 = por %p45, %p46
      %p48 = scmp.ne.s32.totalorder %s37, %s40
      %p49 = scmp.eq.s32.totalorder %s18, 3
      %p50 = por %p48, %p49
      %p51 = scmp.ne.s32.totalorder %s40, %s41
      %p52 = scmp.eq.s32.totalorder %s18, 0
      %p53 = por %p51, %p52
      %p54 = scmp.ne.s32.totalorder %s40, %s41
      %p55 = scmp.eq.s32.totalorder %s19, 3
      %p56 = por %p54, %p55
      %p58 = scmp.ne.s32.totalorder %s41, %s57
      %p59 = scmp.eq.s32.totalorder %s19, 0
      %p60 = por %p58, %p59
      %s62 = sadd.s32 %s61, 1
      %p65 = scmp.eq.s32.totalorder %s13, 3
      %p66 = scmp.ne.s32.totalorder %s61, %s63
      %p67 = scmp.eq.s32.totalorder %s13, 0
      %p68 = por %p66, %p67
      %p69 = scmp.ne.s32.totalorder %s61, %s63
      %p70 = scmp.eq.s32.totalorder %s18, 3
      %p71 = por %p69, %p70
      %p72 = scmp.ne.s32.totalorder %s63, %s64
      %p73 = scmp.eq.s32.totalorder %s18, 0
      %p74 = por %p72, %p73
      %p75 = scmp.ne.s32.totalorder %s63, %s64
      %p76 = scmp.eq.s32.totalorder %s19, 3
      %p77 = por %p75, %p76
      %p79 = scmp.ne.s32.totalorder %s64, %s78
      %p80 = scmp.eq.s32.totalorder %s19, 0
      %p81 = por %p79, %p80
      %s82 = ssub.s32 %s20, %s32
      %p83 = scmp.eq.s32.totalorder %s82, 0
      %s85 = sadd.s32 %s84, 1
      %s86 = scalar_select %p83, %s84, %s85
      %p89 = pneg %p83
      %p90 = scmp.eq.s32.totalorder %s13, 3
      %p91 = por %p89, %p90
      %p92 = scmp.ne.s32.totalorder %s84, %s87
      %p93 = scmp.eq.s32.totalorder %s13, 0
      %p94 = por %p92, %p93
      %p95 = scmp.ne.s32.totalorder %s84, %s87
      %p96 = scmp.eq.s32.totalorder %s18, 3
      %p97 = por %p95, %p96
      %p98 = scmp.ne.s32.totalorder %s87, %s88
      %p99 = scmp.eq.s32.totalorder %s18, 0
      %p100 = por %p98, %p99
      %p101 = scmp.ne.s32.totalorder %s87, %s88
      %p102 = scmp.eq.s32.totalorder %s19, 3
      %p103 = por %p101, %p102
      %p105 = scmp.ne.s32.totalorder %s88, %s104
      %p106 = scmp.eq.s32.totalorder %s19, 0
      %p107 = por %p105, %p106
      %s108 = ssub.s32 %s20, %s32
      %p109 = scmp.eq.s32.totalorder %s108, 0
      %s111 = sadd.s32 %s110, 1
      %s112 = scalar_select %p109, %s110, %s111
      %p115 = pneg %p109
      %p116 = scmp.eq.s32.totalorder %s13, 3
      %p117 = por %p115, %p116
      %p118 = scmp.ne.s32.totalorder %s110, %s113
      %p119 = scmp.eq.s32.totalorder %s13, 0
      %p120 = por %p118, %p119
      %p121 = scmp.ne.s32.totalorder %s110, %s113
      %p122 = scmp.eq.s32.totalorder %s18, 3
      %p123 = por %p121, %p122
      %p124 = scmp.ne.s32.totalorder %s113, %s114
      %p125 = scmp.eq.s32.totalorder %s18, 0
      %p126 = por %p124, %p125
      %p127 = scmp.ne.s32.totalorder %s113, %s114
      %p128 = scmp.eq.s32.totalorder %s19, 3
      %p129 = por %p127, %p128
      %p131 = scmp.ne.s32.totalorder %s114, %s130
      %p132 = scmp.eq.s32.totalorder %s19, 0
      %p133 = por %p131, %p132
      %p134 = scmp.le.s32.totalorder 1, %s13
      %p135 = scmp.lt.s32.totalorder %s13, 5
      %p136 = pnand %p134, %p135
      %p137 = pneg %p136
      // Predicated region
      $region9: #{tpu_custom_call.1} parent=5 // pred_check
        _
      $region10: #{tpu_custom_call.1} parent=5 // pred_check_branch
        %139 = sbr.rel (%p136) target = $region12
      $region11: #{tpu_custom_call.1} parent=5 // pred_region
        %s140 = ssub.s32 %s13, 1
        // Predicated region
        $region13: #{tpu_custom_call.1} parent=11 // pred_check
          %p141 = pneg %p74
        $region14: #{tpu_custom_call.1} parent=11 // pred_check_branch
          %143 = sbr.rel (%p141) target = $region16
        $region15: #{tpu_custom_call.1} parent=11 // pred_region
          _
        $region16: #{tpu_custom_call.1} parent=11 // pred_fallthru
          _
      $region12: #{tpu_custom_call.1} parent=5 // pred_fallthru
        _
      %p144 = scmp.lt.s32.totalorder %s13, 4
      // Predicated region
      $region17: #{tpu_custom_call.1} parent=5 // pred_check
        %p145 = pneg %p144
      $region18: #{tpu_custom_call.1} parent=5 // pred_check_branch
        %147 = sbr.rel (%p145) target = $region20
      $region19: #{tpu_custom_call.1} parent=5 // pred_region
        // Predicated region
        $region21: #{tpu_custom_call.1} parent=19 // pred_check
          %p148 = pneg %p47
        $region22: #{tpu_custom_call.1} parent=19 // pred_check_branch
          %150 = sbr.rel (%p148) target = $region24
        $region23: #{tpu_custom_call.1} parent=19 // pred_region
          %s151 = sand.u32 %s37, 1
          %s152 = scalar_lea.sflag [#allocation3], %s151
          %s153 = sand.u32 %s37, 1
          %s154 = smul.addr %s153, 32
          %s155 = scalar_lea.vmem [#allocation2], %s154
          %s157 = ssub.s32 512, 512
          %158 = vsyncadd %s152, %s157
          %s159 = smul.addr %s20, 8
          %s160 = sadd.s32 %s21, %s159
          %s161 = smul.addr %s160, 128
          %s162 = scalar_lea.hbm %s0, %s161
          %s163 = sshll.u32 %s155, 4
          %s164 = int_to_ptr.vmem [resolvable:$true] %s163
          %169 = dma.hbm_to_vmem [thread:$0]  %s162, 512, %s164, %s152, 256, 128, 8
        $region24: #{tpu_custom_call.1} parent=19 // pred_fallthru
          _
      $region20: #{tpu_custom_call.1} parent=5 // pred_fallthru
        _
      %p170 = scmp.le.s32.totalorder 1, %s13
      %p171 = scmp.lt.s32.totalorder %s13, 5
      %p172 = pnand %p170, %p171
      %p173 = pneg %p172
      // Predicated region
      $region25: #{tpu_custom_call.1} parent=5 // pred_check
        _
      $region26: #{tpu_custom_call.1} parent=5 // pred_check_branch
        %175 = sbr.rel (%p172) target = $region28
      $region27: #{tpu_custom_call.1} parent=5 // pred_region
        %s176 = ssub.s32 %s13, 1
        %s177 = sand.u32 %s40, 1
        %s178 = scalar_lea.sflag [#allocation3], %s177
        %s179 = sand.u32 %s40, 1
        %s180 = smul.addr %s179, 32
        %s181 = scalar_lea.vmem [#allocation2], %s180
        // Predicated region
        $region29: #{tpu_custom_call.1} parent=27 // pred_check
          %p182 = pneg %p53
        $region30: #{tpu_custom_call.1} parent=27 // pred_check_branch
          %184 = sbr.rel (%p182) target = $region32
        $region31: #{tpu_custom_call.1} parent=27 // pred_region
          %185 = dma.done %s178, 512
        $region32: #{tpu_custom_call.1} parent=27 // pred_fallthru
          _
        %s186 = sand.u32 %s40, 1
        %s187 = scalar_lea.sflag [#allocation3], %s186
        %s188 = sand.u32 %s40, 1
        %s189 = smul.addr %s188, 32
        %s190 = scalar_lea.vmem [#allocation2], %s189
        %p191 = pneg %p53
        %p192 = pneg %p50
        %p193 = pneg %p74
        %p194 = pneg %p71
        %p195 = pneg %p100
        %p196 = pneg %p97
        %p197 = scmp.lt.s32.totalorder %s22, 1
        %s198 = scalar_select %p197, %s22, 1
        %s199 = smul.addr %s198, 4
        %s200 = smul.addr %s199, 8
        %s201 = scalar_lea.vmem %s2, %s200
        %p202 = pneg %p126
        %p203 = pneg %p123
        %p204 = scmp.lt.s32.totalorder %s22, 1
        %s205 = scalar_select %p204, %s22, 1
        %s206 = smul.addr %s205, 4
        %s207 = smul.addr %s206, 8
        %s208 = scalar_lea.vmem %s3, %s207
        %p209 = scmp.lt.s32.totalorder %s22, 1
        %s210 = scalar_select %p209, %s22, 1
        %s211 = smul.addr %s210, 4
        %s212 = smul.addr %s211, 8
        %s213 = scalar_lea.vmem %s2, %s212
        %p214 = scmp.lt.s32.totalorder %s22, 1
        %s215 = scalar_select %p214, %s22, 1
        %s216 = smul.addr %s215, 4
        %s217 = smul.addr %s216, 8
        %s218 = scalar_lea.vmem %s3, %s217
        %p219 = scmp.eq.s32.totalorder %s23, 0
        // Predicated region
        $region33: #{tpu_custom_call.1} parent=27 // pred_check
          %p220 = pneg %p219
        $region34: #{tpu_custom_call.1} parent=27 // pred_check_branch
          %222 = sbr.rel (%p220) target = $region36
        $region35: #{tpu_custom_call.1} parent=27 // pred_region
          %vm223 = vcmask 64512
          %224 = vst.msk [vmem:[%s213] sm:$0xff] %vm223, 0.0
          %225 = vst.msk [vmem:[%s213 + $0x8] sm:$0xff] %vm223, 0.0
          %226 = vst.msk [vmem:[%s213 + $0x10] sm:$0xff] %vm223, 0.0
          %227 = vst.msk [vmem:[%s213 + $0x18] sm:$0xff] %vm223, 0.0
          %vm228 = vcmask 7168
          %229 = vst.msk [vmem:[%s218] sm:$0xff] %vm228, 0.0
          %230 = vst.msk [vmem:[%s218 + $0x8] sm:$0xff] %vm228, 0.0
          %231 = vst.msk [vmem:[%s218 + $0x10] sm:$0xff] %vm228, 0.0
          %232 = vst.msk [vmem:[%s218 + $0x18] sm:$0xff] %vm228, 0.0
        $region36: #{tpu_custom_call.1} parent=27 // pred_fallthru
          _
        %v233 = vld [vmem:[%s181] sm:$0xff]
        %v234 = vld [vmem:[%s181 + $0x8] sm:$0xff]
        %v235 = vld [vmem:[%s181 + $0x10] sm:$0xff]
        %v236 = vld [vmem:[%s181 + $0x18] sm:$0xff]
        %v237 = vld [vmem:[%s1] sm:$0xff]
        %v238 = vld [vmem:[%s1 + $0x8] sm:$0xff]
        %v239 = vld [vmem:[%s1 + $0x10] sm:$0xff]
        %v240 = vld [vmem:[%s1 + $0x18] sm:$0xff]
        %v241 = vld [vmem:[%s1 + $0x20] sm:$0xff]
        %v242 = vld [vmem:[%s1 + $0x28] sm:$0xff]
        %v243 = vld [vmem:[%s1 + $0x30] sm:$0xff]
        %v244 = vld [vmem:[%s1 + $0x38] sm:$0xff]
        %vm245 = vcmask 261120
        %v247 = vsel %vm245, %v237, 0
        %v250 = vsel %vm245, %v238, 0
        %v253 = vsel %vm245, %v239, 0
        %v256 = vsel %vm245, %v240, 0
        %v259 = vsel %vm245, %v241, 0
        %v262 = vsel %vm245, %v242, 0
        %v265 = vsel %vm245, %v243, 0
        %v268 = vsel %vm245, %v244, 0
        %270 = vmatprep.subr.mxu0 0.0
        %v271 = vand.u32 %v233, 4294901760
        %272 = vmatpush1.msra.mxu0 %v271
        %273 = vmatprep.subr.mxu0 0.0
        %v274 = vand.u32 %v234, 4294901760
        %275 = vmatpush1.msra.mxu0 %v274
        %276 = vmatprep.subr.mxu0 0.0
        %v277 = vand.u32 %v235, 4294901760
        %278 = vmatpush1.msra.mxu0 %v277
        %279 = vmatprep.subr.mxu0 0.0
        %v280 = vand.u32 %v236, 4294901760
        %281 = vmatpush1.msra.mxu0 %v280
        %282 = vmatprep.subr.mxu0 0.0
        %283 = vmatpush1.msra.mxu0 0.0
        %284 = vmatprep.subr.mxu0 0.0
        %285 = vmatpush1.msra.mxu0 0.0
        %286 = vmatprep.subr.mxu0 0.0
        %287 = vmatpush1.msra.mxu0 0.0
        %288 = vmatprep.subr.mxu0 0.0
        %289 = vmatpush1.msra.mxu0 0.0
        %290 = vmatprep.subr.mxu0 0.0
        %291 = vmatpush1.msra.mxu0 0.0
        %292 = vmatprep.subr.mxu0 0.0
        %293 = vmatpush1.msra.mxu0 0.0
        %294 = vmatprep.subr.mxu0 0.0
        %295 = vmatpush1.msra.mxu0 0.0
        %296 = vmatprep.subr.mxu0 0.0
        %297 = vmatpush1.msra.mxu0 0.0
        %298 = vmatprep.subr.mxu0 0.0
        %299 = vmatpush1.msra.mxu0 0.0
        %300 = vmatprep.subr.mxu0 0.0
        %301 = vmatpush1.msra.mxu0 0.0
        %302 = vmatprep.subr.mxu0 0.0
        %303 = vmatpush1.msra.mxu0 0.0
        %304 = vmatprep.subr.mxu0 0.0
        %305 = vmatpush1.msra.mxu0 0.0
        %306 = vmatprep.subr.mxu0 0.0
        %307 = vmatpush1.msra.mxu0 0.0
        %308 = vmatprep.subr.mxu0 0.0
        %309 = vmatpush1.msra.mxu0 0.0
        %310 = vmatprep.subr.mxu0 0.0
        %311 = vmatpush1.msra.mxu0 0.0
        %312 = vmatprep.subr.mxu0 0.0
        %313 = vmatpush1.msra.mxu0 0.0
        %314 = vmatprep.subr.mxu0 0.0
        %315 = vmatpush1.msra.mxu0 0.0
        %316 = vmatprep.subr.mxu0 0.0
        %317 = vmatpush1.msra.mxu0 0.0
        %318 = vmatprep.subr.mxu0 0.0
        %319 = vmatpush1.msra.mxu0 0.0
        %320 = vmatprep.subr.mxu0 0.0
        %321 = vmatpush1.msra.mxu0 0.0
        %322 = vmatprep.subr.mxu0 0.0
        %323 = vmatpush1.msra.mxu0 0.0
        %324 = vmatprep.subr.mxu0 0.0
        %325 = vmatpush1.msra.mxu0 0.0
        %326 = vmatprep.subr.mxu0 0.0
        %327 = vmatpush1.msra.mxu0 0.0
        %328 = vmatprep.subr.mxu0 0.0
        %329 = vmatpush1.msra.mxu0 0.0
        %330 = vmatprep.subr.mxu0 0.0
        %331 = vmatpush1.msra.mxu0 0.0
        %332 = vmatprep.subr.mxu0 0.0
        %333 = vmatpush1.msra.mxu0 0.0
        %334 = vmatprep.subr.mxu0 0.0
        %335 = vmatpush1.msra.mxu0 0.0
        %336 = vmatprep.subr.mxu0 0.0
        %337 = vmatpush1.msra.mxu0 0.0
        %338 = vmatprep.mubr.f32.mxu0 0.0
        %v339 = vand.u32 %v247, 4294901760
        %v340 = vsub.f32 %v247, %v339
        %v341 = vand.u32 %v340, 4294901760
        %v342 = vsub.f32 %v340, %v341
        %v343 = vand.u32 %v342, 4294901760
        %344 = vmatmul.mubr.f32.gmra.mrb[0].mxu0 %v343
        %v345 = vpop.f32.mrb[0].mxu0
        %v346 = vadd.f32 0.0, %v345
        %v347 = vpop.f32.mrb[0].mxu0
        %348 = vmatprep.mubr.f32.mxu0 0.0
        %v349 = vand.u32 %v250, 4294901760
        %v350 = vsub.f32 %v250, %v349
        %v351 = vand.u32 %v350, 4294901760
        %v352 = vsub.f32 %v350, %v351
        %v353 = vand.u32 %v352, 4294901760
        %354 = vmatmul.mubr.f32.gmra.mrb[0].mxu0 %v353
        %v355 = vpop.f32.mrb[0].mxu0
        %v356 = vadd.f32 0.0, %v355
        %v357 = vpop.f32.mrb[0].mxu0
        %358 = vmatprep.mubr.f32.mxu0 0.0
        %v359 = vand.u32 %v253, 4294901760
        %v360 = vsub.f32 %v253, %v359
        %v361 = vand.u32 %v360, 4294901760
        %v362 = vsub.f32 %v360, %v361
        %v363 = vand.u32 %v362, 4294901760
        %364 = vmatmul.mubr.f32.gmra.mrb[0].mxu0 %v363
        %v365 = vpop.f32.mrb[0].mxu0
        %v366 = vadd.f32 0.0, %v365
        %v367 = vpop.f32.mrb[0].mxu0
        %368 = vmatprep.mubr.f32.mxu0 0.0
        %v369 = vand.u32 %v256, 4294901760
        %v370 = vsub.f32 %v256, %v369
        %v371 = vand.u32 %v370, 4294901760
        %v372 = vsub.f32 %v370, %v371
        %v373 = vand.u32 %v372, 4294901760
        %374 = vmatmul.mubr.f32.gmra.mrb[0].mxu0 %v373
        %v375 = vpop.f32.mrb[0].mxu0
        %v376 = vadd.f32 0.0, %v375
        %v377 = vpop.f32.mrb[0].mxu0
        %378 = vmatprep.mubr.f32.mxu0 0.0
        %v379 = vand.u32 %v259, 4294901760
        %v380 = vsub.f32 %v259, %v379
        %v381 = vand.u32 %v380, 4294901760
        %v382 = vsub.f32 %v380, %v381
        %v383 = vand.u32 %v382, 4294901760
        %384 = vmatmul.mubr.f32.gmra.mrb[0].mxu0 %v383
        %v385 = vpop.f32.mrb[0].mxu0
        %v386 = vadd.f32 0.0, %v385
        %v387 = vpop.f32.mrb[0].mxu0
        %388 = vmatprep.mubr.f32.mxu0 0.0
        %v389 = vand.u32 %v262, 4294901760
        %v390 = vsub.f32 %v262, %v389
        %v391 = vand.u32 %v390, 4294901760
        %v392 = vsub.f32 %v390, %v391
        %v393 = vand.u32 %v392, 4294901760
        %394 = vmatmul.mubr.f32.gmra.mrb[0].mxu0 %v393
        %v395 = vpop.f32.mrb[0].mxu0
        %v396 = vadd.f32 0.0, %v395
        %v397 = vpop.f32.mrb[0].mxu0
        %398 = vmatprep.mubr.f32.mxu0 0.0
        %v399 = vand.u32 %v265, 4294901760
        %v400 = vsub.f32 %v265, %v399
        %v401 = vand.u32 %v400, 4294901760
        %v402 = vsub.f32 %v400, %v401
        %v403 = vand.u32 %v402, 4294901760
        %404 = vmatmul.mubr.f32.gmra.mrb[0].mxu0 %v403
        %v405 = vpop.f32.mrb[0].mxu0
        %v406 = vadd.f32 0.0, %v405
        %v407 = vpop.f32.mrb[0].mxu0
        %408 = vmatprep.mubr.f32.mxu0 0.0
        %v409 = vand.u32 %v268, 4294901760
        %v410 = vsub.f32 %v268, %v409
        %v411 = vand.u32 %v410, 4294901760
        %v412 = vsub.f32 %v410, %v411
        %v413 = vand.u32 %v412, 4294901760
        %414 = vmatmul.mubr.f32.gmra.mrb[0].mxu0 %v413
        %v415 = vpop.f32.mrb[0].mxu0
        %v416 = vadd.f32 0.0, %v415
        %v417 = vpop.f32.mrb[0].mxu0
        %418 = vdwg.mxu0
        %419 = vmatprep.subr.mxu0 0.0
        %v420 = vand.u32 %v233, 4294901760
        %v421 = vsub.f32 %v233, %v420
        %v422 = vand.u32 %v421, 4294901760
        %v423 = vsub.f32 %v421, %v422
        %v424 = vand.u32 %v423, 4294901760
        %425 = vmatpush1.msra.mxu0 %v424
        %426 = vmatprep.subr.mxu0 0.0
        %v427 = vand.u32 %v234, 4294901760
        %v428 = vsub.f32 %v234, %v427
        %v429 = vand.u32 %v428, 4294901760
        %v430 = vsub.f32 %v428, %v429
        %v431 = vand.u32 %v430, 4294901760
        %432 = vmatpush1.msra.mxu0 %v431
        %433 = vmatprep.subr.mxu0 0.0
        %v434 = vand.u32 %v235, 4294901760
        %v435 = vsub.f32 %v235, %v434
        %v436 = vand.u32 %v435, 4294901760
        %v437 = vsub.f32 %v435, %v436
        %v438 = vand.u32 %v437, 4294901760
        %439 = vmatpush1.msra.mxu0 %v438
        %440 = vmatprep.subr.mxu0 0.0
        %v441 = vand.u32 %v236, 4294901760
        %v442 = vsub.f32 %v236, %v441
        %v443 = vand.u32 %v442, 4294901760
        %v444 = vsub.f32 %v442, %v443
        %v445 = vand.u32 %v444, 4294901760
        %446 = vmatpush1.msra.mxu0 %v445
        %447 = vmatprep.subr.mxu0 0.0
        %448 = vmatpush1.msra.mxu0 0.0
        %449 = vmatprep.subr.mxu0 0.0
        %450 = vmatpush1.msra.mxu0 0.0
        %451 = vmatprep.subr.mxu0 0.0
        %452 = vmatpush1.msra.mxu0 0.0
        %453 = vmatprep.subr.mxu0 0.0
        %454 = vmatpush1.msra.mxu0 0.0
        %455 = vmatprep.subr.mxu0 0.0
        %456 = vmatpush1.msra.mxu0 0.0
        %457 = vmatprep.subr.mxu0 0.0
        %458 = vmatpush1.msra.mxu0 0.0
        %459 = vmatprep.subr.mxu0 0.0
        %460 = vmatpush1.msra.mxu0 0.0
        %461 = vmatprep.subr.mxu0 0.0
        %462 = vmatpush1.msra.mxu0 0.0
        %463 = vmatprep.subr.mxu0 0.0
        %464 = vmatpush1.msra.mxu0 0.0
        %465 = vmatprep.subr.mxu0 0.0
        %466 = vmatpush1.msra.mxu0 0.0
        %467 = vmatprep.subr.mxu0 0.0
        %468 = vmatpush1.msra.mxu0 0.0
        %469 = vmatprep.subr.mxu0 0.0
        %470 = vmatpush1.msra.mxu0 0.0
        %471 = vmatprep.subr.mxu0 0.0
        %472 = vmatpush1.msra.mxu0 0.0
        %473 = vmatprep.subr.mxu0 0.0
        %474 = vmatpush1.msra.mxu0 0.0
        %475 = vmatprep.subr.mxu0 0.0
        %476 = vmatpush1.msra.mxu0 0.0
        %477 = vmatprep.subr.mxu0 0.0
        %478 = vmatpush1.msra.mxu0 0.0
        %479 = vmatprep.subr.mxu0 0.0
        %480 = vmatpush1.msra.mxu0 0.0
        %481 = vmatprep.subr.mxu0 0.0
        %482 = vmatpush1.msra.mxu0 0.0
        %483 = vmatprep.subr.mxu0 0.0
        %484 = vmatpush1.msra.mxu0 0.0
        %485 = vmatprep.subr.mxu0 0.0
        %486 = vmatpush1.msra.mxu0 0.0
        %487 = vmatprep.subr.mxu0 0.0
        %488 = vmatpush1.msra.mxu0 0.0
        %489 = vmatprep.subr.mxu0 0.0
        %490 = vmatpush1.msra.mxu0 0.0
        %491 = vmatprep.subr.mxu0 0.0
        %492 = vmatpush1.msra.mxu0 0.0
        %493 = vmatprep.subr.mxu0 0.0
        %494 = vmatpush1.msra.mxu0 0.0
        %495 = vmatprep.subr.mxu0 0.0
        %496 = vmatpush1.msra.mxu0 0.0
        %497 = vmatprep.subr.mxu0 0.0
        %498 = vmatpush1.msra.mxu0 0.0
        %499 = vmatprep.subr.mxu0 0.0
        %500 = vmatpush1.msra.mxu0 0.0
        %501 = vmatprep.subr.mxu0 0.0
        %502 = vmatpush1.msra.mxu0 0.0
        %503 = vmatprep.mubr.f32.mxu0 0.0
        %v504 = vand.u32 %v247, 4294901760
        %505 = vmatmul.mubr.f32.gmra.mrb[0].mxu0 %v504
        %v506 = vpop.f32.mrb[0].mxu0
        %v507 = vadd.f32 %v346, %v506
        %v508 = vpop.f32.mrb[0].mxu0
        %509 = vmatprep.mubr.f32.mxu0 0.0
        %v510 = vand.u32 %v250, 4294901760
        %511 = vmatmul.mubr.f32.gmra.mrb[0].mxu0 %v510
        %v512 = vpop.f32.mrb[0].mxu0
        %v513 = vadd.f32 %v356, %v512
        %v514 = vpop.f32.mrb[0].mxu0
        %515 = vmatprep.mubr.f32.mxu0 0.0
        %v516 = vand.u32 %v253, 4294901760
        %517 = vmatmul.mubr.f32.gmra.mrb[0].mxu0 %v516
        %v518 = vpop.f32.mrb[0].mxu0
        %v519 = vadd.f32 %v366, %v518
        %v520 = vpop.f32.mrb[0].mxu0
        %521 = vmatprep.mubr.f32.mxu0 0.0
        %v522 = vand.u32 %v256, 4294901760
        %523 = vmatmul.mubr.f32.gmra.mrb[0].mxu0 %v522
        %v524 = vpop.f32.mrb[0].mxu0
        %v525 = vadd.f32 %v376, %v524
        %v526 = vpop.f32.mrb[0].mxu0
        %527 = vmatprep.mubr.f32.mxu0 0.0
        %v528 = vand.u32 %v259, 4294901760
        %529 = vmatmul.mubr.f32.gmra.mrb[0].mxu0 %v528
        %v530 = vpop.f32.mrb[0].mxu0
        %v531 = vadd.f32 %v386, %v530
        %v532 = vpop.f32.mrb[0].mxu0
        %533 = vmatprep.mubr.f32.mxu0 0.0
        %v534 = vand.u32 %v262, 4294901760
        %535 = vmatmul.mubr.f32.gmra.mrb[0].mxu0 %v534
        %v536 = vpop.f32.mrb[0].mxu0
        %v537 = vadd.f32 %v396, %v536
        %v538 = vpop.f32.mrb[0].mxu0
        %539 = vmatprep.mubr.f32.mxu0 0.0
        %v540 = vand.u32 %v265, 4294901760
        %541 = vmatmul.mubr.f32.gmra.mrb[0].mxu0 %v540
        %v542 = vpop.f32.mrb[0].mxu0
        %v543 = vadd.f32 %v406, %v542
        %v544 = vpop.f32.mrb[0].mxu0
        %545 = vmatprep.mubr.f32.mxu0 0.0
        %v546 = vand.u32 %v268, 4294901760
        %547 = vmatmul.mubr.f32.gmra.mrb[0].mxu0 %v546
        %v548 = vpop.f32.mrb[0].mxu0
        %v549 = vadd.f32 %v416, %v548
        %v550 = vpop.f32.mrb[0].mxu0
        %551 = vdwg.mxu0
        %552 = vmatprep.subr.mxu0 0.0
        %v553 = vand.u32 %v233, 4294901760
        %v554 = vsub.f32 %v233, %v553
        %555 = vmatpush1.msra.mxu0 %v554
        %556 = vmatprep.subr.mxu0 0.0
        %v557 = vand.u32 %v234, 4294901760
        %v558 = vsub.f32 %v234, %v557
        %559 = vmatpush1.msra.mxu0 %v558
        %560 = vmatprep.subr.mxu0 0.0
        %v561 = vand.u32 %v235, 4294901760
        %v562 = vsub.f32 %v235, %v561
        %563 = vmatpush1.msra.mxu0 %v562
        %564 = vmatprep.subr.mxu0 0.0
        %v565 = vand.u32 %v236, 4294901760
        %v566 = vsub.f32 %v236, %v565
        %567 = vmatpush1.msra.mxu0 %v566
        %568 = vmatprep.subr.mxu0 0.0
        %569 = vmatpush1.msra.mxu0 0.0
        %570 = vmatprep.subr.mxu0 0.0
        %571 = vmatpush1.msra.mxu0 0.0
        %572 = vmatprep.subr.mxu0 0.0
        %573 = vmatpush1.msra.mxu0 0.0
        %574 = vmatprep.subr.mxu0 0.0
        %575 = vmatpush1.msra.mxu0 0.0
        %576 = vmatprep.subr.mxu0 0.0
        %577 = vmatpush1.msra.mxu0 0.0
        %578 = vmatprep.subr.mxu0 0.0
        %579 = vmatpush1.msra.mxu0 0.0
        %580 = vmatprep.subr.mxu0 0.0
        %581 = vmatpush1.msra.mxu0 0.0
        %582 = vmatprep.subr.mxu0 0.0
        %583 = vmatpush1.msra.mxu0 0.0
        %584 = vmatprep.subr.mxu0 0.0
        %585 = vmatpush1.msra.mxu0 0.0
        %586 = vmatprep.subr.mxu0 0.0
        %587 = vmatpush1.msra.mxu0 0.0
        %588 = vmatprep.subr.mxu0 0.0
        %589 = vmatpush1.msra.mxu0 0.0
        %590 = vmatprep.subr.mxu0 0.0
        %591 = vmatpush1.msra.mxu0 0.0
        %592 = vmatprep.subr.mxu0 0.0
        %593 = vmatpush1.msra.mxu0 0.0
        %594 = vmatprep.subr.mxu0 0.0
        %595 = vmatpush1.msra.mxu0 0.0
        %596 = vmatprep.subr.mxu0 0.0
        %597 = vmatpush1.msra.mxu0 0.0
        %598 = vmatprep.subr.mxu0 0.0
        %599 = vmatpush1.msra.mxu0 0.0
        %600 = vmatprep.subr.mxu0 0.0
        %601 = vmatpush1.msra.mxu0 0.0
        %602 = vmatprep.subr.mxu0 0.0
        %603 = vmatpush1.msra.mxu0 0.0
        %604 = vmatprep.subr.mxu0 0.0
        %605 = vmatpush1.msra.mxu0 0.0
        %606 = vmatprep.subr.mxu0 0.0
        %607 = vmatpush1.msra.mxu0 0.0
        %608 = vmatprep.subr.mxu0 0.0
        %609 = vmatpush1.msra.mxu0 0.0
        %610 = vmatprep.subr.mxu0 0.0
        %611 = vmatpush1.msra.mxu0 0.0
        %612 = vmatprep.subr.mxu0 0.0
        %613 = vmatpush1.msra.mxu0 0.0
        %614 = vmatprep.subr.mxu0 0.0
        %615 = vmatpush1.msra.mxu0 0.0
        %616 = vmatprep.subr.mxu0 0.0
        %617 = vmatpush1.msra.mxu0 0.0
        %618 = vmatprep.subr.mxu0 0.0
        %619 = vmatpush1.msra.mxu0 0.0
        %620 = vmatprep.subr.mxu0 0.0
        %621 = vmatpush1.msra.mxu0 0.0
        %622 = vmatprep.subr.mxu0 0.0
        %623 = vmatpush1.msra.mxu0 0.0
        %624 = vmatprep.mubr.f32.mxu0 0.0
        %v625 = vand.u32 %v247, 4294901760
        %v626 = vsub.f32 %v247, %v625
        %627 = vmatmul.mubr.f32.gmra.mrb[0].mxu0 %v626
        %v628 = vpop.f32.mrb[0].mxu0
        %v629 = vadd.f32 %v507, %v628
        %v630 = vpop.f32.mrb[0].mxu0
        %631 = vmatprep.mubr.f32.mxu0 0.0
        %v632 = vand.u32 %v250, 4294901760
        %v633 = vsub.f32 %v250, %v632
        %634 = vmatmul.mubr.f32.gmra.mrb[0].mxu0 %v633
        %v635 = vpop.f32.mrb[0].mxu0
        %v636 = vadd.f32 %v513, %v635
        %v637 = vpop.f32.mrb[0].mxu0
        %638 = vmatprep.mubr.f32.mxu0 0.0
        %v639 = vand.u32 %v253, 4294901760
        %v640 = vsub.f32 %v253, %v639
        %641 = vmatmul.mubr.f32.gmra.mrb[0].mxu0 %v640
        %v642 = vpop.f32.mrb[0].mxu0
        %v643 = vadd.f32 %v519, %v642
        %v644 = vpop.f32.mrb[0].mxu0
        %645 = vmatprep.mubr.f32.mxu0 0.0
        %v646 = vand.u32 %v256, 4294901760
        %v647 = vsub.f32 %v256, %v646
        %648 = vmatmul.mubr.f32.gmra.mrb[0].mxu0 %v647
        %v649 = vpop.f32.mrb[0].mxu0
        %v650 = vadd.f32 %v525, %v649
        %v651 = vpop.f32.mrb[0].mxu0
        %652 = vmatprep.mubr.f32.mxu0 0.0
        %v653 = vand.u32 %v259, 4294901760
        %v654 = vsub.f32 %v259, %v653
        %655 = vmatmul.mubr.f32.gmra.mrb[0].mxu0 %v654
        %v656 = vpop.f32.mrb[0].mxu0
        %v657 = vadd.f32 %v531, %v656
        %v658 = vpop.f32.mrb[0].mxu0
        %659 = vmatprep.mubr.f32.mxu0 0.0
        %v660 = vand.u32 %v262, 4294901760
        %v661 = vsub.f32 %v262, %v660
        %662 = vmatmul.mubr.f32.gmra.mrb[0].mxu0 %v661
        %v663 = vpop.f32.mrb[0].mxu0
        %v664 = vadd.f32 %v537, %v663
        %v665 = vpop.f32.mrb[0].mxu0
        %666 = vmatprep.mubr.f32.mxu0 0.0
        %v667 = vand.u32 %v265, 4294901760
        %v668 = vsub.f32 %v265, %v667
        %669 = vmatmul.mubr.f32.gmra.mrb[0].mxu0 %v668
        %v670 = vpop.f32.mrb[0].mxu0
        %v671 = vadd.f32 %v543, %v670
        %v672 = vpop.f32.mrb[0].mxu0
        %673 = vmatprep.mubr.f32.mxu0 0.0
        %v674 = vand.u32 %v268, 4294901760
        %v675 = vsub.f32 %v268, %v674
        %676 = vmatmul.mubr.f32.gmra.mrb[0].mxu0 %v675
        %v677 = vpop.f32.mrb[0].mxu0
        %v678 = vadd.f32 %v549, %v677
        %v679 = vpop.f32.mrb[0].mxu0
        %680 = vdwg.mxu0
        %681 = vmatprep.subr.mxu0 0.0
        %v682 = vand.u32 %v233, 4294901760
        %683 = vmatpush1.msra.mxu0 %v682
        %684 = vmatprep.subr.mxu0 0.0
        %v685 = vand.u32 %v234, 4294901760
        %686 = vmatpush1.msra.mxu0 %v685
        %687 = vmatprep.subr.mxu0 0.0
        %v688 = vand.u32 %v235, 4294901760
        %689 = vmatpush1.msra.mxu0 %v688
        %690 = vmatprep.subr.mxu0 0.0
        %v691 = vand.u32 %v236, 4294901760
        %692 = vmatpush1.msra.mxu0 %v691
        %693 = vmatprep.subr.mxu0 0.0
        %694 = vmatpush1.msra.mxu0 0.0
        %695 = vmatprep.subr.mxu0 0.0
        %696 = vmatpush1.msra.mxu0 0.0
        %697 = vmatprep.subr.mxu0 0.0
        %698 = vmatpush1.msra.mxu0 0.0
        %699 = vmatprep.subr.mxu0 0.0
        %700 = vmatpush1.msra.mxu0 0.0
        %701 = vmatprep.subr.mxu0 0.0
        %702 = vmatpush1.msra.mxu0 0.0
        %703 = vmatprep.subr.mxu0 0.0
        %704 = vmatpush1.msra.mxu0 0.0
        %705 = vmatprep.subr.mxu0 0.0
        %706 = vmatpush1.msra.mxu0 0.0
        %707 = vmatprep.subr.mxu0 0.0
        %708 = vmatpush1.msra.mxu0 0.0
        %709 = vmatprep.subr.mxu0 0.0
        %710 = vmatpush1.msra.mxu0 0.0
        %711 = vmatprep.subr.mxu0 0.0
        %712 = vmatpush1.msra.mxu0 0.0
        %713 = vmatprep.subr.mxu0 0.0
        %714 = vmatpush1.msra.mxu0 0.0
        %715 = vmatprep.subr.mxu0 0.0
        %716 = vmatpush1.msra.mxu0 0.0
        %717 = vmatprep.subr.mxu0 0.0
        %718 = vmatpush1.msra.mxu0 0.0
        %719 = vmatprep.subr.mxu0 0.0
        %720 = vmatpush1.msra.mxu0 0.0
        %721 = vmatprep.subr.mxu0 0.0
        %722 = vmatpush1.msra.mxu0 0.0
        %723 = vmatprep.subr.mxu0 0.0
        %724 = vmatpush1.msra.mxu0 0.0
        %725 = vmatprep.subr.mxu0 0.0
        %726 = vmatpush1.msra.mxu0 0.0
        %727 = vmatprep.subr.mxu0 0.0
        %728 = vmatpush1.msra.mxu0 0.0
        %729 = vmatprep.subr.mxu0 0.0
        %730 = vmatpush1.msra.mxu0 0.0
        %731 = vmatprep.subr.mxu0 0.0
        %732 = vmatpush1.msra.mxu0 0.0
        %733 = vmatprep.subr.mxu0 0.0
        %734 = vmatpush1.msra.mxu0 0.0
        %735 = vmatprep.subr.mxu0 0.0
        %736 = vmatpush1.msra.mxu0 0.0
        %737 = vmatprep.subr.mxu0 0.0
        %738 = vmatpush1.msra.mxu0 0.0
        %739 = vmatprep.subr.mxu0 0.0
        %740 = vmatpush1.msra.mxu0 0.0
        %741 = vmatprep.subr.mxu0 0.0
        %742 = vmatpush1.msra.mxu0 0.0
        %743 = vmatprep.subr.mxu0 0.0
        %744 = vmatpush1.msra.mxu0 0.0
        %745 = vmatprep.subr.mxu0 0.0
        %746 = vmatpush1.msra.mxu0 0.0
        %747 = vmatprep.subr.mxu0 0.0
        %748 = vmatpush1.msra.mxu0 0.0
        %749 = vmatprep.mubr.f32.mxu0 0.0
        %v750 = vand.u32 %v247, 4294901760
        %v751 = vsub.f32 %v247, %v750
        %v752 = vand.u32 %v751, 4294901760
        %753 = vmatmul.mubr.f32.gmra.mrb[0].mxu0 %v752
        %v754 = vpop.f32.mrb[0].mxu0
        %v755 = vadd.f32 %v629, %v754
        %v756 = vpop.f32.mrb[0].mxu0
        %757 = vmatprep.mubr.f32.mxu0 0.0
        %v758 = vand.u32 %v250, 4294901760
        %v759 = vsub.f32 %v250, %v758
        %v760 = vand.u32 %v759, 4294901760
        %761 = vmatmul.mubr.f32.gmra.mrb[0].mxu0 %v760
        %v762 = vpop.f32.mrb[0].mxu0
        %v763 = vadd.f32 %v636, %v762
        %v764 = vpop.f32.mrb[0].mxu0
        %765 = vmatprep.mubr.f32.mxu0 0.0
        %v766 = vand.u32 %v253, 4294901760
        %v767 = vsub.f32 %v253, %v766
        %v768 = vand.u32 %v767, 4294901760
        %769 = vmatmul.mubr.f32.gmra.mrb[0].mxu0 %v768
        %v770 = vpop.f32.mrb[0].mxu0
        %v771 = vadd.f32 %v643, %v770
        %v772 = vpop.f32.mrb[0].mxu0
        %773 = vmatprep.mubr.f32.mxu0 0.0
        %v774 = vand.u32 %v256, 4294901760
        %v775 = vsub.f32 %v256, %v774
        %v776 = vand.u32 %v775, 4294901760
        %777 = vmatmul.mubr.f32.gmra.mrb[0].mxu0 %v776
        %v778 = vpop.f32.mrb[0].mxu0
        %v779 = vadd.f32 %v650, %v778
        %v780 = vpop.f32.mrb[0].mxu0
        %781 = vmatprep.mubr.f32.mxu0 0.0
        %v782 = vand.u32 %v259, 4294901760
        %v783 = vsub.f32 %v259, %v782
        %v784 = vand.u32 %v783, 4294901760
        %785 = vmatmul.mubr.f32.gmra.mrb[0].mxu0 %v784
        %v786 = vpop.f32.mrb[0].mxu0
        %v787 = vadd.f32 %v657, %v786
        %v788 = vpop.f32.mrb[0].mxu0
        %789 = vmatprep.mubr.f32.mxu0 0.0
        %v790 = vand.u32 %v262, 4294901760
        %v791 = vsub.f32 %v262, %v790
        %v792 = vand.u32 %v791, 4294901760
        %793 = vmatmul.mubr.f32.gmra.mrb[0].mxu0 %v792
        %v794 = vpop.f32.mrb[0].mxu0
        %v795 = vadd.f32 %v664, %v794
        %v796 = vpop.f32.mrb[0].mxu0
        %797 = vmatprep.mubr.f32.mxu0 0.0
        %v798 = vand.u32 %v265, 4294901760
        %v799 = vsub.f32 %v265, %v798
        %v800 = vand.u32 %v799, 4294901760
        %801 = vmatmul.mubr.f32.gmra.mrb[0].mxu0 %v800
        %v802 = vpop.f32.mrb[0].mxu0
        %v803 = vadd.f32 %v671, %v802
        %v804 = vpop.f32.mrb[0].mxu0
        %805 = vmatprep.mubr.f32.mxu0 0.0
        %v806 = vand.u32 %v268, 4294901760
        %v807 = vsub.f32 %v268, %v806
        %v808 = vand.u32 %v807, 4294901760
        %809 = vmatmul.mubr.f32.gmra.mrb[0].mxu0 %v808
        %v810 = vpop.f32.mrb[0].mxu0
        %v811 = vadd.f32 %v678, %v810
        %v812 = vpop.f32.mrb[0].mxu0
        %813 = vdwg.mxu0
        %814 = vmatprep.subr.mxu0 0.0
        %v815 = vand.u32 %v233, 4294901760
        %v816 = vsub.f32 %v233, %v815
        %v817 = vand.u32 %v816, 4294901760
        %818 = vmatpush1.msra.mxu0 %v817
        %819 = vmatprep.subr.mxu0 0.0
        %v820 = vand.u32 %v234, 4294901760
        %v821 = vsub.f32 %v234, %v820
        %v822 = vand.u32 %v821, 4294901760
        %823 = vmatpush1.msra.mxu0 %v822
        %824 = vmatprep.subr.mxu0 0.0
        %v825 = vand.u32 %v235, 4294901760
        %v826 = vsub.f32 %v235, %v825
        %v827 = vand.u32 %v826, 4294901760
        %828 = vmatpush1.msra.mxu0 %v827
        %829 = vmatprep.subr.mxu0 0.0
        %v830 = vand.u32 %v236, 4294901760
        %v831 = vsub.f32 %v236, %v830
        %v832 = vand.u32 %v831, 4294901760
        %833 = vmatpush1.msra.mxu0 %v832
        %834 = vmatprep.subr.mxu0 0.0
        %835 = vmatpush1.msra.mxu0 0.0
        %836 = vmatprep.subr.mxu0 0.0
        %837 = vmatpush1.msra.mxu0 0.0
        %838 = vmatprep.subr.mxu0 0.0
        %839 = vmatpush1.msra.mxu0 0.0
        %840 = vmatprep.subr.mxu0 0.0
        %841 = vmatpush1.msra.mxu0 0.0
        %842 = vmatprep.subr.mxu0 0.0
        %843 = vmatpush1.msra.mxu0 0.0
        %844 = vmatprep.subr.mxu0 0.0
        %845 = vmatpush1.msra.mxu0 0.0
        %846 = vmatprep.subr.mxu0 0.0
        %847 = vmatpush1.msra.mxu0 0.0
        %848 = vmatprep.subr.mxu0 0.0
        %849 = vmatpush1.msra.mxu0 0.0
        %850 = vmatprep.subr.mxu0 0.0
        %851 = vmatpush1.msra.mxu0 0.0
        %852 = vmatprep.subr.mxu0 0.0
        %853 = vmatpush1.msra.mxu0 0.0
        %854 = vmatprep.subr.mxu0 0.0
        %855 = vmatpush1.msra.mxu0 0.0
        %856 = vmatprep.subr.mxu0 0.0
        %857 = vmatpush1.msra.mxu0 0.0
        %858 = vmatprep.subr.mxu0 0.0
        %859 = vmatpush1.msra.mxu0 0.0
        %860 = vmatprep.subr.mxu0 0.0
        %861 = vmatpush1.msra.mxu0 0.0
        %862 = vmatprep.subr.mxu0 0.0
        %863 = vmatpush1.msra.mxu0 0.0
        %864 = vmatprep.subr.mxu0 0.0
        %865 = vmatpush1.msra.mxu0 0.0
        %866 = vmatprep.subr.mxu0 0.0
        %867 = vmatpush1.msra.mxu0 0.0
        %868 = vmatprep.subr.mxu0 0.0
        %869 = vmatpush1.msra.mxu0 0.0
        %870 = vmatprep.subr.mxu0 0.0
        %871 = vmatpush1.msra.mxu0 0.0
        %872 = vmatprep.subr.mxu0 0.0
        %873 = vmatpush1.msra.mxu0 0.0
        %874 = vmatprep.subr.mxu0 0.0
        %875 = vmatpush1.msra.mxu0 0.0
        %876 = vmatprep.subr.mxu0 0.0
        %877 = vmatpush1.msra.mxu0 0.0
        %878 = vmatprep.subr.mxu0 0.0
        %879 = vmatpush1.msra.mxu0 0.0
        %880 = vmatprep.subr.mxu0 0.0
        %881 = vmatpush1.msra.mxu0 0.0
        %882 = vmatprep.subr.mxu0 0.0
        %883 = vmatpush1.msra.mxu0 0.0
        %884 = vmatprep.subr.mxu0 0.0
        %885 = vmatpush1.msra.mxu0 0.0
        %886 = vmatprep.subr.mxu0 0.0
        %887 = vmatpush1.msra.mxu0 0.0
        %888 = vmatprep.subr.mxu0 0.0
        %889 = vmatpush1.msra.mxu0 0.0
        %890 = vmatprep.mubr.f32.mxu0 0.0
        %v891 = vand.u32 %v247, 4294901760
        %892 = vmatmul.mubr.f32.gmra.mrb[0].mxu0 %v891
        %v893 = vpop.f32.mrb[0].mxu0
        %v894 = vadd.f32 %v755, %v893
        %v895 = vpop.f32.mrb[0].mxu0
        %896 = vmatprep.mubr.f32.mxu0 0.0
        %v897 = vand.u32 %v250, 4294901760
        %898 = vmatmul.mubr.f32.gmra.mrb[0].mxu0 %v897
        %v899 = vpop.f32.mrb[0].mxu0
        %v900 = vadd.f32 %v763, %v899
        %v901 = vpop.f32.mrb[0].mxu0
        %902 = vmatprep.mubr.f32.mxu0 0.0
        %v903 = vand.u32 %v253, 4294901760
        %904 = vmatmul.mubr.f32.gmra.mrb[0].mxu0 %v903
        %v905 = vpop.f32.mrb[0].mxu0
        %v906 = vadd.f32 %v771, %v905
        %v907 = vpop.f32.mrb[0].mxu0
        %908 = vmatprep.mubr.f32.mxu0 0.0
        %v909 = vand.u32 %v256, 4294901760
        %910 = vmatmul.mubr.f32.gmra.mrb[0].mxu0 %v909
        %v911 = vpop.f32.mrb[0].mxu0
        %v912 = vadd.f32 %v779, %v911
        %v913 = vpop.f32.mrb[0].mxu0
        %914 = vmatprep.mubr.f32.mxu0 0.0
        %v915 = vand.u32 %v259, 4294901760
        %916 = vmatmul.mubr.f32.gmra.mrb[0].mxu0 %v915
        %v917 = vpop.f32.mrb[0].mxu0
        %v918 = vadd.f32 %v787, %v917
        %v919 = vpop.f32.mrb[0].mxu0
        %920 = vmatprep.mubr.f32.mxu0 0.0
        %v921 = vand.u32 %v262, 4294901760
        %922 = vmatmul.mubr.f32.gmra.mrb[0].mxu0 %v921
        %v923 = vpop.f32.mrb[0].mxu0
        %v924 = vadd.f32 %v795, %v923
        %v925 = vpop.f32.mrb[0].mxu0
        %926 = vmatprep.mubr.f32.mxu0 0.0
        %v927 = vand.u32 %v265, 4294901760
        %928 = vmatmul.mubr.f32.gmra.mrb[0].mxu0 %v927
        %v929 = vpop.f32.mrb[0].mxu0
        %v930 = vadd.f32 %v803, %v929
        %v931 = vpop.f32.mrb[0].mxu0
        %932 = vmatprep.mubr.f32.mxu0 0.0
        %v933 = vand.u32 %v268, 4294901760
        %934 = vmatmul.mubr.f32.gmra.mrb[0].mxu0 %v933
        %v935 = vpop.f32.mrb[0].mxu0
        %v936 = vadd.f32 %v811, %v935
        %v937 = vpop.f32.mrb[0].mxu0
        %938 = vdwg.mxu0
        %939 = vmatprep.subr.mxu0 0.0
        %v940 = vand.u32 %v233, 4294901760
        %941 = vmatpush1.msra.mxu0 %v940
        %942 = vmatprep.subr.mxu0 0.0
        %v943 = vand.u32 %v234, 4294901760
        %944 = vmatpush1.msra.mxu0 %v943
        %945 = vmatprep.subr.mxu0 0.0
        %v946 = vand.u32 %v235, 4294901760
        %947 = vmatpush1.msra.mxu0 %v946
        %948 = vmatprep.subr.mxu0 0.0
        %v949 = vand.u32 %v236, 4294901760
        %950 = vmatpush1.msra.mxu0 %v949
        %951 = vmatprep.subr.mxu0 0.0
        %952 = vmatpush1.msra.mxu0 0.0
        %953 = vmatprep.subr.mxu0 0.0
        %954 = vmatpush1.msra.mxu0 0.0
        %955 = vmatprep.subr.mxu0 0.0
        %956 = vmatpush1.msra.mxu0 0.0
        %957 = vmatprep.subr.mxu0 0.0
        %958 = vmatpush1.msra.mxu0 0.0
        %959 = vmatprep.subr.mxu0 0.0
        %960 = vmatpush1.msra.mxu0 0.0
        %961 = vmatprep.subr.mxu0 0.0
        %962 = vmatpush1.msra.mxu0 0.0
        %963 = vmatprep.subr.mxu0 0.0
        %964 = vmatpush1.msra.mxu0 0.0
        %965 = vmatprep.subr.mxu0 0.0
        %966 = vmatpush1.msra.mxu0 0.0
        %967 = vmatprep.subr.mxu0 0.0
        %968 = vmatpush1.msra.mxu0 0.0
        %969 = vmatprep.subr.mxu0 0.0
        %970 = vmatpush1.msra.mxu0 0.0
        %971 = vmatprep.subr.mxu0 0.0
        %972 = vmatpush1.msra.mxu0 0.0
        %973 = vmatprep.subr.mxu0 0.0
        %974 = vmatpush1.msra.mxu0 0.0
        %975 = vmatprep.subr.mxu0 0.0
        %976 = vmatpush1.msra.mxu0 0.0
        %977 = vmatprep.subr.mxu0 0.0
        %978 = vmatpush1.msra.mxu0 0.0
        %979 = vmatprep.subr.mxu0 0.0
        %980 = vmatpush1.msra.mxu0 0.0
        %981 = vmatprep.subr.mxu0 0.0
        %982 = vmatpush1.msra.mxu0 0.0
        %983 = vmatprep.subr.mxu0 0.0
        %984 = vmatpush1.msra.mxu0 0.0
        %985 = vmatprep.subr.mxu0 0.0
        %986 = vmatpush1.msra.mxu0 0.0
        %987 = vmatprep.subr.mxu0 0.0
        %988 = vmatpush1.msra.mxu0 0.0
        %989 = vmatprep.subr.mxu0 0.0
        %990 = vmatpush1.msra.mxu0 0.0
        %991 = vmatprep.subr.mxu0 0.0
        %992 = vmatpush1.msra.mxu0 0.0
        %993 = vmatprep.subr.mxu0 0.0
        %994 = vmatpush1.msra.mxu0 0.0
        %995 = vmatprep.subr.mxu0 0.0
        %996 = vmatpush1.msra.mxu0 0.0
        %997 = vmatprep.subr.mxu0 0.0
        %998 = vmatpush1.msra.mxu0 0.0
        %999 = vmatprep.subr.mxu0 0.0
        %1000 = vmatpush1.msra.mxu0 0.0
        %1001 = vmatprep.subr.mxu0 0.0
        %1002 = vmatpush1.msra.mxu0 0.0
        %1003 = vmatprep.subr.mxu0 0.0
        %1004 = vmatpush1.msra.mxu0 0.0
        %1005 = vmatprep.subr.mxu0 0.0
        %1006 = vmatpush1.msra.mxu0 0.0
        %1007 = vmatprep.mubr.f32.mxu0 0.0
        %v1008 = vand.u32 %v247, 4294901760
        %1009 = vmatmul.mubr.f32.gmra.mrb[0].mxu0 %v1008
        %v1010 = vpop.f32.mrb[0].mxu0
        %v1011 = vadd.f32 %v894, %v1010
        %v1012 = vpop.f32.mrb[0].mxu0
        %1013 = vmatprep.mubr.f32.mxu0 0.0
        %v1014 = vand.u32 %v250, 4294901760
        %1015 = vmatmul.mubr.f32.gmra.mrb[0].mxu0 %v1014
        %v1016 = vpop.f32.mrb[0].mxu0
        %v1017 = vadd.f32 %v900, %v1016
        %v1018 = vpop.f32.mrb[0].mxu0
        %1019 = vmatprep.mubr.f32.mxu0 0.0
        %v1020 = vand.u32 %v253, 4294901760
        %1021 = vmatmul.mubr.f32.gmra.mrb[0].mxu0 %v1020
        %v1022 = vpop.f32.mrb[0].mxu0
        %v1023 = vadd.f32 %v906, %v1022
        %v1024 = vpop.f32.mrb[0].mxu0
        %1025 = vmatprep.mubr.f32.mxu0 0.0
        %v1026 = vand.u32 %v256, 4294901760
        %1027 = vmatmul.mubr.f32.gmra.mrb[0].mxu0 %v1026
        %v1028 = vpop.f32.mrb[0].mxu0
        %v1029 = vadd.f32 %v912, %v1028
        %v1030 = vpop.f32.mrb[0].mxu0
        %1031 = vmatprep.mubr.f32.mxu0 0.0
        %v1032 = vand.u32 %v259, 4294901760
        %1033 = vmatmul.mubr.f32.gmra.mrb[0].mxu0 %v1032
        %v1034 = vpop.f32.mrb[0].mxu0
        %v1035 = vadd.f32 %v918, %v1034
        %v1036 = vpop.f32.mrb[0].mxu0
        %1037 = vmatprep.mubr.f32.mxu0 0.0
        %v1038 = vand.u32 %v262, 4294901760
        %1039 = vmatmul.mubr.f32.gmra.mrb[0].mxu0 %v1038
        %v1040 = vpop.f32.mrb[0].mxu0
        %v1041 = vadd.f32 %v924, %v1040
        %v1042 = vpop.f32.mrb[0].mxu0
        %1043 = vmatprep.mubr.f32.mxu0 0.0
        %v1044 = vand.u32 %v265, 4294901760
        %1045 = vmatmul.mubr.f32.gmra.mrb[0].mxu0 %v1044
        %v1046 = vpop.f32.mrb[0].mxu0
        %v1047 = vadd.f32 %v930, %v1046
        %v1048 = vpop.f32.mrb[0].mxu0
        %1049 = vmatprep.mubr.f32.mxu0 0.0
        %v1050 = vand.u32 %v268, 4294901760
        %1051 = vmatmul.mubr.f32.gmra.mrb[0].mxu0 %v1050
        %v1052 = vpop.f32.mrb[0].mxu0
        %v1053 = vadd.f32 %v936, %v1052
        %v1054 = vpop.f32.mrb[0].mxu0
        %1055 = vdwg.mxu0
        %v1056 = vmin.f32 %v1011, 0.0
        %v1057 = vmin.f32 %v1017, 0.0
        %v1058 = vmin.f32 %v1023, 0.0
        %v1059 = vmin.f32 %v1029, 0.0
        %v1060 = vmul.f32 %v1056, 1.442695
        %v1061 = vpow.pop %v1060
        %v1062 = vmul.f32 %v1057, 1.442695
        %v1063 = vpow.pop %v1062
        %v1064 = vmul.f32 %v1058, 1.442695
        %v1065 = vpow.pop %v1064
        %v1066 = vmul.f32 %v1059, 1.442695
        %v1067 = vpow.pop %v1066
        %v1068 = vmax.f32 %v1011, 0.0
        %v1069 = vmax.f32 %v1017, 0.0
        %v1070 = vmax.f32 %v1023, 0.0
        %v1071 = vmax.f32 %v1029, 0.0
        %v1072 = vadd.f32 %v1061, %v1068
        %v1073 = vadd.f32 %v1063, %v1069
        %v1074 = vadd.f32 %v1065, %v1070
        %v1075 = vadd.f32 %v1067, %v1071
        %v1076 = vld [vmem:[%s218] sm:$0xff]
        %v1077 = vld [vmem:[%s218 + $0x8] sm:$0xff]
        %v1078 = vld [vmem:[%s218 + $0x10] sm:$0xff]
        %v1079 = vld [vmem:[%s218 + $0x18] sm:$0xff]
        %1080 = vadd.xlane.f32.xlu0 %v1072
        %v1081 = vpop.xlane.xlu0 %1080
        %1082 = vadd.xlane.f32.xlu0 %v1073
        %v1083 = vpop.xlane.xlu0 %1082
        %1084 = vadd.xlane.f32.xlu0 %v1074
        %v1085 = vpop.xlane.xlu0 %1084
        %1086 = vadd.xlane.f32.xlu0 %v1075
        %v1087 = vpop.xlane.xlu0 %1086
        %v1088 = vadd.f32 %v1076, %v1081
        %v1089 = vadd.f32 %v1077, %v1083
        %v1090 = vadd.f32 %v1078, %v1085
        %v1091 = vadd.f32 %v1079, %v1087
        %vm1092 = vcmask 7168
        %1093 = vst.msk [vmem:[%s218] sm:$0xff] %vm1092, %v1088
        %1094 = vst.msk [vmem:[%s218 + $0x8] sm:$0xff] %vm1092, %v1089
        %1095 = vst.msk [vmem:[%s218 + $0x10] sm:$0xff] %vm1092, %v1090
        %1096 = vst.msk [vmem:[%s218 + $0x18] sm:$0xff] %vm1092, %v1091
        %v1097 = vld [vmem:[%s213] sm:$0xff]
        %1098 = vmatprep.subr.mxu0 0.0
        %v1099 = vand.u32 %v1072, 4294901760
        %1100 = vmatpush1.xpose.msra.mxu0 %v1099
        %1101 = vmatprep.subr.mxu0 0.0
        %1102 = vmatpush1.xpose.msra.mxu0 0.0
        %1103 = vmatprep.subr.mxu0 0.0
        %1104 = vmatpush1.xpose.msra.mxu0 0.0
        %1105 = vmatprep.subr.mxu0 0.0
        %1106 = vmatpush1.xpose.msra.mxu0 0.0
        %1107 = vmatprep.subr.mxu0 0.0
        %1108 = vmatpush1.xpose.msra.mxu0 0.0
        %1109 = vmatprep.subr.mxu0 0.0
        %1110 = vmatpush1.xpose.msra.mxu0 0.0
        %1111 = vmatprep.subr.mxu0 0.0
        %1112 = vmatpush1.xpose.msra.mxu0 0.0
        %1113 = vmatprep.subr.mxu0 0.0
        %1114 = vmatpush1.xpose.msra.mxu0 0.0
        %1115 = vmatprep.subr.mxu0 0.0
        %1116 = vmatpush1.xpose.msra.mxu0 0.0
        %1117 = vmatprep.subr.mxu0 0.0
        %1118 = vmatpush1.xpose.msra.mxu0 0.0
        %1119 = vmatprep.subr.mxu0 0.0
        %1120 = vmatpush1.xpose.msra.mxu0 0.0
        %1121 = vmatprep.subr.mxu0 0.0
        %1122 = vmatpush1.xpose.msra.mxu0 0.0
        %1123 = vmatprep.subr.mxu0 0.0
        %1124 = vmatpush1.xpose.msra.mxu0 0.0
        %1125 = vmatprep.subr.mxu0 0.0
        %1126 = vmatpush1.xpose.msra.mxu0 0.0
        %1127 = vmatprep.subr.mxu0 0.0
        %1128 = vmatpush1.xpose.msra.mxu0 0.0
        %1129 = vmatprep.subr.mxu0 0.0
        %1130 = vmatpush1.xpose.msra.mxu0 0.0
        %1131 = vmatprep.subr.mxu0 0.0
        %1132 = vmatpush1.xpose.msra.mxu0 0.0
        %1133 = vmatprep.subr.mxu0 0.0
        %1134 = vmatpush1.xpose.msra.mxu0 0.0
        %1135 = vmatprep.subr.mxu0 0.0
        %1136 = vmatpush1.xpose.msra.mxu0 0.0
        %1137 = vmatprep.subr.mxu0 0.0
        %1138 = vmatpush1.xpose.msra.mxu0 0.0
        %1139 = vmatprep.subr.mxu0 0.0
        %1140 = vmatpush1.xpose.msra.mxu0 0.0
        %1141 = vmatprep.subr.mxu0 0.0
        %1142 = vmatpush1.xpose.msra.mxu0 0.0
        %1143 = vmatprep.subr.mxu0 0.0
        %1144 = vmatpush1.xpose.msra.mxu0 0.0
        %1145 = vmatprep.subr.mxu0 0.0
        %1146 = vmatpush1.xpose.msra.mxu0 0.0
        %1147 = vmatprep.subr.mxu0 0.0
        %1148 = vmatpush1.xpose.msra.mxu0 0.0
        %1149 = vmatprep.subr.mxu0 0.0
        %1150 = vmatpush1.xpose.msra.mxu0 0.0
        %1151 = vmatprep.subr.mxu0 0.0
        %1152 = vmatpush1.xpose.msra.mxu0 0.0
        %1153 = vmatprep.subr.mxu0 0.0
        %1154 = vmatpush1.xpose.msra.mxu0 0.0
        %1155 = vmatprep.subr.mxu0 0.0
        %1156 = vmatpush1.xpose.msra.mxu0 0.0
        %1157 = vmatprep.subr.mxu0 0.0
        %1158 = vmatpush1.xpose.msra.mxu0 0.0
        %1159 = vmatprep.subr.mxu0 0.0
        %1160 = vmatpush1.xpose.msra.mxu0 0.0
        %1161 = vmatprep.subr.mxu0 0.0
        %1162 = vmatpush1.xpose.msra.mxu0 0.0
        %1163 = vmatprep.mubr.f32.mxu0 0.0
        %v1164 = vand.u32 %v1035, 4294901760
        %v1165 = vsub.f32 %v1035, %v1164
        %v1166 = vand.u32 %v1165, 4294901760
        %v1167 = vsub.f32 %v1165, %v1166
        %v1168 = vand.u32 %v1167, 4294901760
        %1169 = vmatmul.mubr.f32.gmra.mrb[0].mxu0 %v1168
        %v1170 = vpop.f32.mrb[0].mxu0
        %v1171 = vadd.f32 0.0, %v1170
        %v1172 = vpop.f32.mrb[0].mxu0
        %1173 = vdwg.mxu0
        %1174 = vmatprep.subr.mxu0 0.0
        %v1175 = vand.u32 %v1072, 4294901760
        %v1176 = vsub.f32 %v1072, %v1175
        %v1177 = vand.u32 %v1176, 4294901760
        %v1178 = vsub.f32 %v1176, %v1177
        %v1179 = vand.u32 %v1178, 4294901760
        %1180 = vmatpush1.xpose.msra.mxu0 %v1179
        %1181 = vmatprep.subr.mxu0 0.0
        %1182 = vmatpush1.xpose.msra.mxu0 0.0
        %1183 = vmatprep.subr.mxu0 0.0
        %1184 = vmatpush1.xpose.msra.mxu0 0.0
        %1185 = vmatprep.subr.mxu0 0.0
        %1186 = vmatpush1.xpose.msra.mxu0 0.0
        %1187 = vmatprep.subr.mxu0 0.0
        %1188 = vmatpush1.xpose.msra.mxu0 0.0
        %1189 = vmatprep.subr.mxu0 0.0
        %1190 = vmatpush1.xpose.msra.mxu0 0.0
        %1191 = vmatprep.subr.mxu0 0.0
        %1192 = vmatpush1.xpose.msra.mxu0 0.0
        %1193 = vmatprep.subr.mxu0 0.0
        %1194 = vmatpush1.xpose.msra.mxu0 0.0
        %1195 = vmatprep.subr.mxu0 0.0
        %1196 = vmatpush1.xpose.msra.mxu0 0.0
        %1197 = vmatprep.subr.mxu0 0.0
        %1198 = vmatpush1.xpose.msra.mxu0 0.0
        %1199 = vmatprep.subr.mxu0 0.0
        %1200 = vmatpush1.xpose.msra.mxu0 0.0
        %1201 = vmatprep.subr.mxu0 0.0
        %1202 = vmatpush1.xpose.msra.mxu0 0.0
        %1203 = vmatprep.subr.mxu0 0.0
        %1204 = vmatpush1.xpose.msra.mxu0 0.0
        %1205 = vmatprep.subr.mxu0 0.0
        %1206 = vmatpush1.xpose.msra.mxu0 0.0
        %1207 = vmatprep.subr.mxu0 0.0
        %1208 = vmatpush1.xpose.msra.mxu0 0.0
        %1209 = vmatprep.subr.mxu0 0.0
        %1210 = vmatpush1.xpose.msra.mxu0 0.0
        %1211 = vmatprep.subr.mxu0 0.0
        %1212 = vmatpush1.xpose.msra.mxu0 0.0
        %1213 = vmatprep.subr.mxu0 0.0
        %1214 = vmatpush1.xpose.msra.mxu0 0.0
        %1215 = vmatprep.subr.mxu0 0.0
        %1216 = vmatpush1.xpose.msra.mxu0 0.0
        %1217 = vmatprep.subr.mxu0 0.0
        %1218 = vmatpush1.xpose.msra.mxu0 0.0
        %1219 = vmatprep.subr.mxu0 0.0
        %1220 = vmatpush1.xpose.msra.mxu0 0.0
        %1221 = vmatprep.subr.mxu0 0.0
        %1222 = vmatpush1.xpose.msra.mxu0 0.0
        %1223 = vmatprep.subr.mxu0 0.0
        %1224 = vmatpush1.xpose.msra.mxu0 0.0
        %1225 = vmatprep.subr.mxu0 0.0
        %1226 = vmatpush1.xpose.msra.mxu0 0.0
        %1227 = vmatprep.subr.mxu0 0.0
        %1228 = vmatpush1.xpose.msra.mxu0 0.0
        %1229 = vmatprep.subr.mxu0 0.0
        %1230 = vmatpush1.xpose.msra.mxu0 0.0
        %1231 = vmatprep.subr.mxu0 0.0
        %1232 = vmatpush1.xpose.msra.mxu0 0.0
        %1233 = vmatprep.subr.mxu0 0.0
        %1234 = vmatpush1.xpose.msra.mxu0 0.0
        %1235 = vmatprep.subr.mxu0 0.0
        %1236 = vmatpush1.xpose.msra.mxu0 0.0
        %1237 = vmatprep.subr.mxu0 0.0
        %1238 = vmatpush1.xpose.msra.mxu0 0.0
        %1239 = vmatprep.subr.mxu0 0.0
        %1240 = vmatpush1.xpose.msra.mxu0 0.0
        %1241 = vmatprep.subr.mxu0 0.0
        %1242 = vmatpush1.xpose.msra.mxu0 0.0
        %1243 = vmatprep.mubr.f32.mxu0 0.0
        %v1244 = vand.u32 %v1035, 4294901760
        %1245 = vmatmul.mubr.f32.gmra.mrb[0].mxu0 %v1244
        %v1246 = vpop.f32.mrb[0].mxu0
        %v1247 = vadd.f32 %v1171, %v1246
        %v1248 = vpop.f32.mrb[0].mxu0
        %1249 = vdwg.mxu0
        %1250 = vmatprep.subr.mxu0 0.0
        %v1251 = vand.u32 %v1072, 4294901760
        %v1252 = vsub.f32 %v1072, %v1251
        %1253 = vmatpush1.xpose.msra.mxu0 %v1252
        %1254 = vmatprep.subr.mxu0 0.0
        %1255 = vmatpush1.xpose.msra.mxu0 0.0
        %1256 = vmatprep.subr.mxu0 0.0
        %1257 = vmatpush1.xpose.msra.mxu0 0.0
        %1258 = vmatprep.subr.mxu0 0.0
        %1259 = vmatpush1.xpose.msra.mxu0 0.0
        %1260 = vmatprep.subr.mxu0 0.0
        %1261 = vmatpush1.xpose.msra.mxu0 0.0
        %1262 = vmatprep.subr.mxu0 0.0
        %1263 = vmatpush1.xpose.msra.mxu0 0.0
        %1264 = vmatprep.subr.mxu0 0.0
        %1265 = vmatpush1.xpose.msra.mxu0 0.0
        %1266 = vmatprep.subr.mxu0 0.0
        %1267 = vmatpush1.xpose.msra.mxu0 0.0
        %1268 = vmatprep.subr.mxu0 0.0
        %1269 = vmatpush1.xpose.msra.mxu0 0.0
        %1270 = vmatprep.subr.mxu0 0.0
        %1271 = vmatpush1.xpose.msra.mxu0 0.0
        %1272 = vmatprep.subr.mxu0 0.0
        %1273 = vmatpush1.xpose.msra.mxu0 0.0
        %1274 = vmatprep.subr.mxu0 0.0
        %1275 = vmatpush1.xpose.msra.mxu0 0.0
        %1276 = vmatprep.subr.mxu0 0.0
        %1277 = vmatpush1.xpose.msra.mxu0 0.0
        %1278 = vmatprep.subr.mxu0 0.0
        %1279 = vmatpush1.xpose.msra.mxu0 0.0
        %1280 = vmatprep.subr.mxu0 0.0
        %1281 = vmatpush1.xpose.msra.mxu0 0.0
        %1282 = vmatprep.subr.mxu0 0.0
        %1283 = vmatpush1.xpose.msra.mxu0 0.0
        %1284 = vmatprep.subr.mxu0 0.0
        %1285 = vmatpush1.xpose.msra.mxu0 0.0
        %1286 = vmatprep.subr.mxu0 0.0
        %1287 = vmatpush1.xpose.msra.mxu0 0.0
        %1288 = vmatprep.subr.mxu0 0.0
        %1289 = vmatpush1.xpose.msra.mxu0 0.0
        %1290 = vmatprep.subr.mxu0 0.0
        %1291 = vmatpush1.xpose.msra.mxu0 0.0
        %1292 = vmatprep.subr.mxu0 0.0
        %1293 = vmatpush1.xpose.msra.mxu0 0.0
        %1294 = vmatprep.subr.mxu0 0.0
        %1295 = vmatpush1.xpose.msra.mxu0 0.0
        %1296 = vmatprep.subr.mxu0 0.0
        %1297 = vmatpush1.xpose.msra.mxu0 0.0
        %1298 = vmatprep.subr.mxu0 0.0
        %1299 = vmatpush1.xpose.msra.mxu0 0.0
        %1300 = vmatprep.subr.mxu0 0.0
        %1301 = vmatpush1.xpose.msra.mxu0 0.0
        %1302 = vmatprep.subr.mxu0 0.0
        %1303 = vmatpush1.xpose.msra.mxu0 0.0
        %1304 = vmatprep.subr.mxu0 0.0
        %1305 = vmatpush1.xpose.msra.mxu0 0.0
        %1306 = vmatprep.subr.mxu0 0.0
        %1307 = vmatpush1.xpose.msra.mxu0 0.0
        %1308 = vmatprep.subr.mxu0 0.0
        %1309 = vmatpush1.xpose.msra.mxu0 0.0
        %1310 = vmatprep.subr.mxu0 0.0
        %1311 = vmatpush1.xpose.msra.mxu0 0.0
        %1312 = vmatprep.subr.mxu0 0.0
        %1313 = vmatpush1.xpose.msra.mxu0 0.0
        %1314 = vmatprep.subr.mxu0 0.0
        %1315 = vmatpush1.xpose.msra.mxu0 0.0
        %1316 = vmatprep.mubr.f32.mxu0 0.0
        %v1317 = vand.u32 %v1035, 4294901760
        %v1318 = vsub.f32 %v1035, %v1317
        %1319 = vmatmul.mubr.f32.gmra.mrb[0].mxu0 %v1318
        %v1320 = vpop.f32.mrb[0].mxu0
        %v1321 = vadd.f32 %v1247, %v1320
        %v1322 = vpop.f32.mrb[0].mxu0
        %1323 = vdwg.mxu0
        %1324 = vmatprep.subr.mxu0 0.0
        %v1325 = vand.u32 %v1072, 4294901760
        %1326 = vmatpush1.xpose.msra.mxu0 %v1325
        %1327 = vmatprep.subr.mxu0 0.0
        %1328 = vmatpush1.xpose.msra.mxu0 0.0
        %1329 = vmatprep.subr.mxu0 0.0
        %1330 = vmatpush1.xpose.msra.mxu0 0.0
        %1331 = vmatprep.subr.mxu0 0.0
        %1332 = vmatpush1.xpose.msra.mxu0 0.0
        %1333 = vmatprep.subr.mxu0 0.0
        %1334 = vmatpush1.xpose.msra.mxu0 0.0
        %1335 = vmatprep.subr.mxu0 0.0
        %1336 = vmatpush1.xpose.msra.mxu0 0.0
        %1337 = vmatprep.subr.mxu0 0.0
        %1338 = vmatpush1.xpose.msra.mxu0 0.0
        %1339 = vmatprep.subr.mxu0 0.0
        %1340 = vmatpush1.xpose.msra.mxu0 0.0
        %1341 = vmatprep.subr.mxu0 0.0
        %1342 = vmatpush1.xpose.msra.mxu0 0.0
        %1343 = vmatprep.subr.mxu0 0.0
        %1344 = vmatpush1.xpose.msra.mxu0 0.0
        %1345 = vmatprep.subr.mxu0 0.0
        %1346 = vmatpush1.xpose.msra.mxu0 0.0
        %1347 = vmatprep.subr.mxu0 0.0
        %1348 = vmatpush1.xpose.msra.mxu0 0.0
        %1349 = vmatprep.subr.mxu0 0.0
        %1350 = vmatpush1.xpose.msra.mxu0 0.0
        %1351 = vmatprep.subr.mxu0 0.0
        %1352 = vmatpush1.xpose.msra.mxu0 0.0
        %1353 = vmatprep.subr.mxu0 0.0
        %1354 = vmatpush1.xpose.msra.mxu0 0.0
        %1355 = vmatprep.subr.mxu0 0.0
        %1356 = vmatpush1.xpose.msra.mxu0 0.0
        %1357 = vmatprep.subr.mxu0 0.0
        %1358 = vmatpush1.xpose.msra.mxu0 0.0
        %1359 = vmatprep.subr.mxu0 0.0
        %1360 = vmatpush1.xpose.msra.mxu0 0.0
        %1361 = vmatprep.subr.mxu0 0.0
        %1362 = vmatpush1.xpose.msra.mxu0 0.0
        %1363 = vmatprep.subr.mxu0 0.0
        %1364 = vmatpush1.xpose.msra.mxu0 0.0
        %1365 = vmatprep.subr.mxu0 0.0
        %1366 = vmatpush1.xpose.msra.mxu0 0.0
        %1367 = vmatprep.subr.mxu0 0.0
        %1368 = vmatpush1.xpose.msra.mxu0 0.0
        %1369 = vmatprep.subr.mxu0 0.0
        %1370 = vmatpush1.xpose.msra.mxu0 0.0
        %1371 = vmatprep.subr.mxu0 0.0
        %1372 = vmatpush1.xpose.msra.mxu0 0.0
        %1373 = vmatprep.subr.mxu0 0.0
        %1374 = vmatpush1.xpose.msra.mxu0 0.0
        %1375 = vmatprep.subr.mxu0 0.0
        %1376 = vmatpush1.xpose.msra.mxu0 0.0
        %1377 = vmatprep.subr.mxu0 0.0
        %1378 = vmatpush1.xpose.msra.mxu0 0.0
        %1379 = vmatprep.subr.mxu0 0.0
        %1380 = vmatpush1.xpose.msra.mxu0 0.0
        %1381 = vmatprep.subr.mxu0 0.0
        %1382 = vmatpush1.xpose.msra.mxu0 0.0
        %1383 = vmatprep.subr.mxu0 0.0
        %1384 = vmatpush1.xpose.msra.mxu0 0.0
        %1385 = vmatprep.subr.mxu0 0.0
        %1386 = vmatpush1.xpose.msra.mxu0 0.0
        %1387 = vmatprep.subr.mxu0 0.0
        %1388 = vmatpush1.xpose.msra.mxu0 0.0
        %1389 = vmatprep.mubr.f32.mxu0 0.0
        %v1390 = vand.u32 %v1035, 4294901760
        %v1391 = vsub.f32 %v1035, %v1390
        %v1392 = vand.u32 %v1391, 4294901760
        %1393 = vmatmul.mubr.f32.gmra.mrb[0].mxu0 %v1392
        %v1394 = vpop.f32.mrb[0].mxu0
        %v1395 = vadd.f32 %v1321, %v1394
        %v1396 = vpop.f32.mrb[0].mxu0
        %1397 = vdwg.mxu0
        %1398 = vmatprep.subr.mxu0 0.0
        %v1399 = vand.u32 %v1072, 4294901760
        %v1400 = vsub.f32 %v1072, %v1399
        %v1401 = vand.u32 %v1400, 4294901760
        %1402 = vmatpush1.xpose.msra.mxu0 %v1401
        %1403 = vmatprep.subr.mxu0 0.0
        %1404 = vmatpush1.xpose.msra.mxu0 0.0
        %1405 = vmatprep.subr.mxu0 0.0
        %1406 = vmatpush1.xpose.msra.mxu0 0.0
        %1407 = vmatprep.subr.mxu0 0.0
        %1408 = vmatpush1.xpose.msra.mxu0 0.0
        %1409 = vmatprep.subr.mxu0 0.0
        %1410 = vmatpush1.xpose.msra.mxu0 0.0
        %1411 = vmatprep.subr.mxu0 0.0
        %1412 = vmatpush1.xpose.msra.mxu0 0.0
        %1413 = vmatprep.subr.mxu0 0.0
        %1414 = vmatpush1.xpose.msra.mxu0 0.0
        %1415 = vmatprep.subr.mxu0 0.0
        %1416 = vmatpush1.xpose.msra.mxu0 0.0
        %1417 = vmatprep.subr.mxu0 0.0
        %1418 = vmatpush1.xpose.msra.mxu0 0.0
        %1419 = vmatprep.subr.mxu0 0.0
        %1420 = vmatpush1.xpose.msra.mxu0 0.0
        %1421 = vmatprep.subr.mxu0 0.0
        %1422 = vmatpush1.xpose.msra.mxu0 0.0
        %1423 = vmatprep.subr.mxu0 0.0
        %1424 = vmatpush1.xpose.msra.mxu0 0.0
        %1425 = vmatprep.subr.mxu0 0.0
        %1426 = vmatpush1.xpose.msra.mxu0 0.0
        %1427 = vmatprep.subr.mxu0 0.0
        %1428 = vmatpush1.xpose.msra.mxu0 0.0
        %1429 = vmatprep.subr.mxu0 0.0
        %1430 = vmatpush1.xpose.msra.mxu0 0.0
        %1431 = vmatprep.subr.mxu0 0.0
        %1432 = vmatpush1.xpose.msra.mxu0 0.0
        %1433 = vmatprep.subr.mxu0 0.0
        %1434 = vmatpush1.xpose.msra.mxu0 0.0
        %1435 = vmatprep.subr.mxu0 0.0
        %1436 = vmatpush1.xpose.msra.mxu0 0.0
        %1437 = vmatprep.subr.mxu0 0.0
        %1438 = vmatpush1.xpose.msra.mxu0 0.0
        %1439 = vmatprep.subr.mxu0 0.0
        %1440 = vmatpush1.xpose.msra.mxu0 0.0
        %1441 = vmatprep.subr.mxu0 0.0
        %1442 = vmatpush1.xpose.msra.mxu0 0.0
        %1443 = vmatprep.subr.mxu0 0.0
        %1444 = vmatpush1.xpose.msra.mxu0 0.0
        %1445 = vmatprep.subr.mxu0 0.0
        %1446 = vmatpush1.xpose.msra.mxu0 0.0
        %1447 = vmatprep.subr.mxu0 0.0
        %1448 = vmatpush1.xpose.msra.mxu0 0.0
        %1449 = vmatprep.subr.mxu0 0.0
        %1450 = vmatpush1.xpose.msra.mxu0 0.0
        %1451 = vmatprep.subr.mxu0 0.0
        %1452 = vmatpush1.xpose.msra.mxu0 0.0
        %1453 = vmatprep.subr.mxu0 0.0
        %1454 = vmatpush1.xpose.msra.mxu0 0.0
        %1455 = vmatprep.subr.mxu0 0.0
        %1456 = vmatpush1.xpose.msra.mxu0 0.0
        %1457 = vmatprep.subr.mxu0 0.0
        %1458 = vmatpush1.xpose.msra.mxu0 0.0
        %1459 = vmatprep.subr.mxu0 0.0
        %1460 = vmatpush1.xpose.msra.mxu0 0.0
        %1461 = vmatprep.subr.mxu0 0.0
        %1462 = vmatpush1.xpose.msra.mxu0 0.0
        %1463 = vmatprep.subr.mxu0 0.0
        %1464 = vmatpush1.xpose.msra.mxu0 0.0
        %1465 = vmatprep.mubr.f32.mxu0 0.0
        %v1466 = vand.u32 %v1035, 4294901760
        %1467 = vmatmul.mubr.f32.gmra.mrb[0].mxu0 %v1466
        %v1468 = vpop.f32.mrb[0].mxu0
        %v1469 = vadd.f32 %v1395, %v1468
        %v1470 = vpop.f32.mrb[0].mxu0
        %1471 = vdwg.mxu0
        %1472 = vmatprep.subr.mxu0 0.0
        %v1473 = vand.u32 %v1072, 4294901760
        %1474 = vmatpush1.xpose.msra.mxu0 %v1473
        %1475 = vmatprep.subr.mxu0 0.0
        %1476 = vmatpush1.xpose.msra.mxu0 0.0
        %1477 = vmatprep.subr.mxu0 0.0
        %1478 = vmatpush1.xpose.msra.mxu0 0.0
        %1479 = vmatprep.subr.mxu0 0.0
        %1480 = vmatpush1.xpose.msra.mxu0 0.0
        %1481 = vmatprep.subr.mxu0 0.0
        %1482 = vmatpush1.xpose.msra.mxu0 0.0
        %1483 = vmatprep.subr.mxu0 0.0
        %1484 = vmatpush1.xpose.msra.mxu0 0.0
        %1485 = vmatprep.subr.mxu0 0.0
        %1486 = vmatpush1.xpose.msra.mxu0 0.0
        %1487 = vmatprep.subr.mxu0 0.0
        %1488 = vmatpush1.xpose.msra.mxu0 0.0
        %1489 = vmatprep.subr.mxu0 0.0
        %1490 = vmatpush1.xpose.msra.mxu0 0.0
        %1491 = vmatprep.subr.mxu0 0.0
        %1492 = vmatpush1.xpose.msra.mxu0 0.0
        %1493 = vmatprep.subr.mxu0 0.0
        %1494 = vmatpush1.xpose.msra.mxu0 0.0
        %1495 = vmatprep.subr.mxu0 0.0
        %1496 = vmatpush1.xpose.msra.mxu0 0.0
        %1497 = vmatprep.subr.mxu0 0.0
        %1498 = vmatpush1.xpose.msra.mxu0 0.0
        %1499 = vmatprep.subr.mxu0 0.0
        %1500 = vmatpush1.xpose.msra.mxu0 0.0
        %1501 = vmatprep.subr.mxu0 0.0
        %1502 = vmatpush1.xpose.msra.mxu0 0.0
        %1503 = vmatprep.subr.mxu0 0.0
        %1504 = vmatpush1.xpose.msra.mxu0 0.0
        %1505 = vmatprep.subr.mxu0 0.0
        %1506 = vmatpush1.xpose.msra.mxu0 0.0
        %1507 = vmatprep.subr.mxu0 0.0
        %1508 = vmatpush1.xpose.msra.mxu0 0.0
        %1509 = vmatprep.subr.mxu0 0.0
        %1510 = vmatpush1.xpose.msra.mxu0 0.0
        %1511 = vmatprep.subr.mxu0 0.0
        %1512 = vmatpush1.xpose.msra.mxu0 0.0
        %1513 = vmatprep.subr.mxu0 0.0
        %1514 = vmatpush1.xpose.msra.mxu0 0.0
        %1515 = vmatprep.subr.mxu0 0.0
        %1516 = vmatpush1.xpose.msra.mxu0 0.0
        %1517 = vmatprep.subr.mxu0 0.0
        %1518 = vmatpush1.xpose.msra.mxu0 0.0
        %1519 = vmatprep.subr.mxu0 0.0
        %1520 = vmatpush1.xpose.msra.mxu0 0.0
        %1521 = vmatprep.subr.mxu0 0.0
        %1522 = vmatpush1.xpose.msra.mxu0 0.0
        %1523 = vmatprep.subr.mxu0 0.0
        %1524 = vmatpush1.xpose.msra.mxu0 0.0
        %1525 = vmatprep.subr.mxu0 0.0
        %1526 = vmatpush1.xpose.msra.mxu0 0.0
        %1527 = vmatprep.subr.mxu0 0.0
        %1528 = vmatpush1.xpose.msra.mxu0 0.0
        %1529 = vmatprep.subr.mxu0 0.0
        %1530 = vmatpush1.xpose.msra.mxu0 0.0
        %1531 = vmatprep.subr.mxu0 0.0
        %1532 = vmatpush1.xpose.msra.mxu0 0.0
        %1533 = vmatprep.subr.mxu0 0.0
        %1534 = vmatpush1.xpose.msra.mxu0 0.0
        %1535 = vmatprep.subr.mxu0 0.0
        %1536 = vmatpush1.xpose.msra.mxu0 0.0
        %1537 = vmatprep.mubr.f32.mxu0 0.0
        %v1538 = vand.u32 %v1035, 4294901760
        %1539 = vmatmul.mubr.f32.gmra.mrb[0].mxu0 %v1538
        %v1540 = vpop.f32.mrb[0].mxu0
        %v1541 = vadd.f32 %v1469, %v1540
        %v1542 = vpop.f32.mrb[0].mxu0
        %1543 = vdwg.mxu0
        %v1544 = vadd.f32 %v1097, %v1541
        %vm1545 = vcmask 64512
        %1546 = vst.msk [vmem:[%s213] sm:$0xff] %vm1545, %v1544
        %v1547 = vld [vmem:[%s213 + $0x8] sm:$0xff]
        %1548 = vmatprep.subr.mxu0 0.0
        %v1549 = vand.u32 %v1073, 4294901760
        %1550 = vmatpush1.xpose.msra.mxu0 %v1549
        %1551 = vmatprep.subr.mxu0 0.0
        %1552 = vmatpush1.xpose.msra.mxu0 0.0
        %1553 = vmatprep.subr.mxu0 0.0
        %1554 = vmatpush1.xpose.msra.mxu0 0.0
        %1555 = vmatprep.subr.mxu0 0.0
        %1556 = vmatpush1.xpose.msra.mxu0 0.0
        %1557 = vmatprep.subr.mxu0 0.0
        %1558 = vmatpush1.xpose.msra.mxu0 0.0
        %1559 = vmatprep.subr.mxu0 0.0
        %1560 = vmatpush1.xpose.msra.mxu0 0.0
        %1561 = vmatprep.subr.mxu0 0.0
        %1562 = vmatpush1.xpose.msra.mxu0 0.0
        %1563 = vmatprep.subr.mxu0 0.0
        %1564 = vmatpush1.xpose.msra.mxu0 0.0
        %1565 = vmatprep.subr.mxu0 0.0
        %1566 = vmatpush1.xpose.msra.mxu0 0.0
        %1567 = vmatprep.subr.mxu0 0.0
        %1568 = vmatpush1.xpose.msra.mxu0 0.0
        %1569 = vmatprep.subr.mxu0 0.0
        %1570 = vmatpush1.xpose.msra.mxu0 0.0
        %1571 = vmatprep.subr.mxu0 0.0
        %1572 = vmatpush1.xpose.msra.mxu0 0.0
        %1573 = vmatprep.subr.mxu0 0.0
        %1574 = vmatpush1.xpose.msra.mxu0 0.0
        %1575 = vmatprep.subr.mxu0 0.0
        %1576 = vmatpush1.xpose.msra.mxu0 0.0
        %1577 = vmatprep.subr.mxu0 0.0
        %1578 = vmatpush1.xpose.msra.mxu0 0.0
        %1579 = vmatprep.subr.mxu0 0.0
        %1580 = vmatpush1.xpose.msra.mxu0 0.0
        %1581 = vmatprep.subr.mxu0 0.0
        %1582 = vmatpush1.xpose.msra.mxu0 0.0
        %1583 = vmatprep.subr.mxu0 0.0
        %1584 = vmatpush1.xpose.msra.mxu0 0.0
        %1585 = vmatprep.subr.mxu0 0.0
        %1586 = vmatpush1.xpose.msra.mxu0 0.0
        %1587 = vmatprep.subr.mxu0 0.0
        %1588 = vmatpush1.xpose.msra.mxu0 0.0
        %1589 = vmatprep.subr.mxu0 0.0
        %1590 = vmatpush1.xpose.msra.mxu0 0.0
        %1591 = vmatprep.subr.mxu0 0.0
        %1592 = vmatpush1.xpose.msra.mxu0 0.0
        %1593 = vmatprep.subr.mxu0 0.0
        %1594 = vmatpush1.xpose.msra.mxu0 0.0
        %1595 = vmatprep.subr.mxu0 0.0
        %1596 = vmatpush1.xpose.msra.mxu0 0.0
        %1597 = vmatprep.subr.mxu0 0.0
        %1598 = vmatpush1.xpose.msra.mxu0 0.0
        %1599 = vmatprep.subr.mxu0 0.0
        %1600 = vmatpush1.xpose.msra.mxu0 0.0
        %1601 = vmatprep.subr.mxu0 0.0
        %1602 = vmatpush1.xpose.msra.mxu0 0.0
        %1603 = vmatprep.subr.mxu0 0.0
        %1604 = vmatpush1.xpose.msra.mxu0 0.0
        %1605 = vmatprep.subr.mxu0 0.0
        %1606 = vmatpush1.xpose.msra.mxu0 0.0
        %1607 = vmatprep.subr.mxu0 0.0
        %1608 = vmatpush1.xpose.msra.mxu0 0.0
        %1609 = vmatprep.subr.mxu0 0.0
        %1610 = vmatpush1.xpose.msra.mxu0 0.0
        %1611 = vmatprep.subr.mxu0 0.0
        %1612 = vmatpush1.xpose.msra.mxu0 0.0
        %1613 = vmatprep.mubr.f32.mxu0 0.0
        %v1614 = vand.u32 %v1041, 4294901760
        %v1615 = vsub.f32 %v1041, %v1614
        %v1616 = vand.u32 %v1615, 4294901760
        %v1617 = vsub.f32 %v1615, %v1616
        %v1618 = vand.u32 %v1617, 4294901760
        %1619 = vmatmul.mubr.f32.gmra.mrb[0].mxu0 %v1618
        %v1620 = vpop.f32.mrb[0].mxu0
        %v1621 = vadd.f32 0.0, %v1620
        %v1622 = vpop.f32.mrb[0].mxu0
        %1623 = vdwg.mxu0
        %1624 = vmatprep.subr.mxu0 0.0
        %v1625 = vand.u32 %v1073, 4294901760
        %v1626 = vsub.f32 %v1073, %v1625
        %v1627 = vand.u32 %v1626, 4294901760
        %v1628 = vsub.f32 %v1626, %v1627
        %v1629 = vand.u32 %v1628, 4294901760
        %1630 = vmatpush1.xpose.msra.mxu0 %v1629
        %1631 = vmatprep.subr.mxu0 0.0
        %1632 = vmatpush1.xpose.msra.mxu0 0.0
        %1633 = vmatprep.subr.mxu0 0.0
        %1634 = vmatpush1.xpose.msra.mxu0 0.0
        %1635 = vmatprep.subr.mxu0 0.0
        %1636 = vmatpush1.xpose.msra.mxu0 0.0
        %1637 = vmatprep.subr.mxu0 0.0
        %1638 = vmatpush1.xpose.msra.mxu0 0.0
        %1639 = vmatprep.subr.mxu0 0.0
        %1640 = vmatpush1.xpose.msra.mxu0 0.0
        %1641 = vmatprep.subr.mxu0 0.0
        %1642 = vmatpush1.xpose.msra.mxu0 0.0
        %1643 = vmatprep.subr.mxu0 0.0
        %1644 = vmatpush1.xpose.msra.mxu0 0.0
        %1645 = vmatprep.subr.mxu0 0.0
        %1646 = vmatpush1.xpose.msra.mxu0 0.0
        %1647 = vmatprep.subr.mxu0 0.0
        %1648 = vmatpush1.xpose.msra.mxu0 0.0
        %1649 = vmatprep.subr.mxu0 0.0
        %1650 = vmatpush1.xpose.msra.mxu0 0.0
        %1651 = vmatprep.subr.mxu0 0.0
        %1652 = vmatpush1.xpose.msra.mxu0 0.0
        %1653 = vmatprep.subr.mxu0 0.0
        %1654 = vmatpush1.xpose.msra.mxu0 0.0
        %1655 = vmatprep.subr.mxu0 0.0
        %1656 = vmatpush1.xpose.msra.mxu0 0.0
        %1657 = vmatprep.subr.mxu0 0.0
        %1658 = vmatpush1.xpose.msra.mxu0 0.0
        %1659 = vmatprep.subr.mxu0 0.0
        %1660 = vmatpush1.xpose.msra.mxu0 0.0
        %1661 = vmatprep.subr.mxu0 0.0
        %1662 = vmatpush1.xpose.msra.mxu0 0.0
        %1663 = vmatprep.subr.mxu0 0.0
        %1664 = vmatpush1.xpose.msra.mxu0 0.0
        %1665 = vmatprep.subr.mxu0 0.0
        %1666 = vmatpush1.xpose.msra.mxu0 0.0
        %1667 = vmatprep.subr.mxu0 0.0
        %1668 = vmatpush1.xpose.msra.mxu0 0.0
        %1669 = vmatprep.subr.mxu0 0.0
        %1670 = vmatpush1.xpose.msra.mxu0 0.0
        %1671 = vmatprep.subr.mxu0 0.0
        %1672 = vmatpush1.xpose.msra.mxu0 0.0
        %1673 = vmatprep.subr.mxu0 0.0
        %1674 = vmatpush1.xpose.msra.mxu0 0.0
        %1675 = vmatprep.subr.mxu0 0.0
        %1676 = vmatpush1.xpose.msra.mxu0 0.0
        %1677 = vmatprep.subr.mxu0 0.0
        %1678 = vmatpush1.xpose.msra.mxu0 0.0
        %1679 = vmatprep.subr.mxu0 0.0
        %1680 = vmatpush1.xpose.msra.mxu0 0.0
        %1681 = vmatprep.subr.mxu0 0.0
        %1682 = vmatpush1.xpose.msra.mxu0 0.0
        %1683 = vmatprep.subr.mxu0 0.0
        %1684 = vmatpush1.xpose.msra.mxu0 0.0
        %1685 = vmatprep.subr.mxu0 0.0
        %1686 = vmatpush1.xpose.msra.mxu0 0.0
        %1687 = vmatprep.subr.mxu0 0.0
        %1688 = vmatpush1.xpose.msra.mxu0 0.0
        %1689 = vmatprep.subr.mxu0 0.0
        %1690 = vmatpush1.xpose.msra.mxu0 0.0
        %1691 = vmatprep.subr.mxu0 0.0
        %1692 = vmatpush1.xpose.msra.mxu0 0.0
        %1693 = vmatprep.mubr.f32.mxu0 0.0
        %v1694 = vand.u32 %v1041, 4294901760
        %1695 = vmatmul.mubr.f32.gmra.mrb[0].mxu0 %v1694
        %v1696 = vpop.f32.mrb[0].mxu0
        %v1697 = vadd.f32 %v1621, %v1696
        %v1698 = vpop.f32.mrb[0].mxu0
        %1699 = vdwg.mxu0
        %1700 = vmatprep.subr.mxu0 0.0
        %v1701 = vand.u32 %v1073, 4294901760
        %v1702 = vsub.f32 %v1073, %v1701
        %1703 = vmatpush1.xpose.msra.mxu0 %v1702
        %1704 = vmatprep.subr.mxu0 0.0
        %1705 = vmatpush1.xpose.msra.mxu0 0.0
        %1706 = vmatprep.subr.mxu0 0.0
        %1707 = vmatpush1.xpose.msra.mxu0 0.0
        %1708 = vmatprep.subr.mxu0 0.0
        %1709 = vmatpush1.xpose.msra.mxu0 0.0
        %1710 = vmatprep.subr.mxu0 0.0
        %1711 = vmatpush1.xpose.msra.mxu0 0.0
        %1712 = vmatprep.subr.mxu0 0.0
        %1713 = vmatpush1.xpose.msra.mxu0 0.0
        %1714 = vmatprep.subr.mxu0 0.0
        %1715 = vmatpush1.xpose.msra.mxu0 0.0
        %1716 = vmatprep.subr.mxu0 0.0
        %1717 = vmatpush1.xpose.msra.mxu0 0.0
        %1718 = vmatprep.subr.mxu0 0.0
        %1719 = vmatpush1.xpose.msra.mxu0 0.0
        %1720 = vmatprep.subr.mxu0 0.0
        %1721 = vmatpush1.xpose.msra.mxu0 0.0
        %1722 = vmatprep.subr.mxu0 0.0
        %1723 = vmatpush1.xpose.msra.mxu0 0.0
        %1724 = vmatprep.subr.mxu0 0.0
        %1725 = vmatpush1.xpose.msra.mxu0 0.0
        %1726 = vmatprep.subr.mxu0 0.0
        %1727 = vmatpush1.xpose.msra.mxu0 0.0
        %1728 = vmatprep.subr.mxu0 0.0
        %1729 = vmatpush1.xpose.msra.mxu0 0.0
        %1730 = vmatprep.subr.mxu0 0.0
        %1731 = vmatpush1.xpose.msra.mxu0 0.0
        %1732 = vmatprep.subr.mxu0 0.0
        %1733 = vmatpush1.xpose.msra.mxu0 0.0
        %1734 = vmatprep.subr.mxu0 0.0
        %1735 = vmatpush1.xpose.msra.mxu0 0.0
        %1736 = vmatprep.subr.mxu0 0.0
        %1737 = vmatpush1.xpose.msra.mxu0 0.0
        %1738 = vmatprep.subr.mxu0 0.0
        %1739 = vmatpush1.xpose.msra.mxu0 0.0
        %1740 = vmatprep.subr.mxu0 0.0
        %1741 = vmatpush1.xpose.msra.mxu0 0.0
        %1742 = vmatprep.subr.mxu0 0.0
        %1743 = vmatpush1.xpose.msra.mxu0 0.0
        %1744 = vmatprep.subr.mxu0 0.0
        %1745 = vmatpush1.xpose.msra.mxu0 0.0
        %1746 = vmatprep.subr.mxu0 0.0
        %1747 = vmatpush1.xpose.msra.mxu0 0.0
        %1748 = vmatprep.subr.mxu0 0.0
        %1749 = vmatpush1.xpose.msra.mxu0 0.0
        %1750 = vmatprep.subr.mxu0 0.0
        %1751 = vmatpush1.xpose.msra.mxu0 0.0
        %1752 = vmatprep.subr.mxu0 0.0
        %1753 = vmatpush1.xpose.msra.mxu0 0.0
        %1754 = vmatprep.subr.mxu0 0.0
        %1755 = vmatpush1.xpose.msra.mxu0 0.0
        %1756 = vmatprep.subr.mxu0 0.0
        %1757 = vmatpush1.xpose.msra.mxu0 0.0
        %1758 = vmatprep.subr.mxu0 0.0
        %1759 = vmatpush1.xpose.msra.mxu0 0.0
        %1760 = vmatprep.subr.mxu0 0.0
        %1761 = vmatpush1.xpose.msra.mxu0 0.0
        %1762 = vmatprep.subr.mxu0 0.0
        %1763 = vmatpush1.xpose.msra.mxu0 0.0
        %1764 = vmatprep.subr.mxu0 0.0
        %1765 = vmatpush1.xpose.msra.mxu0 0.0
        %1766 = vmatprep.mubr.f32.mxu0 0.0
        %v1767 = vand.u32 %v1041, 4294901760
        %v1768 = vsub.f32 %v1041, %v1767
        %1769 = vmatmul.mubr.f32.gmra.mrb[0].mxu0 %v1768
        %v1770 = vpop.f32.mrb[0].mxu0
        %v1771 = vadd.f32 %v1697, %v1770
        %v1772 = vpop.f32.mrb[0].mxu0
        %1773 = vdwg.mxu0
        %1774 = vmatprep.subr.mxu0 0.0
        %v1775 = vand.u32 %v1073, 4294901760
        %1776 = vmatpush1.xpose.msra.mxu0 %v1775
        %1777 = vmatprep.subr.mxu0 0.0
        %1778 = vmatpush1.xpose.msra.mxu0 0.0
        %1779 = vmatprep.subr.mxu0 0.0
        %1780 = vmatpush1.xpose.msra.mxu0 0.0
        %1781 = vmatprep.subr.mxu0 0.0
        %1782 = vmatpush1.xpose.msra.mxu0 0.0
        %1783 = vmatprep.subr.mxu0 0.0
        %1784 = vmatpush1.xpose.msra.mxu0 0.0
        %1785 = vmatprep.subr.mxu0 0.0
        %1786 = vmatpush1.xpose.msra.mxu0 0.0
        %1787 = vmatprep.subr.mxu0 0.0
        %1788 = vmatpush1.xpose.msra.mxu0 0.0
        %1789 = vmatprep.subr.mxu0 0.0
        %1790 = vmatpush1.xpose.msra.mxu0 0.0
        %1791 = vmatprep.subr.mxu0 0.0
        %1792 = vmatpush1.xpose.msra.mxu0 0.0
        %1793 = vmatprep.subr.mxu0 0.0
        %1794 = vmatpush1.xpose.msra.mxu0 0.0
        %1795 = vmatprep.subr.mxu0 0.0
        %1796 = vmatpush1.xpose.msra.mxu0 0.0
        %1797 = vmatprep.subr.mxu0 0.0
        %1798 = vmatpush1.xpose.msra.mxu0 0.0
        %1799 = vmatprep.subr.mxu0 0.0
        %1800 = vmatpush1.xpose.msra.mxu0 0.0
        %1801 = vmatprep.subr.mxu0 0.0
        %1802 = vmatpush1.xpose.msra.mxu0 0.0
        %1803 = vmatprep.subr.mxu0 0.0
        %1804 = vmatpush1.xpose.msra.mxu0 0.0
        %1805 = vmatprep.subr.mxu0 0.0
        %1806 = vmatpush1.xpose.msra.mxu0 0.0
        %1807 = vmatprep.subr.mxu0 0.0
        %1808 = vmatpush1.xpose.msra.mxu0 0.0
        %1809 = vmatprep.subr.mxu0 0.0
        %1810 = vmatpush1.xpose.msra.mxu0 0.0
        %1811 = vmatprep.subr.mxu0 0.0
        %1812 = vmatpush1.xpose.msra.mxu0 0.0
        %1813 = vmatprep.subr.mxu0 0.0
        %1814 = vmatpush1.xpose.msra.mxu0 0.0
        %1815 = vmatprep.subr.mxu0 0.0
        %1816 = vmatpush1.xpose.msra.mxu0 0.0
        %1817 = vmatprep.subr.mxu0 0.0
        %1818 = vmatpush1.xpose.msra.mxu0 0.0
        %1819 = vmatprep.subr.mxu0 0.0
        %1820 = vmatpush1.xpose.msra.mxu0 0.0
        %1821 = vmatprep.subr.mxu0 0.0
        %1822 = vmatpush1.xpose.msra.mxu0 0.0
        %1823 = vmatprep.subr.mxu0 0.0
        %1824 = vmatpush1.xpose.msra.mxu0 0.0
        %1825 = vmatprep.subr.mxu0 0.0
        %1826 = vmatpush1.xpose.msra.mxu0 0.0
        %1827 = vmatprep.subr.mxu0 0.0
        %1828 = vmatpush1.xpose.msra.mxu0 0.0
        %1829 = vmatprep.subr.mxu0 0.0
        %1830 = vmatpush1.xpose.msra.mxu0 0.0
        %1831 = vmatprep.subr.mxu0 0.0
        %1832 = vmatpush1.xpose.msra.mxu0 0.0
        %1833 = vmatprep.subr.mxu0 0.0
        %1834 = vmatpush1.xpose.msra.mxu0 0.0
        %1835 = vmatprep.subr.mxu0 0.0
        %1836 = vmatpush1.xpose.msra.mxu0 0.0
        %1837 = vmatprep.subr.mxu0 0.0
        %1838 = vmatpush1.xpose.msra.mxu0 0.0
        %1839 = vmatprep.mubr.f32.mxu0 0.0
        %v1840 = vand.u32 %v1041, 4294901760
        %v1841 = vsub.f32 %v1041, %v1840
        %v1842 = vand.u32 %v1841, 4294901760
        %1843 = vmatmul.mubr.f32.gmra.mrb[0].mxu0 %v1842
        %v1844 = vpop.f32.mrb[0].mxu0
        %v1845 = vadd.f32 %v1771, %v1844
        %v1846 = vpop.f32.mrb[0].mxu0
        %1847 = vdwg.mxu0
        %1848 = vmatprep.subr.mxu0 0.0
        %v1849 = vand.u32 %v1073, 4294901760
        %v1850 = vsub.f32 %v1073, %v1849
        %v1851 = vand.u32 %v1850, 4294901760
        %1852 = vmatpush1.xpose.msra.mxu0 %v1851
        %1853 = vmatprep.subr.mxu0 0.0
        %1854 = vmatpush1.xpose.msra.mxu0 0.0
        %1855 = vmatprep.subr.mxu0 0.0
        %1856 = vmatpush1.xpose.msra.mxu0 0.0
        %1857 = vmatprep.subr.mxu0 0.0
        %1858 = vmatpush1.xpose.msra.mxu0 0.0
        %1859 = vmatprep.subr.mxu0 0.0
        %1860 = vmatpush1.xpose.msra.mxu0 0.0
        %1861 = vmatprep.subr.mxu0 0.0
        %1862 = vmatpush1.xpose.msra.mxu0 0.0
        %1863 = vmatprep.subr.mxu0 0.0
        %1864 = vmatpush1.xpose.msra.mxu0 0.0
        %1865 = vmatprep.subr.mxu0 0.0
        %1866 = vmatpush1.xpose.msra.mxu0 0.0
        %1867 = vmatprep.subr.mxu0 0.0
        %1868 = vmatpush1.xpose.msra.mxu0 0.0
        %1869 = vmatprep.subr.mxu0 0.0
        %1870 = vmatpush1.xpose.msra.mxu0 0.0
        %1871 = vmatprep.subr.mxu0 0.0
        %1872 = vmatpush1.xpose.msra.mxu0 0.0
        %1873 = vmatprep.subr.mxu0 0.0
        %1874 = vmatpush1.xpose.msra.mxu0 0.0
        %1875 = vmatprep.subr.mxu0 0.0
        %1876 = vmatpush1.xpose.msra.mxu0 0.0
        %1877 = vmatprep.subr.mxu0 0.0
        %1878 = vmatpush1.xpose.msra.mxu0 0.0
        %1879 = vmatprep.subr.mxu0 0.0
        %1880 = vmatpush1.xpose.msra.mxu0 0.0
        %1881 = vmatprep.subr.mxu0 0.0
        %1882 = vmatpush1.xpose.msra.mxu0 0.0
        %1883 = vmatprep.subr.mxu0 0.0
        %1884 = vmatpush1.xpose.msra.mxu0 0.0
        %1885 = vmatprep.subr.mxu0 0.0
        %1886 = vmatpush1.xpose.msra.mxu0 0.0
        %1887 = vmatprep.subr.mxu0 0.0
        %1888 = vmatpush1.xpose.msra.mxu0 0.0
        %1889 = vmatprep.subr.mxu0 0.0
        %1890 = vmatpush1.xpose.msra.mxu0 0.0
        %1891 = vmatprep.subr.mxu0 0.0
        %1892 = vmatpush1.xpose.msra.mxu0 0.0
        %1893 = vmatprep.subr.mxu0 0.0
        %1894 = vmatpush1.xpose.msra.mxu0 0.0
        %1895 = vmatprep.subr.mxu0 0.0
        %1896 = vmatpush1.xpose.msra.mxu0 0.0
        %1897 = vmatprep.subr.mxu0 0.0
        %1898 = vmatpush1.xpose.msra.mxu0 0.0
        %1899 = vmatprep.subr.mxu0 0.0
        %1900 = vmatpush1.xpose.msra.mxu0 0.0
        %1901 = vmatprep.subr.mxu0 0.0
        %1902 = vmatpush1.xpose.msra.mxu0 0.0
        %1903 = vmatprep.subr.mxu0 0.0
        %1904 = vmatpush1.xpose.msra.mxu0 0.0
        %1905 = vmatprep.subr.mxu0 0.0
        %1906 = vmatpush1.xpose.msra.mxu0 0.0
        %1907 = vmatprep.subr.mxu0 0.0
        %1908 = vmatpush1.xpose.msra.mxu0 0.0
        %1909 = vmatprep.subr.mxu0 0.0
        %1910 = vmatpush1.xpose.msra.mxu0 0.0
        %1911 = vmatprep.subr.mxu0 0.0
        %1912 = vmatpush1.xpose.msra.mxu0 0.0
        %1913 = vmatprep.subr.mxu0 0.0
        %1914 = vmatpush1.xpose.msra.mxu0 0.0
        %1915 = vmatprep.mubr.f32.mxu0 0.0
        %v1916 = vand.u32 %v1041, 4294901760
        %1917 = vmatmul.mubr.f32.gmra.mrb[0].mxu0 %v1916
        %v1918 = vpop.f32.mrb[0].mxu0
        %v1919 = vadd.f32 %v1845, %v1918
        %v1920 = vpop.f32.mrb[0].mxu0
        %1921 = vdwg.mxu0
        %1922 = vmatprep.subr.mxu0 0.0
        %v1923 = vand.u32 %v1073, 4294901760
        %1924 = vmatpush1.xpose.msra.mxu0 %v1923
        %1925 = vmatprep.subr.mxu0 0.0
        %1926 = vmatpush1.xpose.msra.mxu0 0.0
        %1927 = vmatprep.subr.mxu0 0.0
        %1928 = vmatpush1.xpose.msra.mxu0 0.0
        %1929 = vmatprep.subr.mxu0 0.0
        %1930 = vmatpush1.xpose.msra.mxu0 0.0
        %1931 = vmatprep.subr.mxu0 0.0
        %1932 = vmatpush1.xpose.msra.mxu0 0.0
        %1933 = vmatprep.subr.mxu0 0.0
        %1934 = vmatpush1.xpose.msra.mxu0 0.0
        %1935 = vmatprep.subr.mxu0 0.0
        %1936 = vmatpush1.xpose.msra.mxu0 0.0
        %1937 = vmatprep.subr.mxu0 0.0
        %1938 = vmatpush1.xpose.msra.mxu0 0.0
        %1939 = vmatprep.subr.mxu0 0.0
        %1940 = vmatpush1.xpose.msra.mxu0 0.0
        %1941 = vmatprep.subr.mxu0 0.0
        %1942 = vmatpush1.xpose.msra.mxu0 0.0
        %1943 = vmatprep.subr.mxu0 0.0
        %1944 = vmatpush1.xpose.msra.mxu0 0.0
        %1945 = vmatprep.subr.mxu0 0.0
        %1946 = vmatpush1.xpose.msra.mxu0 0.0
        %1947 = vmatprep.subr.mxu0 0.0
        %1948 = vmatpush1.xpose.msra.mxu0 0.0
        %1949 = vmatprep.subr.mxu0 0.0
        %1950 = vmatpush1.xpose.msra.mxu0 0.0
        %1951 = vmatprep.subr.mxu0 0.0
        %1952 = vmatpush1.xpose.msra.mxu0 0.0
        %1953 = vmatprep.subr.mxu0 0.0
        %1954 = vmatpush1.xpose.msra.mxu0 0.0
        %1955 = vmatprep.subr.mxu0 0.0
        %1956 = vmatpush1.xpose.msra.mxu0 0.0
        %1957 = vmatprep.subr.mxu0 0.0
        %1958 = vmatpush1.xpose.msra.mxu0 0.0
        %1959 = vmatprep.subr.mxu0 0.0
        %1960 = vmatpush1.xpose.msra.mxu0 0.0
        %1961 = vmatprep.subr.mxu0 0.0
        %1962 = vmatpush1.xpose.msra.mxu0 0.0
        %1963 = vmatprep.subr.mxu0 0.0
        %1964 = vmatpush1.xpose.msra.mxu0 0.0
        %1965 = vmatprep.subr.mxu0 0.0
        %1966 = vmatpush1.xpose.msra.mxu0 0.0
        %1967 = vmatprep.subr.mxu0 0.0
        %1968 = vmatpush1.xpose.msra.mxu0 0.0
        %1969 = vmatprep.subr.mxu0 0.0
        %1970 = vmatpush1.xpose.msra.mxu0 0.0
        %1971 = vmatprep.subr.mxu0 0.0
        %1972 = vmatpush1.xpose.msra.mxu0 0.0
        %1973 = vmatprep.subr.mxu0 0.0
        %1974 = vmatpush1.xpose.msra.mxu0 0.0
        %1975 = vmatprep.subr.mxu0 0.0
        %1976 = vmatpush1.xpose.msra.mxu0 0.0
        %1977 = vmatprep.subr.mxu0 0.0
        %1978 = vmatpush1.xpose.msra.mxu0 0.0
        %1979 = vmatprep.subr.mxu0 0.0
        %1980 = vmatpush1.xpose.msra.mxu0 0.0
        %1981 = vmatprep.subr.mxu0 0.0
        %1982 = vmatpush1.xpose.msra.mxu0 0.0
        %1983 = vmatprep.subr.mxu0 0.0
        %1984 = vmatpush1.xpose.msra.mxu0 0.0
        %1985 = vmatprep.subr.mxu0 0.0
        %1986 = vmatpush1.xpose.msra.mxu0 0.0
        %1987 = vmatprep.mubr.f32.mxu0 0.0
        %v1988 = vand.u32 %v1041, 4294901760
        %1989 = vmatmul.mubr.f32.gmra.mrb[0].mxu0 %v1988
        %v1990 = vpop.f32.mrb[0].mxu0
        %v1991 = vadd.f32 %v1919, %v1990
        %v1992 = vpop.f32.mrb[0].mxu0
        %1993 = vdwg.mxu0
        %v1994 = vadd.f32 %v1547, %v1991
        %1995 = vst.msk [vmem:[%s213 + $0x8] sm:$0xff] %vm1545, %v1994
        %v1996 = vld [vmem:[%s213 + $0x10] sm:$0xff]
        %1997 = vmatprep.subr.mxu0 0.0
        %v1998 = vand.u32 %v1074, 4294901760
        %1999 = vmatpush1.xpose.msra.mxu0 %v1998
        %2000 = vmatprep.subr.mxu0 0.0
        %2001 = vmatpush1.xpose.msra.mxu0 0.0
        %2002 = vmatprep.subr.mxu0 0.0
        %2003 = vmatpush1.xpose.msra.mxu0 0.0
        %2004 = vmatprep.subr.mxu0 0.0
        %2005 = vmatpush1.xpose.msra.mxu0 0.0
        %2006 = vmatprep.subr.mxu0 0.0
        %2007 = vmatpush1.xpose.msra.mxu0 0.0
        %2008 = vmatprep.subr.mxu0 0.0
        %2009 = vmatpush1.xpose.msra.mxu0 0.0
        %2010 = vmatprep.subr.mxu0 0.0
        %2011 = vmatpush1.xpose.msra.mxu0 0.0
        %2012 = vmatprep.subr.mxu0 0.0
        %2013 = vmatpush1.xpose.msra.mxu0 0.0
        %2014 = vmatprep.subr.mxu0 0.0
        %2015 = vmatpush1.xpose.msra.mxu0 0.0
        %2016 = vmatprep.subr.mxu0 0.0
        %2017 = vmatpush1.xpose.msra.mxu0 0.0
        %2018 = vmatprep.subr.mxu0 0.0
        %2019 = vmatpush1.xpose.msra.mxu0 0.0
        %2020 = vmatprep.subr.mxu0 0.0
        %2021 = vmatpush1.xpose.msra.mxu0 0.0
        %2022 = vmatprep.subr.mxu0 0.0
        %2023 = vmatpush1.xpose.msra.mxu0 0.0
        %2024 = vmatprep.subr.mxu0 0.0
        %2025 = vmatpush1.xpose.msra.mxu0 0.0
        %2026 = vmatprep.subr.mxu0 0.0
        %2027 = vmatpush1.xpose.msra.mxu0 0.0
        %2028 = vmatprep.subr.mxu0 0.0
        %2029 = vmatpush1.xpose.msra.mxu0 0.0
        %2030 = vmatprep.subr.mxu0 0.0
        %2031 = vmatpush1.xpose.msra.mxu0 0.0
        %2032 = vmatprep.subr.mxu0 0.0
        %2033 = vmatpush1.xpose.msra.mxu0 0.0
        %2034 = vmatprep.subr.mxu0 0.0
        %2035 = vmatpush1.xpose.msra.mxu0 0.0
        %2036 = vmatprep.subr.mxu0 0.0
        %2037 = vmatpush1.xpose.msra.mxu0 0.0
        %2038 = vmatprep.subr.mxu0 0.0
        %2039 = vmatpush1.xpose.msra.mxu0 0.0
        %2040 = vmatprep.subr.mxu0 0.0
        %2041 = vmatpush1.xpose.msra.mxu0 0.0
        %2042 = vmatprep.subr.mxu0 0.0
        %2043 = vmatpush1.xpose.msra.mxu0 0.0
        %2044 = vmatprep.subr.mxu0 0.0
        %2045 = vmatpush1.xpose.msra.mxu0 0.0
        %2046 = vmatprep.subr.mxu0 0.0
        %2047 = vmatpush1.xpose.msra.mxu0 0.0
        %2048 = vmatprep.subr.mxu0 0.0
        %2049 = vmatpush1.xpose.msra.mxu0 0.0
        %2050 = vmatprep.subr.mxu0 0.0
        %2051 = vmatpush1.xpose.msra.mxu0 0.0
        %2052 = vmatprep.subr.mxu0 0.0
        %2053 = vmatpush1.xpose.msra.mxu0 0.0
        %2054 = vmatprep.subr.mxu0 0.0
        %2055 = vmatpush1.xpose.msra.mxu0 0.0
        %2056 = vmatprep.subr.mxu0 0.0
        %2057 = vmatpush1.xpose.msra.mxu0 0.0
        %2058 = vmatprep.subr.mxu0 0.0
        %2059 = vmatpush1.xpose.msra.mxu0 0.0
        %2060 = vmatprep.subr.mxu0 0.0
        %2061 = vmatpush1.xpose.msra.mxu0 0.0
        %2062 = vmatprep.mubr.f32.mxu0 0.0
        %v2063 = vand.u32 %v1047, 4294901760
        %v2064 = vsub.f32 %v1047, %v2063
        %v2065 = vand.u32 %v2064, 4294901760
        %v2066 = vsub.f32 %v2064, %v2065
        %v2067 = vand.u32 %v2066, 4294901760
        %2068 = vmatmul.mubr.f32.gmra.mrb[0].mxu0 %v2067
        %v2069 = vpop.f32.mrb[0].mxu0
        %v2070 = vadd.f32 0.0, %v2069
        %v2071 = vpop.f32.mrb[0].mxu0
        %2072 = vdwg.mxu0
        %2073 = vmatprep.subr.mxu0 0.0
        %v2074 = vand.u32 %v1074, 4294901760
        %v2075 = vsub.f32 %v1074, %v2074
        %v2076 = vand.u32 %v2075, 4294901760
        %v2077 = vsub.f32 %v2075, %v2076
        %v2078 = vand.u32 %v2077, 4294901760
        %2079 = vmatpush1.xpose.msra.mxu0 %v2078
        %2080 = vmatprep.subr.mxu0 0.0
        %2081 = vmatpush1.xpose.msra.mxu0 0.0
        %2082 = vmatprep.subr.mxu0 0.0
        %2083 = vmatpush1.xpose.msra.mxu0 0.0
        %2084 = vmatprep.subr.mxu0 0.0
        %2085 = vmatpush1.xpose.msra.mxu0 0.0
        %2086 = vmatprep.subr.mxu0 0.0
        %2087 = vmatpush1.xpose.msra.mxu0 0.0
        %2088 = vmatprep.subr.mxu0 0.0
        %2089 = vmatpush1.xpose.msra.mxu0 0.0
        %2090 = vmatprep.subr.mxu0 0.0
        %2091 = vmatpush1.xpose.msra.mxu0 0.0
        %2092 = vmatprep.subr.mxu0 0.0
        %2093 = vmatpush1.xpose.msra.mxu0 0.0
        %2094 = vmatprep.subr.mxu0 0.0
        %2095 = vmatpush1.xpose.msra.mxu0 0.0
        %2096 = vmatprep.subr.mxu0 0.0
        %2097 = vmatpush1.xpose.msra.mxu0 0.0
        %2098 = vmatprep.subr.mxu0 0.0
        %2099 = vmatpush1.xpose.msra.mxu0 0.0
        %2100 = vmatprep.subr.mxu0 0.0
        %2101 = vmatpush1.xpose.msra.mxu0 0.0
        %2102 = vmatprep.subr.mxu0 0.0
        %2103 = vmatpush1.xpose.msra.mxu0 0.0
        %2104 = vmatprep.subr.mxu0 0.0
        %2105 = vmatpush1.xpose.msra.mxu0 0.0
        %2106 = vmatprep.subr.mxu0 0.0
        %2107 = vmatpush1.xpose.msra.mxu0 0.0
        %2108 = vmatprep.subr.mxu0 0.0
        %2109 = vmatpush1.xpose.msra.mxu0 0.0
        %2110 = vmatprep.subr.mxu0 0.0
        %2111 = vmatpush1.xpose.msra.mxu0 0.0
        %2112 = vmatprep.subr.mxu0 0.0
        %2113 = vmatpush1.xpose.msra.mxu0 0.0
        %2114 = vmatprep.subr.mxu0 0.0
        %2115 = vmatpush1.xpose.msra.mxu0 0.0
        %2116 = vmatprep.subr.mxu0 0.0
        %2117 = vmatpush1.xpose.msra.mxu0 0.0
        %2118 = vmatprep.subr.mxu0 0.0
        %2119 = vmatpush1.xpose.msra.mxu0 0.0
        %2120 = vmatprep.subr.mxu0 0.0
        %2121 = vmatpush1.xpose.msra.mxu0 0.0
        %2122 = vmatprep.subr.mxu0 0.0
        %2123 = vmatpush1.xpose.msra.mxu0 0.0
        %2124 = vmatprep.subr.mxu0 0.0
        %2125 = vmatpush1.xpose.msra.mxu0 0.0
        %2126 = vmatprep.subr.mxu0 0.0
        %2127 = vmatpush1.xpose.msra.mxu0 0.0
        %2128 = vmatprep.subr.mxu0 0.0
        %2129 = vmatpush1.xpose.msra.mxu0 0.0
        %2130 = vmatprep.subr.mxu0 0.0
        %2131 = vmatpush1.xpose.msra.mxu0 0.0
        %2132 = vmatprep.subr.mxu0 0.0
        %2133 = vmatpush1.xpose.msra.mxu0 0.0
        %2134 = vmatprep.subr.mxu0 0.0
        %2135 = vmatpush1.xpose.msra.mxu0 0.0
        %2136 = vmatprep.subr.mxu0 0.0
        %2137 = vmatpush1.xpose.msra.mxu0 0.0
        %2138 = vmatprep.subr.mxu0 0.0
        %2139 = vmatpush1.xpose.msra.mxu0 0.0
        %2140 = vmatprep.subr.mxu0 0.0
        %2141 = vmatpush1.xpose.msra.mxu0 0.0
        %2142 = vmatprep.mubr.f32.mxu0 0.0
        %v2143 = vand.u32 %v1047, 4294901760
        %2144 = vmatmul.mubr.f32.gmra.mrb[0].mxu0 %v2143
        %v2145 = vpop.f32.mrb[0].mxu0
        %v2146 = vadd.f32 %v2070, %v2145
        %v2147 = vpop.f32.mrb[0].mxu0
        %2148 = vdwg.mxu0
        %2149 = vmatprep.subr.mxu0 0.0
        %v2150 = vand.u32 %v1074, 4294901760
        %v2151 = vsub.f32 %v1074, %v2150
        %2152 = vmatpush1.xpose.msra.mxu0 %v2151
        %2153 = vmatprep.subr.mxu0 0.0
        %2154 = vmatpush1.xpose.msra.mxu0 0.0
        %2155 = vmatprep.subr.mxu0 0.0
        %2156 = vmatpush1.xpose.msra.mxu0 0.0
        %2157 = vmatprep.subr.mxu0 0.0
        %2158 = vmatpush1.xpose.msra.mxu0 0.0
        %2159 = vmatprep.subr.mxu0 0.0
        %2160 = vmatpush1.xpose.msra.mxu0 0.0
        %2161 = vmatprep.subr.mxu0 0.0
        %2162 = vmatpush1.xpose.msra.mxu0 0.0
        %2163 = vmatprep.subr.mxu0 0.0
        %2164 = vmatpush1.xpose.msra.mxu0 0.0
        %2165 = vmatprep.subr.mxu0 0.0
        %2166 = vmatpush1.xpose.msra.mxu0 0.0
        %2167 = vmatprep.subr.mxu0 0.0
        %2168 = vmatpush1.xpose.msra.mxu0 0.0
        %2169 = vmatprep.subr.mxu0 0.0
        %2170 = vmatpush1.xpose.msra.mxu0 0.0
        %2171 = vmatprep.subr.mxu0 0.0
        %2172 = vmatpush1.xpose.msra.mxu0 0.0
        %2173 = vmatprep.subr.mxu0 0.0
        %2174 = vmatpush1.xpose.msra.mxu0 0.0
        %2175 = vmatprep.subr.mxu0 0.0
        %2176 = vmatpush1.xpose.msra.mxu0 0.0
        %2177 = vmatprep.subr.mxu0 0.0
        %2178 = vmatpush1.xpose.msra.mxu0 0.0
        %2179 = vmatprep.subr.mxu0 0.0
        %2180 = vmatpush1.xpose.msra.mxu0 0.0
        %2181 = vmatprep.subr.mxu0 0.0
        %2182 = vmatpush1.xpose.msra.mxu0 0.0
        %2183 = vmatprep.subr.mxu0 0.0
        %2184 = vmatpush1.xpose.msra.mxu0 0.0
        %2185 = vmatprep.subr.mxu0 0.0
        %2186 = vmatpush1.xpose.msra.mxu0 0.0
        %2187 = vmatprep.subr.mxu0 0.0
        %2188 = vmatpush1.xpose.msra.mxu0 0.0
        %2189 = vmatprep.subr.mxu0 0.0
        %2190 = vmatpush1.xpose.msra.mxu0 0.0
        %2191 = vmatprep.subr.mxu0 0.0
        %2192 = vmatpush1.xpose.msra.mxu0 0.0
        %2193 = vmatprep.subr.mxu0 0.0
        %2194 = vmatpush1.xpose.msra.mxu0 0.0
        %2195 = vmatprep.subr.mxu0 0.0
        %2196 = vmatpush1.xpose.msra.mxu0 0.0
        %2197 = vmatprep.subr.mxu0 0.0
        %2198 = vmatpush1.xpose.msra.mxu0 0.0
        %2199 = vmatprep.subr.mxu0 0.0
        %2200 = vmatpush1.xpose.msra.mxu0 0.0
        %2201 = vmatprep.subr.mxu0 0.0
        %2202 = vmatpush1.xpose.msra.mxu0 0.0
        %2203 = vmatprep.subr.mxu0 0.0
        %2204 = vmatpush1.xpose.msra.mxu0 0.0
        %2205 = vmatprep.subr.mxu0 0.0
        %2206 = vmatpush1.xpose.msra.mxu0 0.0
        %2207 = vmatprep.subr.mxu0 0.0
        %2208 = vmatpush1.xpose.msra.mxu0 0.0
        %2209 = vmatprep.subr.mxu0 0.0
        %2210 = vmatpush1.xpose.msra.mxu0 0.0
        %2211 = vmatprep.subr.mxu0 0.0
        %2212 = vmatpush1.xpose.msra.mxu0 0.0
        %2213 = vmatprep.subr.mxu0 0.0
        %2214 = vmatpush1.xpose.msra.mxu0 0.0
        %2215 = vmatprep.mubr.f32.mxu0 0.0
        %v2216 = vand.u32 %v1047, 4294901760
        %v2217 = vsub.f32 %v1047, %v2216
        %2218 = vmatmul.mubr.f32.gmra.mrb[0].mxu0 %v2217
        %v2219 = vpop.f32.mrb[0].mxu0
        %v2220 = vadd.f32 %v2146, %v2219
        %v2221 = vpop.f32.mrb[0].mxu0
        %2222 = vdwg.mxu0
        %2223 = vmatprep.subr.mxu0 0.0
        %v2224 = vand.u32 %v1074, 4294901760
        %2225 = vmatpush1.xpose.msra.mxu0 %v2224
        %2226 = vmatprep.subr.mxu0 0.0
        %2227 = vmatpush1.xpose.msra.mxu0 0.0
        %2228 = vmatprep.subr.mxu0 0.0
        %2229 = vmatpush1.xpose.msra.mxu0 0.0
        %2230 = vmatprep.subr.mxu0 0.0
        %2231 = vmatpush1.xpose.msra.mxu0 0.0
        %2232 = vmatprep.subr.mxu0 0.0
        %2233 = vmatpush1.xpose.msra.mxu0 0.0
        %2234 = vmatprep.subr.mxu0 0.0
        %2235 = vmatpush1.xpose.msra.mxu0 0.0
        %2236 = vmatprep.subr.mxu0 0.0
        %2237 = vmatpush1.xpose.msra.mxu0 0.0
        %2238 = vmatprep.subr.mxu0 0.0
        %2239 = vmatpush1.xpose.msra.mxu0 0.0
        %2240 = vmatprep.subr.mxu0 0.0
        %2241 = vmatpush1.xpose.msra.mxu0 0.0
        %2242 = vmatprep.subr.mxu0 0.0
        %2243 = vmatpush1.xpose.msra.mxu0 0.0
        %2244 = vmatprep.subr.mxu0 0.0
        %2245 = vmatpush1.xpose.msra.mxu0 0.0
        %2246 = vmatprep.subr.mxu0 0.0
        %2247 = vmatpush1.xpose.msra.mxu0 0.0
        %2248 = vmatprep.subr.mxu0 0.0
        %2249 = vmatpush1.xpose.msra.mxu0 0.0
        %2250 = vmatprep.subr.mxu0 0.0
        %2251 = vmatpush1.xpose.msra.mxu0 0.0
        %2252 = vmatprep.subr.mxu0 0.0
        %2253 = vmatpush1.xpose.msra.mxu0 0.0
        %2254 = vmatprep.subr.mxu0 0.0
        %2255 = vmatpush1.xpose.msra.mxu0 0.0
        %2256 = vmatprep.subr.mxu0 0.0
        %2257 = vmatpush1.xpose.msra.mxu0 0.0
        %2258 = vmatprep.subr.mxu0 0.0
        %2259 = vmatpush1.xpose.msra.mxu0 0.0
        %2260 = vmatprep.subr.mxu0 0.0
        %2261 = vmatpush1.xpose.msra.mxu0 0.0
        %2262 = vmatprep.subr.mxu0 0.0
        %2263 = vmatpush1.xpose.msra.mxu0 0.0
        %2264 = vmatprep.subr.mxu0 0.0
        %2265 = vmatpush1.xpose.msra.mxu0 0.0
        %2266 = vmatprep.subr.mxu0 0.0
        %2267 = vmatpush1.xpose.msra.mxu0 0.0
        %2268 = vmatprep.subr.mxu0 0.0
        %2269 = vmatpush1.xpose.msra.mxu0 0.0
        %2270 = vmatprep.subr.mxu0 0.0
        %2271 = vmatpush1.xpose.msra.mxu0 0.0
        %2272 = vmatprep.subr.mxu0 0.0
        %2273 = vmatpush1.xpose.msra.mxu0 0.0
        %2274 = vmatprep.subr.mxu0 0.0
        %2275 = vmatpush1.xpose.msra.mxu0 0.0
        %2276 = vmatprep.subr.mxu0 0.0
        %2277 = vmatpush1.xpose.msra.mxu0 0.0
        %2278 = vmatprep.subr.mxu0 0.0
        %2279 = vmatpush1.xpose.msra.mxu0 0.0
        %2280 = vmatprep.subr.mxu0 0.0
        %2281 = vmatpush1.xpose.msra.mxu0 0.0
        %2282 = vmatprep.subr.mxu0 0.0
        %2283 = vmatpush1.xpose.msra.mxu0 0.0
        %2284 = vmatprep.subr.mxu0 0.0
        %2285 = vmatpush1.xpose.msra.mxu0 0.0
        %2286 = vmatprep.subr.mxu0 0.0
        %2287 = vmatpush1.xpose.msra.mxu0 0.0
        %2288 = vmatprep.mubr.f32.mxu0 0.0
        %v2289 = vand.u32 %v1047, 4294901760
        %v2290 = vsub.f32 %v1047, %v2289
        %v2291 = vand.u32 %v2290, 4294901760
        %2292 = vmatmul.mubr.f32.gmra.mrb[0].mxu0 %v2291
        %v2293 = vpop.f32.mrb[0].mxu0
        %v2294 = vadd.f32 %v2220, %v2293
        %v2295 = vpop.f32.mrb[0].mxu0
        %2296 = vdwg.mxu0
        %2297 = vmatprep.subr.mxu0 0.0
        %v2298 = vand.u32 %v1074, 4294901760
        %v2299 = vsub.f32 %v1074, %v2298
        %v2300 = vand.u32 %v2299, 4294901760
        %2301 = vmatpush1.xpose.msra.mxu0 %v2300
        %2302 = vmatprep.subr.mxu0 0.0
        %2303 = vmatpush1.xpose.msra.mxu0 0.0
        %2304 = vmatprep.subr.mxu0 0.0
        %2305 = vmatpush1.xpose.msra.mxu0 0.0
        %2306 = vmatprep.subr.mxu0 0.0
        %2307 = vmatpush1.xpose.msra.mxu0 0.0
        %2308 = vmatprep.subr.mxu0 0.0
        %2309 = vmatpush1.xpose.msra.mxu0 0.0
        %2310 = vmatprep.subr.mxu0 0.0
        %2311 = vmatpush1.xpose.msra.mxu0 0.0
        %2312 = vmatprep.subr.mxu0 0.0
        %2313 = vmatpush1.xpose.msra.mxu0 0.0
        %2314 = vmatprep.subr.mxu0 0.0
        %2315 = vmatpush1.xpose.msra.mxu0 0.0
        %2316 = vmatprep.subr.mxu0 0.0
        %2317 = vmatpush1.xpose.msra.mxu0 0.0
        %2318 = vmatprep.subr.mxu0 0.0
        %2319 = vmatpush1.xpose.msra.mxu0 0.0
        %2320 = vmatprep.subr.mxu0 0.0
        %2321 = vmatpush1.xpose.msra.mxu0 0.0
        %2322 = vmatprep.subr.mxu0 0.0
        %2323 = vmatpush1.xpose.msra.mxu0 0.0
        %2324 = vmatprep.subr.mxu0 0.0
        %2325 = vmatpush1.xpose.msra.mxu0 0.0
        %2326 = vmatprep.subr.mxu0 0.0
        %2327 = vmatpush1.xpose.msra.mxu0 0.0
        %2328 = vmatprep.subr.mxu0 0.0
        %2329 = vmatpush1.xpose.msra.mxu0 0.0
        %2330 = vmatprep.subr.mxu0 0.0
        %2331 = vmatpush1.xpose.msra.mxu0 0.0
        %2332 = vmatprep.subr.mxu0 0.0
        %2333 = vmatpush1.xpose.msra.mxu0 0.0
        %2334 = vmatprep.subr.mxu0 0.0
        %2335 = vmatpush1.xpose.msra.mxu0 0.0
        %2336 = vmatprep.subr.mxu0 0.0
        %2337 = vmatpush1.xpose.msra.mxu0 0.0
        %2338 = vmatprep.subr.mxu0 0.0
        %2339 = vmatpush1.xpose.msra.mxu0 0.0
        %2340 = vmatprep.subr.mxu0 0.0
        %2341 = vmatpush1.xpose.msra.mxu0 0.0
        %2342 = vmatprep.subr.mxu0 0.0
        %2343 = vmatpush1.xpose.msra.mxu0 0.0
        %2344 = vmatprep.subr.mxu0 0.0
        %2345 = vmatpush1.xpose.msra.mxu0 0.0
        %2346 = vmatprep.subr.mxu0 0.0
        %2347 = vmatpush1.xpose.msra.mxu0 0.0
        %2348 = vmatprep.subr.mxu0 0.0
        %2349 = vmatpush1.xpose.msra.mxu0 0.0
        %2350 = vmatprep.subr.mxu0 0.0
        %2351 = vmatpush1.xpose.msra.mxu0 0.0
        %2352 = vmatprep.subr.mxu0 0.0
        %2353 = vmatpush1.xpose.msra.mxu0 0.0
        %2354 = vmatprep.subr.mxu0 0.0
        %2355 = vmatpush1.xpose.msra.mxu0 0.0
        %2356 = vmatprep.subr.mxu0 0.0
        %2357 = vmatpush1.xpose.msra.mxu0 0.0
        %2358 = vmatprep.subr.mxu0 0.0
        %2359 = vmatpush1.xpose.msra.mxu0 0.0
        %2360 = vmatprep.subr.mxu0 0.0
        %2361 = vmatpush1.xpose.msra.mxu0 0.0
        %2362 = vmatprep.subr.mxu0 0.0
        %2363 = vmatpush1.xpose.msra.mxu0 0.0
        %2364 = vmatprep.mubr.f32.mxu0 0.0
        %v2365 = vand.u32 %v1047, 4294901760
        %2366 = vmatmul.mubr.f32.gmra.mrb[0].mxu0 %v2365
        %v2367 = vpop.f32.mrb[0].mxu0
        %v2368 = vadd.f32 %v2294, %v2367
        %v2369 = vpop.f32.mrb[0].mxu0
        %2370 = vdwg.mxu0
        %2371 = vmatprep.subr.mxu0 0.0
        %v2372 = vand.u32 %v1074, 4294901760
        %2373 = vmatpush1.xpose.msra.mxu0 %v2372
        %2374 = vmatprep.subr.mxu0 0.0
        %2375 = vmatpush1.xpose.msra.mxu0 0.0
        %2376 = vmatprep.subr.mxu0 0.0
        %2377 = vmatpush1.xpose.msra.mxu0 0.0
        %2378 = vmatprep.subr.mxu0 0.0
        %2379 = vmatpush1.xpose.msra.mxu0 0.0
        %2380 = vmatprep.subr.mxu0 0.0
        %2381 = vmatpush1.xpose.msra.mxu0 0.0
        %2382 = vmatprep.subr.mxu0 0.0
        %2383 = vmatpush1.xpose.msra.mxu0 0.0
        %2384 = vmatprep.subr.mxu0 0.0
        %2385 = vmatpush1.xpose.msra.mxu0 0.0
        %2386 = vmatprep.subr.mxu0 0.0
        %2387 = vmatpush1.xpose.msra.mxu0 0.0
        %2388 = vmatprep.subr.mxu0 0.0
        %2389 = vmatpush1.xpose.msra.mxu0 0.0
        %2390 = vmatprep.subr.mxu0 0.0
        %2391 = vmatpush1.xpose.msra.mxu0 0.0
        %2392 = vmatprep.subr.mxu0 0.0
        %2393 = vmatpush1.xpose.msra.mxu0 0.0
        %2394 = vmatprep.subr.mxu0 0.0
        %2395 = vmatpush1.xpose.msra.mxu0 0.0
        %2396 = vmatprep.subr.mxu0 0.0
        %2397 = vmatpush1.xpose.msra.mxu0 0.0
        %2398 = vmatprep.subr.mxu0 0.0
        %2399 = vmatpush1.xpose.msra.mxu0 0.0
        %2400 = vmatprep.subr.mxu0 0.0
        %2401 = vmatpush1.xpose.msra.mxu0 0.0
        %2402 = vmatprep.subr.mxu0 0.0
        %2403 = vmatpush1.xpose.msra.mxu0 0.0
        %2404 = vmatprep.subr.mxu0 0.0
        %2405 = vmatpush1.xpose.msra.mxu0 0.0
        %2406 = vmatprep.subr.mxu0 0.0
        %2407 = vmatpush1.xpose.msra.mxu0 0.0
        %2408 = vmatprep.subr.mxu0 0.0
        %2409 = vmatpush1.xpose.msra.mxu0 0.0
        %2410 = vmatprep.subr.mxu0 0.0
        %2411 = vmatpush1.xpose.msra.mxu0 0.0
        %2412 = vmatprep.subr.mxu0 0.0
        %2413 = vmatpush1.xpose.msra.mxu0 0.0
        %2414 = vmatprep.subr.mxu0 0.0
        %2415 = vmatpush1.xpose.msra.mxu0 0.0
        %2416 = vmatprep.subr.mxu0 0.0
        %2417 = vmatpush1.xpose.msra.mxu0 0.0
        %2418 = vmatprep.subr.mxu0 0.0
        %2419 = vmatpush1.xpose.msra.mxu0 0.0
        %2420 = vmatprep.subr.mxu0 0.0
        %2421 = vmatpush1.xpose.msra.mxu0 0.0
        %2422 = vmatprep.subr.mxu0 0.0
        %2423 = vmatpush1.xpose.msra.mxu0 0.0
        %2424 = vmatprep.subr.mxu0 0.0
        %2425 = vmatpush1.xpose.msra.mxu0 0.0
        %2426 = vmatprep.subr.mxu0 0.0
        %2427 = vmatpush1.xpose.msra.mxu0 0.0
        %2428 = vmatprep.subr.mxu0 0.0
        %2429 = vmatpush1.xpose.msra.mxu0 0.0
        %2430 = vmatprep.subr.mxu0 0.0
        %2431 = vmatpush1.xpose.msra.mxu0 0.0
        %2432 = vmatprep.subr.mxu0 0.0
        %2433 = vmatpush1.xpose.msra.mxu0 0.0
        %2434 = vmatprep.subr.mxu0 0.0
        %2435 = vmatpush1.xpose.msra.mxu0 0.0
        %2436 = vmatprep.mubr.f32.mxu0 0.0
        %v2437 = vand.u32 %v1047, 4294901760
        %2438 = vmatmul.mubr.f32.gmra.mrb[0].mxu0 %v2437
        %v2439 = vpop.f32.mrb[0].mxu0
        %v2440 = vadd.f32 %v2368, %v2439
        %v2441 = vpop.f32.mrb[0].mxu0
        %2442 = vdwg.mxu0
        %v2443 = vadd.f32 %v1996, %v2440
        %2444 = vst.msk [vmem:[%s213 + $0x10] sm:$0xff] %vm1545, %v2443
        %v2445 = vld [vmem:[%s213 + $0x18] sm:$0xff]
        %2446 = vmatprep.subr.mxu0 0.0
        %v2447 = vand.u32 %v1075, 4294901760
        %2448 = vmatpush1.xpose.msra.mxu0 %v2447
        %2449 = vmatprep.subr.mxu0 0.0
        %2450 = vmatpush1.xpose.msra.mxu0 0.0
        %2451 = vmatprep.subr.mxu0 0.0
        %2452 = vmatpush1.xpose.msra.mxu0 0.0
        %2453 = vmatprep.subr.mxu0 0.0
        %2454 = vmatpush1.xpose.msra.mxu0 0.0
        %2455 = vmatprep.subr.mxu0 0.0
        %2456 = vmatpush1.xpose.msra.mxu0 0.0
        %2457 = vmatprep.subr.mxu0 0.0
        %2458 = vmatpush1.xpose.msra.mxu0 0.0
        %2459 = vmatprep.subr.mxu0 0.0
        %2460 = vmatpush1.xpose.msra.mxu0 0.0
        %2461 = vmatprep.subr.mxu0 0.0
        %2462 = vmatpush1.xpose.msra.mxu0 0.0
        %2463 = vmatprep.subr.mxu0 0.0
        %2464 = vmatpush1.xpose.msra.mxu0 0.0
        %2465 = vmatprep.subr.mxu0 0.0
        %2466 = vmatpush1.xpose.msra.mxu0 0.0
        %2467 = vmatprep.subr.mxu0 0.0
        %2468 = vmatpush1.xpose.msra.mxu0 0.0
        %2469 = vmatprep.subr.mxu0 0.0
        %2470 = vmatpush1.xpose.msra.mxu0 0.0
        %2471 = vmatprep.subr.mxu0 0.0
        %2472 = vmatpush1.xpose.msra.mxu0 0.0
        %2473 = vmatprep.subr.mxu0 0.0
        %2474 = vmatpush1.xpose.msra.mxu0 0.0
        %2475 = vmatprep.subr.mxu0 0.0
        %2476 = vmatpush1.xpose.msra.mxu0 0.0
        %2477 = vmatprep.subr.mxu0 0.0
        %2478 = vmatpush1.xpose.msra.mxu0 0.0
        %2479 = vmatprep.subr.mxu0 0.0
        %2480 = vmatpush1.xpose.msra.mxu0 0.0
        %2481 = vmatprep.subr.mxu0 0.0
        %2482 = vmatpush1.xpose.msra.mxu0 0.0
        %2483 = vmatprep.subr.mxu0 0.0
        %2484 = vmatpush1.xpose.msra.mxu0 0.0
        %2485 = vmatprep.subr.mxu0 0.0
        %2486 = vmatpush1.xpose.msra.mxu0 0.0
        %2487 = vmatprep.subr.mxu0 0.0
        %2488 = vmatpush1.xpose.msra.mxu0 0.0
        %2489 = vmatprep.subr.mxu0 0.0
        %2490 = vmatpush1.xpose.msra.mxu0 0.0
        %2491 = vmatprep.subr.mxu0 0.0
        %2492 = vmatpush1.xpose.msra.mxu0 0.0
        %2493 = vmatprep.subr.mxu0 0.0
        %2494 = vmatpush1.xpose.msra.mxu0 0.0
        %2495 = vmatprep.subr.mxu0 0.0
        %2496 = vmatpush1.xpose.msra.mxu0 0.0
        %2497 = vmatprep.subr.mxu0 0.0
        %2498 = vmatpush1.xpose.msra.mxu0 0.0
        %2499 = vmatprep.subr.mxu0 0.0
        %2500 = vmatpush1.xpose.msra.mxu0 0.0
        %2501 = vmatprep.subr.mxu0 0.0
        %2502 = vmatpush1.xpose.msra.mxu0 0.0
        %2503 = vmatprep.subr.mxu0 0.0
        %2504 = vmatpush1.xpose.msra.mxu0 0.0
        %2505 = vmatprep.subr.mxu0 0.0
        %2506 = vmatpush1.xpose.msra.mxu0 0.0
        %2507 = vmatprep.subr.mxu0 0.0
        %2508 = vmatpush1.xpose.msra.mxu0 0.0
        %2509 = vmatprep.subr.mxu0 0.0
        %2510 = vmatpush1.xpose.msra.mxu0 0.0
        %2511 = vmatprep.mubr.f32.mxu0 0.0
        %v2512 = vand.u32 %v1053, 4294901760
        %v2513 = vsub.f32 %v1053, %v2512
        %v2514 = vand.u32 %v2513, 4294901760
        %v2515 = vsub.f32 %v2513, %v2514
        %v2516 = vand.u32 %v2515, 4294901760
        %2517 = vmatmul.mubr.f32.gmra.mrb[0].mxu0 %v2516
        %v2518 = vpop.f32.mrb[0].mxu0
        %v2519 = vadd.f32 0.0, %v2518
        %v2520 = vpop.f32.mrb[0].mxu0
        %2521 = vdwg.mxu0
        %2522 = vmatprep.subr.mxu0 0.0
        %v2523 = vand.u32 %v1075, 4294901760
        %v2524 = vsub.f32 %v1075, %v2523
        %v2525 = vand.u32 %v2524, 4294901760
        %v2526 = vsub.f32 %v2524, %v2525
        %v2527 = vand.u32 %v2526, 4294901760
        %2528 = vmatpush1.xpose.msra.mxu0 %v2527
        %2529 = vmatprep.subr.mxu0 0.0
        %2530 = vmatpush1.xpose.msra.mxu0 0.0
        %2531 = vmatprep.subr.mxu0 0.0
        %2532 = vmatpush1.xpose.msra.mxu0 0.0
        %2533 = vmatprep.subr.mxu0 0.0
        %2534 = vmatpush1.xpose.msra.mxu0 0.0
        %2535 = vmatprep.subr.mxu0 0.0
        %2536 = vmatpush1.xpose.msra.mxu0 0.0
        %2537 = vmatprep.subr.mxu0 0.0
        %2538 = vmatpush1.xpose.msra.mxu0 0.0
        %2539 = vmatprep.subr.mxu0 0.0
        %2540 = vmatpush1.xpose.msra.mxu0 0.0
        %2541 = vmatprep.subr.mxu0 0.0
        %2542 = vmatpush1.xpose.msra.mxu0 0.0
        %2543 = vmatprep.subr.mxu0 0.0
        %2544 = vmatpush1.xpose.msra.mxu0 0.0
        %2545 = vmatprep.subr.mxu0 0.0
        %2546 = vmatpush1.xpose.msra.mxu0 0.0
        %2547 = vmatprep.subr.mxu0 0.0
        %2548 = vmatpush1.xpose.msra.mxu0 0.0
        %2549 = vmatprep.subr.mxu0 0.0
        %2550 = vmatpush1.xpose.msra.mxu0 0.0
        %2551 = vmatprep.subr.mxu0 0.0
        %2552 = vmatpush1.xpose.msra.mxu0 0.0
        %2553 = vmatprep.subr.mxu0 0.0
        %2554 = vmatpush1.xpose.msra.mxu0 0.0
        %2555 = vmatprep.subr.mxu0 0.0
        %2556 = vmatpush1.xpose.msra.mxu0 0.0
        %2557 = vmatprep.subr.mxu0 0.0
        %2558 = vmatpush1.xpose.msra.mxu0 0.0
        %2559 = vmatprep.subr.mxu0 0.0
        %2560 = vmatpush1.xpose.msra.mxu0 0.0
        %2561 = vmatprep.subr.mxu0 0.0
        %2562 = vmatpush1.xpose.msra.mxu0 0.0
        %2563 = vmatprep.subr.mxu0 0.0
        %2564 = vmatpush1.xpose.msra.mxu0 0.0
        %2565 = vmatprep.subr.mxu0 0.0
        %2566 = vmatpush1.xpose.msra.mxu0 0.0
        %2567 = vmatprep.subr.mxu0 0.0
        %2568 = vmatpush1.xpose.msra.mxu0 0.0
        %2569 = vmatprep.subr.mxu0 0.0
        %2570 = vmatpush1.xpose.msra.mxu0 0.0
        %2571 = vmatprep.subr.mxu0 0.0
        %2572 = vmatpush1.xpose.msra.mxu0 0.0
        %2573 = vmatprep.subr.mxu0 0.0
        %2574 = vmatpush1.xpose.msra.mxu0 0.0
        %2575 = vmatprep.subr.mxu0 0.0
        %2576 = vmatpush1.xpose.msra.mxu0 0.0
        %2577 = vmatprep.subr.mxu0 0.0
        %2578 = vmatpush1.xpose.msra.mxu0 0.0
        %2579 = vmatprep.subr.mxu0 0.0
        %2580 = vmatpush1.xpose.msra.mxu0 0.0
        %2581 = vmatprep.subr.mxu0 0.0
        %2582 = vmatpush1.xpose.msra.mxu0 0.0
        %2583 = vmatprep.subr.mxu0 0.0
        %2584 = vmatpush1.xpose.msra.mxu0 0.0
        %2585 = vmatprep.subr.mxu0 0.0
        %2586 = vmatpush1.xpose.msra.mxu0 0.0
        %2587 = vmatprep.subr.mxu0 0.0
        %2588 = vmatpush1.xpose.msra.mxu0 0.0
        %2589 = vmatprep.subr.mxu0 0.0
        %2590 = vmatpush1.xpose.msra.mxu0 0.0
        %2591 = vmatprep.mubr.f32.mxu0 0.0
        %v2592 = vand.u32 %v1053, 4294901760
        %2593 = vmatmul.mubr.f32.gmra.mrb[0].mxu0 %v2592
        %v2594 = vpop.f32.mrb[0].mxu0
        %v2595 = vadd.f32 %v2519, %v2594
        %v2596 = vpop.f32.mrb[0].mxu0
        %2597 = vdwg.mxu0
        %2598 = vmatprep.subr.mxu0 0.0
        %v2599 = vand.u32 %v1075, 4294901760
        %v2600 = vsub.f32 %v1075, %v2599
        %2601 = vmatpush1.xpose.msra.mxu0 %v2600
        %2602 = vmatprep.subr.mxu0 0.0
        %2603 = vmatpush1.xpose.msra.mxu0 0.0
        %2604 = vmatprep.subr.mxu0 0.0
        %2605 = vmatpush1.xpose.msra.mxu0 0.0
        %2606 = vmatprep.subr.mxu0 0.0
        %2607 = vmatpush1.xpose.msra.mxu0 0.0
        %2608 = vmatprep.subr.mxu0 0.0
        %2609 = vmatpush1.xpose.msra.mxu0 0.0
        %2610 = vmatprep.subr.mxu0 0.0
        %2611 = vmatpush1.xpose.msra.mxu0 0.0
        %2612 = vmatprep.subr.mxu0 0.0
        %2613 = vmatpush1.xpose.msra.mxu0 0.0
        %2614 = vmatprep.subr.mxu0 0.0
        %2615 = vmatpush1.xpose.msra.mxu0 0.0
        %2616 = vmatprep.subr.mxu0 0.0
        %2617 = vmatpush1.xpose.msra.mxu0 0.0
        %2618 = vmatprep.subr.mxu0 0.0
        %2619 = vmatpush1.xpose.msra.mxu0 0.0
        %2620 = vmatprep.subr.mxu0 0.0
        %2621 = vmatpush1.xpose.msra.mxu0 0.0
        %2622 = vmatprep.subr.mxu0 0.0
        %2623 = vmatpush1.xpose.msra.mxu0 0.0
        %2624 = vmatprep.subr.mxu0 0.0
        %2625 = vmatpush1.xpose.msra.mxu0 0.0
        %2626 = vmatprep.subr.mxu0 0.0
        %2627 = vmatpush1.xpose.msra.mxu0 0.0
        %2628 = vmatprep.subr.mxu0 0.0
        %2629 = vmatpush1.xpose.msra.mxu0 0.0
        %2630 = vmatprep.subr.mxu0 0.0
        %2631 = vmatpush1.xpose.msra.mxu0 0.0
        %2632 = vmatprep.subr.mxu0 0.0
        %2633 = vmatpush1.xpose.msra.mxu0 0.0
        %2634 = vmatprep.subr.mxu0 0.0
        %2635 = vmatpush1.xpose.msra.mxu0 0.0
        %2636 = vmatprep.subr.mxu0 0.0
        %2637 = vmatpush1.xpose.msra.mxu0 0.0
        %2638 = vmatprep.subr.mxu0 0.0
        %2639 = vmatpush1.xpose.msra.mxu0 0.0
        %2640 = vmatprep.subr.mxu0 0.0
        %2641 = vmatpush1.xpose.msra.mxu0 0.0
        %2642 = vmatprep.subr.mxu0 0.0
        %2643 = vmatpush1.xpose.msra.mxu0 0.0
        %2644 = vmatprep.subr.mxu0 0.0
        %2645 = vmatpush1.xpose.msra.mxu0 0.0
        %2646 = vmatprep.subr.mxu0 0.0
        %2647 = vmatpush1.xpose.msra.mxu0 0.0
        %2648 = vmatprep.subr.mxu0 0.0
        %2649 = vmatpush1.xpose.msra.mxu0 0.0
        %2650 = vmatprep.subr.mxu0 0.0
        %2651 = vmatpush1.xpose.msra.mxu0 0.0
        %2652 = vmatprep.subr.mxu0 0.0
        %2653 = vmatpush1.xpose.msra.mxu0 0.0
        %2654 = vmatprep.subr.mxu0 0.0
        %2655 = vmatpush1.xpose.msra.mxu0 0.0
        %2656 = vmatprep.subr.mxu0 0.0
        %2657 = vmatpush1.xpose.msra.mxu0 0.0
        %2658 = vmatprep.subr.mxu0 0.0
        %2659 = vmatpush1.xpose.msra.mxu0 0.0
        %2660 = vmatprep.subr.mxu0 0.0
        %2661 = vmatpush1.xpose.msra.mxu0 0.0
        %2662 = vmatprep.subr.mxu0 0.0
        %2663 = vmatpush1.xpose.msra.mxu0 0.0
        %2664 = vmatprep.mubr.f32.mxu0 0.0
        %v2665 = vand.u32 %v1053, 4294901760
        %v2666 = vsub.f32 %v1053, %v2665
        %2667 = vmatmul.mubr.f32.gmra.mrb[0].mxu0 %v2666
        %v2668 = vpop.f32.mrb[0].mxu0
        %v2669 = vadd.f32 %v2595, %v2668
        %v2670 = vpop.f32.mrb[0].mxu0
        %2671 = vdwg.mxu0
        %2672 = vmatprep.subr.mxu0 0.0
        %v2673 = vand.u32 %v1075, 4294901760
        %2674 = vmatpush1.xpose.msra.mxu0 %v2673
        %2675 = vmatprep.subr.mxu0 0.0
        %2676 = vmatpush1.xpose.msra.mxu0 0.0
        %2677 = vmatprep.subr.mxu0 0.0
        %2678 = vmatpush1.xpose.msra.mxu0 0.0
        %2679 = vmatprep.subr.mxu0 0.0
        %2680 = vmatpush1.xpose.msra.mxu0 0.0
        %2681 = vmatprep.subr.mxu0 0.0
        %2682 = vmatpush1.xpose.msra.mxu0 0.0
        %2683 = vmatprep.subr.mxu0 0.0
        %2684 = vmatpush1.xpose.msra.mxu0 0.0
        %2685 = vmatprep.subr.mxu0 0.0
        %2686 = vmatpush1.xpose.msra.mxu0 0.0
        %2687 = vmatprep.subr.mxu0 0.0
        %2688 = vmatpush1.xpose.msra.mxu0 0.0
        %2689 = vmatprep.subr.mxu0 0.0
        %2690 = vmatpush1.xpose.msra.mxu0 0.0
        %2691 = vmatprep.subr.mxu0 0.0
        %2692 = vmatpush1.xpose.msra.mxu0 0.0
        %2693 = vmatprep.subr.mxu0 0.0
        %2694 = vmatpush1.xpose.msra.mxu0 0.0
        %2695 = vmatprep.subr.mxu0 0.0
        %2696 = vmatpush1.xpose.msra.mxu0 0.0
        %2697 = vmatprep.subr.mxu0 0.0
        %2698 = vmatpush1.xpose.msra.mxu0 0.0
        %2699 = vmatprep.subr.mxu0 0.0
        %2700 = vmatpush1.xpose.msra.mxu0 0.0
        %2701 = vmatprep.subr.mxu0 0.0
        %2702 = vmatpush1.xpose.msra.mxu0 0.0
        %2703 = vmatprep.subr.mxu0 0.0
        %2704 = vmatpush1.xpose.msra.mxu0 0.0
        %2705 = vmatprep.subr.mxu0 0.0
        %2706 = vmatpush1.xpose.msra.mxu0 0.0
        %2707 = vmatprep.subr.mxu0 0.0
        %2708 = vmatpush1.xpose.msra.mxu0 0.0
        %2709 = vmatprep.subr.mxu0 0.0
        %2710 = vmatpush1.xpose.msra.mxu0 0.0
        %2711 = vmatprep.subr.mxu0 0.0
        %2712 = vmatpush1.xpose.msra.mxu0 0.0
        %2713 = vmatprep.subr.mxu0 0.0
        %2714 = vmatpush1.xpose.msra.mxu0 0.0
        %2715 = vmatprep.subr.mxu0 0.0
        %2716 = vmatpush1.xpose.msra.mxu0 0.0
        %2717 = vmatprep.subr.mxu0 0.0
        %2718 = vmatpush1.xpose.msra.mxu0 0.0
        %2719 = vmatprep.subr.mxu0 0.0
        %2720 = vmatpush1.xpose.msra.mxu0 0.0
        %2721 = vmatprep.subr.mxu0 0.0
        %2722 = vmatpush1.xpose.msra.mxu0 0.0
        %2723 = vmatprep.subr.mxu0 0.0
        %2724 = vmatpush1.xpose.msra.mxu0 0.0
        %2725 = vmatprep.subr.mxu0 0.0
        %2726 = vmatpush1.xpose.msra.mxu0 0.0
        %2727 = vmatprep.subr.mxu0 0.0
        %2728 = vmatpush1.xpose.msra.mxu0 0.0
        %2729 = vmatprep.subr.mxu0 0.0
        %2730 = vmatpush1.xpose.msra.mxu0 0.0
        %2731 = vmatprep.subr.mxu0 0.0
        %2732 = vmatpush1.xpose.msra.mxu0 0.0
        %2733 = vmatprep.subr.mxu0 0.0
        %2734 = vmatpush1.xpose.msra.mxu0 0.0
        %2735 = vmatprep.subr.mxu0 0.0
        %2736 = vmatpush1.xpose.msra.mxu0 0.0
        %2737 = vmatprep.mubr.f32.mxu0 0.0
        %v2738 = vand.u32 %v1053, 4294901760
        %v2739 = vsub.f32 %v1053, %v2738
        %v2740 = vand.u32 %v2739, 4294901760
        %2741 = vmatmul.mubr.f32.gmra.mrb[0].mxu0 %v2740
        %v2742 = vpop.f32.mrb[0].mxu0
        %v2743 = vadd.f32 %v2669, %v2742
        %v2744 = vpop.f32.mrb[0].mxu0
        %2745 = vdwg.mxu0
        %2746 = vmatprep.subr.mxu0 0.0
        %v2747 = vand.u32 %v1075, 4294901760
        %v2748 = vsub.f32 %v1075, %v2747
        %v2749 = vand.u32 %v2748, 4294901760
        %2750 = vmatpush1.xpose.msra.mxu0 %v2749
        %2751 = vmatprep.subr.mxu0 0.0
        %2752 = vmatpush1.xpose.msra.mxu0 0.0
        %2753 = vmatprep.subr.mxu0 0.0
        %2754 = vmatpush1.xpose.msra.mxu0 0.0
        %2755 = vmatprep.subr.mxu0 0.0
        %2756 = vmatpush1.xpose.msra.mxu0 0.0
        %2757 = vmatprep.subr.mxu0 0.0
        %2758 = vmatpush1.xpose.msra.mxu0 0.0
        %2759 = vmatprep.subr.mxu0 0.0
        %2760 = vmatpush1.xpose.msra.mxu0 0.0
        %2761 = vmatprep.subr.mxu0 0.0
        %2762 = vmatpush1.xpose.msra.mxu0 0.0
        %2763 = vmatprep.subr.mxu0 0.0
        %2764 = vmatpush1.xpose.msra.mxu0 0.0
        %2765 = vmatprep.subr.mxu0 0.0
        %2766 = vmatpush1.xpose.msra.mxu0 0.0
        %2767 = vmatprep.subr.mxu0 0.0
        %2768 = vmatpush1.xpose.msra.mxu0 0.0
        %2769 = vmatprep.subr.mxu0 0.0
        %2770 = vmatpush1.xpose.msra.mxu0 0.0
        %2771 = vmatprep.subr.mxu0 0.0
        %2772 = vmatpush1.xpose.msra.mxu0 0.0
        %2773 = vmatprep.subr.mxu0 0.0
        %2774 = vmatpush1.xpose.msra.mxu0 0.0
        %2775 = vmatprep.subr.mxu0 0.0
        %2776 = vmatpush1.xpose.msra.mxu0 0.0
        %2777 = vmatprep.subr.mxu0 0.0
        %2778 = vmatpush1.xpose.msra.mxu0 0.0
        %2779 = vmatprep.subr.mxu0 0.0
        %2780 = vmatpush1.xpose.msra.mxu0 0.0
        %2781 = vmatprep.subr.mxu0 0.0
        %2782 = vmatpush1.xpose.msra.mxu0 0.0
        %2783 = vmatprep.subr.mxu0 0.0
        %2784 = vmatpush1.xpose.msra.mxu0 0.0
        %2785 = vmatprep.subr.mxu0 0.0
        %2786 = vmatpush1.xpose.msra.mxu0 0.0
        %2787 = vmatprep.subr.mxu0 0.0
        %2788 = vmatpush1.xpose.msra.mxu0 0.0
        %2789 = vmatprep.subr.mxu0 0.0
        %2790 = vmatpush1.xpose.msra.mxu0 0.0
        %2791 = vmatprep.subr.mxu0 0.0
        %2792 = vmatpush1.xpose.msra.mxu0 0.0
        %2793 = vmatprep.subr.mxu0 0.0
        %2794 = vmatpush1.xpose.msra.mxu0 0.0
        %2795 = vmatprep.subr.mxu0 0.0
        %2796 = vmatpush1.xpose.msra.mxu0 0.0
        %2797 = vmatprep.subr.mxu0 0.0
        %2798 = vmatpush1.xpose.msra.mxu0 0.0
        %2799 = vmatprep.subr.mxu0 0.0
        %2800 = vmatpush1.xpose.msra.mxu0 0.0
        %2801 = vmatprep.subr.mxu0 0.0
        %2802 = vmatpush1.xpose.msra.mxu0 0.0
        %2803 = vmatprep.subr.mxu0 0.0
        %2804 = vmatpush1.xpose.msra.mxu0 0.0
        %2805 = vmatprep.subr.mxu0 0.0
        %2806 = vmatpush1.xpose.msra.mxu0 0.0
        %2807 = vmatprep.subr.mxu0 0.0
        %2808 = vmatpush1.xpose.msra.mxu0 0.0
        %2809 = vmatprep.subr.mxu0 0.0
        %2810 = vmatpush1.xpose.msra.mxu0 0.0
        %2811 = vmatprep.subr.mxu0 0.0
        %2812 = vmatpush1.xpose.msra.mxu0 0.0
        %2813 = vmatprep.mubr.f32.mxu0 0.0
        %v2814 = vand.u32 %v1053, 4294901760
        %2815 = vmatmul.mubr.f32.gmra.mrb[0].mxu0 %v2814
        %v2816 = vpop.f32.mrb[0].mxu0
        %v2817 = vadd.f32 %v2743, %v2816
        %v2818 = vpop.f32.mrb[0].mxu0
        %2819 = vdwg.mxu0
        %2820 = vmatprep.subr.mxu0 0.0
        %v2821 = vand.u32 %v1075, 4294901760
        %2822 = vmatpush1.xpose.msra.mxu0 %v2821
        %2823 = vmatprep.subr.mxu0 0.0
        %2824 = vmatpush1.xpose.msra.mxu0 0.0
        %2825 = vmatprep.subr.mxu0 0.0
        %2826 = vmatpush1.xpose.msra.mxu0 0.0
        %2827 = vmatprep.subr.mxu0 0.0
        %2828 = vmatpush1.xpose.msra.mxu0 0.0
        %2829 = vmatprep.subr.mxu0 0.0
        %2830 = vmatpush1.xpose.msra.mxu0 0.0
        %2831 = vmatprep.subr.mxu0 0.0
        %2832 = vmatpush1.xpose.msra.mxu0 0.0
        %2833 = vmatprep.subr.mxu0 0.0
        %2834 = vmatpush1.xpose.msra.mxu0 0.0
        %2835 = vmatprep.subr.mxu0 0.0
        %2836 = vmatpush1.xpose.msra.mxu0 0.0
        %2837 = vmatprep.subr.mxu0 0.0
        %2838 = vmatpush1.xpose.msra.mxu0 0.0
        %2839 = vmatprep.subr.mxu0 0.0
        %2840 = vmatpush1.xpose.msra.mxu0 0.0
        %2841 = vmatprep.subr.mxu0 0.0
        %2842 = vmatpush1.xpose.msra.mxu0 0.0
        %2843 = vmatprep.subr.mxu0 0.0
        %2844 = vmatpush1.xpose.msra.mxu0 0.0
        %2845 = vmatprep.subr.mxu0 0.0
        %2846 = vmatpush1.xpose.msra.mxu0 0.0
        %2847 = vmatprep.subr.mxu0 0.0
        %2848 = vmatpush1.xpose.msra.mxu0 0.0
        %2849 = vmatprep.subr.mxu0 0.0
        %2850 = vmatpush1.xpose.msra.mxu0 0.0
        %2851 = vmatprep.subr.mxu0 0.0
        %2852 = vmatpush1.xpose.msra.mxu0 0.0
        %2853 = vmatprep.subr.mxu0 0.0
        %2854 = vmatpush1.xpose.msra.mxu0 0.0
        %2855 = vmatprep.subr.mxu0 0.0
        %2856 = vmatpush1.xpose.msra.mxu0 0.0
        %2857 = vmatprep.subr.mxu0 0.0
        %2858 = vmatpush1.xpose.msra.mxu0 0.0
        %2859 = vmatprep.subr.mxu0 0.0
        %2860 = vmatpush1.xpose.msra.mxu0 0.0
        %2861 = vmatprep.subr.mxu0 0.0
        %2862 = vmatpush1.xpose.msra.mxu0 0.0
        %2863 = vmatprep.subr.mxu0 0.0
        %2864 = vmatpush1.xpose.msra.mxu0 0.0
        %2865 = vmatprep.subr.mxu0 0.0
        %2866 = vmatpush1.xpose.msra.mxu0 0.0
        %2867 = vmatprep.subr.mxu0 0.0
        %2868 = vmatpush1.xpose.msra.mxu0 0.0
        %2869 = vmatprep.subr.mxu0 0.0
        %2870 = vmatpush1.xpose.msra.mxu0 0.0
        %2871 = vmatprep.subr.mxu0 0.0
        %2872 = vmatpush1.xpose.msra.mxu0 0.0
        %2873 = vmatprep.subr.mxu0 0.0
        %2874 = vmatpush1.xpose.msra.mxu0 0.0
        %2875 = vmatprep.subr.mxu0 0.0
        %2876 = vmatpush1.xpose.msra.mxu0 0.0
        %2877 = vmatprep.subr.mxu0 0.0
        %2878 = vmatpush1.xpose.msra.mxu0 0.0
        %2879 = vmatprep.subr.mxu0 0.0
        %2880 = vmatpush1.xpose.msra.mxu0 0.0
        %2881 = vmatprep.subr.mxu0 0.0
        %2882 = vmatpush1.xpose.msra.mxu0 0.0
        %2883 = vmatprep.subr.mxu0 0.0
        %2884 = vmatpush1.xpose.msra.mxu0 0.0
        %2885 = vmatprep.mubr.f32.mxu0 0.0
        %v2886 = vand.u32 %v1053, 4294901760
        %2887 = vmatmul.mubr.f32.gmra.mrb[0].mxu0 %v2886
        %v2888 = vpop.f32.mrb[0].mxu0
        %v2889 = vadd.f32 %v2817, %v2888
        %v2890 = vpop.f32.mrb[0].mxu0
        %2891 = vdwg.mxu0
        %v2892 = vadd.f32 %v2445, %v2889
        %2893 = vst.msk [vmem:[%s213 + $0x18] sm:$0xff] %vm1545, %v2892
        %p2894 = scmp.lt.s32.totalorder %s22, 1
        %s2895 = scalar_select %p2894, %s22, 1
        %s2896 = smul.addr %s2895, 4
        %s2897 = smul.addr %s2896, 8
        %s2898 = scalar_lea.vmem %s2, %s2897
        %p2899 = scmp.lt.s32.totalorder %s22, 1
        %s2900 = scalar_select %p2899, %s22, 1
        %s2901 = smul.addr %s2900, 4
        %s2902 = smul.addr %s2901, 8
        %s2903 = scalar_lea.vmem %s3, %s2902
        // Predicated region
        $region37: #{tpu_custom_call.1} parent=27 // pred_check
          %p2904 = pneg %p97
        $region38: #{tpu_custom_call.1} parent=27 // pred_check_branch
          %2906 = sbr.rel (%p2904) target = $region40
        $region39: #{tpu_custom_call.1} parent=27 // pred_region
          _
        $region40: #{tpu_custom_call.1} parent=27 // pred_fallthru
          _
        // Predicated region
        $region41: #{tpu_custom_call.1} parent=27 // pred_check
          %p2907 = pneg %p123
        $region42: #{tpu_custom_call.1} parent=27 // pred_check_branch
          %2909 = sbr.rel (%p2907) target = $region44
        $region43: #{tpu_custom_call.1} parent=27 // pred_region
          _
        $region44: #{tpu_custom_call.1} parent=27 // pred_fallthru
          _
      $region28: #{tpu_custom_call.1} parent=5 // pred_fallthru
        _
      %p2910 = scmp.le.s32.totalorder 2, %s13
      // Predicated region
      $region45: #{tpu_custom_call.1} parent=5 // pred_check
        %p2911 = pneg %p2910
      $region46: #{tpu_custom_call.1} parent=5 // pred_check_branch
        %2913 = sbr.rel (%p2911) target = $region48
      $region47: #{tpu_custom_call.1} parent=5 // pred_region
        %s2914 = ssub.s32 %s13, 2
        // Predicated region
        $region49: #{tpu_custom_call.1} parent=47 // pred_check
          %p2915 = pneg %p103
        $region50: #{tpu_custom_call.1} parent=47 // pred_check_branch
          %2917 = sbr.rel (%p2915) target = $region52
        $region51: #{tpu_custom_call.1} parent=47 // pred_region
          %p2918 = scmp.lt.s32.totalorder %s24, 1
          %s2919 = scalar_select %p2918, %s24, 1
          %s2920 = smul.addr %s2919, 4
          %s2921 = smul.addr %s2920, 8
          %s2922 = scalar_lea.vmem %s2, %s2921
        $region52: #{tpu_custom_call.1} parent=47 // pred_fallthru
          _
        // Predicated region
        $region53: #{tpu_custom_call.1} parent=47 // pred_check
          %p2923 = pneg %p129
        $region54: #{tpu_custom_call.1} parent=47 // pred_check_branch
          %2925 = sbr.rel (%p2923) target = $region56
        $region55: #{tpu_custom_call.1} parent=47 // pred_region
          %p2926 = scmp.lt.s32.totalorder %s24, 1
          %s2927 = scalar_select %p2926, %s24, 1
          %s2928 = smul.addr %s2927, 4
          %s2929 = smul.addr %s2928, 8
          %s2930 = scalar_lea.vmem %s3, %s2929
        $region56: #{tpu_custom_call.1} parent=47 // pred_fallthru
          _
      $region48: #{tpu_custom_call.1} parent=5 // pred_fallthru
        _
    $region6: #{tpu_custom_call.1} parent=1 // loop_footer
      %s17 = sadd.s32 1, %s13
    $region7: #{tpu_custom_call.1} parent=1 // loop_footer_branch
      %12 = sbr.rel target = $region3
    $region8: #{tpu_custom_call.1} parent=1 // loop_exit
      _
    %2931 = vsyncpa [#allocation3], 1
    %s2932 = scalar_lea.sflag [#allocation3], 1
    %2933 = vsyncpa %s2932, 1

// kernel: tpu_custom_call.1
$region0: #{tpu_custom_call.1}
  #allocation0 [shape = 'u32[]', space=smem, size = 0x4, offset = 0x4, fixed_abs, tag = 'smem constant byte address 0x4 - core index']
  #allocation1 [shape = 'u32[144,128]{1,0:T(1,128)}', space=vmem, size = 0x12000, scoped, tag = 'internal scratch']
  %s0 = inlined_call_operand.hbm [shape: f32[2,32,256], index: 0, kind: input, shape index: {}]
  %s1 = inlined_call_operand.vmem [shape: f32[64,32], index: 1, kind: input, shape index: {}]
  %s2 = inlined_call_operand.vmem [shape: f32[2,32,8], index: 2, kind: output, shape index: {0}]
  %s3 = inlined_call_operand.vmem [shape: f32[2,32,1], index: 3, kind: output, shape index: {1}]
  %4 = xla_tuple %s2, %s3
  %s5 = sld [smem:[#allocation0]]
  $region57: #{tpu_custom_call.1} parent=0
    _
  %s7 = ssub.s32 1, %s5
  %s8 = scalar_select 0, %s7, %s5
  $region1: #{tpu_custom_call.1} parent=0
    #allocation2 [shape = 'u8[32768]{0}', space=vmem, size = 0x8000, scoped, tag = 'input window, operand 0']
    #allocation3 [shape = 's32[2]{0}', space=sflag, size = 0x8, scoped, tag = 'scoped memory for tpu_custom_call.1']
    %9 = vsyncpa [#allocation3], 0
    %s10 = scalar_lea.sflag [#allocation3], 1
    %11 = vsyncpa %s10, 0
    loop: start=0, step=1, limit=6
    $region2: #{tpu_custom_call.1} parent=1 // loop_pre_header
      _
    $region3: #{tpu_custom_call.1} parent=1 // loop_header
      %s13 = sphi 0, %s17
      %p14 = scmp.ge.s32.totalorder %s13, 6
      %s20 = sphi 0, %s32
      %s21 = sphi 0, %s28
      %s22 = sphi 0, %s20
      %s23 = sphi 0, %s21
      %s24 = sphi 0, %s22
      %s25 = sphi 0, %s23
      %s37 = sphi 0, %s39
      %s40 = sphi 0, %s37
      %s41 = sphi 0, %s40
      %s57 = sphi 0, %s41
      %s61 = sphi 0, %s61
      %s63 = sphi 0, %s61
      %s64 = sphi 0, %s63
      %s78 = sphi 0, %s64
      %s84 = sphi 0, %s86
      %s87 = sphi 0, %s84
      %s88 = sphi 0, %s87
      %s104 = sphi 0, %s88
      %s110 = sphi 0, %s112
      %s113 = sphi 0, %s110
      %s114 = sphi 0, %s113
      %s130 = sphi 0, %s114
    $region4: #{tpu_custom_call.1} parent=1 // loop_header_branch
      %16 = sbr.rel (%p14) target = $region8
    $region5: #{tpu_custom_call.1} parent=1 // loop_body
      %s18 = ssub.s32 %s13, 1
      %s19 = ssub.s32 %s13, 2
      %s26 = sadd.s32 1, %s21
      %p27 = scmp.ge.s32.totalorder %s26, 2
      %s28 = scalar_select %p27, 0, %s26
      %s29 = sadd.s32 1, %s20
      %s30 = scalar_select %p27, %s29, %s20
      %p31 = scmp.ge.s32.totalorder %s30, 2
      %s32 = scalar_select %p31, 0, %s30
      %s33 = ssub.s32 %s20, %s32
      %s34 = ssub.s32 %s21, %s28
      %s35 = sor.u32 %s33, %s34
      %p36 = scmp.eq.s32.totalorder %s35, 0
      %s38 = sadd.s32 %s37, 1
      %s39 = scalar_select %p36, %s37, %s38
      %p42 = pneg %p36
      %p43 = scmp.eq.s32.totalorder %s13, 3
      %p44 = por %p42, %p43
      %p45 = scmp.ne.s32.totalorder %s37, %s40
      %p46 = scmp.eq.s32.totalorder %s13, 0
      %p47 = por %p45, %p46
      %p48 = scmp.ne.s32.totalorder %s37, %s40
      %p49 = scmp.eq.s32.totalorder %s18, 3
      %p50 = por %p48, %p49
      %p51 = scmp.ne.s32.totalorder %s40, %s41
      %p52 = scmp.eq.s32.totalorder %s18, 0
      %p53 = por %p51, %p52
      %p54 = scmp.ne.s32.totalorder %s40, %s41
      %p55 = scmp.eq.s32.totalorder %s19, 3
      %p56 = por %p54, %p55
      %p58 = scmp.ne.s32.totalorder %s41, %s57
      %p59 = scmp.eq.s32.totalorder %s19, 0
      %p60 = por %p58, %p59
      %s62 = sadd.s32 %s61, 1
      %p65 = scmp.eq.s32.totalorder %s13, 3
      %p66 = scmp.ne.s32.totalorder %s61, %s63
      %p67 = scmp.eq.s32.totalorder %s13, 0
      %p68 = por %p66, %p67
      %p69 = scmp.ne.s32.totalorder %s61, %s63
      %p70 = scmp.eq.s32.totalorder %s18, 3
      %p71 = por %p69, %p70
      %p72 = scmp.ne.s32.totalorder %s63, %s64
      %p73 = scmp.eq.s32.totalorder %s18, 0
      %p74 = por %p72, %p73
      %p75 = scmp.ne.s32.totalorder %s63, %s64
      %p76 = scmp.eq.s32.totalorder %s19, 3
      %p77 = por %p75, %p76
      %p79 = scmp.ne.s32.totalorder %s64, %s78
      %p80 = scmp.eq.s32.totalorder %s19, 0
      %p81 = por %p79, %p80
      %s82 = ssub.s32 %s20, %s32
      %p83 = scmp.eq.s32.totalorder %s82, 0
      %s85 = sadd.s32 %s84, 1
      %s86 = scalar_select %p83, %s84, %s85
      %p89 = pneg %p83
      %p90 = scmp.eq.s32.totalorder %s13, 3
      %p91 = por %p89, %p90
      %p92 = scmp.ne.s32.totalorder %s84, %s87
      %p93 = scmp.eq.s32.totalorder %s13, 0
      %p94 = por %p92, %p93
      %p95 = scmp.ne.s32.totalorder %s84, %s87
      %p96 = scmp.eq.s32.totalorder %s18, 3
      %p97 = por %p95, %p96
      %p98 = scmp.ne.s32.totalorder %s87, %s88
      %p99 = scmp.eq.s32.totalorder %s18, 0
      %p100 = por %p98, %p99
      %p101 = scmp.ne.s32.totalorder %s87, %s88
      %p102 = scmp.eq.s32.totalorder %s19, 3
      %p103 = por %p101, %p102
      %p105 = scmp.ne.s32.totalorder %s88, %s104
      %p106 = scmp.eq.s32.totalorder %s19, 0
      %p107 = por %p105, %p106
      %s108 = ssub.s32 %s20, %s32
      %p109 = scmp.eq.s32.totalorder %s108, 0
      %s111 = sadd.s32 %s110, 1
      %s112 = scalar_select %p109, %s110, %s111
      %p115 = pneg %p109
      %p116 = scmp.eq.s32.totalorder %s13, 3
      %p117 = por %p115, %p116
      %p118 = scmp.ne.s32.totalorder %s110, %s113
      %p119 = scmp.eq.s32.totalorder %s13, 0
      %p120 = por %p118, %p119
      %p121 = scmp.ne.s32.totalorder %s110, %s113
      %p122 = scmp.eq.s32.totalorder %s18, 3
      %p123 = por %p121, %p122
      %p124 = scmp.ne.s32.totalorder %s113, %s114
      %p125 = scmp.eq.s32.totalorder %s18, 0
      %p126 = por %p124, %p125
      %p127 = scmp.ne.s32.totalorder %s113, %s114
      %p128 = scmp.eq.s32.totalorder %s19, 3
      %p129 = por %p127, %p128
      %p131 = scmp.ne.s32.totalorder %s114, %s130
      %p132 = scmp.eq.s32.totalorder %s19, 0
      %p133 = por %p131, %p132
      %p134 = scmp.le.s32.totalorder 1, %s13
      %p135 = scmp.lt.s32.totalorder %s13, 5
      %p136 = pnand %p134, %p135
      %p137 = pneg %p136
      // Predicated region
      $region9: #{tpu_custom_call.1} parent=5 // pred_check
        _
      $region10: #{tpu_custom_call.1} parent=5 // pred_check_branch
        %139 = sbr.rel (%p136) target = $region12
      $region11: #{tpu_custom_call.1} parent=5 // pred_region
        %s140 = ssub.s32 %s13, 1
        // Predicated region
        $region13: #{tpu_custom_call.1} parent=11 // pred_check
          %p141 = pneg %p74
        $region14: #{tpu_custom_call.1} parent=11 // pred_check_branch
          %143 = sbr.rel (%p141) target = $region16
        $region15: #{tpu_custom_call.1} parent=11 // pred_region
          _
        $region16: #{tpu_custom_call.1} parent=11 // pred_fallthru
          _
      $region12: #{tpu_custom_call.1} parent=5 // pred_fallthru
        _
      %p144 = scmp.lt.s32.totalorder %s13, 4
      // Predicated region
      $region17: #{tpu_custom_call.1} parent=5 // pred_check
        %p145 = pneg %p144
      $region18: #{tpu_custom_call.1} parent=5 // pred_check_branch
        %147 = sbr.rel (%p145) target = $region20
      $region19: #{tpu_custom_call.1} parent=5 // pred_region
        // Predicated region
        $region21: #{tpu_custom_call.1} parent=19 // pred_check
          %p148 = pneg %p47
        $region22: #{tpu_custom_call.1} parent=19 // pred_check_branch
          %150 = sbr.rel (%p148) target = $region24
        $region23: #{tpu_custom_call.1} parent=19 // pred_region
          %s151 = sand.u32 %s37, 1
          %s152 = scalar_lea.sflag [#allocation3], %s151
          %s153 = sand.u32 %s37, 1
          %s154 = smul.addr %s153, 32
          %s155 = scalar_lea.vmem [#allocation2], %s154
          %s157 = ssub.s32 512, 512
          %158 = vsyncadd %s152, %s157
          %s159 = smul.addr %s20, 8
          %s160 = sadd.s32 %s21, %s159
          %s161 = smul.addr %s160, 128
          %s162 = scalar_lea.hbm %s0, %s161
          %s163 = sshll.u32 %s155, 4
          %s164 = int_to_ptr.vmem [resolvable:$true] %s163
          %169 = dma.hbm_to_vmem [thread:$0]  %s162, 512, %s164, %s152, 256, 128, 8
        $region24: #{tpu_custom_call.1} parent=19 // pred_fallthru
          _
      $region20: #{tpu_custom_call.1} parent=5 // pred_fallthru
        _
      %p170 = scmp.le.s32.totalorder 1, %s13
      %p171 = scmp.lt.s32.totalorder %s13, 5
      %p172 = pnand %p170, %p171
      %p173 = pneg %p172
      // Predicated region
      $region25: #{tpu_custom_call.1} parent=5 // pred_check
        _
      $region26: #{tpu_custom_call.1} parent=5 // pred_check_branch
        %175 = sbr.rel (%p172) target = $region28
      $region27: #{tpu_custom_call.1} parent=5 // pred_region
        %s176 = ssub.s32 %s13, 1
        %s177 = sand.u32 %s40, 1
        %s178 = scalar_lea.sflag [#allocation3], %s177
        %s179 = sand.u32 %s40, 1
        %s180 = smul.addr %s179, 32
        %s181 = scalar_lea.vmem [#allocation2], %s180
        // Predicated region
        $region29: #{tpu_custom_call.1} parent=27 // pred_check
          %p182 = pneg %p53
        $region30: #{tpu_custom_call.1} parent=27 // pred_check_branch
          %184 = sbr.rel (%p182) target = $region32
        $region31: #{tpu_custom_call.1} parent=27 // pred_region
          %185 = dma.done %s178, 512
        $region32: #{tpu_custom_call.1} parent=27 // pred_fallthru
          _
        %s186 = sand.u32 %s40, 1
        %s187 = scalar_lea.sflag [#allocation3], %s186
        %s188 = sand.u32 %s40, 1
        %s189 = smul.addr %s188, 32
        %s190 = scalar_lea.vmem [#allocation2], %s189
        %p191 = pneg %p53
        %p192 = pneg %p50
        %p193 = pneg %p74
        %p194 = pneg %p71
        %p195 = pneg %p100
        %p196 = pneg %p97
        %p197 = scmp.lt.s32.totalorder %s22, 1
        %s198 = scalar_select %p197, %s22, 1
        %s199 = smul.addr %s198, 4
        %s200 = smul.addr %s199, 8
        %s201 = scalar_lea.vmem %s2, %s200
        %p202 = pneg %p126
        %p203 = pneg %p123
        %p204 = scmp.lt.s32.totalorder %s22, 1
        %s205 = scalar_select %p204, %s22, 1
        %s206 = smul.addr %s205, 4
        %s207 = smul.addr %s206, 8
        %s208 = scalar_lea.vmem %s3, %s207
        %p209 = scmp.lt.s32.totalorder %s22, 1
        %s210 = scalar_select %p209, %s22, 1
        %s211 = smul.addr %s210, 4
        %s212 = smul.addr %s211, 8
        %s213 = scalar_lea.vmem %s2, %s212
        %p214 = scmp.lt.s32.totalorder %s22, 1
        %s215 = scalar_select %p214, %s22, 1
        %s216 = smul.addr %s215, 4
        %s217 = smul.addr %s216, 8
        %s218 = scalar_lea.vmem %s3, %s217
        %p219 = scmp.eq.s32.totalorder %s23, 0
        // Predicated region
        $region33: #{tpu_custom_call.1} parent=27 // pred_check
          %p220 = pneg %p219
        $region34: #{tpu_custom_call.1} parent=27 // pred_check_branch
          %222 = sbr.rel (%p220) target = $region36
        $region35: #{tpu_custom_call.1} parent=27 // pred_region
          %vm223 = vcmask 64512
          %224 = vst.msk [vmem:[%s213] sm:$0xff] %vm223, 0.0
          %225 = vst.msk [vmem:[%s213 + $0x8] sm:$0xff] %vm223, 0.0
          %226 = vst.msk [vmem:[%s213 + $0x10] sm:$0xff] %vm223, 0.0
          %227 = vst.msk [vmem:[%s213 + $0x18] sm:$0xff] %vm223, 0.0
          %vm228 = vcmask 7168
          %229 = vst.msk [vmem:[%s218] sm:$0xff] %vm228, 0.0
          %230 = vst.msk [vmem:[%s218 + $0x8] sm:$0xff] %vm228, 0.0
          %231 = vst.msk [vmem:[%s218 + $0x10] sm:$0xff] %vm228, 0.0
          %232 = vst.msk [vmem:[%s218 + $0x18] sm:$0xff] %vm228, 0.0
        $region36: #{tpu_custom_call.1} parent=27 // pred_fallthru
          _
        %v233 = vld [vmem:[%s181] sm:$0xff]
        %v234 = vld [vmem:[%s181 + $0x8] sm:$0xff]
        %v235 = vld [vmem:[%s181 + $0x10] sm:$0xff]
        %v236 = vld [vmem:[%s181 + $0x18] sm:$0xff]
        %v237 = vld [vmem:[%s1] sm:$0xff]
        %v238 = vld [vmem:[%s1 + $0x8] sm:$0xff]
        %v239 = vld [vmem:[%s1 + $0x10] sm:$0xff]
        %v240 = vld [vmem:[%s1 + $0x18] sm:$0xff]
        %v241 = vld [vmem:[%s1 + $0x20] sm:$0xff]
        %v242 = vld [vmem:[%s1 + $0x28] sm:$0xff]
        %v243 = vld [vmem:[%s1 + $0x30] sm:$0xff]
        %v244 = vld [vmem:[%s1 + $0x38] sm:$0xff]
        %vm245 = vcmask 261120
        %v247 = vsel %vm245, %v237, 0
        %v250 = vsel %vm245, %v238, 0
        %v253 = vsel %vm245, %v239, 0
        %v256 = vsel %vm245, %v240, 0
        %v259 = vsel %vm245, %v241, 0
        %v262 = vsel %vm245, %v242, 0
        %v265 = vsel %vm245, %v243, 0
        %v268 = vsel %vm245, %v244, 0
        %270 = vmatprep.subr.mxu0 0.0
        %v271 = vand.u32 %v233, 4294901760
        %272 = vmatpush1.msra.mxu0 %v271
        %273 = vmatprep.subr.mxu0 0.0
        %v274 = vand.u32 %v234, 4294901760
        %275 = vmatpush1.msra.mxu0 %v274
        %276 = vmatprep.subr.mxu0 0.0
        %v277 = vand.u32 %v235, 4294901760
        %278 = vmatpush1.msra.mxu0 %v277
        %279 = vmatprep.subr.mxu0 0.0
        %v280 = vand.u32 %v236, 4294901760
        %281 = vmatpush1.msra.mxu0 %v280
        %282 = vmatprep.subr.mxu0 0.0
        %283 = vmatpush1.msra.mxu0 0.0
        %284 = vmatprep.subr.mxu0 0.0
        %285 = vmatpush1.msra.mxu0 0.0
        %286 = vmatprep.subr.mxu0 0.0
        %287 = vmatpush1.msra.mxu0 0.0
        %288 = vmatprep.subr.mxu0 0.0
        %289 = vmatpush1.msra.mxu0 0.0
        %290 = vmatprep.subr.mxu0 0.0
        %291 = vmatpush1.msra.mxu0 0.0
        %292 = vmatprep.subr.mxu0 0.0
        %293 = vmatpush1.msra.mxu0 0.0
        %294 = vmatprep.subr.mxu0 0.0
        %295 = vmatpush1.msra.mxu0 0.0
        %296 = vmatprep.subr.mxu0 0.0
        %297 = vmatpush1.msra.mxu0 0.0
        %298 = vmatprep.subr.mxu0 0.0
        %299 = vmatpush1.msra.mxu0 0.0
        %300 = vmatprep.subr.mxu0 0.0
        %301 = vmatpush1.msra.mxu0 0.0
        %302 = vmatprep.subr.mxu0 0.0
        %303 = vmatpush1.msra.mxu0 0.0
        %304 = vmatprep.subr.mxu0 0.0
        %305 = vmatpush1.msra.mxu0 0.0
        %306 = vmatprep.subr.mxu0 0.0
        %307 = vmatpush1.msra.mxu0 0.0
        %308 = vmatprep.subr.mxu0 0.0
        %309 = vmatpush1.msra.mxu0 0.0
        %310 = vmatprep.subr.mxu0 0.0
        %311 = vmatpush1.msra.mxu0 0.0
        %312 = vmatprep.subr.mxu0 0.0
        %313 = vmatpush1.msra.mxu0 0.0
        %314 = vmatprep.subr.mxu0 0.0
        %315 = vmatpush1.msra.mxu0 0.0
        %316 = vmatprep.subr.mxu0 0.0
        %317 = vmatpush1.msra.mxu0 0.0
        %318 = vmatprep.subr.mxu0 0.0
        %319 = vmatpush1.msra.mxu0 0.0
        %320 = vmatprep.subr.mxu0 0.0
        %321 = vmatpush1.msra.mxu0 0.0
        %322 = vmatprep.subr.mxu0 0.0
        %323 = vmatpush1.msra.mxu0 0.0
        %324 = vmatprep.subr.mxu0 0.0
        %325 = vmatpush1.msra.mxu0 0.0
        %326 = vmatprep.subr.mxu0 0.0
        %327 = vmatpush1.msra.mxu0 0.0
        %328 = vmatprep.subr.mxu0 0.0
        %329 = vmatpush1.msra.mxu0 0.0
        %330 = vmatprep.subr.mxu0 0.0
        %331 = vmatpush1.msra.mxu0 0.0
        %332 = vmatprep.subr.mxu0 0.0
        %333 = vmatpush1.msra.mxu0 0.0
        %334 = vmatprep.subr.mxu0 0.0
        %335 = vmatpush1.msra.mxu0 0.0
        %336 = vmatprep.subr.mxu0 0.0
        %337 = vmatpush1.msra.mxu0 0.0
        %338 = vmatprep.mubr.f32.mxu0 0.0
        %v339 = vand.u32 %v247, 4294901760
        %v340 = vsub.f32 %v247, %v339
        %v341 = vand.u32 %v340, 4294901760
        %v342 = vsub.f32 %v340, %v341
        %v343 = vand.u32 %v342, 4294901760
        %344 = vmatmul.mubr.f32.gmra.mrb[0].mxu0 %v343
        %v345 = vpop.f32.mrb[0].mxu0
        %v346 = vadd.f32 0.0, %v345
        %v347 = vpop.f32.mrb[0].mxu0
        %348 = vmatprep.mubr.f32.mxu0 0.0
        %v349 = vand.u32 %v250, 4294901760
        %v350 = vsub.f32 %v250, %v349
        %v351 = vand.u32 %v350, 4294901760
        %v352 = vsub.f32 %v350, %v351
        %v353 = vand.u32 %v352, 4294901760
        %354 = vmatmul.mubr.f32.gmra.mrb[0].mxu0 %v353
        %v355 = vpop.f32.mrb[0].mxu0
        %v356 = vadd.f32 0.0, %v355
        %v357 = vpop.f32.mrb[0].mxu0
        %358 = vmatprep.mubr.f32.mxu0 0.0
        %v359 = vand.u32 %v253, 4294901760
        %v360 = vsub.f32 %v253, %v359
        %v361 = vand.u32 %v360, 4294901760
        %v362 = vsub.f32 %v360, %v361
        %v363 = vand.u32 %v362, 4294901760
        %364 = vmatmul.mubr.f32.gmra.mrb[0].mxu0 %v363
        %v365 = vpop.f32.mrb[0].mxu0
        %v366 = vadd.f32 0.0, %v365
        %v367 = vpop.f32.mrb[0].mxu0
        %368 = vmatprep.mubr.f32.mxu0 0.0
        %v369 = vand.u32 %v256, 4294901760
        %v370 = vsub.f32 %v256, %v369
        %v371 = vand.u32 %v370, 4294901760
        %v372 = vsub.f32 %v370, %v371
        %v373 = vand.u32 %v372, 4294901760
        %374 = vmatmul.mubr.f32.gmra.mrb[0].mxu0 %v373
        %v375 = vpop.f32.mrb[0].mxu0
        %v376 = vadd.f32 0.0, %v375
        %v377 = vpop.f32.mrb[0].mxu0
        %378 = vmatprep.mubr.f32.mxu0 0.0
        %v379 = vand.u32 %v259, 4294901760
        %v380 = vsub.f32 %v259, %v379
        %v381 = vand.u32 %v380, 4294901760
        %v382 = vsub.f32 %v380, %v381
        %v383 = vand.u32 %v382, 4294901760
        %384 = vmatmul.mubr.f32.gmra.mrb[0].mxu0 %v383
        %v385 = vpop.f32.mrb[0].mxu0
        %v386 = vadd.f32 0.0, %v385
        %v387 = vpop.f32.mrb[0].mxu0
        %388 = vmatprep.mubr.f32.mxu0 0.0
        %v389 = vand.u32 %v262, 4294901760
        %v390 = vsub.f32 %v262, %v389
        %v391 = vand.u32 %v390, 4294901760
        %v392 = vsub.f32 %v390, %v391
        %v393 = vand.u32 %v392, 4294901760
        %394 = vmatmul.mubr.f32.gmra.mrb[0].mxu0 %v393
        %v395 = vpop.f32.mrb[0].mxu0
        %v396 = vadd.f32 0.0, %v395
        %v397 = vpop.f32.mrb[0].mxu0
        %398 = vmatprep.mubr.f32.mxu0 0.0
        %v399 = vand.u32 %v265, 4294901760
        %v400 = vsub.f32 %v265, %v399
        %v401 = vand.u32 %v400, 4294901760
        %v402 = vsub.f32 %v400, %v401
        %v403 = vand.u32 %v402, 4294901760
        %404 = vmatmul.mubr.f32.gmra.mrb[0].mxu0 %v403
        %v405 = vpop.f32.mrb[0].mxu0
        %v406 = vadd.f32 0.0, %v405
        %v407 = vpop.f32.mrb[0].mxu0
        %408 = vmatprep.mubr.f32.mxu0 0.0
        %v409 = vand.u32 %v268, 4294901760
        %v410 = vsub.f32 %v268, %v409
        %v411 = vand.u32 %v410, 4294901760
        %v412 = vsub.f32 %v410, %v411
        %v413 = vand.u32 %v412, 4294901760
        %414 = vmatmul.mubr.f32.gmra.mrb[0].mxu0 %v413
        %v415 = vpop.f32.mrb[0].mxu0
        %v416 = vadd.f32 0.0, %v415
        %v417 = vpop.f32.mrb[0].mxu0
        %418 = vdwg.mxu0
        %419 = vmatprep.subr.mxu0 0.0
        %v420 = vand.u32 %v233, 4294901760
        %v421 = vsub.f32 %v233, %v420
        %v422 = vand.u32 %v421, 4294901760
        %v423 = vsub.f32 %v421, %v422
        %v424 = vand.u32 %v423, 4294901760
        %425 = vmatpush1.msra.mxu0 %v424
        %426 = vmatprep.subr.mxu0 0.0
        %v427 = vand.u32 %v234, 4294901760
        %v428 = vsub.f32 %v234, %v427
        %v429 = vand.u32 %v428, 4294901760
        %v430 = vsub.f32 %v428, %v429
        %v431 = vand.u32 %v430, 4294901760
        %432 = vmatpush1.msra.mxu0 %v431
        %433 = vmatprep.subr.mxu0 0.0
        %v434 = vand.u32 %v235, 4294901760
        %v435 = vsub.f32 %v235, %v434
        %v436 = vand.u32 %v435, 4294901760
        %v437 = vsub.f32 %v435, %v436
        %v438 = vand.u32 %v437, 4294901760
        %439 = vmatpush1.msra.mxu0 %v438
        %440 = vmatprep.subr.mxu0 0.0
        %v441 = vand.u32 %v236, 4294901760
        %v442 = vsub.f32 %v236, %v441
        %v443 = vand.u32 %v442, 4294901760
        %v444 = vsub.f32 %v442, %v443
        %v445 = vand.u32 %v444, 4294901760
        %446 = vmatpush1.msra.mxu0 %v445
        %447 = vmatprep.subr.mxu0 0.0
        %448 = vmatpush1.msra.mxu0 0.0
        %449 = vmatprep.subr.mxu0 0.0
        %450 = vmatpush1.msra.mxu0 0.0
        %451 = vmatprep.subr.mxu0 0.0
        %452 = vmatpush1.msra.mxu0 0.0
        %453 = vmatprep.subr.mxu0 0.0
        %454 = vmatpush1.msra.mxu0 0.0
        %455 = vmatprep.subr.mxu0 0.0
        %456 = vmatpush1.msra.mxu0 0.0
        %457 = vmatprep.subr.mxu0 0.0
        %458 = vmatpush1.msra.mxu0 0.0
        %459 = vmatprep.subr.mxu0 0.0
        %460 = vmatpush1.msra.mxu0 0.0
        %461 = vmatprep.subr.mxu0 0.0
        %462 = vmatpush1.msra.mxu0 0.0
        %463 = vmatprep.subr.mxu0 0.0
        %464 = vmatpush1.msra.mxu0 0.0
        %465 = vmatprep.subr.mxu0 0.0
        %466 = vmatpush1.msra.mxu0 0.0
        %467 = vmatprep.subr.mxu0 0.0
        %468 = vmatpush1.msra.mxu0 0.0
        %469 = vmatprep.subr.mxu0 0.0
        %470 = vmatpush1.msra.mxu0 0.0
        %471 = vmatprep.subr.mxu0 0.0
        %472 = vmatpush1.msra.mxu0 0.0
        %473 = vmatprep.subr.mxu0 0.0
        %474 = vmatpush1.msra.mxu0 0.0
        %475 = vmatprep.subr.mxu0 0.0
        %476 = vmatpush1.msra.mxu0 0.0
        %477 = vmatprep.subr.mxu0 0.0
        %478 = vmatpush1.msra.mxu0 0.0
        %479 = vmatprep.subr.mxu0 0.0
        %480 = vmatpush1.msra.mxu0 0.0
        %481 = vmatprep.subr.mxu0 0.0
        %482 = vmatpush1.msra.mxu0 0.0
        %483 = vmatprep.subr.mxu0 0.0
        %484 = vmatpush1.msra.mxu0 0.0
        %485 = vmatprep.subr.mxu0 0.0
        %486 = vmatpush1.msra.mxu0 0.0
        %487 = vmatprep.subr.mxu0 0.0
        %488 = vmatpush1.msra.mxu0 0.0
        %489 = vmatprep.subr.mxu0 0.0
        %490 = vmatpush1.msra.mxu0 0.0
        %491 = vmatprep.subr.mxu0 0.0
        %492 = vmatpush1.msra.mxu0 0.0
        %493 = vmatprep.subr.mxu0 0.0
        %494 = vmatpush1.msra.mxu0 0.0
        %495 = vmatprep.subr.mxu0 0.0
        %496 = vmatpush1.msra.mxu0 0.0
        %497 = vmatprep.subr.mxu0 0.0
        %498 = vmatpush1.msra.mxu0 0.0
        %499 = vmatprep.subr.mxu0 0.0
        %500 = vmatpush1.msra.mxu0 0.0
        %501 = vmatprep.subr.mxu0 0.0
        %502 = vmatpush1.msra.mxu0 0.0
        %503 = vmatprep.mubr.f32.mxu0 0.0
        %v504 = vand.u32 %v247, 4294901760
        %505 = vmatmul.mubr.f32.gmra.mrb[0].mxu0 %v504
        %v506 = vpop.f32.mrb[0].mxu0
        %v507 = vadd.f32 %v346, %v506
        %v508 = vpop.f32.mrb[0].mxu0
        %509 = vmatprep.mubr.f32.mxu0 0.0
        %v510 = vand.u32 %v250, 4294901760
        %511 = vmatmul.mubr.f32.gmra.mrb[0].mxu0 %v510
        %v512 = vpop.f32.mrb[0].mxu0
        %v513 = vadd.f32 %v356, %v512
        %v514 = vpop.f32.mrb[0].mxu0
        %515 = vmatprep.mubr.f32.mxu0 0.0
        %v516 = vand.u32 %v253, 4294901760
        %517 = vmatmul.mubr.f32.gmra.mrb[0].mxu0 %v516
        %v518 = vpop.f32.mrb[0].mxu0
        %v519 = vadd.f32 %v366, %v518
        %v520 = vpop.f32.mrb[0].mxu0
        %521 = vmatprep.mubr.f32.mxu0 0.0
        %v522 = vand.u32 %v256, 4294901760
        %523 = vmatmul.mubr.f32.gmra.mrb[0].mxu0 %v522
        %v524 = vpop.f32.mrb[0].mxu0
        %v525 = vadd.f32 %v376, %v524
        %v526 = vpop.f32.mrb[0].mxu0
        %527 = vmatprep.mubr.f32.mxu0 0.0
        %v528 = vand.u32 %v259, 4294901760
        %529 = vmatmul.mubr.f32.gmra.mrb[0].mxu0 %v528
        %v530 = vpop.f32.mrb[0].mxu0
        %v531 = vadd.f32 %v386, %v530
        %v532 = vpop.f32.mrb[0].mxu0
        %533 = vmatprep.mubr.f32.mxu0 0.0
        %v534 = vand.u32 %v262, 4294901760
        %535 = vmatmul.mubr.f32.gmra.mrb[0].mxu0 %v534
        %v536 = vpop.f32.mrb[0].mxu0
        %v537 = vadd.f32 %v396, %v536
        %v538 = vpop.f32.mrb[0].mxu0
        %539 = vmatprep.mubr.f32.mxu0 0.0
        %v540 = vand.u32 %v265, 4294901760
        %541 = vmatmul.mubr.f32.gmra.mrb[0].mxu0 %v540
        %v542 = vpop.f32.mrb[0].mxu0
        %v543 = vadd.f32 %v406, %v542
        %v544 = vpop.f32.mrb[0].mxu0
        %545 = vmatprep.mubr.f32.mxu0 0.0
        %v546 = vand.u32 %v268, 4294901760
        %547 = vmatmul.mubr.f32.gmra.mrb[0].mxu0 %v546
        %v548 = vpop.f32.mrb[0].mxu0
        %v549 = vadd.f32 %v416, %v548
        %v550 = vpop.f32.mrb[0].mxu0
        %551 = vdwg.mxu0
        %552 = vmatprep.subr.mxu0 0.0
        %v553 = vand.u32 %v233, 4294901760
        %v554 = vsub.f32 %v233, %v553
        %555 = vmatpush1.msra.mxu0 %v554
        %556 = vmatprep.subr.mxu0 0.0
        %v557 = vand.u32 %v234, 4294901760
        %v558 = vsub.f32 %v234, %v557
        %559 = vmatpush1.msra.mxu0 %v558
        %560 = vmatprep.subr.mxu0 0.0
        %v561 = vand.u32 %v235, 4294901760
        %v562 = vsub.f32 %v235, %v561
        %563 = vmatpush1.msra.mxu0 %v562
        %564 = vmatprep.subr.mxu0 0.0
        %v565 = vand.u32 %v236, 4294901760
        %v566 = vsub.f32 %v236, %v565
        %567 = vmatpush1.msra.mxu0 %v566
        %568 = vmatprep.subr.mxu0 0.0
        %569 = vmatpush1.msra.mxu0 0.0
        %570 = vmatprep.subr.mxu0 0.0
        %571 = vmatpush1.msra.mxu0 0.0
        %572 = vmatprep.subr.mxu0 0.0
        %573 = vmatpush1.msra.mxu0 0.0
        %574 = vmatprep.subr.mxu0 0.0
        %575 = vmatpush1.msra.mxu0 0.0
        %576 = vmatprep.subr.mxu0 0.0
        %577 = vmatpush1.msra.mxu0 0.0
        %578 = vmatprep.subr.mxu0 0.0
        %579 = vmatpush1.msra.mxu0 0.0
        %580 = vmatprep.subr.mxu0 0.0
        %581 = vmatpush1.msra.mxu0 0.0
        %582 = vmatprep.subr.mxu0 0.0
        %583 = vmatpush1.msra.mxu0 0.0
        %584 = vmatprep.subr.mxu0 0.0
        %585 = vmatpush1.msra.mxu0 0.0
        %586 = vmatprep.subr.mxu0 0.0
        %587 = vmatpush1.msra.mxu0 0.0
        %588 = vmatprep.subr.mxu0 0.0
        %589 = vmatpush1.msra.mxu0 0.0
        %590 = vmatprep.subr.mxu0 0.0
        %591 = vmatpush1.msra.mxu0 0.0
        %592 = vmatprep.subr.mxu0 0.0
        %593 = vmatpush1.msra.mxu0 0.0
        %594 = vmatprep.subr.mxu0 0.0
        %595 = vmatpush1.msra.mxu0 0.0
        %596 = vmatprep.subr.mxu0 0.0
        %597 = vmatpush1.msra.mxu0 0.0
        %598 = vmatprep.subr.mxu0 0.0
        %599 = vmatpush1.msra.mxu0 0.0
        %600 = vmatprep.subr.mxu0 0.0
        %601 = vmatpush1.msra.mxu0 0.0
        %602 = vmatprep.subr.mxu0 0.0
        %603 = vmatpush1.msra.mxu0 0.0
        %604 = vmatprep.subr.mxu0 0.0
        %605 = vmatpush1.msra.mxu0 0.0
        %606 = vmatprep.subr.mxu0 0.0
        %607 = vmatpush1.msra.mxu0 0.0
        %608 = vmatprep.subr.mxu0 0.0
        %609 = vmatpush1.msra.mxu0 0.0
        %610 = vmatprep.subr.mxu0 0.0
        %611 = vmatpush1.msra.mxu0 0.0
        %612 = vmatprep.subr.mxu0 0.0
        %613 = vmatpush1.msra.mxu0 0.0
        %614 = vmatprep.subr.mxu0 0.0
        %615 = vmatpush1.msra.mxu0 0.0
        %616 = vmatprep.subr.mxu0 0.0
        %617 = vmatpush1.msra.mxu0 0.0
        %618 = vmatprep.subr.mxu0 0.0
        %619 = vmatpush1.msra.mxu0 0.0
        %620 = vmatprep.subr.mxu0 0.0
        %621 = vmatpush1.msra.mxu0 0.0
        %622 = vmatprep.subr.mxu0 0.0
        %623 = vmatpush1.msra.mxu0 0.0
        %624 = vmatprep.mubr.f32.mxu0 0.0
        %v625 = vand.u32 %v247, 4294901760
        %v626 = vsub.f32 %v247, %v625
        %627 = vmatmul.mubr.f32.gmra.mrb[0].mxu0 %v626
        %v628 = vpop.f32.mrb[0].mxu0
        %v629 = vadd.f32 %v507, %v628
        %v630 = vpop.f32.mrb[0].mxu0
        %631 = vmatprep.mubr.f32.mxu0 0.0
        %v632 = vand.u32 %v250, 4294901760
        %v633 = vsub.f32 %v250, %v632
        %634 = vmatmul.mubr.f32.gmra.mrb[0].mxu0 %v633
        %v635 = vpop.f32.mrb[0].mxu0
        %v636 = vadd.f32 %v513, %v635
        %v637 = vpop.f32.mrb[0].mxu0
        %638 = vmatprep.mubr.f32.mxu0 0.0
        %v639 = vand.u32 %v253, 4294901760
        %v640 = vsub.f32 %v253, %v639
        %641 = vmatmul.mubr.f32.gmra.mrb[0].mxu0 %v640
        %v642 = vpop.f32.mrb[0].mxu0
        %v643 = vadd.f32 %v519, %v642
        %v644 = vpop.f32.mrb[0].mxu0
        %645 = vmatprep.mubr.f32.mxu0 0.0
        %v646 = vand.u32 %v256, 4294901760
        %v647 = vsub.f32 %v256, %v646
        %648 = vmatmul.mubr.f32.gmra.mrb[0].mxu0 %v647
        %v649 = vpop.f32.mrb[0].mxu0
        %v650 = vadd.f32 %v525, %v649
        %v651 = vpop.f32.mrb[0].mxu0
        %652 = vmatprep.mubr.f32.mxu0 0.0
        %v653 = vand.u32 %v259, 4294901760
        %v654 = vsub.f32 %v259, %v653
        %655 = vmatmul.mubr.f32.gmra.mrb[0].mxu0 %v654
        %v656 = vpop.f32.mrb[0].mxu0
        %v657 = vadd.f32 %v531, %v656
        %v658 = vpop.f32.mrb[0].mxu0
        %659 = vmatprep.mubr.f32.mxu0 0.0
        %v660 = vand.u32 %v262, 4294901760
        %v661 = vsub.f32 %v262, %v660
        %662 = vmatmul.mubr.f32.gmra.mrb[0].mxu0 %v661
        %v663 = vpop.f32.mrb[0].mxu0
        %v664 = vadd.f32 %v537, %v663
        %v665 = vpop.f32.mrb[0].mxu0
        %666 = vmatprep.mubr.f32.mxu0 0.0
        %v667 = vand.u32 %v265, 4294901760
        %v668 = vsub.f32 %v265, %v667
        %669 = vmatmul.mubr.f32.gmra.mrb[0].mxu0 %v668
        %v670 = vpop.f32.mrb[0].mxu0
        %v671 = vadd.f32 %v543, %v670
        %v672 = vpop.f32.mrb[0].mxu0
        %673 = vmatprep.mubr.f32.mxu0 0.0
        %v674 = vand.u32 %v268, 4294901760
        %v675 = vsub.f32 %v268, %v674
        %676 = vmatmul.mubr.f32.gmra.mrb[0].mxu0 %v675
        %v677 = vpop.f32.mrb[0].mxu0
        %v678 = vadd.f32 %v549, %v677
        %v679 = vpop.f32.mrb[0].mxu0
        %680 = vdwg.mxu0
        %681 = vmatprep.subr.mxu0 0.0
        %v682 = vand.u32 %v233, 4294901760
        %683 = vmatpush1.msra.mxu0 %v682
        %684 = vmatprep.subr.mxu0 0.0
        %v685 = vand.u32 %v234, 4294901760
        %686 = vmatpush1.msra.mxu0 %v685
        %687 = vmatprep.subr.mxu0 0.0
        %v688 = vand.u32 %v235, 4294901760
        %689 = vmatpush1.msra.mxu0 %v688
        %690 = vmatprep.subr.mxu0 0.0
        %v691 = vand.u32 %v236, 4294901760
        %692 = vmatpush1.msra.mxu0 %v691
        %693 = vmatprep.subr.mxu0 0.0
        %694 = vmatpush1.msra.mxu0 0.0
        %695 = vmatprep.subr.mxu0 0.0
        %696 = vmatpush1.msra.mxu0 0.0
        %697 = vmatprep.subr.mxu0 0.0
        %698 = vmatpush1.msra.mxu0 0.0
        %699 = vmatprep.subr.mxu0 0.0
        %700 = vmatpush1.msra.mxu0 0.0
        %701 = vmatprep.subr.mxu0 0.0
        %702 = vmatpush1.msra.mxu0 0.0
        %703 = vmatprep.subr.mxu0 0.0
        %704 = vmatpush1.msra.mxu0 0.0
        %705 = vmatprep.subr.mxu0 0.0
        %706 = vmatpush1.msra.mxu0 0.0
        %707 = vmatprep.subr.mxu0 0.0
        %708 = vmatpush1.msra.mxu0 0.0
        %709 = vmatprep.subr.mxu0 0.0
        %710 = vmatpush1.msra.mxu0 0.0
        %711 = vmatprep.subr.mxu0 0.0
        %712 = vmatpush1.msra.mxu0 0.0
        %713 = vmatprep.subr.mxu0 0.0
        %714 = vmatpush1.msra.mxu0 0.0
        %715 = vmatprep.subr.mxu0 0.0
        %716 = vmatpush1.msra.mxu0 0.0
        %717 = vmatprep.subr.mxu0 0.0
        %718 = vmatpush1.msra.mxu0 0.0
        %719 = vmatprep.subr.mxu0 0.0
        %720 = vmatpush1.msra.mxu0 0.0
        %721 = vmatprep.subr.mxu0 0.0
        %722 = vmatpush1.msra.mxu0 0.0
        %723 = vmatprep.subr.mxu0 0.0
        %724 = vmatpush1.msra.mxu0 0.0
        %725 = vmatprep.subr.mxu0 0.0
        %726 = vmatpush1.msra.mxu0 0.0
        %727 = vmatprep.subr.mxu0 0.0
        %728 = vmatpush1.msra.mxu0 0.0
        %729 = vmatprep.subr.mxu0 0.0
        %730 = vmatpush1.msra.mxu0 0.0
        %731 = vmatprep.subr.mxu0 0.0
        %732 = vmatpush1.msra.mxu0 0.0
        %733 = vmatprep.subr.mxu0 0.0
        %734 = vmatpush1.msra.mxu0 0.0
        %735 = vmatprep.subr.mxu0 0.0
        %736 = vmatpush1.msra.mxu0 0.0
        %737 = vmatprep.subr.mxu0 0.0
        %738 = vmatpush1.msra.mxu0 0.0
        %739 = vmatprep.subr.mxu0 0.0
        %740 = vmatpush1.msra.mxu0 0.0
        %741 = vmatprep.subr.mxu0 0.0
        %742 = vmatpush1.msra.mxu0 0.0
        %743 = vmatprep.subr.mxu0 0.0
        %744 = vmatpush1.msra.mxu0 0.0
        %745 = vmatprep.subr.mxu0 0.0
        %746 = vmatpush1.msra.mxu0 0.0
        %747 = vmatprep.subr.mxu0 0.0
        %748 = vmatpush1.msra.mxu0 0.0
        %749 = vmatprep.mubr.f32.mxu0 0.0
        %v750 = vand.u32 %v247, 4294901760
        %v751 = vsub.f32 %v247, %v750
        %v752 = vand.u32 %v751, 4294901760
        %753 = vmatmul.mubr.f32.gmra.mrb[0].mxu0 %v752
        %v754 = vpop.f32.mrb[0].mxu0
        %v755 = vadd.f32 %v629, %v754
        %v756 = vpop.f32.mrb[0].mxu0
        %757 = vmatprep.mubr.f32.mxu0 0.0
        %v758 = vand.u32 %v250, 4294901760
        %v759 = vsub.f32 %v250, %v758
        %v760 = vand.u32 %v759, 4294901760
        %761 = vmatmul.mubr.f32.gmra.mrb[0].mxu0 %v760
        %v762 = vpop.f32.mrb[0].mxu0
        %v763 = vadd.f32 %v636, %v762
        %v764 = vpop.f32.mrb[0].mxu0
        %765 = vmatprep.mubr.f32.mxu0 0.0
        %v766 = vand.u32 %v253, 4294901760
        %v767 = vsub.f32 %v253, %v766
        %v768 = vand.u32 %v767, 4294901760
        %769 = vmatmul.mubr.f32.gmra.mrb[0].mxu0 %v768
        %v770 = vpop.f32.mrb[0].mxu0
        %v771 = vadd.f32 %v643, %v770
        %v772 = vpop.f32.mrb[0].mxu0
        %773 = vmatprep.mubr.f32.mxu0 0.0
        %v774 = vand.u32 %v256, 4294901760
        %v775 = vsub.f32 %v256, %v774
        %v776 = vand.u32 %v775, 4294901760
        %777 = vmatmul.mubr.f32.gmra.mrb[0].mxu0 %v776
        %v778 = vpop.f32.mrb[0].mxu0
        %v779 = vadd.f32 %v650, %v778
        %v780 = vpop.f32.mrb[0].mxu0
        %781 = vmatprep.mubr.f32.mxu0 0.0
        %v782 = vand.u32 %v259, 4294901760
        %v783 = vsub.f32 %v259, %v782
        %v784 = vand.u32 %v783, 4294901760
        %785 = vmatmul.mubr.f32.gmra.mrb[0].mxu0 %v784
        %v786 = vpop.f32.mrb[0].mxu0
        %v787 = vadd.f32 %v657, %v786
        %v788 = vpop.f32.mrb[0].mxu0
        %789 = vmatprep.mubr.f32.mxu0 0.0
        %v790 = vand.u32 %v262, 4294901760
        %v791 = vsub.f32 %v262, %v790
        %v792 = vand.u32 %v791, 4294901760
        %793 = vmatmul.mubr.f32.gmra.mrb[0].mxu0 %v792
        %v794 = vpop.f32.mrb[0].mxu0
        %v795 = vadd.f32 %v664, %v794
        %v796 = vpop.f32.mrb[0].mxu0
        %797 = vmatprep.mubr.f32.mxu0 0.0
        %v798 = vand.u32 %v265, 4294901760
        %v799 = vsub.f32 %v265, %v798
        %v800 = vand.u32 %v799, 4294901760
        %801 = vmatmul.mubr.f32.gmra.mrb[0].mxu0 %v800
        %v802 = vpop.f32.mrb[0].mxu0
        %v803 = vadd.f32 %v671, %v802
        %v804 = vpop.f32.mrb[0].mxu0
        %805 = vmatprep.mubr.f32.mxu0 0.0
        %v806 = vand.u32 %v268, 4294901760
        %v807 = vsub.f32 %v268, %v806
        %v808 = vand.u32 %v807, 4294901760
        %809 = vmatmul.mubr.f32.gmra.mrb[0].mxu0 %v808
        %v810 = vpop.f32.mrb[0].mxu0
        %v811 = vadd.f32 %v678, %v810
        %v812 = vpop.f32.mrb[0].mxu0
        %813 = vdwg.mxu0
        %814 = vmatprep.subr.mxu0 0.0
        %v815 = vand.u32 %v233, 4294901760
        %v816 = vsub.f32 %v233, %v815
        %v817 = vand.u32 %v816, 4294901760
        %818 = vmatpush1.msra.mxu0 %v817
        %819 = vmatprep.subr.mxu0 0.0
        %v820 = vand.u32 %v234, 4294901760
        %v821 = vsub.f32 %v234, %v820
        %v822 = vand.u32 %v821, 4294901760
        %823 = vmatpush1.msra.mxu0 %v822
        %824 = vmatprep.subr.mxu0 0.0
        %v825 = vand.u32 %v235, 4294901760
        %v826 = vsub.f32 %v235, %v825
        %v827 = vand.u32 %v826, 4294901760
        %828 = vmatpush1.msra.mxu0 %v827
        %829 = vmatprep.subr.mxu0 0.0
        %v830 = vand.u32 %v236, 4294901760
        %v831 = vsub.f32 %v236, %v830
        %v832 = vand.u32 %v831, 4294901760
        %833 = vmatpush1.msra.mxu0 %v832
        %834 = vmatprep.subr.mxu0 0.0
        %835 = vmatpush1.msra.mxu0 0.0
        %836 = vmatprep.subr.mxu0 0.0
        %837 = vmatpush1.msra.mxu0 0.0
        %838 = vmatprep.subr.mxu0 0.0
        %839 = vmatpush1.msra.mxu0 0.0
        %840 = vmatprep.subr.mxu0 0.0
        %841 = vmatpush1.msra.mxu0 0.0
        %842 = vmatprep.subr.mxu0 0.0
        %843 = vmatpush1.msra.mxu0 0.0
        %844 = vmatprep.subr.mxu0 0.0
        %845 = vmatpush1.msra.mxu0 0.0
        %846 = vmatprep.subr.mxu0 0.0
        %847 = vmatpush1.msra.mxu0 0.0
        %848 = vmatprep.subr.mxu0 0.0
        %849 = vmatpush1.msra.mxu0 0.0
        %850 = vmatprep.subr.mxu0 0.0
        %851 = vmatpush1.msra.mxu0 0.0
        %852 = vmatprep.subr.mxu0 0.0
        %853 = vmatpush1.msra.mxu0 0.0
        %854 = vmatprep.subr.mxu0 0.0
        %855 = vmatpush1.msra.mxu0 0.0
        %856 = vmatprep.subr.mxu0 0.0
        %857 = vmatpush1.msra.mxu0 0.0
        %858 = vmatprep.subr.mxu0 0.0
        %859 = vmatpush1.msra.mxu0 0.0
        %860 = vmatprep.subr.mxu0 0.0
        %861 = vmatpush1.msra.mxu0 0.0
        %862 = vmatprep.subr.mxu0 0.0
        %863 = vmatpush1.msra.mxu0 0.0
        %864 = vmatprep.subr.mxu0 0.0
        %865 = vmatpush1.msra.mxu0 0.0
        %866 = vmatprep.subr.mxu0 0.0
        %867 = vmatpush1.msra.mxu0 0.0
        %868 = vmatprep.subr.mxu0 0.0
        %869 = vmatpush1.msra.mxu0 0.0
        %870 = vmatprep.subr.mxu0 0.0
        %871 = vmatpush1.msra.mxu0 0.0
        %872 = vmatprep.subr.mxu0 0.0
        %873 = vmatpush1.msra.mxu0 0.0
        %874 = vmatprep.subr.mxu0 0.0
        %875 = vmatpush1.msra.mxu0 0.0
        %876 = vmatprep.subr.mxu0 0.0
        %877 = vmatpush1.msra.mxu0 0.0
        %878 = vmatprep.subr.mxu0 0.0
        %879 = vmatpush1.msra.mxu0 0.0
        %880 = vmatprep.subr.mxu0 0.0
        %881 = vmatpush1.msra.mxu0 0.0
        %882 = vmatprep.subr.mxu0 0.0
        %883 = vmatpush1.msra.mxu0 0.0
        %884 = vmatprep.subr.mxu0 0.0
        %885 = vmatpush1.msra.mxu0 0.0
        %886 = vmatprep.subr.mxu0 0.0
        %887 = vmatpush1.msra.mxu0 0.0
        %888 = vmatprep.subr.mxu0 0.0
        %889 = vmatpush1.msra.mxu0 0.0
        %890 = vmatprep.mubr.f32.mxu0 0.0
        %v891 = vand.u32 %v247, 4294901760
        %892 = vmatmul.mubr.f32.gmra.mrb[0].mxu0 %v891
        %v893 = vpop.f32.mrb[0].mxu0
        %v894 = vadd.f32 %v755, %v893
        %v895 = vpop.f32.mrb[0].mxu0
        %896 = vmatprep.mubr.f32.mxu0 0.0
        %v897 = vand.u32 %v250, 4294901760
        %898 = vmatmul.mubr.f32.gmra.mrb[0].mxu0 %v897
        %v899 = vpop.f32.mrb[0].mxu0
        %v900 = vadd.f32 %v763, %v899
        %v901 = vpop.f32.mrb[0].mxu0
        %902 = vmatprep.mubr.f32.mxu0 0.0
        %v903 = vand.u32 %v253, 4294901760
        %904 = vmatmul.mubr.f32.gmra.mrb[0].mxu0 %v903
        %v905 = vpop.f32.mrb[0].mxu0
        %v906 = vadd.f32 %v771, %v905
        %v907 = vpop.f32.mrb[0].mxu0
        %908 = vmatprep.mubr.f32.mxu0 0.0
        %v909 = vand.u32 %v256, 4294901760
        %910 = vmatmul.mubr.f32.gmra.mrb[0].mxu0 %v909
        %v911 = vpop.f32.mrb[0].mxu0
        %v912 = vadd.f32 %v779, %v911
        %v913 = vpop.f32.mrb[0].mxu0
        %914 = vmatprep.mubr.f32.mxu0 0.0
        %v915 = vand.u32 %v259, 4294901760
        %916 = vmatmul.mubr.f32.gmra.mrb[0].mxu0 %v915
        %v917 = vpop.f32.mrb[0].mxu0
        %v918 = vadd.f32 %v787, %v917
        %v919 = vpop.f32.mrb[0].mxu0
        %920 = vmatprep.mubr.f32.mxu0 0.0
        %v921 = vand.u32 %v262, 4294901760
        %922 = vmatmul.mubr.f32.gmra.mrb[0].mxu0 %v921
        %v923 = vpop.f32.mrb[0].mxu0
        %v924 = vadd.f32 %v795, %v923
        %v925 = vpop.f32.mrb[0].mxu0
        %926 = vmatprep.mubr.f32.mxu0 0.0
        %v927 = vand.u32 %v265, 4294901760
        %928 = vmatmul.mubr.f32.gmra.mrb[0].mxu0 %v927
        %v929 = vpop.f32.mrb[0].mxu0
        %v930 = vadd.f32 %v803, %v929
        %v931 = vpop.f32.mrb[0].mxu0
        %932 = vmatprep.mubr.f32.mxu0 0.0
        %v933 = vand.u32 %v268, 4294901760
        %934 = vmatmul.mubr.f32.gmra.mrb[0].mxu0 %v933
        %v935 = vpop.f32.mrb[0].mxu0
        %v936 = vadd.f32 %v811, %v935
        %v937 = vpop.f32.mrb[0].mxu0
        %938 = vdwg.mxu0
        %939 = vmatprep.subr.mxu0 0.0
        %v940 = vand.u32 %v233, 4294901760
        %941 = vmatpush1.msra.mxu0 %v940
        %942 = vmatprep.subr.mxu0 0.0
        %v943 = vand.u32 %v234, 4294901760
        %944 = vmatpush1.msra.mxu0 %v943
        %945 = vmatprep.subr.mxu0 0.0
        %v946 = vand.u32 %v235, 4294901760
        %947 = vmatpush1.msra.mxu0 %v946
        %948 = vmatprep.subr.mxu0 0.0
        %v949 = vand.u32 %v236, 4294901760
        %950 = vmatpush1.msra.mxu0 %v949
        %951 = vmatprep.subr.mxu0 0.0
        %952 = vmatpush1.msra.mxu0 0.0
        %953 = vmatprep.subr.mxu0 0.0
        %954 = vmatpush1.msra.mxu0 0.0
        %955 = vmatprep.subr.mxu0 0.0
        %956 = vmatpush1.msra.mxu0 0.0
        %957 = vmatprep.subr.mxu0 0.0
        %958 = vmatpush1.msra.mxu0 0.0
        %959 = vmatprep.subr.mxu0 0.0
        %960 = vmatpush1.msra.mxu0 0.0
        %961 = vmatprep.subr.mxu0 0.0
        %962 = vmatpush1.msra.mxu0 0.0
        %963 = vmatprep.subr.mxu0 0.0
        %964 = vmatpush1.msra.mxu0 0.0
        %965 = vmatprep.subr.mxu0 0.0
        %966 = vmatpush1.msra.mxu0 0.0
        %967 = vmatprep.subr.mxu0 0.0
        %968 = vmatpush1.msra.mxu0 0.0
        %969 = vmatprep.subr.mxu0 0.0
        %970 = vmatpush1.msra.mxu0 0.0
        %971 = vmatprep.subr.mxu0 0.0
        %972 = vmatpush1.msra.mxu0 0.0
        %973 = vmatprep.subr.mxu0 0.0
        %974 = vmatpush1.msra.mxu0 0.0
        %975 = vmatprep.subr.mxu0 0.0
        %976 = vmatpush1.msra.mxu0 0.0
        %977 = vmatprep.subr.mxu0 0.0
        %978 = vmatpush1.msra.mxu0 0.0
        %979 = vmatprep.subr.mxu0 0.0
        %980 = vmatpush1.msra.mxu0 0.0
        %981 = vmatprep.subr.mxu0 0.0
        %982 = vmatpush1.msra.mxu0 0.0
        %983 = vmatprep.subr.mxu0 0.0
        %984 = vmatpush1.msra.mxu0 0.0
        %985 = vmatprep.subr.mxu0 0.0
        %986 = vmatpush1.msra.mxu0 0.0
        %987 = vmatprep.subr.mxu0 0.0
        %988 = vmatpush1.msra.mxu0 0.0
        %989 = vmatprep.subr.mxu0 0.0
        %990 = vmatpush1.msra.mxu0 0.0
        %991 = vmatprep.subr.mxu0 0.0
        %992 = vmatpush1.msra.mxu0 0.0
        %993 = vmatprep.subr.mxu0 0.0
        %994 = vmatpush1.msra.mxu0 0.0
        %995 = vmatprep.subr.mxu0 0.0
        %996 = vmatpush1.msra.mxu0 0.0
        %997 = vmatprep.subr.mxu0 0.0
        %998 = vmatpush1.msra.mxu0 0.0
        %999 = vmatprep.subr.mxu0 0.0
        %1000 = vmatpush1.msra.mxu0 0.0
        %1001 = vmatprep.subr.mxu0 0.0
        %1002 = vmatpush1.msra.mxu0 0.0
        %1003 = vmatprep.subr.mxu0 0.0
        %1004 = vmatpush1.msra.mxu0 0.0
        %1005 = vmatprep.subr.mxu0 0.0
        %1006 = vmatpush1.msra.mxu0 0.0
        %1007 = vmatprep.mubr.f32.mxu0 0.0
        %v1008 = vand.u32 %v247, 4294901760
        %1009 = vmatmul.mubr.f32.gmra.mrb[0].mxu0 %v1008
        %v1010 = vpop.f32.mrb[0].mxu0
        %v1011 = vadd.f32 %v894, %v1010
        %v1012 = vpop.f32.mrb[0].mxu0
        %1013 = vmatprep.mubr.f32.mxu0 0.0
        %v1014 = vand.u32 %v250, 4294901760
        %1015 = vmatmul.mubr.f32.gmra.mrb[0].mxu0 %v1014
        %v1016 = vpop.f32.mrb[0].mxu0
        %v1017 = vadd.f32 %v900, %v1016
        %v1018 = vpop.f32.mrb[0].mxu0
        %1019 = vmatprep.mubr.f32.mxu0 0.0
        %v1020 = vand.u32 %v253, 4294901760
        %1021 = vmatmul.mubr.f32.gmra.mrb[0].mxu0 %v1020
        %v1022 = vpop.f32.mrb[0].mxu0
        %v1023 = vadd.f32 %v906, %v1022
        %v1024 = vpop.f32.mrb[0].mxu0
        %1025 = vmatprep.mubr.f32.mxu0 0.0
        %v1026 = vand.u32 %v256, 4294901760
        %1027 = vmatmul.mubr.f32.gmra.mrb[0].mxu0 %v1026
        %v1028 = vpop.f32.mrb[0].mxu0
        %v1029 = vadd.f32 %v912, %v1028
        %v1030 = vpop.f32.mrb[0].mxu0
        %1031 = vmatprep.mubr.f32.mxu0 0.0
        %v1032 = vand.u32 %v259, 4294901760
        %1033 = vmatmul.mubr.f32.gmra.mrb[0].mxu0 %v1032
        %v1034 = vpop.f32.mrb[0].mxu0
        %v1035 = vadd.f32 %v918, %v1034
        %v1036 = vpop.f32.mrb[0].mxu0
        %1037 = vmatprep.mubr.f32.mxu0 0.0
        %v1038 = vand.u32 %v262, 4294901760
        %1039 = vmatmul.mubr.f32.gmra.mrb[0].mxu0 %v1038
        %v1040 = vpop.f32.mrb[0].mxu0
        %v1041 = vadd.f32 %v924, %v1040
        %v1042 = vpop.f32.mrb[0].mxu0
        %1043 = vmatprep.mubr.f32.mxu0 0.0
        %v1044 = vand.u32 %v265, 4294901760
        %1045 = vmatmul.mubr.f32.gmra.mrb[0].mxu0 %v1044
        %v1046 = vpop.f32.mrb[0].mxu0
        %v1047 = vadd.f32 %v930, %v1046
        %v1048 = vpop.f32.mrb[0].mxu0
        %1049 = vmatprep.mubr.f32.mxu0 0.0
        %v1050 = vand.u32 %v268, 4294901760
        %1051 = vmatmul.mubr.f32.gmra.mrb[0].mxu0 %v1050
        %v1052 = vpop.f32.mrb[0].mxu0
        %v1053 = vadd.f32 %v936, %v1052
        %v1054 = vpop.f32.mrb[0].mxu0
        %1055 = vdwg.mxu0
        %v1056 = vmin.f32 %v1011, 0.0
        %v1057 = vmin.f32 %v1017, 0.0
        %v1058 = vmin.f32 %v1023, 0.0
        %v1059 = vmin.f32 %v1029, 0.0
        %v1060 = vmul.f32 %v1056, 1.442695
        %v1061 = vpow.pop %v1060
        %v1062 = vmul.f32 %v1057, 1.442695
        %v1063 = vpow.pop %v1062
        %v1064 = vmul.f32 %v1058, 1.442695
        %v1065 = vpow.pop %v1064
        %v1066 = vmul.f32 %v1059, 1.442695
        %v1067 = vpow.pop %v1066
        %v1068 = vmax.f32 %v1011, 0.0
        %v1069 = vmax.f32 %v1017, 0.0
        %v1070 = vmax.f32 %v1023, 0.0
        %v1071 = vmax.f32 %v1029, 0.0
        %v1072 = vadd.f32 %v1061, %v1068
        %v1073 = vadd.f32 %v1063, %v1069
        %v1074 = vadd.f32 %v1065, %v1070
        %v1075 = vadd.f32 %v1067, %v1071
        %v1076 = vld [vmem:[%s218] sm:$0xff]
        %v1077 = vld [vmem:[%s218 + $0x8] sm:$0xff]
        %v1078 = vld [vmem:[%s218 + $0x10] sm:$0xff]
        %v1079 = vld [vmem:[%s218 + $0x18] sm:$0xff]
        %1080 = vadd.xlane.f32.xlu0 %v1072
        %v1081 = vpop.xlane.xlu0 %1080
        %1082 = vadd.xlane.f32.xlu0 %v1073
        %v1083 = vpop.xlane.xlu0 %1082
        %1084 = vadd.xlane.f32.xlu0 %v1074
        %v1085 = vpop.xlane.xlu0 %1084
        %1086 = vadd.xlane.f32.xlu0 %v1075
        %v1087 = vpop.xlane.xlu0 %1086
        %v1088 = vadd.f32 %v1076, %v1081
        %v1089 = vadd.f32 %v1077, %v1083
        %v1090 = vadd.f32 %v1078, %v1085
        %v1091 = vadd.f32 %v1079, %v1087
        %vm1092 = vcmask 7168
        %1093 = vst.msk [vmem:[%s218] sm:$0xff] %vm1092, %v1088
        %1094 = vst.msk [vmem:[%s218 + $0x8] sm:$0xff] %vm1092, %v1089
        %1095 = vst.msk [vmem:[%s218 + $0x10] sm:$0xff] %vm1092, %v1090
        %1096 = vst.msk [vmem:[%s218 + $0x18] sm:$0xff] %vm1092, %v1091
        %v1097 = vld [vmem:[%s213] sm:$0xff]
        %1098 = vmatprep.subr.mxu0 0.0
        %v1099 = vand.u32 %v1072, 4294901760
        %1100 = vmatpush1.xpose.msra.mxu0 %v1099
        %1101 = vmatprep.subr.mxu0 0.0
        %1102 = vmatpush1.xpose.msra.mxu0 0.0
        %1103 = vmatprep.subr.mxu0 0.0
        %1104 = vmatpush1.xpose.msra.mxu0 0.0
        %1105 = vmatprep.subr.mxu0 0.0
        %1106 = vmatpush1.xpose.msra.mxu0 0.0
        %1107 = vmatprep.subr.mxu0 0.0
        %1108 = vmatpush1.xpose.msra.mxu0 0.0
        %1109 = vmatprep.subr.mxu0 0.0
        %1110 = vmatpush1.xpose.msra.mxu0 0.0
        %1111 = vmatprep.subr.mxu0 0.0
        %1112 = vmatpush1.xpose.msra.mxu0 0.0
        %1113 = vmatprep.subr.mxu0 0.0
        %1114 = vmatpush1.xpose.msra.mxu0 0.0
        %1115 = vmatprep.subr.mxu0 0.0
        %1116 = vmatpush1.xpose.msra.mxu0 0.0
        %1117 = vmatprep.subr.mxu0 0.0
        %1118 = vmatpush1.xpose.msra.mxu0 0.0
        %1119 = vmatprep.subr.mxu0 0.0
        %1120 = vmatpush1.xpose.msra.mxu0 0.0
        %1121 = vmatprep.subr.mxu0 0.0
        %1122 = vmatpush1.xpose.msra.mxu0 0.0
        %1123 = vmatprep.subr.mxu0 0.0
        %1124 = vmatpush1.xpose.msra.mxu0 0.0
        %1125 = vmatprep.subr.mxu0 0.0
        %1126 = vmatpush1.xpose.msra.mxu0 0.0
        %1127 = vmatprep.subr.mxu0 0.0
        %1128 = vmatpush1.xpose.msra.mxu0 0.0
        %1129 = vmatprep.subr.mxu0 0.0
        %1130 = vmatpush1.xpose.msra.mxu0 0.0
        %1131 = vmatprep.subr.mxu0 0.0
        %1132 = vmatpush1.xpose.msra.mxu0 0.0
        %1133 = vmatprep.subr.mxu0 0.0
        %1134 = vmatpush1.xpose.msra.mxu0 0.0
        %1135 = vmatprep.subr.mxu0 0.0
        %1136 = vmatpush1.xpose.msra.mxu0 0.0
        %1137 = vmatprep.subr.mxu0 0.0
        %1138 = vmatpush1.xpose.msra.mxu0 0.0
        %1139 = vmatprep.subr.mxu0 0.0
        %1140 = vmatpush1.xpose.msra.mxu0 0.0
        %1141 = vmatprep.subr.mxu0 0.0
        %1142 = vmatpush1.xpose.msra.mxu0 0.0
        %1143 = vmatprep.subr.mxu0 0.0
        %1144 = vmatpush1.xpose.msra.mxu0 0.0
        %1145 = vmatprep.subr.mxu0 0.0
        %1146 = vmatpush1.xpose.msra.mxu0 0.0
        %1147 = vmatprep.subr.mxu0 0.0
        %1148 = vmatpush1.xpose.msra.mxu0 0.0
        %1149 = vmatprep.subr.mxu0 0.0
        %1150 = vmatpush1.xpose.msra.mxu0 0.0
        %1151 = vmatprep.subr.mxu0 0.0
        %1152 = vmatpush1.xpose.msra.mxu0 0.0
        %1153 = vmatprep.subr.mxu0 0.0
        %1154 = vmatpush1.xpose.msra.mxu0 0.0
        %1155 = vmatprep.subr.mxu0 0.0
        %1156 = vmatpush1.xpose.msra.mxu0 0.0
        %1157 = vmatprep.subr.mxu0 0.0
        %1158 = vmatpush1.xpose.msra.mxu0 0.0
        %1159 = vmatprep.subr.mxu0 0.0
        %1160 = vmatpush1.xpose.msra.mxu0 0.0
        %1161 = vmatprep.subr.mxu0 0.0
        %1162 = vmatpush1.xpose.msra.mxu0 0.0
        %1163 = vmatprep.mubr.f32.mxu0 0.0
        %v1164 = vand.u32 %v1035, 4294901760
        %v1165 = vsub.f32 %v1035, %v1164
        %v1166 = vand.u32 %v1165, 4294901760
        %v1167 = vsub.f32 %v1165, %v1166
        %v1168 = vand.u32 %v1167, 4294901760
        %1169 = vmatmul.mubr.f32.gmra.mrb[0].mxu0 %v1168
        %v1170 = vpop.f32.mrb[0].mxu0
        %v1171 = vadd.f32 0.0, %v1170
        %v1172 = vpop.f32.mrb[0].mxu0
        %1173 = vdwg.mxu0
        %1174 = vmatprep.subr.mxu0 0.0
        %v1175 = vand.u32 %v1072, 4294901760
        %v1176 = vsub.f32 %v1072, %v1175
        %v1177 = vand.u32 %v1176, 4294901760
        %v1178 = vsub.f32 %v1176, %v1177
        %v1179 = vand.u32 %v1178, 4294901760
        %1180 = vmatpush1.xpose.msra.mxu0 %v1179
        %1181 = vmatprep.subr.mxu0 0.0
        %1182 = vmatpush1.xpose.msra.mxu0 0.0
        %1183 = vmatprep.subr.mxu0 0.0
        %1184 = vmatpush1.xpose.msra.mxu0 0.0
        %1185 = vmatprep.subr.mxu0 0.0
        %1186 = vmatpush1.xpose.msra.mxu0 0.0
        %1187 = vmatprep.subr.mxu0 0.0
        %1188 = vmatpush1.xpose.msra.mxu0 0.0
        %1189 = vmatprep.subr.mxu0 0.0
        %1190 = vmatpush1.xpose.msra.mxu0 0.0
        %1191 = vmatprep.subr.mxu0 0.0
        %1192 = vmatpush1.xpose.msra.mxu0 0.0
        %1193 = vmatprep.subr.mxu0 0.0
        %1194 = vmatpush1.xpose.msra.mxu0 0.0
        %1195 = vmatprep.subr.mxu0 0.0
        %1196 = vmatpush1.xpose.msra.mxu0 0.0
        %1197 = vmatprep.subr.mxu0 0.0
        %1198 = vmatpush1.xpose.msra.mxu0 0.0
        %1199 = vmatprep.subr.mxu0 0.0
        %1200 = vmatpush1.xpose.msra.mxu0 0.0
        %1201 = vmatprep.subr.mxu0 0.0
        %1202 = vmatpush1.xpose.msra.mxu0 0.0
        %1203 = vmatprep.subr.mxu0 0.0
        %1204 = vmatpush1.xpose.msra.mxu0 0.0
        %1205 = vmatprep.subr.mxu0 0.0
        %1206 = vmatpush1.xpose.msra.mxu0 0.0
        %1207 = vmatprep.subr.mxu0 0.0
        %1208 = vmatpush1.xpose.msra.mxu0 0.0
        %1209 = vmatprep.subr.mxu0 0.0
        %1210 = vmatpush1.xpose.msra.mxu0 0.0
        %1211 = vmatprep.subr.mxu0 0.0
        %1212 = vmatpush1.xpose.msra.mxu0 0.0
        %1213 = vmatprep.subr.mxu0 0.0
        %1214 = vmatpush1.xpose.msra.mxu0 0.0
        %1215 = vmatprep.subr.mxu0 0.0
        %1216 = vmatpush1.xpose.msra.mxu0 0.0
        %1217 = vmatprep.subr.mxu0 0.0
        %1218 = vmatpush1.xpose.msra.mxu0 0.0
        %1219 = vmatprep.subr.mxu0 0.0
        %1220 = vmatpush1.xpose.msra.mxu0 0.0
        %1221 = vmatprep.subr.mxu0 0.0
        %1222 = vmatpush1.xpose.msra.mxu0 0.0
        %1223 = vmatprep.subr.mxu0 0.0
        %1224 = vmatpush1.xpose.msra.mxu0 0.0
        %1225 = vmatprep.subr.mxu0 0.0
        %1226 = vmatpush1.xpose.msra.mxu0 0.0
        %1227 = vmatprep.subr.mxu0 0.0
        %1228 = vmatpush1.xpose.msra.mxu0 0.0
        %1229 = vmatprep.subr.mxu0 0.0
        %1230 = vmatpush1.xpose.msra.mxu0 0.0
        %1231 = vmatprep.subr.mxu0 0.0
        %1232 = vmatpush1.xpose.msra.mxu0 0.0
        %1233 = vmatprep.subr.mxu0 0.0
        %1234 = vmatpush1.xpose.msra.mxu0 0.0
        %1235 = vmatprep.subr.mxu0 0.0
        %1236 = vmatpush1.xpose.msra.mxu0 0.0
        %1237 = vmatprep.subr.mxu0 0.0
        %1238 = vmatpush1.xpose.msra.mxu0 0.0
        %1239 = vmatprep.subr.mxu0 0.0
        %1240 = vmatpush1.xpose.msra.mxu0 0.0
        %1241 = vmatprep.subr.mxu0 0.0
        %1242 = vmatpush1.xpose.msra.mxu0 0.0
        %1243 = vmatprep.mubr.f32.mxu0 0.0
        %v1244 = vand.u32 %v1035, 4294901760
        %1245 = vmatmul.mubr.f32.gmra.mrb[0].mxu0 %v1244
        %v1246 = vpop.f32.mrb[0].mxu0
        %v1247 = vadd.f32 %v1171, %v1246
        %v1248 = vpop.f32.mrb[0].mxu0
        %1249 = vdwg.mxu0
        %1250 = vmatprep.subr.mxu0 0.0
        %v1251 = vand.u32 %v1072, 4294901760
        %v1252 = vsub.f32 %v1072, %v1251
        %1253 = vmatpush1.xpose.msra.mxu0 %v1252
        %1254 = vmatprep.subr.mxu0 0.0
        %1255 = vmatpush1.xpose.msra.mxu0 0.0
        %1256 = vmatprep.subr.mxu0 0.0
        %1257 = vmatpush1.xpose.msra.mxu0 0.0
        %1258 = vmatprep.subr.mxu0 0.0
        %1259 = vmatpush1.xpose.msra.mxu0 0.0
        %1260 = vmatprep.subr.mxu0 0.0
        %1261 = vmatpush1.xpose.msra.mxu0 0.0
        %1262 = vmatprep.subr.mxu0 0.0
        %1263 = vmatpush1.xpose.msra.mxu0 0.0
        %1264 = vmatprep.subr.mxu0 0.0
        %1265 = vmatpush1.xpose.msra.mxu0 0.0
        %1266 = vmatprep.subr.mxu0 0.0
        %1267 = vmatpush1.xpose.msra.mxu0 0.0
        %1268 = vmatprep.subr.mxu0 0.0
        %1269 = vmatpush1.xpose.msra.mxu0 0.0
        %1270 = vmatprep.subr.mxu0 0.0
        %1271 = vmatpush1.xpose.msra.mxu0 0.0
        %1272 = vmatprep.subr.mxu0 0.0
        %1273 = vmatpush1.xpose.msra.mxu0 0.0
        %1274 = vmatprep.subr.mxu0 0.0
        %1275 = vmatpush1.xpose.msra.mxu0 0.0
        %1276 = vmatprep.subr.mxu0 0.0
        %1277 = vmatpush1.xpose.msra.mxu0 0.0
        %1278 = vmatprep.subr.mxu0 0.0
        %1279 = vmatpush1.xpose.msra.mxu0 0.0
        %1280 = vmatprep.subr.mxu0 0.0
        %1281 = vmatpush1.xpose.msra.mxu0 0.0
        %1282 = vmatprep.subr.mxu0 0.0
        %1283 = vmatpush1.xpose.msra.mxu0 0.0
        %1284 = vmatprep.subr.mxu0 0.0
        %1285 = vmatpush1.xpose.msra.mxu0 0.0
        %1286 = vmatprep.subr.mxu0 0.0
        %1287 = vmatpush1.xpose.msra.mxu0 0.0
        %1288 = vmatprep.subr.mxu0 0.0
        %1289 = vmatpush1.xpose.msra.mxu0 0.0
        %1290 = vmatprep.subr.mxu0 0.0
        %1291 = vmatpush1.xpose.msra.mxu0 0.0
        %1292 = vmatprep.subr.mxu0 0.0
        %1293 = vmatpush1.xpose.msra.mxu0 0.0
        %1294 = vmatprep.subr.mxu0 0.0
        %1295 = vmatpush1.xpose.msra.mxu0 0.0
        %1296 = vmatprep.subr.mxu0 0.0
        %1297 = vmatpush1.xpose.msra.mxu0 0.0
        %1298 = vmatprep.subr.mxu0 0.0
        %1299 = vmatpush1.xpose.msra.mxu0 0.0
        %1300 = vmatprep.subr.mxu0 0.0
        %1301 = vmatpush1.xpose.msra.mxu0 0.0
        %1302 = vmatprep.subr.mxu0 0.0
        %1303 = vmatpush1.xpose.msra.mxu0 0.0
        %1304 = vmatprep.subr.mxu0 0.0
        %1305 = vmatpush1.xpose.msra.mxu0 0.0
        %1306 = vmatprep.subr.mxu0 0.0
        %1307 = vmatpush1.xpose.msra.mxu0 0.0
        %1308 = vmatprep.subr.mxu0 0.0
        %1309 = vmatpush1.xpose.msra.mxu0 0.0
        %1310 = vmatprep.subr.mxu0 0.0
        %1311 = vmatpush1.xpose.msra.mxu0 0.0
        %1312 = vmatprep.subr.mxu0 0.0
        %1313 = vmatpush1.xpose.msra.mxu0 0.0
        %1314 = vmatprep.subr.mxu0 0.0
        %1315 = vmatpush1.xpose.msra.mxu0 0.0
        %1316 = vmatprep.mubr.f32.mxu0 0.0
        %v1317 = vand.u32 %v1035, 4294901760
        %v1318 = vsub.f32 %v1035, %v1317
        %1319 = vmatmul.mubr.f32.gmra.mrb[0].mxu0 %v1318
        %v1320 = vpop.f32.mrb[0].mxu0
        %v1321 = vadd.f32 %v1247, %v1320
        %v1322 = vpop.f32.mrb[0].mxu0
        %1323 = vdwg.mxu0
        %1324 = vmatprep.subr.mxu0 0.0
        %v1325 = vand.u32 %v1072, 4294901760
        %1326 = vmatpush1.xpose.msra.mxu0 %v1325
        %1327 = vmatprep.subr.mxu0 0.0
        %1328 = vmatpush1.xpose.msra.mxu0 0.0
        %1329 = vmatprep.subr.mxu0 0.0
        %1330 = vmatpush1.xpose.msra.mxu0 0.0
        %1331 = vmatprep.subr.mxu0 0.0
        %1332 = vmatpush1.xpose.msra.mxu0 0.0
        %1333 = vmatprep.subr.mxu0 0.0
        %1334 = vmatpush1.xpose.msra.mxu0 0.0
        %1335 = vmatprep.subr.mxu0 0.0
        %1336 = vmatpush1.xpose.msra.mxu0 0.0
        %1337 = vmatprep.subr.mxu0 0.0
        %1338 = vmatpush1.xpose.msra.mxu0 0.0
        %1339 = vmatprep.subr.mxu0 0.0
        %1340 = vmatpush1.xpose.msra.mxu0 0.0
        %1341 = vmatprep.subr.mxu0 0.0
        %1342 = vmatpush1.xpose.msra.mxu0 0.0
        %1343 = vmatprep.subr.mxu0 0.0
        %1344 = vmatpush1.xpose.msra.mxu0 0.0
        %1345 = vmatprep.subr.mxu0 0.0
        %1346 = vmatpush1.xpose.msra.mxu0 0.0
        %1347 = vmatprep.subr.mxu0 0.0
        %1348 = vmatpush1.xpose.msra.mxu0 0.0
        %1349 = vmatprep.subr.mxu0 0.0
        %1350 = vmatpush1.xpose.msra.mxu0 0.0
        %1351 = vmatprep.subr.mxu0 0.0
        %1352 = vmatpush1.xpose.msra.mxu0 0.0
        %1353 = vmatprep.subr.mxu0 0.0
        %1354 = vmatpush1.xpose.msra.mxu0 0.0
        %1355 = vmatprep.subr.mxu0 0.0
        %1356 = vmatpush1.xpose.msra.mxu0 0.0
        %1357 = vmatprep.subr.mxu0 0.0
        %1358 = vmatpush1.xpose.msra.mxu0 0.0
        %1359 = vmatprep.subr.mxu0 0.0
        %1360 = vmatpush1.xpose.msra.mxu0 0.0
        %1361 = vmatprep.subr.mxu0 0.0
        %1362 = vmatpush1.xpose.msra.mxu0 0.0
        %1363 = vmatprep.subr.mxu0 0.0
        %1364 = vmatpush1.xpose.msra.mxu0 0.0
        %1365 = vmatprep.subr.mxu0 0.0
        %1366 = vmatpush1.xpose.msra.mxu0 0.0
        %1367 = vmatprep.subr.mxu0 0.0
        %1368 = vmatpush1.xpose.msra.mxu0 0.0
        %1369 = vmatprep.subr.mxu0 0.0
        %1370 = vmatpush1.xpose.msra.mxu0 0.0
        %1371 = vmatprep.subr.mxu0 0.0
        %1372 = vmatpush1.xpose.msra.mxu0 0.0
        %1373 = vmatprep.subr.mxu0 0.0
        %1374 = vmatpush1.xpose.msra.mxu0 0.0
        %1375 = vmatprep.subr.mxu0 0.0
        %1376 = vmatpush1.xpose.msra.mxu0 0.0
        %1377 = vmatprep.subr.mxu0 0.0
        %1378 = vmatpush1.xpose.msra.mxu0 0.0
        %1379 = vmatprep.subr.mxu0 0.0
        %1380 = vmatpush1.xpose.msra.mxu0 0.0
        %1381 = vmatprep.subr.mxu0 0.0
        %1382 = vmatpush1.xpose.msra.mxu0 0.0
        %1383 = vmatprep.subr.mxu0 0.0
        %1384 = vmatpush1.xpose.msra.mxu0 0.0
        %1385 = vmatprep.subr.mxu0 0.0
        %1386 = vmatpush1.xpose.msra.mxu0 0.0
        %1387 = vmatprep.subr.mxu0 0.0
        %1388 = vmatpush1.xpose.msra.mxu0 0.0
        %1389 = vmatprep.mubr.f32.mxu0 0.0
        %v1390 = vand.u32 %v1035, 4294901760
        %v1391 = vsub.f32 %v1035, %v1390
        %v1392 = vand.u32 %v1391, 4294901760
        %1393 = vmatmul.mubr.f32.gmra.mrb[0].mxu0 %v1392
        %v1394 = vpop.f32.mrb[0].mxu0
        %v1395 = vadd.f32 %v1321, %v1394
        %v1396 = vpop.f32.mrb[0].mxu0
        %1397 = vdwg.mxu0
        %1398 = vmatprep.subr.mxu0 0.0
        %v1399 = vand.u32 %v1072, 4294901760
        %v1400 = vsub.f32 %v1072, %v1399
        %v1401 = vand.u32 %v1400, 4294901760
        %1402 = vmatpush1.xpose.msra.mxu0 %v1401
        %1403 = vmatprep.subr.mxu0 0.0
        %1404 = vmatpush1.xpose.msra.mxu0 0.0
        %1405 = vmatprep.subr.mxu0 0.0
        %1406 = vmatpush1.xpose.msra.mxu0 0.0
        %1407 = vmatprep.subr.mxu0 0.0
        %1408 = vmatpush1.xpose.msra.mxu0 0.0
        %1409 = vmatprep.subr.mxu0 0.0
        %1410 = vmatpush1.xpose.msra.mxu0 0.0
        %1411 = vmatprep.subr.mxu0 0.0
        %1412 = vmatpush1.xpose.msra.mxu0 0.0
        %1413 = vmatprep.subr.mxu0 0.0
        %1414 = vmatpush1.xpose.msra.mxu0 0.0
        %1415 = vmatprep.subr.mxu0 0.0
        %1416 = vmatpush1.xpose.msra.mxu0 0.0
        %1417 = vmatprep.subr.mxu0 0.0
        %1418 = vmatpush1.xpose.msra.mxu0 0.0
        %1419 = vmatprep.subr.mxu0 0.0
        %1420 = vmatpush1.xpose.msra.mxu0 0.0
        %1421 = vmatprep.subr.mxu0 0.0
        %1422 = vmatpush1.xpose.msra.mxu0 0.0
        %1423 = vmatprep.subr.mxu0 0.0
        %1424 = vmatpush1.xpose.msra.mxu0 0.0
        %1425 = vmatprep.subr.mxu0 0.0
        %1426 = vmatpush1.xpose.msra.mxu0 0.0
        %1427 = vmatprep.subr.mxu0 0.0
        %1428 = vmatpush1.xpose.msra.mxu0 0.0
        %1429 = vmatprep.subr.mxu0 0.0
        %1430 = vmatpush1.xpose.msra.mxu0 0.0
        %1431 = vmatprep.subr.mxu0 0.0
        %1432 = vmatpush1.xpose.msra.mxu0 0.0
        %1433 = vmatprep.subr.mxu0 0.0
        %1434 = vmatpush1.xpose.msra.mxu0 0.0
        %1435 = vmatprep.subr.mxu0 0.0
        %1436 = vmatpush1.xpose.msra.mxu0 0.0
        %1437 = vmatprep.subr.mxu0 0.0
        %1438 = vmatpush1.xpose.msra.mxu0 0.0
        %1439 = vmatprep.subr.mxu0 0.0
        %1440 = vmatpush1.xpose.msra.mxu0 0.0
        %1441 = vmatprep.subr.mxu0 0.0
        %1442 = vmatpush1.xpose.msra.mxu0 0.0
        %1443 = vmatprep.subr.mxu0 0.0
        %1444 = vmatpush1.xpose.msra.mxu0 0.0
        %1445 = vmatprep.subr.mxu0 0.0
        %1446 = vmatpush1.xpose.msra.mxu0 0.0
        %1447 = vmatprep.subr.mxu0 0.0
        %1448 = vmatpush1.xpose.msra.mxu0 0.0
        %1449 = vmatprep.subr.mxu0 0.0
        %1450 = vmatpush1.xpose.msra.mxu0 0.0
        %1451 = vmatprep.subr.mxu0 0.0
        %1452 = vmatpush1.xpose.msra.mxu0 0.0
        %1453 = vmatprep.subr.mxu0 0.0
        %1454 = vmatpush1.xpose.msra.mxu0 0.0
        %1455 = vmatprep.subr.mxu0 0.0
        %1456 = vmatpush1.xpose.msra.mxu0 0.0
        %1457 = vmatprep.subr.mxu0 0.0
        %1458 = vmatpush1.xpose.msra.mxu0 0.0
        %1459 = vmatprep.subr.mxu0 0.0
        %1460 = vmatpush1.xpose.msra.mxu0 0.0
        %1461 = vmatprep.subr.mxu0 0.0
        %1462 = vmatpush1.xpose.msra.mxu0 0.0
        %1463 = vmatprep.subr.mxu0 0.0
        %1464 = vmatpush1.xpose.msra.mxu0 0.0
        %1465 = vmatprep.mubr.f32.mxu0 0.0
        %v1466 = vand.u32 %v1035, 4294901760
        %1467 = vmatmul.mubr.f32.gmra.mrb[0].mxu0 %v1466
        %v1468 = vpop.f32.mrb[0].mxu0
        %v1469 = vadd.f32 %v1395, %v1468
        %v1470 = vpop.f32.mrb[0].mxu0
        %1471 = vdwg.mxu0
        %1472 = vmatprep.subr.mxu0 0.0
        %v1473 = vand.u32 %v1072, 4294901760
        %1474 = vmatpush1.xpose.msra.mxu0 %v1473
        %1475 = vmatprep.subr.mxu0 0.0
        %1476 = vmatpush1.xpose.msra.mxu0 0.0
        %1477 = vmatprep.subr.mxu0 0.0
        %1478 = vmatpush1.xpose.msra.mxu0 0.0
        %1479 = vmatprep.subr.mxu0 0.0
        %1480 = vmatpush1.xpose.msra.mxu0 0.0
        %1481 = vmatprep.subr.mxu0 0.0
        %1482 = vmatpush1.xpose.msra.mxu0 0.0
        %1483 = vmatprep.subr.mxu0 0.0
        %1484 = vmatpush1.xpose.msra.mxu0 0.0
        %1485 = vmatprep.subr.mxu0 0.0
        %1486 = vmatpush1.xpose.msra.mxu0 0.0
        %1487 = vmatprep.subr.mxu0 0.0
        %1488 = vmatpush1.xpose.msra.mxu0 0.0
        %1489 = vmatprep.subr.mxu0 0.0
        %1490 = vmatpush1.xpose.msra.mxu0 0.0
        %1491 = vmatprep.subr.mxu0 0.0
        %1492 = vmatpush1.xpose.msra.mxu0 0.0
        %1493 = vmatprep.subr.mxu0 0.0
        %1494 = vmatpush1.xpose.msra.mxu0 0.0
        %1495 = vmatprep.subr.mxu0 0.0
        %1496 = vmatpush1.xpose.msra.mxu0 0.0
        %1497 = vmatprep.subr.mxu0 0.0
        %1498 = vmatpush1.xpose.msra.mxu0 0.0
        %1499 = vmatprep.subr.mxu0 0.0
        %1500 = vmatpush1.xpose.msra.mxu0 0.0
        %1501 = vmatprep.subr.mxu0 0.0
        %1502 = vmatpush1.xpose.msra.mxu0 0.0
        %1503 = vmatprep.subr.mxu0 0.0
        %1504 = vmatpush1.xpose.msra.mxu0 0.0
        %1505 = vmatprep.subr.mxu0 0.0
        %1506 = vmatpush1.xpose.msra.mxu0 0.0
        %1507 = vmatprep.subr.mxu0 0.0
        %1508 = vmatpush1.xpose.msra.mxu0 0.0
        %1509 = vmatprep.subr.mxu0 0.0
        %1510 = vmatpush1.xpose.msra.mxu0 0.0
        %1511 = vmatprep.subr.mxu0 0.0
        %1512 = vmatpush1.xpose.msra.mxu0 0.0
        %1513 = vmatprep.subr.mxu0 0.0
        %1514 = vmatpush1.xpose.msra.mxu0 0.0
        %1515 = vmatprep.subr.mxu0 0.0
        %1516 = vmatpush1.xpose.msra.mxu0 0.0
        %1517 = vmatprep.subr.mxu0 0.0
        %1518 = vmatpush1.xpose.msra.mxu0 0.0
        %1519 = vmatprep.subr.mxu0 0.0
        %1520 = vmatpush1.xpose.msra.mxu0 0.0
        %1521 = vmatprep.subr.mxu0 0.0
        %1522 = vmatpush1.xpose.msra.mxu0 0.0
        %1523 = vmatprep.subr.mxu0 0.0
        %1524 = vmatpush1.xpose.msra.mxu0 0.0
        %1525 = vmatprep.subr.mxu0 0.0
        %1526 = vmatpush1.xpose.msra.mxu0 0.0
        %1527 = vmatprep.subr.mxu0 0.0
        %1528 = vmatpush1.xpose.msra.mxu0 0.0
        %1529 = vmatprep.subr.mxu0 0.0
        %1530 = vmatpush1.xpose.msra.mxu0 0.0
        %1531 = vmatprep.subr.mxu0 0.0
        %1532 = vmatpush1.xpose.msra.mxu0 0.0
        %1533 = vmatprep.subr.mxu0 0.0
        %1534 = vmatpush1.xpose.msra.mxu0 0.0
        %1535 = vmatprep.subr.mxu0 0.0
        %1536 = vmatpush1.xpose.msra.mxu0 0.0
        %1537 = vmatprep.mubr.f32.mxu0 0.0
        %v1538 = vand.u32 %v1035, 4294901760
        %1539 = vmatmul.mubr.f32.gmra.mrb[0].mxu0 %v1538
        %v1540 = vpop.f32.mrb[0].mxu0
        %v1541 = vadd.f32 %v1469, %v1540
        %v1542 = vpop.f32.mrb[0].mxu0
        %1543 = vdwg.mxu0
        %v1544 = vadd.f32 %v1097, %v1541
        %vm1545 = vcmask 64512
        %1546 = vst.msk [vmem:[%s213] sm:$0xff] %vm1545, %v1544
        %v1547 = vld [vmem:[%s213 + $0x8] sm:$0xff]
        %1548 = vmatprep.subr.mxu0 0.0
        %v1549 = vand.u32 %v1073, 4294901760
        %1550 = vmatpush1.xpose.msra.mxu0 %v1549
        %1551 = vmatprep.subr.mxu0 0.0
        %1552 = vmatpush1.xpose.msra.mxu0 0.0
        %1553 = vmatprep.subr.mxu0 0.0
        %1554 = vmatpush1.xpose.msra.mxu0 0.0
        %1555 = vmatprep.subr.mxu0 0.0
        %1556 = vmatpush1.xpose.msra.mxu0 0.0
        %1557 = vmatprep.subr.mxu0 0.0
        %1558 = vmatpush1.xpose.msra.mxu0 0.0
        %1559 = vmatprep.subr.mxu0 0.0
        %1560 = vmatpush1.xpose.msra.mxu0 0.0
        %1561 = vmatprep.subr.mxu0 0.0
        %1562 = vmatpush1.xpose.msra.mxu0 0.0
        %1563 = vmatprep.subr.mxu0 0.0
        %1564 = vmatpush1.xpose.msra.mxu0 0.0
        %1565 = vmatprep.subr.mxu0 0.0
        %1566 = vmatpush1.xpose.msra.mxu0 0.0
        %1567 = vmatprep.subr.mxu0 0.0
        %1568 = vmatpush1.xpose.msra.mxu0 0.0
        %1569 = vmatprep.subr.mxu0 0.0
        %1570 = vmatpush1.xpose.msra.mxu0 0.0
        %1571 = vmatprep.subr.mxu0 0.0
        %1572 = vmatpush1.xpose.msra.mxu0 0.0
        %1573 = vmatprep.subr.mxu0 0.0
        %1574 = vmatpush1.xpose.msra.mxu0 0.0
        %1575 = vmatprep.subr.mxu0 0.0
        %1576 = vmatpush1.xpose.msra.mxu0 0.0
        %1577 = vmatprep.subr.mxu0 0.0
        %1578 = vmatpush1.xpose.msra.mxu0 0.0
        %1579 = vmatprep.subr.mxu0 0.0
        %1580 = vmatpush1.xpose.msra.mxu0 0.0
        %1581 = vmatprep.subr.mxu0 0.0
        %1582 = vmatpush1.xpose.msra.mxu0 0.0
        %1583 = vmatprep.subr.mxu0 0.0
        %1584 = vmatpush1.xpose.msra.mxu0 0.0
        %1585 = vmatprep.subr.mxu0 0.0
        %1586 = vmatpush1.xpose.msra.mxu0 0.0
        %1587 = vmatprep.subr.mxu0 0.0
        %1588 = vmatpush1.xpose.msra.mxu0 0.0
        %1589 = vmatprep.subr.mxu0 0.0
        %1590 = vmatpush1.xpose.msra.mxu0 0.0
        %1591 = vmatprep.subr.mxu0 0.0
        %1592 = vmatpush1.xpose.msra.mxu0 0.0
        %1593 = vmatprep.subr.mxu0 0.0
        %1594 = vmatpush1.xpose.msra.mxu0 0.0
        %1595 = vmatprep.subr.mxu0 0.0
        %1596 = vmatpush1.xpose.msra.mxu0 0.0
        %1597 = vmatprep.subr.mxu0 0.0
        %1598 = vmatpush1.xpose.msra.mxu0 0.0
        %1599 = vmatprep.subr.mxu0 0.0
        %1600 = vmatpush1.xpose.msra.mxu0 0.0
        %1601 = vmatprep.subr.mxu0 0.0
        %1602 = vmatpush1.xpose.msra.mxu0 0.0
        %1603 = vmatprep.subr.mxu0 0.0
        %1604 = vmatpush1.xpose.msra.mxu0 0.0
        %1605 = vmatprep.subr.mxu0 0.0
        %1606 = vmatpush1.xpose.msra.mxu0 0.0
        %1607 = vmatprep.subr.mxu0 0.0
        %1608 = vmatpush1.xpose.msra.mxu0 0.0
        %1609 = vmatprep.subr.mxu0 0.0
        %1610 = vmatpush1.xpose.msra.mxu0 0.0
        %1611 = vmatprep.subr.mxu0 0.0
        %1612 = vmatpush1.xpose.msra.mxu0 0.0
        %1613 = vmatprep.mubr.f32.mxu0 0.0
        %v1614 = vand.u32 %v1041, 4294901760
        %v1615 = vsub.f32 %v1041, %v1614
        %v1616 = vand.u32 %v1615, 4294901760
        %v1617 = vsub.f32 %v1615, %v1616
        %v1618 = vand.u32 %v1617, 4294901760
        %1619 = vmatmul.mubr.f32.gmra.mrb[0].mxu0 %v1618
        %v1620 = vpop.f32.mrb[0].mxu0
        %v1621 = vadd.f32 0.0, %v1620
        %v1622 = vpop.f32.mrb[0].mxu0
        %1623 = vdwg.mxu0
        %1624 = vmatprep.subr.mxu0 0.0
        %v1625 = vand.u32 %v1073, 4294901760
        %v1626 = vsub.f32 %v1073, %v1625
        %v1627 = vand.u32 %v1626, 4294901760
        %v1628 = vsub.f32 %v1626, %v1627
        %v1629 = vand.u32 %v1628, 4294901760
        %1630 = vmatpush1.xpose.msra.mxu0 %v1629
        %1631 = vmatprep.subr.mxu0 0.0
        %1632 = vmatpush1.xpose.msra.mxu0 0.0
        %1633 = vmatprep.subr.mxu0 0.0
        %1634 = vmatpush1.xpose.msra.mxu0 0.0
        %1635 = vmatprep.subr.mxu0 0.0
        %1636 = vmatpush1.xpose.msra.mxu0 0.0
        %1637 = vmatprep.subr.mxu0 0.0
        %1638 = vmatpush1.xpose.msra.mxu0 0.0
        %1639 = vmatprep.subr.mxu0 0.0
        %1640 = vmatpush1.xpose.msra.mxu0 0.0
        %1641 = vmatprep.subr.mxu0 0.0
        %1642 = vmatpush1.xpose.msra.mxu0 0.0
        %1643 = vmatprep.subr.mxu0 0.0
        %1644 = vmatpush1.xpose.msra.mxu0 0.0
        %1645 = vmatprep.subr.mxu0 0.0
        %1646 = vmatpush1.xpose.msra.mxu0 0.0
        %1647 = vmatprep.subr.mxu0 0.0
        %1648 = vmatpush1.xpose.msra.mxu0 0.0
        %1649 = vmatprep.subr.mxu0 0.0
        %1650 = vmatpush1.xpose.msra.mxu0 0.0
        %1651 = vmatprep.subr.mxu0 0.0
        %1652 = vmatpush1.xpose.msra.mxu0 0.0
        %1653 = vmatprep.subr.mxu0 0.0
        %1654 = vmatpush1.xpose.msra.mxu0 0.0
        %1655 = vmatprep.subr.mxu0 0.0
        %1656 = vmatpush1.xpose.msra.mxu0 0.0
        %1657 = vmatprep.subr.mxu0 0.0
        %1658 = vmatpush1.xpose.msra.mxu0 0.0
        %1659 = vmatprep.subr.mxu0 0.0
        %1660 = vmatpush1.xpose.msra.mxu0 0.0
        %1661 = vmatprep.subr.mxu0 0.0
        %1662 = vmatpush1.xpose.msra.mxu0 0.0
        %1663 = vmatprep.subr.mxu0 0.0
        %1664 = vmatpush1.xpose.msra.mxu0 0.0
        %1665 = vmatprep.subr.mxu0 0.0
        %1666 = vmatpush1.xpose.msra.mxu0 0.0
        %1667 = vmatprep.subr.mxu0 0.0
        %1668 = vmatpush1.xpose.msra.mxu0 0.0
        %1669 = vmatprep.subr.mxu0 0.0
        %1670 = vmatpush1.xpose.msra.mxu0 0.0
        %1671 = vmatprep.subr.mxu0 0.0
        %1672 = vmatpush1.xpose.msra.mxu0 0.0
        %1673 = vmatprep.subr.mxu0 0.0
        %1674 = vmatpush1.xpose.msra.mxu0 0.0
        %1675 = vmatprep.subr.mxu0 0.0
        %1676 = vmatpush1.xpose.msra.mxu0 0.0
        %1677 = vmatprep.subr.mxu0 0.0
        %1678 = vmatpush1.xpose.msra.mxu0 0.0
        %1679 = vmatprep.subr.mxu0 0.0
        %1680 = vmatpush1.xpose.msra.mxu0 0.0
        %1681 = vmatprep.subr.mxu0 0.0
        %1682 = vmatpush1.xpose.msra.mxu0 0.0
        %1683 = vmatprep.subr.mxu0 0.0
        %1684 = vmatpush1.xpose.msra.mxu0 0.0
        %1685 = vmatprep.subr.mxu0 0.0
        %1686 = vmatpush1.xpose.msra.mxu0 0.0
        %1687 = vmatprep.subr.mxu0 0.0
        %1688 = vmatpush1.xpose.msra.mxu0 0.0
        %1689 = vmatprep.subr.mxu0 0.0
        %1690 = vmatpush1.xpose.msra.mxu0 0.0
        %1691 = vmatprep.subr.mxu0 0.0
        %1692 = vmatpush1.xpose.msra.mxu0 0.0
        %1693 = vmatprep.mubr.f32.mxu0 0.0
        %v1694 = vand.u32 %v1041, 4294901760
        %1695 = vmatmul.mubr.f32.gmra.mrb[0].mxu0 %v1694
        %v1696 = vpop.f32.mrb[0].mxu0
        %v1697 = vadd.f32 %v1621, %v1696
        %v1698 = vpop.f32.mrb[0].mxu0
        %1699 = vdwg.mxu0
        %1700 = vmatprep.subr.mxu0 0.0
        %v1701 = vand.u32 %v1073, 4294901760
        %v1702 = vsub.f32 %v1073, %v1701
        %1703 = vmatpush1.xpose.msra.mxu0 %v1702
        %1704 = vmatprep.subr.mxu0 0.0
        %1705 = vmatpush1.xpose.msra.mxu0 0.0
        %1706 = vmatprep.subr.mxu0 0.0
        %1707 = vmatpush1.xpose.msra.mxu0 0.0
        %1708 = vmatprep.subr.mxu0 0.0
        %1709 = vmatpush1.xpose.msra.mxu0 0.0
        %1710 = vmatprep.subr.mxu0 0.0
        %1711 = vmatpush1.xpose.msra.mxu0 0.0
        %1712 = vmatprep.subr.mxu0 0.0
        %1713 = vmatpush1.xpose.msra.mxu0 0.0
        %1714 = vmatprep.subr.mxu0 0.0
        %1715 = vmatpush1.xpose.msra.mxu0 0.0
        %1716 = vmatprep.subr.mxu0 0.0
        %1717 = vmatpush1.xpose.msra.mxu0 0.0
        %1718 = vmatprep.subr.mxu0 0.0
        %1719 = vmatpush1.xpose.msra.mxu0 0.0
        %1720 = vmatprep.subr.mxu0 0.0
        %1721 = vmatpush1.xpose.msra.mxu0 0.0
        %1722 = vmatprep.subr.mxu0 0.0
        %1723 = vmatpush1.xpose.msra.mxu0 0.0
        %1724 = vmatprep.subr.mxu0 0.0
        %1725 = vmatpush1.xpose.msra.mxu0 0.0
        %1726 = vmatprep.subr.mxu0 0.0
        %1727 = vmatpush1.xpose.msra.mxu0 0.0
        %1728 = vmatprep.subr.mxu0 0.0
        %1729 = vmatpush1.xpose.msra.mxu0 0.0
        %1730 = vmatprep.subr.mxu0 0.0
        %1731 = vmatpush1.xpose.msra.mxu0 0.0
        %1732 = vmatprep.subr.mxu0 0.0
        %1733 = vmatpush1.xpose.msra.mxu0 0.0
        %1734 = vmatprep.subr.mxu0 0.0
        %1735 = vmatpush1.xpose.msra.mxu0 0.0
        %1736 = vmatprep.subr.mxu0 0.0
        %1737 = vmatpush1.xpose.msra.mxu0 0.0
        %1738 = vmatprep.subr.mxu0 0.0
        %1739 = vmatpush1.xpose.msra.mxu0 0.0
        %1740 = vmatprep.subr.mxu0 0.0
        %1741 = vmatpush1.xpose.msra.mxu0 0.0
        %1742 = vmatprep.subr.mxu0 0.0
        %1743 = vmatpush1.xpose.msra.mxu0 0.0
        %1744 = vmatprep.subr.mxu0 0.0
        %1745 = vmatpush1.xpose.msra.mxu0 0.0
        %1746 = vmatprep.subr.mxu0 0.0
        %1747 = vmatpush1.xpose.msra.mxu0 0.0
        %1748 = vmatprep.subr.mxu0 0.0
        %1749 = vmatpush1.xpose.msra.mxu0 0.0
        %1750 = vmatprep.subr.mxu0 0.0
        %1751 = vmatpush1.xpose.msra.mxu0 0.0
        %1752 = vmatprep.subr.mxu0 0.0
        %1753 = vmatpush1.xpose.msra.mxu0 0.0
        %1754 = vmatprep.subr.mxu0 0.0
        %1755 = vmatpush1.xpose.msra.mxu0 0.0
        %1756 = vmatprep.subr.mxu0 0.0
        %1757 = vmatpush1.xpose.msra.mxu0 0.0
        %1758 = vmatprep.subr.mxu0 0.0
        %1759 = vmatpush1.xpose.msra.mxu0 0.0
        %1760 = vmatprep.subr.mxu0 0.0
        %1761 = vmatpush1.xpose.msra.mxu0 0.0
        %1762 = vmatprep.subr.mxu0 0.0
        %1763 = vmatpush1.xpose.msra.mxu0 0.0
        %1764 = vmatprep.subr.mxu0 0.0
        %1765 = vmatpush1.xpose.msra.mxu0 0.0
        %1766 = vmatprep.mubr.f32.mxu0 0.0
        %v1767 = vand.u32 %v1041, 4294901760
        %v1768 = vsub.f32 %v1041, %v1767
        %1769 = vmatmul.mubr.f32.gmra.mrb[0].mxu0 %v1768
        %v1770 = vpop.f32.mrb[0].mxu0
        %v1771 = vadd.f32 %v1697, %v1770
        %v1772 = vpop.f32.mrb[0].mxu0
        %1773 = vdwg.mxu0
        %1774 = vmatprep.subr.mxu0 0.0
        %v1775 = vand.u32 %v1073, 4294901760
        %1776 = vmatpush1.xpose.msra.mxu0 %v1775
        %1777 = vmatprep.subr.mxu0 0.0
        %1778 = vmatpush1.xpose.msra.mxu0 0.0
        %1779 = vmatprep.subr.mxu0 0.0
        %1780 = vmatpush1.xpose.msra.mxu0 0.0
        %1781 = vmatprep.subr.mxu0 0.0
        %1782 = vmatpush1.xpose.msra.mxu0 0.0
        %1783 = vmatprep.subr.mxu0 0.0
        %1784 = vmatpush1.xpose.msra.mxu0 0.0
        %1785 = vmatprep.subr.mxu0 0.0
        %1786 = vmatpush1.xpose.msra.mxu0 0.0
        %1787 = vmatprep.subr.mxu0 0.0
        %1788 = vmatpush1.xpose.msra.mxu0 0.0
        %1789 = vmatprep.subr.mxu0 0.0
        %1790 = vmatpush1.xpose.msra.mxu0 0.0
        %1791 = vmatprep.subr.mxu0 0.0
        %1792 = vmatpush1.xpose.msra.mxu0 0.0
        %1793 = vmatprep.subr.mxu0 0.0
        %1794 = vmatpush1.xpose.msra.mxu0 0.0
        %1795 = vmatprep.subr.mxu0 0.0
        %1796 = vmatpush1.xpose.msra.mxu0 0.0
        %1797 = vmatprep.subr.mxu0 0.0
        %1798 = vmatpush1.xpose.msra.mxu0 0.0
        %1799 = vmatprep.subr.mxu0 0.0
        %1800 = vmatpush1.xpose.msra.mxu0 0.0
        %1801 = vmatprep.subr.mxu0 0.0
        %1802 = vmatpush1.xpose.msra.mxu0 0.0
        %1803 = vmatprep.subr.mxu0 0.0
        %1804 = vmatpush1.xpose.msra.mxu0 0.0
        %1805 = vmatprep.subr.mxu0 0.0
        %1806 = vmatpush1.xpose.msra.mxu0 0.0
        %1807 = vmatprep.subr.mxu0 0.0
        %1808 = vmatpush1.xpose.msra.mxu0 0.0
        %1809 = vmatprep.subr.mxu0 0.0
        %1810 = vmatpush1.xpose.msra.mxu0 0.0
        %1811 = vmatprep.subr.mxu0 0.0
        %1812 = vmatpush1.xpose.msra.mxu0 0.0
        %1813 = vmatprep.subr.mxu0 0.0
        %1814 = vmatpush1.xpose.msra.mxu0 0.0
        %1815 = vmatprep.subr.mxu0 0.0
        %1816 = vmatpush1.xpose.msra.mxu0 0.0
        %1817 = vmatprep.subr.mxu0 0.0
        %1818 = vmatpush1.xpose.msra.mxu0 0.0
        %1819 = vmatprep.subr.mxu0 0.0
        %1820 = vmatpush1.xpose.msra.mxu0 0.0
        %1821 = vmatprep.subr.mxu0 0.0
        %1822 = vmatpush1.xpose.msra.mxu0 0.0
        %1823 = vmatprep.subr.mxu0 0.0
        %1824 = vmatpush1.xpose.msra.mxu0 0.0
        %1825 = vmatprep.subr.mxu0 0.0
        %1826 = vmatpush1.xpose.msra.mxu0 0.0
        %1827 = vmatprep.subr.mxu0 0.0
        %1828 = vmatpush1.xpose.msra.mxu0 0.0
        %1829 = vmatprep.subr.mxu0 0.0
        %1830 = vmatpush1.xpose.msra.mxu0 0.0
        %1831 = vmatprep.subr.mxu0 0.0
        %1832 = vmatpush1.xpose.msra.mxu0 0.0
        %1833 = vmatprep.subr.mxu0 0.0
        %1834 = vmatpush1.xpose.msra.mxu0 0.0
        %1835 = vmatprep.subr.mxu0 0.0
        %1836 = vmatpush1.xpose.msra.mxu0 0.0
        %1837 = vmatprep.subr.mxu0 0.0
        %1838 = vmatpush1.xpose.msra.mxu0 0.0
        %1839 = vmatprep.mubr.f32.mxu0 0.0
        %v1840 = vand.u32 %v1041, 4294901760
        %v1841 = vsub.f32 %v1041, %v1840
        %v1842 = vand.u32 %v1841, 4294901760
        %1843 = vmatmul.mubr.f32.gmra.mrb[0].mxu0 %v1842
        %v1844 = vpop.f32.mrb[0].mxu0
        %v1845 = vadd.f32 %v1771, %v1844
        %v1846 = vpop.f32.mrb[0].mxu0
        %1847 = vdwg.mxu0
        %1848 = vmatprep.subr.mxu0 0.0
        %v1849 = vand.u32 %v1073, 4294901760
        %v1850 = vsub.f32 %v1073, %v1849
        %v1851 = vand.u32 %v1850, 4294901760
        %1852 = vmatpush1.xpose.msra.mxu0 %v1851
        %1853 = vmatprep.subr.mxu0 0.0
        %1854 = vmatpush1.xpose.msra.mxu0 0.0
        %1855 = vmatprep.subr.mxu0 0.0
        %1856 = vmatpush1.xpose.msra.mxu0 0.0
        %1857 = vmatprep.subr.mxu0 0.0
        %1858 = vmatpush1.xpose.msra.mxu0 0.0
        %1859 = vmatprep.subr.mxu0 0.0
        %1860 = vmatpush1.xpose.msra.mxu0 0.0
        %1861 = vmatprep.subr.mxu0 0.0
        %1862 = vmatpush1.xpose.msra.mxu0 0.0
        %1863 = vmatprep.subr.mxu0 0.0
        %1864 = vmatpush1.xpose.msra.mxu0 0.0
        %1865 = vmatprep.subr.mxu0 0.0
        %1866 = vmatpush1.xpose.msra.mxu0 0.0
        %1867 = vmatprep.subr.mxu0 0.0
        %1868 = vmatpush1.xpose.msra.mxu0 0.0
        %1869 = vmatprep.subr.mxu0 0.0
        %1870 = vmatpush1.xpose.msra.mxu0 0.0
        %1871 = vmatprep.subr.mxu0 0.0
        %1872 = vmatpush1.xpose.msra.mxu0 0.0
        %1873 = vmatprep.subr.mxu0 0.0
        %1874 = vmatpush1.xpose.msra.mxu0 0.0
        %1875 = vmatprep.subr.mxu0 0.0
        %1876 = vmatpush1.xpose.msra.mxu0 0.0
        %1877 = vmatprep.subr.mxu0 0.0
        %1878 = vmatpush1.xpose.msra.mxu0 0.0
        %1879 = vmatprep.subr.mxu0 0.0
        %1880 = vmatpush1.xpose.msra.mxu0 0.0
        %1881 = vmatprep.subr.mxu0 0.0
        %1882 = vmatpush1.xpose.msra.mxu0 0.0
        %1883 = vmatprep.subr.mxu0 0.0
        %1884 = vmatpush1.xpose.msra.mxu0 0.0
        %1885 = vmatprep.subr.mxu0 0.0
        %1886 = vmatpush1.xpose.msra.mxu0 0.0
        %1887 = vmatprep.subr.mxu0 0.0
        %1888 = vmatpush1.xpose.msra.mxu0 0.0
        %1889 = vmatprep.subr.mxu0 0.0
        %1890 = vmatpush1.xpose.msra.mxu0 0.0
        %1891 = vmatprep.subr.mxu0 0.0
        %1892 = vmatpush1.xpose.msra.mxu0 0.0
        %1893 = vmatprep.subr.mxu0 0.0
        %1894 = vmatpush1.xpose.msra.mxu0 0.0
        %1895 = vmatprep.subr.mxu0 0.0
        %1896 = vmatpush1.xpose.msra.mxu0 0.0
        %1897 = vmatprep.subr.mxu0 0.0
        %1898 = vmatpush1.xpose.msra.mxu0 0.0
        %1899 = vmatprep.subr.mxu0 0.0
        %1900 = vmatpush1.xpose.msra.mxu0 0.0
        %1901 = vmatprep.subr.mxu0 0.0
        %1902 = vmatpush1.xpose.msra.mxu0 0.0
        %1903 = vmatprep.subr.mxu0 0.0
        %1904 = vmatpush1.xpose.msra.mxu0 0.0
        %1905 = vmatprep.subr.mxu0 0.0
        %1906 = vmatpush1.xpose.msra.mxu0 0.0
        %1907 = vmatprep.subr.mxu0 0.0
        %1908 = vmatpush1.xpose.msra.mxu0 0.0
        %1909 = vmatprep.subr.mxu0 0.0
        %1910 = vmatpush1.xpose.msra.mxu0 0.0
        %1911 = vmatprep.subr.mxu0 0.0
        %1912 = vmatpush1.xpose.msra.mxu0 0.0
        %1913 = vmatprep.subr.mxu0 0.0
        %1914 = vmatpush1.xpose.msra.mxu0 0.0
        %1915 = vmatprep.mubr.f32.mxu0 0.0
        %v1916 = vand.u32 %v1041, 4294901760
        %1917 = vmatmul.mubr.f32.gmra.mrb[0].mxu0 %v1916
        %v1918 = vpop.f32.mrb[0].mxu0
        %v1919 = vadd.f32 %v1845, %v1918
        %v1920 = vpop.f32.mrb[0].mxu0
        %1921 = vdwg.mxu0
        %1922 = vmatprep.subr.mxu0 0.0
        %v1923 = vand.u32 %v1073, 4294901760
        %1924 = vmatpush1.xpose.msra.mxu0 %v1923
        %1925 = vmatprep.subr.mxu0 0.0
        %1926 = vmatpush1.xpose.msra.mxu0 0.0
        %1927 = vmatprep.subr.mxu0 0.0
        %1928 = vmatpush1.xpose.msra.mxu0 0.0
        %1929 = vmatprep.subr.mxu0 0.0
        %1930 = vmatpush1.xpose.msra.mxu0 0.0
        %1931 = vmatprep.subr.mxu0 0.0
        %1932 = vmatpush1.xpose.msra.mxu0 0.0
        %1933 = vmatprep.subr.mxu0 0.0
        %1934 = vmatpush1.xpose.msra.mxu0 0.0
        %1935 = vmatprep.subr.mxu0 0.0
        %1936 = vmatpush1.xpose.msra.mxu0 0.0
        %1937 = vmatprep.subr.mxu0 0.0
        %1938 = vmatpush1.xpose.msra.mxu0 0.0
        %1939 = vmatprep.subr.mxu0 0.0
        %1940 = vmatpush1.xpose.msra.mxu0 0.0
        %1941 = vmatprep.subr.mxu0 0.0
        %1942 = vmatpush1.xpose.msra.mxu0 0.0
        %1943 = vmatprep.subr.mxu0 0.0
        %1944 = vmatpush1.xpose.msra.mxu0 0.0
        %1945 = vmatprep.subr.mxu0 0.0
        %1946 = vmatpush1.xpose.msra.mxu0 0.0
        %1947 = vmatprep.subr.mxu0 0.0
        %1948 = vmatpush1.xpose.msra.mxu0 0.0
        %1949 = vmatprep.subr.mxu0 0.0
        %1950 = vmatpush1.xpose.msra.mxu0 0.0
        %1951 = vmatprep.subr.mxu0 0.0
        %1952 = vmatpush1.xpose.msra.mxu0 0.0
        %1953 = vmatprep.subr.mxu0 0.0
        %1954 = vmatpush1.xpose.msra.mxu0 0.0
        %1955 = vmatprep.subr.mxu0 0.0
        %1956 = vmatpush1.xpose.msra.mxu0 0.0
        %1957 = vmatprep.subr.mxu0 0.0
        %1958 = vmatpush1.xpose.msra.mxu0 0.0
        %1959 = vmatprep.subr.mxu0 0.0
        %1960 = vmatpush1.xpose.msra.mxu0 0.0
        %1961 = vmatprep.subr.mxu0 0.0
        %1962 = vmatpush1.xpose.msra.mxu0 0.0
        %1963 = vmatprep.subr.mxu0 0.0
        %1964 = vmatpush1.xpose.msra.mxu0 0.0
        %1965 = vmatprep.subr.mxu0 0.0
        %1966 = vmatpush1.xpose.msra.mxu0 0.0
        %1967 = vmatprep.subr.mxu0 0.0
        %1968 = vmatpush1.xpose.msra.mxu0 0.0
        %1969 = vmatprep.subr.mxu0 0.0
        %1970 = vmatpush1.xpose.msra.mxu0 0.0
        %1971 = vmatprep.subr.mxu0 0.0
        %1972 = vmatpush1.xpose.msra.mxu0 0.0
        %1973 = vmatprep.subr.mxu0 0.0
        %1974 = vmatpush1.xpose.msra.mxu0 0.0
        %1975 = vmatprep.subr.mxu0 0.0
        %1976 = vmatpush1.xpose.msra.mxu0 0.0
        %1977 = vmatprep.subr.mxu0 0.0
        %1978 = vmatpush1.xpose.msra.mxu0 0.0
        %1979 = vmatprep.subr.mxu0 0.0
        %1980 = vmatpush1.xpose.msra.mxu0 0.0
        %1981 = vmatprep.subr.mxu0 0.0
        %1982 = vmatpush1.xpose.msra.mxu0 0.0
        %1983 = vmatprep.subr.mxu0 0.0
        %1984 = vmatpush1.xpose.msra.mxu0 0.0
        %1985 = vmatprep.subr.mxu0 0.0
        %1986 = vmatpush1.xpose.msra.mxu0 0.0
        %1987 = vmatprep.mubr.f32.mxu0 0.0
        %v1988 = vand.u32 %v1041, 4294901760
        %1989 = vmatmul.mubr.f32.gmra.mrb[0].mxu0 %v1988
        %v1990 = vpop.f32.mrb[0].mxu0
        %v1991 = vadd.f32 %v1919, %v1990
        %v1992 = vpop.f32.mrb[0].mxu0
        %1993 = vdwg.mxu0
        %v1994 = vadd.f32 %v1547, %v1991
        %1995 = vst.msk [vmem:[%s213 + $0x8] sm:$0xff] %vm1545, %v1994
        %v1996 = vld [vmem:[%s213 + $0x10] sm:$0xff]
        %1997 = vmatprep.subr.mxu0 0.0
        %v1998 = vand.u32 %v1074, 4294901760
        %1999 = vmatpush1.xpose.msra.mxu0 %v1998
        %2000 = vmatprep.subr.mxu0 0.0
        %2001 = vmatpush1.xpose.msra.mxu0 0.0
        %2002 = vmatprep.subr.mxu0 0.0
        %2003 = vmatpush1.xpose.msra.mxu0 0.0
        %2004 = vmatprep.subr.mxu0 0.0
        %2005 = vmatpush1.xpose.msra.mxu0 0.0
        %2006 = vmatprep.subr.mxu0 0.0
        %2007 = vmatpush1.xpose.msra.mxu0 0.0
        %2008 = vmatprep.subr.mxu0 0.0
        %2009 = vmatpush1.xpose.msra.mxu0 0.0
        %2010 = vmatprep.subr.mxu0 0.0
        %2011 = vmatpush1.xpose.msra.mxu0 0.0
        %2012 = vmatprep.subr.mxu0 0.0
        %2013 = vmatpush1.xpose.msra.mxu0 0.0
        %2014 = vmatprep.subr.mxu0 0.0
        %2015 = vmatpush1.xpose.msra.mxu0 0.0
        %2016 = vmatprep.subr.mxu0 0.0
        %2017 = vmatpush1.xpose.msra.mxu0 0.0
        %2018 = vmatprep.subr.mxu0 0.0
        %2019 = vmatpush1.xpose.msra.mxu0 0.0
        %2020 = vmatprep.subr.mxu0 0.0
        %2021 = vmatpush1.xpose.msra.mxu0 0.0
        %2022 = vmatprep.subr.mxu0 0.0
        %2023 = vmatpush1.xpose.msra.mxu0 0.0
        %2024 = vmatprep.subr.mxu0 0.0
        %2025 = vmatpush1.xpose.msra.mxu0 0.0
        %2026 = vmatprep.subr.mxu0 0.0
        %2027 = vmatpush1.xpose.msra.mxu0 0.0
        %2028 = vmatprep.subr.mxu0 0.0
        %2029 = vmatpush1.xpose.msra.mxu0 0.0
        %2030 = vmatprep.subr.mxu0 0.0
        %2031 = vmatpush1.xpose.msra.mxu0 0.0
        %2032 = vmatprep.subr.mxu0 0.0
        %2033 = vmatpush1.xpose.msra.mxu0 0.0
        %2034 = vmatprep.subr.mxu0 0.0
        %2035 = vmatpush1.xpose.msra.mxu0 0.0
        %2036 = vmatprep.subr.mxu0 0.0
        %2037 = vmatpush1.xpose.msra.mxu0 0.0
        %2038 = vmatprep.subr.mxu0 0.0
        %2039 = vmatpush1.xpose.msra.mxu0 0.0
        %2040 = vmatprep.subr.mxu0 0.0
        %2041 = vmatpush1.xpose.msra.mxu0 0.0
        %2042 = vmatprep.subr.mxu0 0.0
        %2043 = vmatpush1.xpose.msra.mxu0 0.0
        %2044 = vmatprep.subr.mxu0 0.0
        %2045 = vmatpush1.xpose.msra.mxu0 0.0
        %2046 = vmatprep.subr.mxu0 0.0
        %2047 = vmatpush1.xpose.msra.mxu0 0.0
        %2048 = vmatprep.subr.mxu0 0.0
        %2049 = vmatpush1.xpose.msra.mxu0 0.0
        %2050 = vmatprep.subr.mxu0 0.0
        %2051 = vmatpush1.xpose.msra.mxu0 0.0
        %2052 = vmatprep.subr.mxu0 0.0
        %2053 = vmatpush1.xpose.msra.mxu0 0.0
        %2054 = vmatprep.subr.mxu0 0.0
        %2055 = vmatpush1.xpose.msra.mxu0 0.0
        %2056 = vmatprep.subr.mxu0 0.0
        %2057 = vmatpush1.xpose.msra.mxu0 0.0
        %2058 = vmatprep.subr.mxu0 0.0
        %2059 = vmatpush1.xpose.msra.mxu0 0.0
        %2060 = vmatprep.subr.mxu0 0.0
        %2061 = vmatpush1.xpose.msra.mxu0 0.0
        %2062 = vmatprep.mubr.f32.mxu0 0.0
        %v2063 = vand.u32 %v1047, 4294901760
        %v2064 = vsub.f32 %v1047, %v2063
        %v2065 = vand.u32 %v2064, 4294901760
        %v2066 = vsub.f32 %v2064, %v2065
        %v2067 = vand.u32 %v2066, 4294901760
        %2068 = vmatmul.mubr.f32.gmra.mrb[0].mxu0 %v2067
        %v2069 = vpop.f32.mrb[0].mxu0
        %v2070 = vadd.f32 0.0, %v2069
        %v2071 = vpop.f32.mrb[0].mxu0
        %2072 = vdwg.mxu0
        %2073 = vmatprep.subr.mxu0 0.0
        %v2074 = vand.u32 %v1074, 4294901760
        %v2075 = vsub.f32 %v1074, %v2074
        %v2076 = vand.u32 %v2075, 4294901760
        %v2077 = vsub.f32 %v2075, %v2076
        %v2078 = vand.u32 %v2077, 4294901760
        %2079 = vmatpush1.xpose.msra.mxu0 %v2078
        %2080 = vmatprep.subr.mxu0 0.0
        %2081 = vmatpush1.xpose.msra.mxu0 0.0
        %2082 = vmatprep.subr.mxu0 0.0
        %2083 = vmatpush1.xpose.msra.mxu0 0.0
        %2084 = vmatprep.subr.mxu0 0.0
        %2085 = vmatpush1.xpose.msra.mxu0 0.0
        %2086 = vmatprep.subr.mxu0 0.0
        %2087 = vmatpush1.xpose.msra.mxu0 0.0
        %2088 = vmatprep.subr.mxu0 0.0
        %2089 = vmatpush1.xpose.msra.mxu0 0.0
        %2090 = vmatprep.subr.mxu0 0.0
        %2091 = vmatpush1.xpose.msra.mxu0 0.0
        %2092 = vmatprep.subr.mxu0 0.0
        %2093 = vmatpush1.xpose.msra.mxu0 0.0
        %2094 = vmatprep.subr.mxu0 0.0
        %2095 = vmatpush1.xpose.msra.mxu0 0.0
        %2096 = vmatprep.subr.mxu0 0.0
        %2097 = vmatpush1.xpose.msra.mxu0 0.0
        %2098 = vmatprep.subr.mxu0 0.0
        %2099 = vmatpush1.xpose.msra.mxu0 0.0
        %2100 = vmatprep.subr.mxu0 0.0
        %2101 = vmatpush1.xpose.msra.mxu0 0.0
        %2102 = vmatprep.subr.mxu0 0.0
        %2103 = vmatpush1.xpose.msra.mxu0 0.0
        %2104 = vmatprep.subr.mxu0 0.0
        %2105 = vmatpush1.xpose.msra.mxu0 0.0
        %2106 = vmatprep.subr.mxu0 0.0
        %2107 = vmatpush1.xpose.msra.mxu0 0.0
        %2108 = vmatprep.subr.mxu0 0.0
        %2109 = vmatpush1.xpose.msra.mxu0 0.0
        %2110 = vmatprep.subr.mxu0 0.0
        %2111 = vmatpush1.xpose.msra.mxu0 0.0
        %2112 = vmatprep.subr.mxu0 0.0
        %2113 = vmatpush1.xpose.msra.mxu0 0.0
        %2114 = vmatprep.subr.mxu0 0.0
        %2115 = vmatpush1.xpose.msra.mxu0 0.0
        %2116 = vmatprep.subr.mxu0 0.0
        %2117 = vmatpush1.xpose.msra.mxu0 0.0
        %2118 = vmatprep.subr.mxu0 0.0
        %2119 = vmatpush1.xpose.msra.mxu0 0.0
        %2120 = vmatprep.subr.mxu0 0.0
        %2121 = vmatpush1.xpose.msra.mxu0 0.0
        %2122 = vmatprep.subr.mxu0 0.0
        %2123 = vmatpush1.xpose.msra.mxu0 0.0
        %2124 = vmatprep.subr.mxu0 0.0
        %2125 = vmatpush1.xpose.msra.mxu0 0.0
        %2126 = vmatprep.subr.mxu0 0.0
        %2127 = vmatpush1.xpose.msra.mxu0 0.0
        %2128 = vmatprep.subr.mxu0 0.0
        %2129 = vmatpush1.xpose.msra.mxu0 0.0
        %2130 = vmatprep.subr.mxu0 0.0
        %2131 = vmatpush1.xpose.msra.mxu0 0.0
        %2132 = vmatprep.subr.mxu0 0.0
        %2133 = vmatpush1.xpose.msra.mxu0 0.0
        %2134 = vmatprep.subr.mxu0 0.0
        %2135 = vmatpush1.xpose.msra.mxu0 0.0
        %2136 = vmatprep.subr.mxu0 0.0
        %2137 = vmatpush1.xpose.msra.mxu0 0.0
        %2138 = vmatprep.subr.mxu0 0.0
        %2139 = vmatpush1.xpose.msra.mxu0 0.0
        %2140 = vmatprep.subr.mxu0 0.0
        %2141 = vmatpush1.xpose.msra.mxu0 0.0
        %2142 = vmatprep.mubr.f32.mxu0 0.0
        %v2143 = vand.u32 %v1047, 4294901760
        %2144 = vmatmul.mubr.f32.gmra.mrb[0].mxu0 %v2143
        %v2145 = vpop.f32.mrb[0].mxu0
        %v2146 = vadd.f32 %v2070, %v2145
        %v2147 = vpop.f32.mrb[0].mxu0
        %2148 = vdwg.mxu0
        %2149 = vmatprep.subr.mxu0 0.0
        %v2150 = vand.u32 %v1074, 4294901760
        %v2151 = vsub.f32 %v1074, %v2150
        %2152 = vmatpush1.xpose.msra.mxu0 %v2151
        %2153 = vmatprep.subr.mxu0 0.0
        %2154 = vmatpush1.xpose.msra.mxu0 0.0
        %2155 = vmatprep.subr.mxu0 0.0
        %2156 = vmatpush1.xpose.msra.mxu0 0.0
        %2157 = vmatprep.subr.mxu0 0.0
        %2158 = vmatpush1.xpose.msra.mxu0 0.0
        %2159 = vmatprep.subr.mxu0 0.0
        %2160 = vmatpush1.xpose.msra.mxu0 0.0
        %2161 = vmatprep.subr.mxu0 0.0
        %2162 = vmatpush1.xpose.msra.mxu0 0.0
        %2163 = vmatprep.subr.mxu0 0.0
        %2164 = vmatpush1.xpose.msra.mxu0 0.0
        %2165 = vmatprep.subr.mxu0 0.0
        %2166 = vmatpush1.xpose.msra.mxu0 0.0
        %2167 = vmatprep.subr.mxu0 0.0
        %2168 = vmatpush1.xpose.msra.mxu0 0.0
        %2169 = vmatprep.subr.mxu0 0.0
        %2170 = vmatpush1.xpose.msra.mxu0 0.0
        %2171 = vmatprep.subr.mxu0 0.0
        %2172 = vmatpush1.xpose.msra.mxu0 0.0
        %2173 = vmatprep.subr.mxu0 0.0
        %2174 = vmatpush1.xpose.msra.mxu0 0.0
        %2175 = vmatprep.subr.mxu0 0.0
        %2176 = vmatpush1.xpose.msra.mxu0 0.0
        %2177 = vmatprep.subr.mxu0 0.0
        %2178 = vmatpush1.xpose.msra.mxu0 0.0
        %2179 = vmatprep.subr.mxu0 0.0
        %2180 = vmatpush1.xpose.msra.mxu0 0.0
        %2181 = vmatprep.subr.mxu0 0.0
        %2182 = vmatpush1.xpose.msra.mxu0 0.0
        %2183 = vmatprep.subr.mxu0 0.0
        %2184 = vmatpush1.xpose.msra.mxu0 0.0
        %2185 = vmatprep.subr.mxu0 0.0
        %2186 = vmatpush1.xpose.msra.mxu0 0.0
        %2187 = vmatprep.subr.mxu0 0.0
        %2188 = vmatpush1.xpose.msra.mxu0 0.0
        %2189 = vmatprep.subr.mxu0 0.0
        %2190 = vmatpush1.xpose.msra.mxu0 0.0
        %2191 = vmatprep.subr.mxu0 0.0
        %2192 = vmatpush1.xpose.msra.mxu0 0.0
        %2193 = vmatprep.subr.mxu0 0.0
        %2194 = vmatpush1.xpose.msra.mxu0 0.0
        %2195 = vmatprep.subr.mxu0 0.0
        %2196 = vmatpush1.xpose.msra.mxu0 0.0
        %2197 = vmatprep.subr.mxu0 0.0
        %2198 = vmatpush1.xpose.msra.mxu0 0.0
        %2199 = vmatprep.subr.mxu0 0.0
        %2200 = vmatpush1.xpose.msra.mxu0 0.0
        %2201 = vmatprep.subr.mxu0 0.0
        %2202 = vmatpush1.xpose.msra.mxu0 0.0
        %2203 = vmatprep.subr.mxu0 0.0
        %2204 = vmatpush1.xpose.msra.mxu0 0.0
        %2205 = vmatprep.subr.mxu0 0.0
        %2206 = vmatpush1.xpose.msra.mxu0 0.0
        %2207 = vmatprep.subr.mxu0 0.0
        %2208 = vmatpush1.xpose.msra.mxu0 0.0
        %2209 = vmatprep.subr.mxu0 0.0
        %2210 = vmatpush1.xpose.msra.mxu0 0.0
        %2211 = vmatprep.subr.mxu0 0.0
        %2212 = vmatpush1.xpose.msra.mxu0 0.0
        %2213 = vmatprep.subr.mxu0 0.0
        %2214 = vmatpush1.xpose.msra.mxu0 0.0
        %2215 = vmatprep.mubr.f32.mxu0 0.0
        %v2216 = vand.u32 %v1047, 4294901760
        %v2217 = vsub.f32 %v1047, %v2216
        %2218 = vmatmul.mubr.f32.gmra.mrb[0].mxu0 %v2217
        %v2219 = vpop.f32.mrb[0].mxu0
        %v2220 = vadd.f32 %v2146, %v2219
        %v2221 = vpop.f32.mrb[0].mxu0
        %2222 = vdwg.mxu0
        %2223 = vmatprep.subr.mxu0 0.0
        %v2224 = vand.u32 %v1074, 4294901760
        %2225 = vmatpush1.xpose.msra.mxu0 %v2224
        %2226 = vmatprep.subr.mxu0 0.0
        %2227 = vmatpush1.xpose.msra.mxu0 0.0
        %2228 = vmatprep.subr.mxu0 0.0
        %2229 = vmatpush1.xpose.msra.mxu0 0.0
        %2230 = vmatprep.subr.mxu0 0.0
        %2231 = vmatpush1.xpose.msra.mxu0 0.0
        %2232 = vmatprep.subr.mxu0 0.0
        %2233 = vmatpush1.xpose.msra.mxu0 0.0
        %2234 = vmatprep.subr.mxu0 0.0
        %2235 = vmatpush1.xpose.msra.mxu0 0.0
        %2236 = vmatprep.subr.mxu0 0.0
        %2237 = vmatpush1.xpose.msra.mxu0 0.0
        %2238 = vmatprep.subr.mxu0 0.0
        %2239 = vmatpush1.xpose.msra.mxu0 0.0
        %2240 = vmatprep.subr.mxu0 0.0
        %2241 = vmatpush1.xpose.msra.mxu0 0.0
        %2242 = vmatprep.subr.mxu0 0.0
        %2243 = vmatpush1.xpose.msra.mxu0 0.0
        %2244 = vmatprep.subr.mxu0 0.0
        %2245 = vmatpush1.xpose.msra.mxu0 0.0
        %2246 = vmatprep.subr.mxu0 0.0
        %2247 = vmatpush1.xpose.msra.mxu0 0.0
        %2248 = vmatprep.subr.mxu0 0.0
        %2249 = vmatpush1.xpose.msra.mxu0 0.0
        %2250 = vmatprep.subr.mxu0 0.0
        %2251 = vmatpush1.xpose.msra.mxu0 0.0
        %2252 = vmatprep.subr.mxu0 0.0
        %2253 = vmatpush1.xpose.msra.mxu0 0.0
        %2254 = vmatprep.subr.mxu0 0.0
        %2255 = vmatpush1.xpose.msra.mxu0 0.0
        %2256 = vmatprep.subr.mxu0 0.0
        %2257 = vmatpush1.xpose.msra.mxu0 0.0
        %2258 = vmatprep.subr.mxu0 0.0
        %2259 = vmatpush1.xpose.msra.mxu0 0.0
        %2260 = vmatprep.subr.mxu0 0.0
        %2261 = vmatpush1.xpose.msra.mxu0 0.0
        %2262 = vmatprep.subr.mxu0 0.0
        %2263 = vmatpush1.xpose.msra.mxu0 0.0
        %2264 = vmatprep.subr.mxu0 0.0
        %2265 = vmatpush1.xpose.msra.mxu0 0.0
        %2266 = vmatprep.subr.mxu0 0.0
        %2267 = vmatpush1.xpose.msra.mxu0 0.0
        %2268 = vmatprep.subr.mxu0 0.0
        %2269 = vmatpush1.xpose.msra.mxu0 0.0
        %2270 = vmatprep.subr.mxu0 0.0
        %2271 = vmatpush1.xpose.msra.mxu0 0.0
        %2272 = vmatprep.subr.mxu0 0.0
        %2273 = vmatpush1.xpose.msra.mxu0 0.0
        %2274 = vmatprep.subr.mxu0 0.0
        %2275 = vmatpush1.xpose.msra.mxu0 0.0
        %2276 = vmatprep.subr.mxu0 0.0
        %2277 = vmatpush1.xpose.msra.mxu0 0.0
        %2278 = vmatprep.subr.mxu0 0.0
        %2279 = vmatpush1.xpose.msra.mxu0 0.0
        %2280 = vmatprep.subr.mxu0 0.0
        %2281 = vmatpush1.xpose.msra.mxu0 0.0
        %2282 = vmatprep.subr.mxu0 0.0
        %2283 = vmatpush1.xpose.msra.mxu0 0.0
        %2284 = vmatprep.subr.mxu0 0.0
        %2285 = vmatpush1.xpose.msra.mxu0 0.0
        %2286 = vmatprep.subr.mxu0 0.0
        %2287 = vmatpush1.xpose.msra.mxu0 0.0
        %2288 = vmatprep.mubr.f32.mxu0 0.0
        %v2289 = vand.u32 %v1047, 4294901760
        %v2290 = vsub.f32 %v1047, %v2289
        %v2291 = vand.u32 %v2290, 4294901760
        %2292 = vmatmul.mubr.f32.gmra.mrb[0].mxu0 %v2291
        %v2293 = vpop.f32.mrb[0].mxu0
        %v2294 = vadd.f32 %v2220, %v2293
        %v2295 = vpop.f32.mrb[0].mxu0
        %2296 = vdwg.mxu0
        %2297 = vmatprep.subr.mxu0 0.0
        %v2298 = vand.u32 %v1074, 4294901760
        %v2299 = vsub.f32 %v1074, %v2298
        %v2300 = vand.u32 %v2299, 4294901760
        %2301 = vmatpush1.xpose.msra.mxu0 %v2300
        %2302 = vmatprep.subr.mxu0 0.0
        %2303 = vmatpush1.xpose.msra.mxu0 0.0
        %2304 = vmatprep.subr.mxu0 0.0
        %2305 = vmatpush1.xpose.msra.mxu0 0.0
        %2306 = vmatprep.subr.mxu0 0.0
        %2307 = vmatpush1.xpose.msra.mxu0 0.0
        %2308 = vmatprep.subr.mxu0 0.0
        %2309 = vmatpush1.xpose.msra.mxu0 0.0
        %2310 = vmatprep.subr.mxu0 0.0
        %2311 = vmatpush1.xpose.msra.mxu0 0.0
        %2312 = vmatprep.subr.mxu0 0.0
        %2313 = vmatpush1.xpose.msra.mxu0 0.0
        %2314 = vmatprep.subr.mxu0 0.0
        %2315 = vmatpush1.xpose.msra.mxu0 0.0
        %2316 = vmatprep.subr.mxu0 0.0
        %2317 = vmatpush1.xpose.msra.mxu0 0.0
        %2318 = vmatprep.subr.mxu0 0.0
        %2319 = vmatpush1.xpose.msra.mxu0 0.0
        %2320 = vmatprep.subr.mxu0 0.0
        %2321 = vmatpush1.xpose.msra.mxu0 0.0
        %2322 = vmatprep.subr.mxu0 0.0
        %2323 = vmatpush1.xpose.msra.mxu0 0.0
        %2324 = vmatprep.subr.mxu0 0.0
        %2325 = vmatpush1.xpose.msra.mxu0 0.0
        %2326 = vmatprep.subr.mxu0 0.0
        %2327 = vmatpush1.xpose.msra.mxu0 0.0
        %2328 = vmatprep.subr.mxu0 0.0
        %2329 = vmatpush1.xpose.msra.mxu0 0.0
        %2330 = vmatprep.subr.mxu0 0.0
        %2331 = vmatpush1.xpose.msra.mxu0 0.0
        %2332 = vmatprep.subr.mxu0 0.0
        %2333 = vmatpush1.xpose.msra.mxu0 0.0
        %2334 = vmatprep.subr.mxu0 0.0
        %2335 = vmatpush1.xpose.msra.mxu0 0.0
        %2336 = vmatprep.subr.mxu0 0.0
        %2337 = vmatpush1.xpose.msra.mxu0 0.0
        %2338 = vmatprep.subr.mxu0 0.0
        %2339 = vmatpush1.xpose.msra.mxu0 0.0
        %2340 = vmatprep.subr.mxu0 0.0
        %2341 = vmatpush1.xpose.msra.mxu0 0.0
        %2342 = vmatprep.subr.mxu0 0.0
        %2343 = vmatpush1.xpose.msra.mxu0 0.0
        %2344 = vmatprep.subr.mxu0 0.0
        %2345 = vmatpush1.xpose.msra.mxu0 0.0
        %2346 = vmatprep.subr.mxu0 0.0
        %2347 = vmatpush1.xpose.msra.mxu0 0.0
        %2348 = vmatprep.subr.mxu0 0.0
        %2349 = vmatpush1.xpose.msra.mxu0 0.0
        %2350 = vmatprep.subr.mxu0 0.0
        %2351 = vmatpush1.xpose.msra.mxu0 0.0
        %2352 = vmatprep.subr.mxu0 0.0
        %2353 = vmatpush1.xpose.msra.mxu0 0.0
        %2354 = vmatprep.subr.mxu0 0.0
        %2355 = vmatpush1.xpose.msra.mxu0 0.0
        %2356 = vmatprep.subr.mxu0 0.0
        %2357 = vmatpush1.xpose.msra.mxu0 0.0
        %2358 = vmatprep.subr.mxu0 0.0
        %2359 = vmatpush1.xpose.msra.mxu0 0.0
        %2360 = vmatprep.subr.mxu0 0.0
        %2361 = vmatpush1.xpose.msra.mxu0 0.0
        %2362 = vmatprep.subr.mxu0 0.0
        %2363 = vmatpush1.xpose.msra.mxu0 0.0
        %2364 = vmatprep.mubr.f32.mxu0 0.0
        %v2365 = vand.u32 %v1047, 4294901760
        %2366 = vmatmul.mubr.f32.gmra.mrb[0].mxu0 %v2365
        %v2367 = vpop.f32.mrb[0].mxu0
        %v2368 = vadd.f32 %v2294, %v2367
        %v2369 = vpop.f32.mrb[0].mxu0
        %2370 = vdwg.mxu0
        %2371 = vmatprep.subr.mxu0 0.0
        %v2372 = vand.u32 %v1074, 4294901760
        %2373 = vmatpush1.xpose.msra.mxu0 %v2372
        %2374 = vmatprep.subr.mxu0 0.0
        %2375 = vmatpush1.xpose.msra.mxu0 0.0
        %2376 = vmatprep.subr.mxu0 0.0
        %2377 = vmatpush1.xpose.msra.mxu0 0.0
        %2378 = vmatprep.subr.mxu0 0.0
        %2379 = vmatpush1.xpose.msra.mxu0 0.0
        %2380 = vmatprep.subr.mxu0 0.0
        %2381 = vmatpush1.xpose.msra.mxu0 0.0
        %2382 = vmatprep.subr.mxu0 0.0
        %2383 = vmatpush1.xpose.msra.mxu0 0.0
        %2384 = vmatprep.subr.mxu0 0.0
        %2385 = vmatpush1.xpose.msra.mxu0 0.0
        %2386 = vmatprep.subr.mxu0 0.0
        %2387 = vmatpush1.xpose.msra.mxu0 0.0
        %2388 = vmatprep.subr.mxu0 0.0
        %2389 = vmatpush1.xpose.msra.mxu0 0.0
        %2390 = vmatprep.subr.mxu0 0.0
        %2391 = vmatpush1.xpose.msra.mxu0 0.0
        %2392 = vmatprep.subr.mxu0 0.0
        %2393 = vmatpush1.xpose.msra.mxu0 0.0
        %2394 = vmatprep.subr.mxu0 0.0
        %2395 = vmatpush1.xpose.msra.mxu0 0.0
        %2396 = vmatprep.subr.mxu0 0.0
        %2397 = vmatpush1.xpose.msra.mxu0 0.0
        %2398 = vmatprep.subr.mxu0 0.0
        %2399 = vmatpush1.xpose.msra.mxu0 0.0
        %2400 = vmatprep.subr.mxu0 0.0
        %2401 = vmatpush1.xpose.msra.mxu0 0.0
        %2402 = vmatprep.subr.mxu0 0.0
        %2403 = vmatpush1.xpose.msra.mxu0 0.0
        %2404 = vmatprep.subr.mxu0 0.0
        %2405 = vmatpush1.xpose.msra.mxu0 0.0
        %2406 = vmatprep.subr.mxu0 0.0
        %2407 = vmatpush1.xpose.msra.mxu0 0.0
        %2408 = vmatprep.subr.mxu0 0.0
        %2409 = vmatpush1.xpose.msra.mxu0 0.0
        %2410 = vmatprep.subr.mxu0 0.0
        %2411 = vmatpush1.xpose.msra.mxu0 0.0
        %2412 = vmatprep.subr.mxu0 0.0
        %2413 = vmatpush1.xpose.msra.mxu0 0.0
        %2414 = vmatprep.subr.mxu0 0.0
        %2415 = vmatpush1.xpose.msra.mxu0 0.0
        %2416 = vmatprep.subr.mxu0 0.0
        %2417 = vmatpush1.xpose.msra.mxu0 0.0
        %2418 = vmatprep.subr.mxu0 0.0
        %2419 = vmatpush1.xpose.msra.mxu0 0.0
        %2420 = vmatprep.subr.mxu0 0.0
        %2421 = vmatpush1.xpose.msra.mxu0 0.0
        %2422 = vmatprep.subr.mxu0 0.0
        %2423 = vmatpush1.xpose.msra.mxu0 0.0
        %2424 = vmatprep.subr.mxu0 0.0
        %2425 = vmatpush1.xpose.msra.mxu0 0.0
        %2426 = vmatprep.subr.mxu0 0.0
        %2427 = vmatpush1.xpose.msra.mxu0 0.0
        %2428 = vmatprep.subr.mxu0 0.0
        %2429 = vmatpush1.xpose.msra.mxu0 0.0
        %2430 = vmatprep.subr.mxu0 0.0
        %2431 = vmatpush1.xpose.msra.mxu0 0.0
        %2432 = vmatprep.subr.mxu0 0.0
        %2433 = vmatpush1.xpose.msra.mxu0 0.0
        %2434 = vmatprep.subr.mxu0 0.0
        %2435 = vmatpush1.xpose.msra.mxu0 0.0
        %2436 = vmatprep.mubr.f32.mxu0 0.0
        %v2437 = vand.u32 %v1047, 4294901760
        %2438 = vmatmul.mubr.f32.gmra.mrb[0].mxu0 %v2437
        %v2439 = vpop.f32.mrb[0].mxu0
        %v2440 = vadd.f32 %v2368, %v2439
        %v2441 = vpop.f32.mrb[0].mxu0
        %2442 = vdwg.mxu0
        %v2443 = vadd.f32 %v1996, %v2440
        %2444 = vst.msk [vmem:[%s213 + $0x10] sm:$0xff] %vm1545, %v2443
        %v2445 = vld [vmem:[%s213 + $0x18] sm:$0xff]
        %2446 = vmatprep.subr.mxu0 0.0
        %v2447 = vand.u32 %v1075, 4294901760
        %2448 = vmatpush1.xpose.msra.mxu0 %v2447
        %2449 = vmatprep.subr.mxu0 0.0
        %2450 = vmatpush1.xpose.msra.mxu0 0.0
        %2451 = vmatprep.subr.mxu0 0.0
        %2452 = vmatpush1.xpose.msra.mxu0 0.0
        %2453 = vmatprep.subr.mxu0 0.0
        %2454 = vmatpush1.xpose.msra.mxu0 0.0
        %2455 = vmatprep.subr.mxu0 0.0
        %2456 = vmatpush1.xpose.msra.mxu0 0.0
        %2457 = vmatprep.subr.mxu0 0.0
        %2458 = vmatpush1.xpose.msra.mxu0 0.0
        %2459 = vmatprep.subr.mxu0 0.0
        %2460 = vmatpush1.xpose.msra.mxu0 0.0
        %2461 = vmatprep.subr.mxu0 0.0
        %2462 = vmatpush1.xpose.msra.mxu0 0.0
        %2463 = vmatprep.subr.mxu0 0.0
        %2464 = vmatpush1.xpose.msra.mxu0 0.0
        %2465 = vmatprep.subr.mxu0 0.0
        %2466 = vmatpush1.xpose.msra.mxu0 0.0
        %2467 = vmatprep.subr.mxu0 0.0
        %2468 = vmatpush1.xpose.msra.mxu0 0.0
        %2469 = vmatprep.subr.mxu0 0.0
        %2470 = vmatpush1.xpose.msra.mxu0 0.0
        %2471 = vmatprep.subr.mxu0 0.0
        %2472 = vmatpush1.xpose.msra.mxu0 0.0
        %2473 = vmatprep.subr.mxu0 0.0
        %2474 = vmatpush1.xpose.msra.mxu0 0.0
        %2475 = vmatprep.subr.mxu0 0.0
        %2476 = vmatpush1.xpose.msra.mxu0 0.0
        %2477 = vmatprep.subr.mxu0 0.0
        %2478 = vmatpush1.xpose.msra.mxu0 0.0
        %2479 = vmatprep.subr.mxu0 0.0
        %2480 = vmatpush1.xpose.msra.mxu0 0.0
        %2481 = vmatprep.subr.mxu0 0.0
        %2482 = vmatpush1.xpose.msra.mxu0 0.0
        %2483 = vmatprep.subr.mxu0 0.0
        %2484 = vmatpush1.xpose.msra.mxu0 0.0
        %2485 = vmatprep.subr.mxu0 0.0
        %2486 = vmatpush1.xpose.msra.mxu0 0.0
        %2487 = vmatprep.subr.mxu0 0.0
        %2488 = vmatpush1.xpose.msra.mxu0 0.0
        %2489 = vmatprep.subr.mxu0 0.0
        %2490 = vmatpush1.xpose.msra.mxu0 0.0
        %2491 = vmatprep.subr.mxu0 0.0
        %2492 = vmatpush1.xpose.msra.mxu0 0.0
        %2493 = vmatprep.subr.mxu0 0.0
        %2494 = vmatpush1.xpose.msra.mxu0 0.0
        %2495 = vmatprep.subr.mxu0 0.0
        %2496 = vmatpush1.xpose.msra.mxu0 0.0
        %2497 = vmatprep.subr.mxu0 0.0
        %2498 = vmatpush1.xpose.msra.mxu0 0.0
        %2499 = vmatprep.subr.mxu0 0.0
        %2500 = vmatpush1.xpose.msra.mxu0 0.0
        %2501 = vmatprep.subr.mxu0 0.0
        %2502 = vmatpush1.xpose.msra.mxu0 0.0
        %2503 = vmatprep.subr.mxu0 0.0
        %2504 = vmatpush1.xpose.msra.mxu0 0.0
        %2505 = vmatprep.subr.mxu0 0.0
        %2506 = vmatpush1.xpose.msra.mxu0 0.0
        %2507 = vmatprep.subr.mxu0 0.0
        %2508 = vmatpush1.xpose.msra.mxu0 0.0
        %2509 = vmatprep.subr.mxu0 0.0
        %2510 = vmatpush1.xpose.msra.mxu0 0.0
        %2511 = vmatprep.mubr.f32.mxu0 0.0
        %v2512 = vand.u32 %v1053, 4294901760
        %v2513 = vsub.f32 %v1053, %v2512
        %v2514 = vand.u32 %v2513, 4294901760
        %v2515 = vsub.f32 %v2513, %v2514
        %v2516 = vand.u32 %v2515, 4294901760
        %2517 = vmatmul.mubr.f32.gmra.mrb[0].mxu0 %v2516
        %v2518 = vpop.f32.mrb[0].mxu0
        %v2519 = vadd.f32 0.0, %v2518
        %v2520 = vpop.f32.mrb[0].mxu0
        %2521 = vdwg.mxu0
        %2522 = vmatprep.subr.mxu0 0.0
        %v2523 = vand.u32 %v1075, 4294901760
        %v2524 = vsub.f32 %v1075, %v2523
        %v2525 = vand.u32 %v2524, 4294901760
        %v2526 = vsub.f32 %v2524, %v2525
        %v2527 = vand.u32 %v2526, 4294901760
        %2528 = vmatpush1.xpose.msra.mxu0 %v2527
        %2529 = vmatprep.subr.mxu0 0.0
        %2530 = vmatpush1.xpose.msra.mxu0 0.0
        %2531 = vmatprep.subr.mxu0 0.0
        %2532 = vmatpush1.xpose.msra.mxu0 0.0
        %2533 = vmatprep.subr.mxu0 0.0
        %2534 = vmatpush1.xpose.msra.mxu0 0.0
        %2535 = vmatprep.subr.mxu0 0.0
        %2536 = vmatpush1.xpose.msra.mxu0 0.0
        %2537 = vmatprep.subr.mxu0 0.0
        %2538 = vmatpush1.xpose.msra.mxu0 0.0
        %2539 = vmatprep.subr.mxu0 0.0
        %2540 = vmatpush1.xpose.msra.mxu0 0.0
        %2541 = vmatprep.subr.mxu0 0.0
        %2542 = vmatpush1.xpose.msra.mxu0 0.0
        %2543 = vmatprep.subr.mxu0 0.0
        %2544 = vmatpush1.xpose.msra.mxu0 0.0
        %2545 = vmatprep.subr.mxu0 0.0
        %2546 = vmatpush1.xpose.msra.mxu0 0.0
        %2547 = vmatprep.subr.mxu0 0.0
        %2548 = vmatpush1.xpose.msra.mxu0 0.0
        %2549 = vmatprep.subr.mxu0 0.0
        %2550 = vmatpush1.xpose.msra.mxu0 0.0
        %2551 = vmatprep.subr.mxu0 0.0
        %2552 = vmatpush1.xpose.msra.mxu0 0.0
        %2553 = vmatprep.subr.mxu0 0.0
        %2554 = vmatpush1.xpose.msra.mxu0 0.0
        %2555 = vmatprep.subr.mxu0 0.0
        %2556 = vmatpush1.xpose.msra.mxu0 0.0
        %2557 = vmatprep.subr.mxu0 0.0
        %2558 = vmatpush1.xpose.msra.mxu0 0.0
        %2559 = vmatprep.subr.mxu0 0.0
        %2560 = vmatpush1.xpose.msra.mxu0 0.0
        %2561 = vmatprep.subr.mxu0 0.0
        %2562 = vmatpush1.xpose.msra.mxu0 0.0
        %2563 = vmatprep.subr.mxu0 0.0
        %2564 = vmatpush1.xpose.msra.mxu0 0.0
        %2565 = vmatprep.subr.mxu0 0.0
        %2566 = vmatpush1.xpose.msra.mxu0 0.0
        %2567 = vmatprep.subr.mxu0 0.0
        %2568 = vmatpush1.xpose.msra.mxu0 0.0
        %2569 = vmatprep.subr.mxu0 0.0
        %2570 = vmatpush1.xpose.msra.mxu0 0.0
        %2571 = vmatprep.subr.mxu0 0.0
        %2572 = vmatpush1.xpose.msra.mxu0 0.0
        %2573 = vmatprep.subr.mxu0 0.0
        %2574 = vmatpush1.xpose.msra.mxu0 0.0
        %2575 = vmatprep.subr.mxu0 0.0
        %2576 = vmatpush1.xpose.msra.mxu0 0.0
        %2577 = vmatprep.subr.mxu0 0.0
        %2578 = vmatpush1.xpose.msra.mxu0 0.0
        %2579 = vmatprep.subr.mxu0 0.0
        %2580 = vmatpush1.xpose.msra.mxu0 0.0
        %2581 = vmatprep.subr.mxu0 0.0
        %2582 = vmatpush1.xpose.msra.mxu0 0.0
        %2583 = vmatprep.subr.mxu0 0.0
        %2584 = vmatpush1.xpose.msra.mxu0 0.0
        %2585 = vmatprep.subr.mxu0 0.0
        %2586 = vmatpush1.xpose.msra.mxu0 0.0
        %2587 = vmatprep.subr.mxu0 0.0
        %2588 = vmatpush1.xpose.msra.mxu0 0.0
        %2589 = vmatprep.subr.mxu0 0.0
        %2590 = vmatpush1.xpose.msra.mxu0 0.0
        %2591 = vmatprep.mubr.f32.mxu0 0.0
        %v2592 = vand.u32 %v1053, 4294901760
        %2593 = vmatmul.mubr.f32.gmra.mrb[0].mxu0 %v2592
        %v2594 = vpop.f32.mrb[0].mxu0
        %v2595 = vadd.f32 %v2519, %v2594
        %v2596 = vpop.f32.mrb[0].mxu0
        %2597 = vdwg.mxu0
        %2598 = vmatprep.subr.mxu0 0.0
        %v2599 = vand.u32 %v1075, 4294901760
        %v2600 = vsub.f32 %v1075, %v2599
        %2601 = vmatpush1.xpose.msra.mxu0 %v2600
        %2602 = vmatprep.subr.mxu0 0.0
        %2603 = vmatpush1.xpose.msra.mxu0 0.0
        %2604 = vmatprep.subr.mxu0 0.0
        %2605 = vmatpush1.xpose.msra.mxu0 0.0
        %2606 = vmatprep.subr.mxu0 0.0
        %2607 = vmatpush1.xpose.msra.mxu0 0.0
        %2608 = vmatprep.subr.mxu0 0.0
        %2609 = vmatpush1.xpose.msra.mxu0 0.0
        %2610 = vmatprep.subr.mxu0 0.0
        %2611 = vmatpush1.xpose.msra.mxu0 0.0
        %2612 = vmatprep.subr.mxu0 0.0
        %2613 = vmatpush1.xpose.msra.mxu0 0.0
        %2614 = vmatprep.subr.mxu0 0.0
        %2615 = vmatpush1.xpose.msra.mxu0 0.0
        %2616 = vmatprep.subr.mxu0 0.0
        %2617 = vmatpush1.xpose.msra.mxu0 0.0
        %2618 = vmatprep.subr.mxu0 0.0
        %2619 = vmatpush1.xpose.msra.mxu0 0.0
        %2620 = vmatprep.subr.mxu0 0.0
        %2621 = vmatpush1.xpose.msra.mxu0 0.0
        %2622 = vmatprep.subr.mxu0 0.0
        %2623 = vmatpush1.xpose.msra.mxu0 0.0
        %2624 = vmatprep.subr.mxu0 0.0
        %2625 = vmatpush1.xpose.msra.mxu0 0.0
        %2626 = vmatprep.subr.mxu0 0.0
        %2627 = vmatpush1.xpose.msra.mxu0 0.0
        %2628 = vmatprep.subr.mxu0 0.0
        %2629 = vmatpush1.xpose.msra.mxu0 0.0
        %2630 = vmatprep.subr.mxu0 0.0
        %2631 = vmatpush1.xpose.msra.mxu0 0.0
        %2632 = vmatprep.subr.mxu0 0.0
        %2633 = vmatpush1.xpose.msra.mxu0 0.0
        %2634 = vmatprep.subr.mxu0 0.0
        %2635 = vmatpush1.xpose.msra.mxu0 0.0
        %2636 = vmatprep.subr.mxu0 0.0
        %2637 = vmatpush1.xpose.msra.mxu0 0.0
        %2638 = vmatprep.subr.mxu0 0.0
        %2639 = vmatpush1.xpose.msra.mxu0 0.0
        %2640 = vmatprep.subr.mxu0 0.0
        %2641 = vmatpush1.xpose.msra.mxu0 0.0
        %2642 = vmatprep.subr.mxu0 0.0
        %2643 = vmatpush1.xpose.msra.mxu0 0.0
        %2644 = vmatprep.subr.mxu0 0.0
        %2645 = vmatpush1.xpose.msra.mxu0 0.0
        %2646 = vmatprep.subr.mxu0 0.0
        %2647 = vmatpush1.xpose.msra.mxu0 0.0
        %2648 = vmatprep.subr.mxu0 0.0
        %2649 = vmatpush1.xpose.msra.mxu0 0.0
        %2650 = vmatprep.subr.mxu0 0.0
        %2651 = vmatpush1.xpose.msra.mxu0 0.0
        %2652 = vmatprep.subr.mxu0 0.0
        %2653 = vmatpush1.xpose.msra.mxu0 0.0
        %2654 = vmatprep.subr.mxu0 0.0
        %2655 = vmatpush1.xpose.msra.mxu0 0.0
        %2656 = vmatprep.subr.mxu0 0.0
        %2657 = vmatpush1.xpose.msra.mxu0 0.0
        %2658 = vmatprep.subr.mxu0 0.0
        %2659 = vmatpush1.xpose.msra.mxu0 0.0
        %2660 = vmatprep.subr.mxu0 0.0
        %2661 = vmatpush1.xpose.msra.mxu0 0.0
        %2662 = vmatprep.subr.mxu0 0.0
        %2663 = vmatpush1.xpose.msra.mxu0 0.0
        %2664 = vmatprep.mubr.f32.mxu0 0.0
        %v2665 = vand.u32 %v1053, 4294901760
        %v2666 = vsub.f32 %v1053, %v2665
        %2667 = vmatmul.mubr.f32.gmra.mrb[0].mxu0 %v2666
        %v2668 = vpop.f32.mrb[0].mxu0
        %v2669 = vadd.f32 %v2595, %v2668
        %v2670 = vpop.f32.mrb[0].mxu0
        %2671 = vdwg.mxu0
        %2672 = vmatprep.subr.mxu0 0.0
        %v2673 = vand.u32 %v1075, 4294901760
        %2674 = vmatpush1.xpose.msra.mxu0 %v2673
        %2675 = vmatprep.subr.mxu0 0.0
        %2676 = vmatpush1.xpose.msra.mxu0 0.0
        %2677 = vmatprep.subr.mxu0 0.0
        %2678 = vmatpush1.xpose.msra.mxu0 0.0
        %2679 = vmatprep.subr.mxu0 0.0
        %2680 = vmatpush1.xpose.msra.mxu0 0.0
        %2681 = vmatprep.subr.mxu0 0.0
        %2682 = vmatpush1.xpose.msra.mxu0 0.0
        %2683 = vmatprep.subr.mxu0 0.0
        %2684 = vmatpush1.xpose.msra.mxu0 0.0
        %2685 = vmatprep.subr.mxu0 0.0
        %2686 = vmatpush1.xpose.msra.mxu0 0.0
        %2687 = vmatprep.subr.mxu0 0.0
        %2688 = vmatpush1.xpose.msra.mxu0 0.0
        %2689 = vmatprep.subr.mxu0 0.0
        %2690 = vmatpush1.xpose.msra.mxu0 0.0
        %2691 = vmatprep.subr.mxu0 0.0
        %2692 = vmatpush1.xpose.msra.mxu0 0.0
        %2693 = vmatprep.subr.mxu0 0.0
        %2694 = vmatpush1.xpose.msra.mxu0 0.0
        %2695 = vmatprep.subr.mxu0 0.0
        %2696 = vmatpush1.xpose.msra.mxu0 0.0
        %2697 = vmatprep.subr.mxu0 0.0
        %2698 = vmatpush1.xpose.msra.mxu0 0.0
        %2699 = vmatprep.subr.mxu0 0.0
        %2700 = vmatpush1.xpose.msra.mxu0 0.0
        %2701 = vmatprep.subr.mxu0 0.0
        %2702 = vmatpush1.xpose.msra.mxu0 0.0
        %2703 = vmatprep.subr.mxu0 0.0
        %2704 = vmatpush1.xpose.msra.mxu0 0.0
        %2705 = vmatprep.subr.mxu0 0.0
        %2706 = vmatpush1.xpose.msra.mxu0 0.0
        %2707 = vmatprep.subr.mxu0 0.0
        %2708 = vmatpush1.xpose.msra.mxu0 0.0
        %2709 = vmatprep.subr.mxu0 0.0
        %2710 = vmatpush1.xpose.msra.mxu0 0.0
        %2711 = vmatprep.subr.mxu0 0.0
        %2712 = vmatpush1.xpose.msra.mxu0 0.0
        %2713 = vmatprep.subr.mxu0 0.0
        %2714 = vmatpush1.xpose.msra.mxu0 0.0
        %2715 = vmatprep.subr.mxu0 0.0
        %2716 = vmatpush1.xpose.msra.mxu0 0.0
        %2717 = vmatprep.subr.mxu0 0.0
        %2718 = vmatpush1.xpose.msra.mxu0 0.0
        %2719 = vmatprep.subr.mxu0 0.0
        %2720 = vmatpush1.xpose.msra.mxu0 0.0
        %2721 = vmatprep.subr.mxu0 0.0
        %2722 = vmatpush1.xpose.msra.mxu0 0.0
        %2723 = vmatprep.subr.mxu0 0.0
        %2724 = vmatpush1.xpose.msra.mxu0 0.0
        %2725 = vmatprep.subr.mxu0 0.0
        %2726 = vmatpush1.xpose.msra.mxu0 0.0
        %2727 = vmatprep.subr.mxu0 0.0
        %2728 = vmatpush1.xpose.msra.mxu0 0.0
        %2729 = vmatprep.subr.mxu0 0.0
        %2730 = vmatpush1.xpose.msra.mxu0 0.0
        %2731 = vmatprep.subr.mxu0 0.0
        %2732 = vmatpush1.xpose.msra.mxu0 0.0
        %2733 = vmatprep.subr.mxu0 0.0
        %2734 = vmatpush1.xpose.msra.mxu0 0.0
        %2735 = vmatprep.subr.mxu0 0.0
        %2736 = vmatpush1.xpose.msra.mxu0 0.0
        %2737 = vmatprep.mubr.f32.mxu0 0.0
        %v2738 = vand.u32 %v1053, 4294901760
        %v2739 = vsub.f32 %v1053, %v2738
        %v2740 = vand.u32 %v2739, 4294901760
        %2741 = vmatmul.mubr.f32.gmra.mrb[0].mxu0 %v2740
        %v2742 = vpop.f32.mrb[0].mxu0
        %v2743 = vadd.f32 %v2669, %v2742
        %v2744 = vpop.f32.mrb[0].mxu0
        %2745 = vdwg.mxu0
        %2746 = vmatprep.subr.mxu0 0.0
        %v2747 = vand.u32 %v1075, 4294901760
        %v2748 = vsub.f32 %v1075, %v2747
        %v2749 = vand.u32 %v2748, 4294901760
        %2750 = vmatpush1.xpose.msra.mxu0 %v2749
        %2751 = vmatprep.subr.mxu0 0.0
        %2752 = vmatpush1.xpose.msra.mxu0 0.0
        %2753 = vmatprep.subr.mxu0 0.0
        %2754 = vmatpush1.xpose.msra.mxu0 0.0
        %2755 = vmatprep.subr.mxu0 0.0
        %2756 = vmatpush1.xpose.msra.mxu0 0.0
        %2757 = vmatprep.subr.mxu0 0.0
        %2758 = vmatpush1.xpose.msra.mxu0 0.0
        %2759 = vmatprep.subr.mxu0 0.0
        %2760 = vmatpush1.xpose.msra.mxu0 0.0
        %2761 = vmatprep.subr.mxu0 0.0
        %2762 = vmatpush1.xpose.msra.mxu0 0.0
        %2763 = vmatprep.subr.mxu0 0.0
        %2764 = vmatpush1.xpose.msra.mxu0 0.0
        %2765 = vmatprep.subr.mxu0 0.0
        %2766 = vmatpush1.xpose.msra.mxu0 0.0
        %2767 = vmatprep.subr.mxu0 0.0
        %2768 = vmatpush1.xpose.msra.mxu0 0.0
        %2769 = vmatprep.subr.mxu0 0.0
        %2770 = vmatpush1.xpose.msra.mxu0 0.0
        %2771 = vmatprep.subr.mxu0 0.0
        %2772 = vmatpush1.xpose.msra.mxu0 0.0
        %2773 = vmatprep.subr.mxu0 0.0
        %2774 = vmatpush1.xpose.msra.mxu0 0.0
        %2775 = vmatprep.subr.mxu0 0.0
        %2776 = vmatpush1.xpose.msra.mxu0 0.0
        %2777 = vmatprep.subr.mxu0 0.0
        %2778 = vmatpush1.xpose.msra.mxu0 0.0
        %2779 = vmatprep.subr.mxu0 0.0
        %2780 = vmatpush1.xpose.msra.mxu0 0.0
        %2781 = vmatprep.subr.mxu0 0.0
        %2782 = vmatpush1.xpose.msra.mxu0 0.0
        %2783 = vmatprep.subr.mxu0 0.0
        %2784 = vmatpush1.xpose.msra.mxu0 0.0
        %2785 = vmatprep.subr.mxu0 0.0
        %2786 = vmatpush1.xpose.msra.mxu0 0.0
        %2787 = vmatprep.subr.mxu0 0.0
        %2788 = vmatpush1.xpose.msra.mxu0 0.0
        %2789 = vmatprep.subr.mxu0 0.0
        %2790 = vmatpush1.xpose.msra.mxu0 0.0
        %2791 = vmatprep.subr.mxu0 0.0
        %2792 = vmatpush1.xpose.msra.mxu0 0.0
        %2793 = vmatprep.subr.mxu0 0.0
        %2794 = vmatpush1.xpose.msra.mxu0 0.0
        %2795 = vmatprep.subr.mxu0 0.0
        %2796 = vmatpush1.xpose.msra.mxu0 0.0
        %2797 = vmatprep.subr.mxu0 0.0
        %2798 = vmatpush1.xpose.msra.mxu0 0.0
        %2799 = vmatprep.subr.mxu0 0.0
        %2800 = vmatpush1.xpose.msra.mxu0 0.0
        %2801 = vmatprep.subr.mxu0 0.0
        %2802 = vmatpush1.xpose.msra.mxu0 0.0
        %2803 = vmatprep.subr.mxu0 0.0
        %2804 = vmatpush1.xpose.msra.mxu0 0.0
        %2805 = vmatprep.subr.mxu0 0.0
        %2806 = vmatpush1.xpose.msra.mxu0 0.0
        %2807 = vmatprep.subr.mxu0 0.0
        %2808 = vmatpush1.xpose.msra.mxu0 0.0
        %2809 = vmatprep.subr.mxu0 0.0
        %2810 = vmatpush1.xpose.msra.mxu0 0.0
        %2811 = vmatprep.subr.mxu0 0.0
        %2812 = vmatpush1.xpose.msra.mxu0 0.0
        %2813 = vmatprep.mubr.f32.mxu0 0.0
        %v2814 = vand.u32 %v1053, 4294901760
        %2815 = vmatmul.mubr.f32.gmra.mrb[0].mxu0 %v2814
        %v2816 = vpop.f32.mrb[0].mxu0
        %v2817 = vadd.f32 %v2743, %v2816
        %v2818 = vpop.f32.mrb[0].mxu0
        %2819 = vdwg.mxu0
        %2820 = vmatprep.subr.mxu0 0.0
        %v2821 = vand.u32 %v1075, 4294901760
        %2822 = vmatpush1.xpose.msra.mxu0 %v2821
        %2823 = vmatprep.subr.mxu0 0.0
        %2824 = vmatpush1.xpose.msra.mxu0 0.0
        %2825 = vmatprep.subr.mxu0 0.0
        %2826 = vmatpush1.xpose.msra.mxu0 0.0
        %2827 = vmatprep.subr.mxu0 0.0
        %2828 = vmatpush1.xpose.msra.mxu0 0.0
        %2829 = vmatprep.subr.mxu0 0.0
        %2830 = vmatpush1.xpose.msra.mxu0 0.0
        %2831 = vmatprep.subr.mxu0 0.0
        %2832 = vmatpush1.xpose.msra.mxu0 0.0
        %2833 = vmatprep.subr.mxu0 0.0
        %2834 = vmatpush1.xpose.msra.mxu0 0.0
        %2835 = vmatprep.subr.mxu0 0.0
        %2836 = vmatpush1.xpose.msra.mxu0 0.0
        %2837 = vmatprep.subr.mxu0 0.0
        %2838 = vmatpush1.xpose.msra.mxu0 0.0
        %2839 = vmatprep.subr.mxu0 0.0
        %2840 = vmatpush1.xpose.msra.mxu0 0.0
        %2841 = vmatprep.subr.mxu0 0.0
        %2842 = vmatpush1.xpose.msra.mxu0 0.0
        %2843 = vmatprep.subr.mxu0 0.0
        %2844 = vmatpush1.xpose.msra.mxu0 0.0
        %2845 = vmatprep.subr.mxu0 0.0
        %2846 = vmatpush1.xpose.msra.mxu0 0.0
        %2847 = vmatprep.subr.mxu0 0.0
        %2848 = vmatpush1.xpose.msra.mxu0 0.0
        %2849 = vmatprep.subr.mxu0 0.0
        %2850 = vmatpush1.xpose.msra.mxu0 0.0
        %2851 = vmatprep.subr.mxu0 0.0
        %2852 = vmatpush1.xpose.msra.mxu0 0.0
        %2853 = vmatprep.subr.mxu0 0.0
        %2854 = vmatpush1.xpose.msra.mxu0 0.0
        %2855 = vmatprep.subr.mxu0 0.0
        %2856 = vmatpush1.xpose.msra.mxu0 0.0
        %2857 = vmatprep.subr.mxu0 0.0
        %2858 = vmatpush1.xpose.msra.mxu0 0.0
        %2859 = vmatprep.subr.mxu0 0.0
        %2860 = vmatpush1.xpose.msra.mxu0 0.0
        %2861 = vmatprep.subr.mxu0 0.0
        %2862 = vmatpush1.xpose.msra.mxu0 0.0
        %2863 = vmatprep.subr.mxu0 0.0
        %2864 = vmatpush1.xpose.msra.mxu0 0.0
        %2865 = vmatprep.subr.mxu0 0.0
        %2866 = vmatpush1.xpose.msra.mxu0 0.0
        %2867 = vmatprep.subr.mxu0 0.0
        %2868 = vmatpush1.xpose.msra.mxu0 0.0
        %2869 = vmatprep.subr.mxu0 0.0
        %2870 = vmatpush1.xpose.msra.mxu0 0.0
        %2871 = vmatprep.subr.mxu0 0.0
        %2872 = vmatpush1.xpose.msra.mxu0 0.0
        %2873 = vmatprep.subr.mxu0 0.0
        %2874 = vmatpush1.xpose.msra.mxu0 0.0
        %2875 = vmatprep.subr.mxu0 0.0
        %2876 = vmatpush1.xpose.msra.mxu0 0.0
        %2877 = vmatprep.subr.mxu0 0.0
        %2878 = vmatpush1.xpose.msra.mxu0 0.0
        %2879 = vmatprep.subr.mxu0 0.0
        %2880 = vmatpush1.xpose.msra.mxu0 0.0
        %2881 = vmatprep.subr.mxu0 0.0
        %2882 = vmatpush1.xpose.msra.mxu0 0.0
        %2883 = vmatprep.subr.mxu0 0.0
        %2884 = vmatpush1.xpose.msra.mxu0 0.0
        %2885 = vmatprep.mubr.f32.mxu0 0.0
        %v2886 = vand.u32 %v1053, 4294901760
        %2887 = vmatmul.mubr.f32.gmra.mrb[0].mxu0 %v2886
        %v2888 = vpop.f32.mrb[0].mxu0
        %v2889 = vadd.f32 %v2817, %v2888
        %v2890 = vpop.f32.mrb[0].mxu0
        %2891 = vdwg.mxu0
        %v2892 = vadd.f32 %v2445, %v2889
        %2893 = vst.msk [vmem:[%s213 + $0x18] sm:$0xff] %vm1545, %v2892
        %p2894 = scmp.lt.s32.totalorder %s22, 1
        %s2895 = scalar_select %p2894, %s22, 1
        %s2896 = smul.addr %s2895, 4
        %s2897 = smul.addr %s2896, 8
        %s2898 = scalar_lea.vmem %s2, %s2897
        %p2899 = scmp.lt.s32.totalorder %s22, 1
        %s2900 = scalar_select %p2899, %s22, 1
        %s2901 = smul.addr %s2900, 4
        %s2902 = smul.addr %s2901, 8
        %s2903 = scalar_lea.vmem %s3, %s2902
        // Predicated region
        $region37: #{tpu_custom_call.1} parent=27 // pred_check
          %p2904 = pneg %p97
        $region38: #{tpu_custom_call.1} parent=27 // pred_check_branch
          %2906 = sbr.rel (%p2904) target = $region40
        $region39: #{tpu_custom_call.1} parent=27 // pred_region
          _
        $region40: #{tpu_custom_call.1} parent=27 // pred_fallthru
          _
        // Predicated region
        $region41: #{tpu_custom_call.1} parent=27 // pred_check
          %p2907 = pneg %p123
        $region42: #{tpu_custom_call.1} parent=27 // pred_check_branch
          %2909 = sbr.rel (%p2907) target = $region44
        $region43: #{tpu_custom_call.1} parent=27 // pred_region
          _
        $region44: #{tpu_custom_call.1} parent=27 // pred_fallthru
          _
      $region28: #{tpu_custom_call.1} parent=5 // pred_fallthru
        _
      %p2910 = scmp.le.s32.totalorder 2, %s13
      // Predicated region
      $region45: #{tpu_custom_call.1} parent=5 // pred_check
        %p2911 = pneg %p2910
      $region46: #{tpu_custom_call.1} parent=5 // pred_check_branch
        %2913 = sbr.rel (%p2911) target = $region48
      $region47: #{tpu_custom_call.1} parent=5 // pred_region
        %s2914 = ssub.s32 %s13, 2
        // Predicated region
        $region49: #{tpu_custom_call.1} parent=47 // pred_check
          %p2915 = pneg %p103
        $region50: #{tpu_custom_call.1} parent=47 // pred_check_branch
          %2917 = sbr.rel (%p2915) target = $region52
        $region51: #{tpu_custom_call.1} parent=47 // pred_region
          %p2918 = scmp.lt.s32.totalorder %s24, 1
          %s2919 = scalar_select %p2918, %s24, 1
          %s2920 = smul.addr %s2919, 4
          %s2921 = smul.addr %s2920, 8
          %s2922 = scalar_lea.vmem %s2, %s2921
        $region52: #{tpu_custom_call.1} parent=47 // pred_fallthru
          _
        // Predicated region
        $region53: #{tpu_custom_call.1} parent=47 // pred_check
          %p2923 = pneg %p129
        $region54: #{tpu_custom_call.1} parent=47 // pred_check_branch
          %2925 = sbr.rel (%p2923) target = $region56
        $region55: #{tpu_custom_call.1} parent=47 // pred_region
          %p2926 = scmp.lt.s32.totalorder %s24, 1
          %s2927 = scalar_select %p2926, %s24, 1
          %s2928 = smul.addr %s2927, 4
          %s2929 = smul.addr %s2928, 8
          %s2930 = scalar_lea.vmem %s3, %s2929
        $region56: #{tpu_custom_call.1} parent=47 // pred_fallthru
          _
      $region48: #{tpu_custom_call.1} parent=5 // pred_fallthru
        _
    $region6: #{tpu_custom_call.1} parent=1 // loop_footer
      %s17 = sadd.s32 1, %s13
    $region7: #{tpu_custom_call.1} parent=1 // loop_footer_branch
      %12 = sbr.rel target = $region3
    $region8: #{tpu_custom_call.1} parent=1 // loop_exit
      _
    %2931 = vsyncpa [#allocation3], 1
    %s2932 = scalar_lea.sflag [#allocation3], 1
    %2933 = vsyncpa %s2932, 1

</llo_original>
